<compile_context>
chip_gen: v5e
topology: v5e:2x2
jax: 0.10.0
libtpu: 0.0.40
codegen_flags: <defaults>
</compile_context>

<pallas_src>
import functools

import jax
import jax.numpy as jnp
import numpy as np
from jax.experimental import pallas as pl
from jax.experimental.pallas import tpu as pltpu

LANE = 128


def _round_up(v, m):
    return -(-v // m) * m


def _zero_halo(ref, nb, h, w, c, dt):
    """Zero the 1-pixel spatial border of a (nb, h+2, w+2, c) padded scratch buffer."""
    ref[:, pl.ds(0, 1), :, :] = jnp.zeros((nb, 1, w + 2, c), dt)
    ref[:, pl.ds(h + 1, 1), :, :] = jnp.zeros((nb, 1, w + 2, c), dt)
    ref[:, :, pl.ds(0, 1), :] = jnp.zeros((nb, h + 2, 1, c), dt)
    ref[:, :, pl.ds(w + 1, 1), :] = jnp.zeros((nb, h + 2, 1, c), dt)


def _preact_block_kernel(x_ref, w1_ref, b1_ref, w2_ref, b2_ref, ws_ref, bs_ref,
                         out_ref, xpad_ref, ypad_ref, acc_ref, *phase_refs,
                         stride, has_shortcut, NB, H, W, Ho, Wo, Cp_in, Cp_out,
                         mxu_dtype):
    f32 = jnp.float32
    M = NB * Ho * Wo
    taps = [(kh, kw) for kh in range(3) for kw in range(3)]

    x = x_ref[...]                       # (NB, H, W, Cp_in) f32, un-activated input
    xr = jnp.maximum(x, 0.0)             # relu(x)

    # ---- padded relu(x): zero halo (4 tiny stores), then interior-only store ---------
    xpad_dt = xpad_ref.dtype
    _zero_halo(xpad_ref, NB, H, W, Cp_in, xpad_dt)
    xpad_ref[:, pl.ds(1, H), pl.ds(1, W), :] = xr.astype(xpad_dt)

    # ---- conv1: 9 shift-accumulate MXU matmuls, M = NB*Ho*Wo, K = Cp_in --------------
    if stride == 1:
        def tap1(kh, kw):
            return xpad_ref[:, pl.ds(kh, Ho), pl.ds(kw, Wo), :]
    else:
        xe_ref, xo_ref = phase_refs
        wh_e = (W + 3) // 2
        wh_o = (W + 2) // 2
        # Decimate W once into even/odd phases so every tap (and shortcut) read below
        # is unit-stride on the sublane axis; only these two reads are W-strided.
        xe_ref[...] = xpad_ref[:, :, pl.ds(0, wh_e, 2), :].astype(mxu_dtype)
        xo_ref[...] = xpad_ref[:, :, pl.ds(1, wh_o, 2), :].astype(mxu_dtype)

        def tap1(kh, kw):
            src = xe_ref if kw % 2 == 0 else xo_ref
            return src[:, pl.ds(kh, Ho, stride), pl.ds(kw // 2, Wo), :]

    for t, (kh, kw) in enumerate(taps):
        contrib = jnp.dot(tap1(kh, kw).reshape(M, Cp_in), w1_ref[t],
                          preferred_element_type=f32)
        if t == 0:
            acc_ref[...] = contrib
        else:
            acc_ref[...] += contrib
    y1 = jnp.maximum(acc_ref[...] + b1_ref[...], 0.0)    # relu(conv1), (M, Cp_out) f32

    # ---- padded relu(conv1) for conv2 (interior-only store) --------------------------
    _zero_halo(ypad_ref, NB, Ho, Wo, Cp_out, mxu_dtype)
    ypad_ref[:, pl.ds(1, Ho), pl.ds(1, Wo), :] = (
        y1.reshape(NB, Ho, Wo, Cp_out).astype(mxu_dtype))

    # ---- conv2: 3x3 stride 1, another 9 shift-accumulate matmuls ---------------------
    for t, (kh, kw) in enumerate(taps):
        patch = ypad_ref[:, pl.ds(kh, Ho), pl.ds(kw, Wo), :].reshape(M, Cp_out)
        contrib = jnp.dot(patch, w2_ref[t], preferred_element_type=f32)
        if t == 0:
            acc_ref[...] = contrib
        else:
            acc_ref[...] += contrib
    y2 = acc_ref[...] + b2_ref[...]

    # ---- shortcut ---------------------------------------------------------------------
    if has_shortcut:
        if stride == 1:
            sc_in = xr.astype(mxu_dtype).reshape(M, Cp_in)
        else:
            xo_ref = phase_refs[1]   # odd W phase: x[2i, 2j] = xpad[1+2i, 1+2j]
            sc_in = xo_ref[:, pl.ds(1, Ho, stride), pl.ds(0, Wo), :].reshape(M, Cp_in)
        sc = jnp.dot(sc_in, ws_ref[...], preferred_element_type=f32) + bs_ref[...]
    else:
        # identity shortcut adds the *un-activated* x (only when stride==1, Cin==Cout)
        sc = x.reshape(M, Cp_in)

    out_ref[...] = (y2 + sc).reshape(NB, Ho, Wo, Cp_out).astype(out_ref.dtype)


def _vmem_plan(N, H, W, Ho, Wo, Cp_in, Cp_out, stride, mxu_dtype):
    """Pick images-per-grid-step NB and a VMEM limit from the chip's actual VMEM."""
    it = np.dtype(mxu_dtype).itemsize
    xpad_it = it if stride == 1 else 4
    per_img = (2 * H * W * Cp_in * 4                      # input block (double-buffered)
               + 2 * Ho * Wo * Cp_out * 4                 # output block (double-buffered)
               + (H + 2) * (W + 2) * Cp_in * xpad_it      # padded relu(x)
               + (Ho + 2) * (Wo + 2) * Cp_out * it        # padded relu(conv1)
               + Ho * Wo * Cp_out * 4)                    # f32 accumulator
    if stride != 1:
        per_img += (H + 2) * ((W + 3) // 2 + (W + 2) // 2) * Cp_in * it
    fixed = (2 * (9 * Cp_in * Cp_out + 9 * Cp_out * Cp_out + Cp_in * Cp_out) * it
             + 2 * 3 * Cp_out * 4)                        # weights/biases (double-buffered)
    try:   # generation-aware: ~128 MiB on v5e/v6e, 64 MiB per TensorCore on v7x
        cap = int(getattr(pltpu.get_tpu_info(), "vmem_capacity_bytes", 0)) or 64 * 2**20
    except Exception:
        cap = 64 * 2**20
    budget = (cap * 5) // 8 - fixed
    nb = 1
    for cand in range(1, min(N, 8) + 1):
        if N % cand:
            continue
        if N >= 2 and N // cand < 2:
            continue            # keep >=2 parallel grid steps so both v7x TCs get work
        if cand * per_img <= budget:
            nb = cand
    usage = fixed + nb * per_img
    vmem_limit = int(min(cap * 7 // 8, max(usage * 3 // 2, 32 * 2**20)))
    return nb, vmem_limit


@functools.partial(jax.jit, static_argnames=("stride", "mxu_dtype"))
def preact_block_no_bn(x_nchw, params, *, stride=1, mxu_dtype=jnp.bfloat16):
    """Runs PreActBlockNoBN.forward. x_nchw: (N, Cin, H, W) float32 -> (N, Cout, Ho, Wo)."""
    N, Cin, H, W = x_nchw.shape
    Cout = params["w1"].shape[-1]
    has_shortcut = (stride != 1) or (Cin != Cout)
    if not has_shortcut:
        assert stride == 1 and Cin == Cout, "identity shortcut requires stride=1, Cin==Cout"
    Ho = (H - 1) // stride + 1
    Wo = (W - 1) // stride + 1

    # channel padding to lane width (lane-dense MXU operands and output stores)
    Cp_in = _round_up(Cin, LANE)
    Cp_out = _round_up(Cout, LANE)

    # NCHW -> NHWC + zero-pad channels (the spatial halo is handled in-kernel).
    x = jnp.transpose(x_nchw, (0, 2, 3, 1))
    x = jnp.pad(x, ((0, 0), (0, 0), (0, 0), (0, Cp_in - Cin)))

    # Parameters: pad channels, keep the 9 taps as a leading dim (shift-accumulate),
    # cast MXU operands (one-time; could be hoisted to model-load time).
    w1 = jnp.pad(params["w1"], ((0, 0), (0, 0), (0, Cp_in - Cin), (0, Cp_out - Cout)))
    w1f = w1.reshape(9, Cp_in, Cp_out).astype(mxu_dtype)
    w2 = jnp.pad(params["w2"], ((0, 0), (0, 0), (0, Cp_out - Cout), (0, Cp_out - Cout)))
    w2f = w2.reshape(9, Cp_out, Cp_out).astype(mxu_dtype)
    b1 = jnp.pad(params["b1"], ((0, 0), (0, Cp_out - Cout))).astype(jnp.float32)
    b2 = jnp.pad(params["b2"], ((0, 0), (0, Cp_out - Cout))).astype(jnp.float32)
    if has_shortcut:
        wsf = jnp.pad(params["ws"], ((0, Cp_in - Cin), (0, Cp_out - Cout))).astype(mxu_dtype)
        bs = jnp.pad(params["bs"], ((0, 0), (0, Cp_out - Cout))).astype(jnp.float32)
    else:
        wsf = jnp.zeros((Cp_in, Cp_out), mxu_dtype)
        bs = jnp.zeros((1, Cp_out), jnp.float32)

    NB, vmem_limit = _vmem_plan(N, H, W, Ho, Wo, Cp_in, Cp_out, stride, mxu_dtype)

    xpad_dt = mxu_dtype if stride == 1 else jnp.float32   # keep f32 for the one W-strided read
    scratch = [
        pltpu.VMEM((NB, H + 2, W + 2, Cp_in), xpad_dt),       # padded relu(x)
        pltpu.VMEM((NB, Ho + 2, Wo + 2, Cp_out), mxu_dtype),  # padded relu(conv1)
        pltpu.VMEM((NB * Ho * Wo, Cp_out), jnp.float32),      # f32 matmul accumulator
    ]
    if stride != 1:
        scratch += [pltpu.VMEM((NB, H + 2, (W + 3) // 2, Cp_in), mxu_dtype),   # even W phase
                    pltpu.VMEM((NB, H + 2, (W + 2) // 2, Cp_in), mxu_dtype)]   # odd  W phase

    kernel = functools.partial(
        _preact_block_kernel, stride=stride, has_shortcut=has_shortcut, NB=NB,
        H=H, W=W, Ho=Ho, Wo=Wo, Cp_in=Cp_in, Cp_out=Cp_out, mxu_dtype=mxu_dtype)

    itemsize = np.dtype(mxu_dtype).itemsize
    flops = 2 * N * Ho * Wo * (9 * Cp_in * Cp_out + 9 * Cp_out * Cp_out
                               + (Cp_in * Cp_out if has_shortcut else 0))
    bytes_accessed = (N * H * W * Cp_in * 4 + N * Ho * Wo * Cp_out * 4
                      + (9 * Cp_in * Cp_out + 9 * Cp_out * Cp_out + Cp_in * Cp_out) * itemsize
                      + 3 * Cp_out * 4)

    out_nhwc = pl.pallas_call(
        kernel,
        out_shape=jax.ShapeDtypeStruct((N, Ho, Wo, Cp_out), jnp.float32),
        grid_spec=pltpu.PrefetchScalarGridSpec(
            num_scalar_prefetch=0,
            grid=(N // NB,),
            in_specs=[
                pl.BlockSpec((NB, H, W, Cp_in), lambda n: (n, 0, 0, 0)),
                pl.BlockSpec((9, Cp_in, Cp_out), lambda n: (0, 0, 0)),   # resident weights
                pl.BlockSpec((1, Cp_out), lambda n: (0, 0)),
                pl.BlockSpec((9, Cp_out, Cp_out), lambda n: (0, 0, 0)),
                pl.BlockSpec((1, Cp_out), lambda n: (0, 0)),
                pl.BlockSpec((Cp_in, Cp_out), lambda n: (0, 0)),
                pl.BlockSpec((1, Cp_out), lambda n: (0, 0)),
            ],
            out_specs=pl.BlockSpec((NB, Ho, Wo, Cp_out), lambda n: (n, 0, 0, 0)),
            scratch_shapes=scratch,
        ),
        compiler_params=pltpu.CompilerParams(
            dimension_semantics=("parallel",),
            vmem_limit_bytes=vmem_limit,
        ),
        cost_estimate=pl.CostEstimate(flops=int(flops), transcendentals=0,
                                      bytes_accessed=int(bytes_accessed)),
    )(x, w1f, b1, w2f, b2, wsf, bs)

    # drop channel padding, NHWC -> NCHW
    return jnp.transpose(out_nhwc[:, :, :, :Cout], (0, 3, 1, 2))


def init_params(key, in_planes, planes):
    """Deterministic synthetic parameters (conv weights in HWIO, biases (1, C))."""
    k1, k2, k3, k4, k5, k6 = jax.random.split(key, 6)
    s1 = 1.0 / np.sqrt(in_planes * 9)
    s2 = 1.0 / np.sqrt(planes * 9)
    s3 = 1.0 / np.sqrt(in_planes)
    return {
        "w1": jax.random.normal(k1, (3, 3, in_planes, planes), jnp.float32) * s1,
        "b1": jax.random.normal(k2, (1, planes), jnp.float32) * s1,
        "w2": jax.random.normal(k3, (3, 3, planes, planes), jnp.float32) * s2,
        "b2": jax.random.normal(k4, (1, planes), jnp.float32) * s2,
        "ws": jax.random.normal(k5, (in_planes, planes), jnp.float32) * s3,
        "bs": jax.random.normal(k6, (1, planes), jnp.float32) * s3,
    }


def reference_forward(x_nchw, params, *, stride=1):
    """Pure-JAX reference mirroring the PyTorch module (for verification)."""
    Cin = x_nchw.shape[1]
    Cout = params["w1"].shape[-1]
    has_shortcut = (stride != 1) or (Cin != Cout)

    def conv(x, w_hwio, b, st, pad):
        w = jnp.transpose(w_hwio, (3, 2, 0, 1))  # HWIO -> OIHW
        y = jax.lax.conv_general_dilated(
            x, w, (st, st), [(pad, pad), (pad, pad)],
            dimension_numbers=("NCHW", "OIHW", "NCHW"))
        return y + b.reshape(1, -1, 1, 1)

    out = jax.nn.relu(x_nchw)
    sc = conv(out, params["ws"].reshape(1, 1, Cin, Cout), params["bs"], stride, 0) \
        if has_shortcut else x_nchw
    out = conv(out, params["w1"], params["b1"], stride, 1)
    out = jax.nn.relu(out)
    out = conv(out, params["w2"], params["b2"], 1, 1)
    return out + sc


if __name__ == "__main__":
    # (N, in_planes, planes, H, W, stride, mxu_dtype, atol, rtol, label)
    configs = [
        (2, 4, 8, 16, 16, 1, jnp.float32, 1e-4, 1e-4, "stride1-projection-f32"),
        (2, 8, 8, 16, 16, 1, jnp.float32, 1e-4, 1e-4, "stride1-identity-f32"),
        (2, 4, 8, 16, 16, 2, jnp.float32, 1e-4, 1e-4, "stride2-projection-f32"),
        (8, 4, 8, 16, 16, 2, jnp.float32, 1e-4, 1e-4, "stride2-projection-f32-batched"),
        (8, 4, 8, 16, 16, 1, jnp.bfloat16, 5e-2, 5e-2, "stride1-projection-bf16-batched"),
    ]
    key = jax.random.PRNGKey(0)
    for (N, cin, cpl, H, W, s, mdt, atol, rtol, label) in configs:
        key, kx, kp = jax.random.split(key, 3)
        x = jax.random.normal(kx, (N, cin, H, W), jnp.float32)
        params = init_params(kp, cin, cpl)

        out = jax.block_until_ready(
            preact_block_no_bn(x, params, stride=s, mxu_dtype=mdt))
        ref = jax.block_until_ready(reference_forward(x, params, stride=s))

        assert out.shape == ref.shape, (label, out.shape, ref.shape)
        err = float(np.max(np.abs(np.asarray(out) - np.asarray(ref))))
        assert np.allclose(np.asarray(out), np.asarray(ref), atol=atol, rtol=rtol), (label, err)

    print("KERNEL_OK")
</pallas_src>

<mosaic_0001>
module attributes {stable_mosaic.version = 11 : i64} {
  func.func @_preact_block_kernel(%arg0: i32, %arg1: memref<1x16x16x128xf32, #tpu.memory_space<vmem>>, %arg2: memref<9x128x128xf32, #tpu.memory_space<vmem>>, %arg3: memref<1x128xf32, #tpu.memory_space<vmem>>, %arg4: memref<9x128x128xf32, #tpu.memory_space<vmem>>, %arg5: memref<1x128xf32, #tpu.memory_space<vmem>>, %arg6: memref<128x128xf32, #tpu.memory_space<vmem>>, %arg7: memref<1x128xf32, #tpu.memory_space<vmem>>, %arg8: memref<1x16x16x128xf32, #tpu.memory_space<vmem>>, %arg9: memref<1x18x18x128xf32, #tpu.memory_space<vmem>>, %arg10: memref<1x18x18x128xf32, #tpu.memory_space<vmem>>, %arg11: memref<256x128xf32, #tpu.memory_space<vmem>>) attributes {dimension_semantics = [#tpu.dimension_semantics<parallel>], iteration_bounds = array<i64: 2>, scalar_prefetch = 0 : i64, scratch_operands = 3 : i64, tpu.core_type = #tpu.core_type<tc>, window_params = [{transform_indices = @transform_0, window_bounds = array<i64: 1, 16, 16, 128>}, {pipeline_mode = #tpu.pipeline_mode<synchronous>, transform_indices = @transform_1, window_bounds = array<i64: 9, 128, 128>}, {pipeline_mode = #tpu.pipeline_mode<synchronous>, transform_indices = @transform_2, window_bounds = array<i64: 1, 128>}, {pipeline_mode = #tpu.pipeline_mode<synchronous>, transform_indices = @transform_3, window_bounds = array<i64: 9, 128, 128>}, {pipeline_mode = #tpu.pipeline_mode<synchronous>, transform_indices = @transform_4, window_bounds = array<i64: 1, 128>}, {pipeline_mode = #tpu.pipeline_mode<synchronous>, transform_indices = @transform_5, window_bounds = array<i64: 128, 128>}, {pipeline_mode = #tpu.pipeline_mode<synchronous>, transform_indices = @transform_6, window_bounds = array<i64: 1, 128>}, {transform_indices = @transform_7, window_bounds = array<i64: 1, 16, 16, 128>}]} {
    %c0 = arith.constant 0 : index
    %c0_0 = arith.constant 0 : index
    %c0_1 = arith.constant 0 : index
    %c0_2 = arith.constant 0 : index
    %0 = vector.load %arg1[%c0, %c0_0, %c0_1, %c0_2] : memref<1x16x16x128xf32, #tpu.memory_space<vmem>>, vector<1x16x16x128xf32>
    %cst = arith.constant 0.000000e+00 : f32
    %1 = vector.broadcast %cst : f32 to vector<1x16x16x128xf32>
    %2 = arith.maximumf %0, %1 : vector<1x16x16x128xf32>
    %cst_3 = arith.constant 0.000000e+00 : f32
    %3 = vector.broadcast %cst_3 : f32 to vector<1x1x18x128xf32>
    %c0_4 = arith.constant 0 : index
    %c0_5 = arith.constant 0 : index
    %c0_6 = arith.constant 0 : index
    %c0_7 = arith.constant 0 : index
    %4 = vector.load %arg9[%c0_4, %c0_5, %c0_6, %c0_7] : memref<1x18x18x128xf32, #tpu.memory_space<vmem>>, vector<1x1x18x128xf32>
    tpu.vector_store %arg9[%c0_4, %c0_5, %c0_6, %c0_7], %3 {strides = array<i32>} : memref<1x18x18x128xf32, #tpu.memory_space<vmem>>, vector<1x1x18x128xf32>,
    %cst_8 = arith.constant 0.000000e+00 : f32
    %5 = vector.broadcast %cst_8 : f32 to vector<1x1x18x128xf32>
    %c0_9 = arith.constant 0 : index
    %c17 = arith.constant 17 : index
    %c0_10 = arith.constant 0 : index
    %c0_11 = arith.constant 0 : index
    %6 = vector.load %arg9[%c0_9, %c17, %c0_10, %c0_11] : memref<1x18x18x128xf32, #tpu.memory_space<vmem>>, vector<1x1x18x128xf32>
    tpu.vector_store %arg9[%c0_9, %c17, %c0_10, %c0_11], %5 {strides = array<i32>} : memref<1x18x18x128xf32, #tpu.memory_space<vmem>>, vector<1x1x18x128xf32>,
    %cst_12 = arith.constant 0.000000e+00 : f32
    %7 = vector.broadcast %cst_12 : f32 to vector<1x18x1x128xf32>
    %c0_13 = arith.constant 0 : index
    %c0_14 = arith.constant 0 : index
    %c0_15 = arith.constant 0 : index
    %c0_16 = arith.constant 0 : index
    %8 = vector.load %arg9[%c0_13, %c0_14, %c0_15, %c0_16] : memref<1x18x18x128xf32, #tpu.memory_space<vmem>>, vector<1x18x1x128xf32>
    tpu.vector_store %arg9[%c0_13, %c0_14, %c0_15, %c0_16], %7 {strides = array<i32>} : memref<1x18x18x128xf32, #tpu.memory_space<vmem>>, vector<1x18x1x128xf32>,
    %cst_17 = arith.constant 0.000000e+00 : f32
    %9 = vector.broadcast %cst_17 : f32 to vector<1x18x1x128xf32>
    %c0_18 = arith.constant 0 : index
    %c0_19 = arith.constant 0 : index
    %c17_20 = arith.constant 17 : index
    %c0_21 = arith.constant 0 : index
    %10 = vector.load %arg9[%c0_18, %c0_19, %c17_20, %c0_21] : memref<1x18x18x128xf32, #tpu.memory_space<vmem>>, vector<1x18x1x128xf32>
    tpu.vector_store %arg9[%c0_18, %c0_19, %c17_20, %c0_21], %9 {strides = array<i32>} : memref<1x18x18x128xf32, #tpu.memory_space<vmem>>, vector<1x18x1x128xf32>,
    %c0_22 = arith.constant 0 : index
    %c1 = arith.constant 1 : index
    %c1_23 = arith.constant 1 : index
    %c0_24 = arith.constant 0 : index
    %11 = vector.load %arg9[%c0_22, %c1, %c1_23, %c0_24] : memref<1x18x18x128xf32, #tpu.memory_space<vmem>>, vector<1x16x16x128xf32>
    tpu.vector_store %arg9[%c0_22, %c1, %c1_23, %c0_24], %2 {strides = array<i32>} : memref<1x18x18x128xf32, #tpu.memory_space<vmem>>, vector<1x16x16x128xf32>,
    %c0_25 = arith.constant 0 : index
    %c0_26 = arith.constant 0 : index
    %c0_27 = arith.constant 0 : index
    %c0_28 = arith.constant 0 : index
    %12 = vector.load %arg9[%c0_25, %c0_26, %c0_27, %c0_28] : memref<1x18x18x128xf32, #tpu.memory_space<vmem>>, vector<1x16x16x128xf32>
    %13 = vector.shape_cast %12 : vector<1x16x16x128xf32> to vector<256x128xf32>
    %c0_29 = arith.constant 0 : index
    %c0_30 = arith.constant 0 : index
    %c0_31 = arith.constant 0 : index
    %14 = vector.load %arg2[%c0_29, %c0_30, %c0_31] : memref<9x128x128xf32, #tpu.memory_space<vmem>>, vector<1x128x128xf32>
    %15 = vector.shape_cast %14 : vector<1x128x128xf32> to vector<128x128xf32>
    %cst_32 = arith.constant dense<0.000000e+00> : vector<256x128xf32>
    %16 = tpu.matmul %13, %15, %cst_32 {dimension_numbers = #tpu.dot_dimension_numbers<[1], [0], [0], [1], [0, 0, 1, 1], [], []>} : vector<256x128xf32>, vector<128x128xf32>, vector<256x128xf32> -> vector<256x128xf32>
    %c0_33 = arith.constant 0 : index
    %c0_34 = arith.constant 0 : index
    %17 = vector.load %arg11[%c0_33, %c0_34] : memref<256x128xf32, #tpu.memory_space<vmem>>, vector<256x128xf32>
    tpu.vector_store %arg11[%c0_33, %c0_34], %16 {strides = array<i32>} : memref<256x128xf32, #tpu.memory_space<vmem>>, vector<256x128xf32>,
    %c0_35 = arith.constant 0 : index
    %c0_36 = arith.constant 0 : index
    %c1_37 = arith.constant 1 : index
    %c0_38 = arith.constant 0 : index
    %18 = vector.load %arg9[%c0_35, %c0_36, %c1_37, %c0_38] : memref<1x18x18x128xf32, #tpu.memory_space<vmem>>, vector<1x16x16x128xf32>
    %19 = vector.shape_cast %18 : vector<1x16x16x128xf32> to vector<256x128xf32>
    %c1_39 = arith.constant 1 : index
    %c0_40 = arith.constant 0 : index
    %c0_41 = arith.constant 0 : index
    %20 = vector.load %arg2[%c1_39, %c0_40, %c0_41] : memref<9x128x128xf32, #tpu.memory_space<vmem>>, vector<1x128x128xf32>
    %21 = vector.shape_cast %20 : vector<1x128x128xf32> to vector<128x128xf32>
    %cst_42 = arith.constant dense<0.000000e+00> : vector<256x128xf32>
    %22 = tpu.matmul %19, %21, %cst_42 {dimension_numbers = #tpu.dot_dimension_numbers<[1], [0], [0], [1], [0, 0, 1, 1], [], []>} : vector<256x128xf32>, vector<128x128xf32>, vector<256x128xf32> -> vector<256x128xf32>
    %c0_43 = arith.constant 0 : index
    %c0_44 = arith.constant 0 : index
    %23 = vector.load %arg11[%c0_43, %c0_44] : memref<256x128xf32, #tpu.memory_space<vmem>>, vector<256x128xf32>
    %24 = arith.addf %23, %22 : vector<256x128xf32>
    %c0_45 = arith.constant 0 : index
    %c0_46 = arith.constant 0 : index
    %25 = vector.load %arg11[%c0_45, %c0_46] : memref<256x128xf32, #tpu.memory_space<vmem>>, vector<256x128xf32>
    tpu.vector_store %arg11[%c0_45, %c0_46], %24 {strides = array<i32>} : memref<256x128xf32, #tpu.memory_space<vmem>>, vector<256x128xf32>,
    %c0_47 = arith.constant 0 : index
    %c0_48 = arith.constant 0 : index
    %c2 = arith.constant 2 : index
    %c0_49 = arith.constant 0 : index
    %26 = vector.load %arg9[%c0_47, %c0_48, %c2, %c0_49] : memref<1x18x18x128xf32, #tpu.memory_space<vmem>>, vector<1x16x16x128xf32>
    %27 = vector.shape_cast %26 : vector<1x16x16x128xf32> to vector<256x128xf32>
    %c2_50 = arith.constant 2 : index
    %c0_51 = arith.constant 0 : index
    %c0_52 = arith.constant 0 : index
    %28 = vector.load %arg2[%c2_50, %c0_51, %c0_52] : memref<9x128x128xf32, #tpu.memory_space<vmem>>, vector<1x128x128xf32>
    %29 = vector.shape_cast %28 : vector<1x128x128xf32> to vector<128x128xf32>
    %cst_53 = arith.constant dense<0.000000e+00> : vector<256x128xf32>
    %30 = tpu.matmul %27, %29, %cst_53 {dimension_numbers = #tpu.dot_dimension_numbers<[1], [0], [0], [1], [0, 0, 1, 1], [], []>} : vector<256x128xf32>, vector<128x128xf32>, vector<256x128xf32> -> vector<256x128xf32>
    %c0_54 = arith.constant 0 : index
    %c0_55 = arith.constant 0 : index
    %31 = vector.load %arg11[%c0_54, %c0_55] : memref<256x128xf32, #tpu.memory_space<vmem>>, vector<256x128xf32>
    %32 = arith.addf %31, %30 : vector<256x128xf32>
    %c0_56 = arith.constant 0 : index
    %c0_57 = arith.constant 0 : index
    %33 = vector.load %arg11[%c0_56, %c0_57] : memref<256x128xf32, #tpu.memory_space<vmem>>, vector<256x128xf32>
    tpu.vector_store %arg11[%c0_56, %c0_57], %32 {strides = array<i32>} : memref<256x128xf32, #tpu.memory_space<vmem>>, vector<256x128xf32>,
    %c0_58 = arith.constant 0 : index
    %c1_59 = arith.constant 1 : index
    %c0_60 = arith.constant 0 : index
    %c0_61 = arith.constant 0 : index
    %34 = vector.load %arg9[%c0_58, %c1_59, %c0_60, %c0_61] : memref<1x18x18x128xf32, #tpu.memory_space<vmem>>, vector<1x16x16x128xf32>
    %35 = vector.shape_cast %34 : vector<1x16x16x128xf32> to vector<256x128xf32>
    %c3 = arith.constant 3 : index
    %c0_62 = arith.constant 0 : index
    %c0_63 = arith.constant 0 : index
    %36 = vector.load %arg2[%c3, %c0_62, %c0_63] : memref<9x128x128xf32, #tpu.memory_space<vmem>>, vector<1x128x128xf32>
    %37 = vector.shape_cast %36 : vector<1x128x128xf32> to vector<128x128xf32>
    %cst_64 = arith.constant dense<0.000000e+00> : vector<256x128xf32>
    %38 = tpu.matmul %35, %37, %cst_64 {dimension_numbers = #tpu.dot_dimension_numbers<[1], [0], [0], [1], [0, 0, 1, 1], [], []>} : vector<256x128xf32>, vector<128x128xf32>, vector<256x128xf32> -> vector<256x128xf32>
    %c0_65 = arith.constant 0 : index
    %c0_66 = arith.constant 0 : index
    %39 = vector.load %arg11[%c0_65, %c0_66] : memref<256x128xf32, #tpu.memory_space<vmem>>, vector<256x128xf32>
    %40 = arith.addf %39, %38 : vector<256x128xf32>
    %c0_67 = arith.constant 0 : index
    %c0_68 = arith.constant 0 : index
    %41 = vector.load %arg11[%c0_67, %c0_68] : memref<256x128xf32, #tpu.memory_space<vmem>>, vector<256x128xf32>
    tpu.vector_store %arg11[%c0_67, %c0_68], %40 {strides = array<i32>} : memref<256x128xf32, #tpu.memory_space<vmem>>, vector<256x128xf32>,
    %c0_69 = arith.constant 0 : index
    %c1_70 = arith.constant 1 : index
    %c1_71 = arith.constant 1 : index
    %c0_72 = arith.constant 0 : index
    %42 = vector.load %arg9[%c0_69, %c1_70, %c1_71, %c0_72] : memref<1x18x18x128xf32, #tpu.memory_space<vmem>>, vector<1x16x16x128xf32>
    %43 = vector.shape_cast %42 : vector<1x16x16x128xf32> to vector<256x128xf32>
    %c4 = arith.constant 4 : index
    %c0_73 = arith.constant 0 : index
    %c0_74 = arith.constant 0 : index
    %44 = vector.load %arg2[%c4, %c0_73, %c0_74] : memref<9x128x128xf32, #tpu.memory_space<vmem>>, vector<1x128x128xf32>
    %45 = vector.shape_cast %44 : vector<1x128x128xf32> to vector<128x128xf32>
    %cst_75 = arith.constant dense<0.000000e+00> : vector<256x128xf32>
    %46 = tpu.matmul %43, %45, %cst_75 {dimension_numbers = #tpu.dot_dimension_numbers<[1], [0], [0], [1], [0, 0, 1, 1], [], []>} : vector<256x128xf32>, vector<128x128xf32>, vector<256x128xf32> -> vector<256x128xf32>
    %c0_76 = arith.constant 0 : index
    %c0_77 = arith.constant 0 : index
    %47 = vector.load %arg11[%c0_76, %c0_77] : memref<256x128xf32, #tpu.memory_space<vmem>>, vector<256x128xf32>
    %48 = arith.addf %47, %46 : vector<256x128xf32>
    %c0_78 = arith.constant 0 : index
    %c0_79 = arith.constant 0 : index
    %49 = vector.load %arg11[%c0_78, %c0_79] : memref<256x128xf32, #tpu.memory_space<vmem>>, vector<256x128xf32>
    tpu.vector_store %arg11[%c0_78, %c0_79], %48 {strides = array<i32>} : memref<256x128xf32, #tpu.memory_space<vmem>>, vector<256x128xf32>,
    %c0_80 = arith.constant 0 : index
    %c1_81 = arith.constant 1 : index
    %c2_82 = arith.constant 2 : index
    %c0_83 = arith.constant 0 : index
    %50 = vector.load %arg9[%c0_80, %c1_81, %c2_82, %c0_83] : memref<1x18x18x128xf32, #tpu.memory_space<vmem>>, vector<1x16x16x128xf32>
    %51 = vector.shape_cast %50 : vector<1x16x16x128xf32> to vector<256x128xf32>
    %c5 = arith.constant 5 : index
    %c0_84 = arith.constant 0 : index
    %c0_85 = arith.constant 0 : index
    %52 = vector.load %arg2[%c5, %c0_84, %c0_85] : memref<9x128x128xf32, #tpu.memory_space<vmem>>, vector<1x128x128xf32>
    %53 = vector.shape_cast %52 : vector<1x128x128xf32> to vector<128x128xf32>
    %cst_86 = arith.constant dense<0.000000e+00> : vector<256x128xf32>
    %54 = tpu.matmul %51, %53, %cst_86 {dimension_numbers = #tpu.dot_dimension_numbers<[1], [0], [0], [1], [0, 0, 1, 1], [], []>} : vector<256x128xf32>, vector<128x128xf32>, vector<256x128xf32> -> vector<256x128xf32>
    %c0_87 = arith.constant 0 : index
    %c0_88 = arith.constant 0 : index
    %55 = vector.load %arg11[%c0_87, %c0_88] : memref<256x128xf32, #tpu.memory_space<vmem>>, vector<256x128xf32>
    %56 = arith.addf %55, %54 : vector<256x128xf32>
    %c0_89 = arith.constant 0 : index
    %c0_90 = arith.constant 0 : index
    %57 = vector.load %arg11[%c0_89, %c0_90] : memref<256x128xf32, #tpu.memory_space<vmem>>, vector<256x128xf32>
    tpu.vector_store %arg11[%c0_89, %c0_90], %56 {strides = array<i32>} : memref<256x128xf32, #tpu.memory_space<vmem>>, vector<256x128xf32>,
    %c0_91 = arith.constant 0 : index
    %c2_92 = arith.constant 2 : index
    %c0_93 = arith.constant 0 : index
    %c0_94 = arith.constant 0 : index
    %58 = vector.load %arg9[%c0_91, %c2_92, %c0_93, %c0_94] : memref<1x18x18x128xf32, #tpu.memory_space<vmem>>, vector<1x16x16x128xf32>
    %59 = vector.shape_cast %58 : vector<1x16x16x128xf32> to vector<256x128xf32>
    %c6 = arith.constant 6 : index
    %c0_95 = arith.constant 0 : index
    %c0_96 = arith.constant 0 : index
    %60 = vector.load %arg2[%c6, %c0_95, %c0_96] : memref<9x128x128xf32, #tpu.memory_space<vmem>>, vector<1x128x128xf32>
    %61 = vector.shape_cast %60 : vector<1x128x128xf32> to vector<128x128xf32>
    %cst_97 = arith.constant dense<0.000000e+00> : vector<256x128xf32>
    %62 = tpu.matmul %59, %61, %cst_97 {dimension_numbers = #tpu.dot_dimension_numbers<[1], [0], [0], [1], [0, 0, 1, 1], [], []>} : vector<256x128xf32>, vector<128x128xf32>, vector<256x128xf32> -> vector<256x128xf32>
    %c0_98 = arith.constant 0 : index
    %c0_99 = arith.constant 0 : index
    %63 = vector.load %arg11[%c0_98, %c0_99] : memref<256x128xf32, #tpu.memory_space<vmem>>, vector<256x128xf32>
    %64 = arith.addf %63, %62 : vector<256x128xf32>
    %c0_100 = arith.constant 0 : index
    %c0_101 = arith.constant 0 : index
    %65 = vector.load %arg11[%c0_100, %c0_101] : memref<256x128xf32, #tpu.memory_space<vmem>>, vector<256x128xf32>
    tpu.vector_store %arg11[%c0_100, %c0_101], %64 {strides = array<i32>} : memref<256x128xf32, #tpu.memory_space<vmem>>, vector<256x128xf32>,
    %c0_102 = arith.constant 0 : index
    %c2_103 = arith.constant 2 : index
    %c1_104 = arith.constant 1 : index
    %c0_105 = arith.constant 0 : index
    %66 = vector.load %arg9[%c0_102, %c2_103, %c1_104, %c0_105] : memref<1x18x18x128xf32, #tpu.memory_space<vmem>>, vector<1x16x16x128xf32>
    %67 = vector.shape_cast %66 : vector<1x16x16x128xf32> to vector<256x128xf32>
    %c7 = arith.constant 7 : index
    %c0_106 = arith.constant 0 : index
    %c0_107 = arith.constant 0 : index
    %68 = vector.load %arg2[%c7, %c0_106, %c0_107] : memref<9x128x128xf32, #tpu.memory_space<vmem>>, vector<1x128x128xf32>
    %69 = vector.shape_cast %68 : vector<1x128x128xf32> to vector<128x128xf32>
    %cst_108 = arith.constant dense<0.000000e+00> : vector<256x128xf32>
    %70 = tpu.matmul %67, %69, %cst_108 {dimension_numbers = #tpu.dot_dimension_numbers<[1], [0], [0], [1], [0, 0, 1, 1], [], []>} : vector<256x128xf32>, vector<128x128xf32>, vector<256x128xf32> -> vector<256x128xf32>
    %c0_109 = arith.constant 0 : index
    %c0_110 = arith.constant 0 : index
    %71 = vector.load %arg11[%c0_109, %c0_110] : memref<256x128xf32, #tpu.memory_space<vmem>>, vector<256x128xf32>
    %72 = arith.addf %71, %70 : vector<256x128xf32>
    %c0_111 = arith.constant 0 : index
    %c0_112 = arith.constant 0 : index
    %73 = vector.load %arg11[%c0_111, %c0_112] : memref<256x128xf32, #tpu.memory_space<vmem>>, vector<256x128xf32>
    tpu.vector_store %arg11[%c0_111, %c0_112], %72 {strides = array<i32>} : memref<256x128xf32, #tpu.memory_space<vmem>>, vector<256x128xf32>,
    %c0_113 = arith.constant 0 : index
    %c2_114 = arith.constant 2 : index
    %c2_115 = arith.constant 2 : index
    %c0_116 = arith.constant 0 : index
    %74 = vector.load %arg9[%c0_113, %c2_114, %c2_115, %c0_116] : memref<1x18x18x128xf32, #tpu.memory_space<vmem>>, vector<1x16x16x128xf32>
    %75 = vector.shape_cast %74 : vector<1x16x16x128xf32> to vector<256x128xf32>
    %c8 = arith.constant 8 : index
    %c0_117 = arith.constant 0 : index
    %c0_118 = arith.constant 0 : index
    %76 = vector.load %arg2[%c8, %c0_117, %c0_118] : memref<9x128x128xf32, #tpu.memory_space<vmem>>, vector<1x128x128xf32>
    %77 = vector.shape_cast %76 : vector<1x128x128xf32> to vector<128x128xf32>
    %cst_119 = arith.constant dense<0.000000e+00> : vector<256x128xf32>
    %78 = tpu.matmul %75, %77, %cst_119 {dimension_numbers = #tpu.dot_dimension_numbers<[1], [0], [0], [1], [0, 0, 1, 1], [], []>} : vector<256x128xf32>, vector<128x128xf32>, vector<256x128xf32> -> vector<256x128xf32>
    %c0_120 = arith.constant 0 : index
    %c0_121 = arith.constant 0 : index
    %79 = vector.load %arg11[%c0_120, %c0_121] : memref<256x128xf32, #tpu.memory_space<vmem>>, vector<256x128xf32>
    %80 = arith.addf %79, %78 : vector<256x128xf32>
    %c0_122 = arith.constant 0 : index
    %c0_123 = arith.constant 0 : index
    %81 = vector.load %arg11[%c0_122, %c0_123] : memref<256x128xf32, #tpu.memory_space<vmem>>, vector<256x128xf32>
    tpu.vector_store %arg11[%c0_122, %c0_123], %80 {strides = array<i32>} : memref<256x128xf32, #tpu.memory_space<vmem>>, vector<256x128xf32>,
    %c0_124 = arith.constant 0 : index
    %c0_125 = arith.constant 0 : index
    %82 = vector.load %arg11[%c0_124, %c0_125] : memref<256x128xf32, #tpu.memory_space<vmem>>, vector<256x128xf32>
    %c0_126 = arith.constant 0 : index
    %c0_127 = arith.constant 0 : index
    %83 = vector.load %arg3[%c0_126, %c0_127] : memref<1x128xf32, #tpu.memory_space<vmem>>, vector<1x128xf32>
    %84 = vector.broadcast %83 : vector<1x128xf32> to vector<256x128xf32>
    %85 = arith.addf %82, %84 : vector<256x128xf32>
    %cst_128 = arith.constant 0.000000e+00 : f32
    %86 = vector.broadcast %cst_128 : f32 to vector<256x128xf32>
    %87 = arith.maximumf %85, %86 : vector<256x128xf32>
    %cst_129 = arith.constant 0.000000e+00 : f32
    %88 = vector.broadcast %cst_129 : f32 to vector<1x1x18x128xf32>
    %c0_130 = arith.constant 0 : index
    %c0_131 = arith.constant 0 : index
    %c0_132 = arith.constant 0 : index
    %c0_133 = arith.constant 0 : index
    %89 = vector.load %arg10[%c0_130, %c0_131, %c0_132, %c0_133] : memref<1x18x18x128xf32, #tpu.memory_space<vmem>>, vector<1x1x18x128xf32>
    tpu.vector_store %arg10[%c0_130, %c0_131, %c0_132, %c0_133], %88 {strides = array<i32>} : memref<1x18x18x128xf32, #tpu.memory_space<vmem>>, vector<1x1x18x128xf32>,
    %cst_134 = arith.constant 0.000000e+00 : f32
    %90 = vector.broadcast %cst_134 : f32 to vector<1x1x18x128xf32>
    %c0_135 = arith.constant 0 : index
    %c17_136 = arith.constant 17 : index
    %c0_137 = arith.constant 0 : index
    %c0_138 = arith.constant 0 : index
    %91 = vector.load %arg10[%c0_135, %c17_136, %c0_137, %c0_138] : memref<1x18x18x128xf32, #tpu.memory_space<vmem>>, vector<1x1x18x128xf32>
    tpu.vector_store %arg10[%c0_135, %c17_136, %c0_137, %c0_138], %90 {strides = array<i32>} : memref<1x18x18x128xf32, #tpu.memory_space<vmem>>, vector<1x1x18x128xf32>,
    %cst_139 = arith.constant 0.000000e+00 : f32
    %92 = vector.broadcast %cst_139 : f32 to vector<1x18x1x128xf32>
    %c0_140 = arith.constant 0 : index
    %c0_141 = arith.constant 0 : index
    %c0_142 = arith.constant 0 : index
    %c0_143 = arith.constant 0 : index
    %93 = vector.load %arg10[%c0_140, %c0_141, %c0_142, %c0_143] : memref<1x18x18x128xf32, #tpu.memory_space<vmem>>, vector<1x18x1x128xf32>
    tpu.vector_store %arg10[%c0_140, %c0_141, %c0_142, %c0_143], %92 {strides = array<i32>} : memref<1x18x18x128xf32, #tpu.memory_space<vmem>>, vector<1x18x1x128xf32>,
    %cst_144 = arith.constant 0.000000e+00 : f32
    %94 = vector.broadcast %cst_144 : f32 to vector<1x18x1x128xf32>
    %c0_145 = arith.constant 0 : index
    %c0_146 = arith.constant 0 : index
    %c17_147 = arith.constant 17 : index
    %c0_148 = arith.constant 0 : index
    %95 = vector.load %arg10[%c0_145, %c0_146, %c17_147, %c0_148] : memref<1x18x18x128xf32, #tpu.memory_space<vmem>>, vector<1x18x1x128xf32>
    tpu.vector_store %arg10[%c0_145, %c0_146, %c17_147, %c0_148], %94 {strides = array<i32>} : memref<1x18x18x128xf32, #tpu.memory_space<vmem>>, vector<1x18x1x128xf32>,
    %96 = vector.shape_cast %87 : vector<256x128xf32> to vector<1x16x16x128xf32>
    %c0_149 = arith.constant 0 : index
    %c1_150 = arith.constant 1 : index
    %c1_151 = arith.constant 1 : index
    %c0_152 = arith.constant 0 : index
    %97 = vector.load %arg10[%c0_149, %c1_150, %c1_151, %c0_152] : memref<1x18x18x128xf32, #tpu.memory_space<vmem>>, vector<1x16x16x128xf32>
    tpu.vector_store %arg10[%c0_149, %c1_150, %c1_151, %c0_152], %96 {strides = array<i32>} : memref<1x18x18x128xf32, #tpu.memory_space<vmem>>, vector<1x16x16x128xf32>,
    %c0_153 = arith.constant 0 : index
    %c0_154 = arith.constant 0 : index
    %c0_155 = arith.constant 0 : index
    %c0_156 = arith.constant 0 : index
    %98 = vector.load %arg10[%c0_153, %c0_154, %c0_155, %c0_156] : memref<1x18x18x128xf32, #tpu.memory_space<vmem>>, vector<1x16x16x128xf32>
    %99 = vector.shape_cast %98 : vector<1x16x16x128xf32> to vector<256x128xf32>
    %c0_157 = arith.constant 0 : index
    %c0_158 = arith.constant 0 : index
    %c0_159 = arith.constant 0 : index
    %100 = vector.load %arg4[%c0_157, %c0_158, %c0_159] : memref<9x128x128xf32, #tpu.memory_space<vmem>>, vector<1x128x128xf32>
    %101 = vector.shape_cast %100 : vector<1x128x128xf32> to vector<128x128xf32>
    %cst_160 = arith.constant dense<0.000000e+00> : vector<256x128xf32>
    %102 = tpu.matmul %99, %101, %cst_160 {dimension_numbers = #tpu.dot_dimension_numbers<[1], [0], [0], [1], [0, 0, 1, 1], [], []>} : vector<256x128xf32>, vector<128x128xf32>, vector<256x128xf32> -> vector<256x128xf32>
    %c0_161 = arith.constant 0 : index
    %c0_162 = arith.constant 0 : index
    %103 = vector.load %arg11[%c0_161, %c0_162] : memref<256x128xf32, #tpu.memory_space<vmem>>, vector<256x128xf32>
    tpu.vector_store %arg11[%c0_161, %c0_162], %102 {strides = array<i32>} : memref<256x128xf32, #tpu.memory_space<vmem>>, vector<256x128xf32>,
    %c0_163 = arith.constant 0 : index
    %c0_164 = arith.constant 0 : index
    %c1_165 = arith.constant 1 : index
    %c0_166 = arith.constant 0 : index
    %104 = vector.load %arg10[%c0_163, %c0_164, %c1_165, %c0_166] : memref<1x18x18x128xf32, #tpu.memory_space<vmem>>, vector<1x16x16x128xf32>
    %105 = vector.shape_cast %104 : vector<1x16x16x128xf32> to vector<256x128xf32>
    %c1_167 = arith.constant 1 : index
    %c0_168 = arith.constant 0 : index
    %c0_169 = arith.constant 0 : index
    %106 = vector.load %arg4[%c1_167, %c0_168, %c0_169] : memref<9x128x128xf32, #tpu.memory_space<vmem>>, vector<1x128x128xf32>
    %107 = vector.shape_cast %106 : vector<1x128x128xf32> to vector<128x128xf32>
    %cst_170 = arith.constant dense<0.000000e+00> : vector<256x128xf32>
    %108 = tpu.matmul %105, %107, %cst_170 {dimension_numbers = #tpu.dot_dimension_numbers<[1], [0], [0], [1], [0, 0, 1, 1], [], []>} : vector<256x128xf32>, vector<128x128xf32>, vector<256x128xf32> -> vector<256x128xf32>
    %c0_171 = arith.constant 0 : index
    %c0_172 = arith.constant 0 : index
    %109 = vector.load %arg11[%c0_171, %c0_172] : memref<256x128xf32, #tpu.memory_space<vmem>>, vector<256x128xf32>
    %110 = arith.addf %109, %108 : vector<256x128xf32>
    %c0_173 = arith.constant 0 : index
    %c0_174 = arith.constant 0 : index
    %111 = vector.load %arg11[%c0_173, %c0_174] : memref<256x128xf32, #tpu.memory_space<vmem>>, vector<256x128xf32>
    tpu.vector_store %arg11[%c0_173, %c0_174], %110 {strides = array<i32>} : memref<256x128xf32, #tpu.memory_space<vmem>>, vector<256x128xf32>,
    %c0_175 = arith.constant 0 : index
    %c0_176 = arith.constant 0 : index
    %c2_177 = arith.constant 2 : index
    %c0_178 = arith.constant 0 : index
    %112 = vector.load %arg10[%c0_175, %c0_176, %c2_177, %c0_178] : memref<1x18x18x128xf32, #tpu.memory_space<vmem>>, vector<1x16x16x128xf32>
    %113 = vector.shape_cast %112 : vector<1x16x16x128xf32> to vector<256x128xf32>
    %c2_179 = arith.constant 2 : index
    %c0_180 = arith.constant 0 : index
    %c0_181 = arith.constant 0 : index
    %114 = vector.load %arg4[%c2_179, %c0_180, %c0_181] : memref<9x128x128xf32, #tpu.memory_space<vmem>>, vector<1x128x128xf32>
    %115 = vector.shape_cast %114 : vector<1x128x128xf32> to vector<128x128xf32>
    %cst_182 = arith.constant dense<0.000000e+00> : vector<256x128xf32>
    %116 = tpu.matmul %113, %115, %cst_182 {dimension_numbers = #tpu.dot_dimension_numbers<[1], [0], [0], [1], [0, 0, 1, 1], [], []>} : vector<256x128xf32>, vector<128x128xf32>, vector<256x128xf32> -> vector<256x128xf32>
    %c0_183 = arith.constant 0 : index
    %c0_184 = arith.constant 0 : index
    %117 = vector.load %arg11[%c0_183, %c0_184] : memref<256x128xf32, #tpu.memory_space<vmem>>, vector<256x128xf32>
    %118 = arith.addf %117, %116 : vector<256x128xf32>
    %c0_185 = arith.constant 0 : index
    %c0_186 = arith.constant 0 : index
    %119 = vector.load %arg11[%c0_185, %c0_186] : memref<256x128xf32, #tpu.memory_space<vmem>>, vector<256x128xf32>
    tpu.vector_store %arg11[%c0_185, %c0_186], %118 {strides = array<i32>} : memref<256x128xf32, #tpu.memory_space<vmem>>, vector<256x128xf32>,
    %c0_187 = arith.constant 0 : index
    %c1_188 = arith.constant 1 : index
    %c0_189 = arith.constant 0 : index
    %c0_190 = arith.constant 0 : index
    %120 = vector.load %arg10[%c0_187, %c1_188, %c0_189, %c0_190] : memref<1x18x18x128xf32, #tpu.memory_space<vmem>>, vector<1x16x16x128xf32>
    %121 = vector.shape_cast %120 : vector<1x16x16x128xf32> to vector<256x128xf32>
    %c3_191 = arith.constant 3 : index
    %c0_192 = arith.constant 0 : index
    %c0_193 = arith.constant 0 : index
    %122 = vector.load %arg4[%c3_191, %c0_192, %c0_193] : memref<9x128x128xf32, #tpu.memory_space<vmem>>, vector<1x128x128xf32>
    %123 = vector.shape_cast %122 : vector<1x128x128xf32> to vector<128x128xf32>
    %cst_194 = arith.constant dense<0.000000e+00> : vector<256x128xf32>
    %124 = tpu.matmul %121, %123, %cst_194 {dimension_numbers = #tpu.dot_dimension_numbers<[1], [0], [0], [1], [0, 0, 1, 1], [], []>} : vector<256x128xf32>, vector<128x128xf32>, vector<256x128xf32> -> vector<256x128xf32>
    %c0_195 = arith.constant 0 : index
    %c0_196 = arith.constant 0 : index
    %125 = vector.load %arg11[%c0_195, %c0_196] : memref<256x128xf32, #tpu.memory_space<vmem>>, vector<256x128xf32>
    %126 = arith.addf %125, %124 : vector<256x128xf32>
    %c0_197 = arith.constant 0 : index
    %c0_198 = arith.constant 0 : index
    %127 = vector.load %arg11[%c0_197, %c0_198] : memref<256x128xf32, #tpu.memory_space<vmem>>, vector<256x128xf32>
    tpu.vector_store %arg11[%c0_197, %c0_198], %126 {strides = array<i32>} : memref<256x128xf32, #tpu.memory_space<vmem>>, vector<256x128xf32>,
    %c0_199 = arith.constant 0 : index
    %c1_200 = arith.constant 1 : index
    %c1_201 = arith.constant 1 : index
    %c0_202 = arith.constant 0 : index
    %128 = vector.load %arg10[%c0_199, %c1_200, %c1_201, %c0_202] : memref<1x18x18x128xf32, #tpu.memory_space<vmem>>, vector<1x16x16x128xf32>
    %129 = vector.shape_cast %128 : vector<1x16x16x128xf32> to vector<256x128xf32>
    %c4_203 = arith.constant 4 : index
    %c0_204 = arith.constant 0 : index
    %c0_205 = arith.constant 0 : index
    %130 = vector.load %arg4[%c4_203, %c0_204, %c0_205] : memref<9x128x128xf32, #tpu.memory_space<vmem>>, vector<1x128x128xf32>
    %131 = vector.shape_cast %130 : vector<1x128x128xf32> to vector<128x128xf32>
    %cst_206 = arith.constant dense<0.000000e+00> : vector<256x128xf32>
    %132 = tpu.matmul %129, %131, %cst_206 {dimension_numbers = #tpu.dot_dimension_numbers<[1], [0], [0], [1], [0, 0, 1, 1], [], []>} : vector<256x128xf32>, vector<128x128xf32>, vector<256x128xf32> -> vector<256x128xf32>
    %c0_207 = arith.constant 0 : index
    %c0_208 = arith.constant 0 : index
    %133 = vector.load %arg11[%c0_207, %c0_208] : memref<256x128xf32, #tpu.memory_space<vmem>>, vector<256x128xf32>
    %134 = arith.addf %133, %132 : vector<256x128xf32>
    %c0_209 = arith.constant 0 : index
    %c0_210 = arith.constant 0 : index
    %135 = vector.load %arg11[%c0_209, %c0_210] : memref<256x128xf32, #tpu.memory_space<vmem>>, vector<256x128xf32>
    tpu.vector_store %arg11[%c0_209, %c0_210], %134 {strides = array<i32>} : memref<256x128xf32, #tpu.memory_space<vmem>>, vector<256x128xf32>,
    %c0_211 = arith.constant 0 : index
    %c1_212 = arith.constant 1 : index
    %c2_213 = arith.constant 2 : index
    %c0_214 = arith.constant 0 : index
    %136 = vector.load %arg10[%c0_211, %c1_212, %c2_213, %c0_214] : memref<1x18x18x128xf32, #tpu.memory_space<vmem>>, vector<1x16x16x128xf32>
    %137 = vector.shape_cast %136 : vector<1x16x16x128xf32> to vector<256x128xf32>
    %c5_215 = arith.constant 5 : index
    %c0_216 = arith.constant 0 : index
    %c0_217 = arith.constant 0 : index
    %138 = vector.load %arg4[%c5_215, %c0_216, %c0_217] : memref<9x128x128xf32, #tpu.memory_space<vmem>>, vector<1x128x128xf32>
    %139 = vector.shape_cast %138 : vector<1x128x128xf32> to vector<128x128xf32>
    %cst_218 = arith.constant dense<0.000000e+00> : vector<256x128xf32>
    %140 = tpu.matmul %137, %139, %cst_218 {dimension_numbers = #tpu.dot_dimension_numbers<[1], [0], [0], [1], [0, 0, 1, 1], [], []>} : vector<256x128xf32>, vector<128x128xf32>, vector<256x128xf32> -> vector<256x128xf32>
    %c0_219 = arith.constant 0 : index
    %c0_220 = arith.constant 0 : index
    %141 = vector.load %arg11[%c0_219, %c0_220] : memref<256x128xf32, #tpu.memory_space<vmem>>, vector<256x128xf32>
    %142 = arith.addf %141, %140 : vector<256x128xf32>
    %c0_221 = arith.constant 0 : index
    %c0_222 = arith.constant 0 : index
    %143 = vector.load %arg11[%c0_221, %c0_222] : memref<256x128xf32, #tpu.memory_space<vmem>>, vector<256x128xf32>
    tpu.vector_store %arg11[%c0_221, %c0_222], %142 {strides = array<i32>} : memref<256x128xf32, #tpu.memory_space<vmem>>, vector<256x128xf32>,
    %c0_223 = arith.constant 0 : index
    %c2_224 = arith.constant 2 : index
    %c0_225 = arith.constant 0 : index
    %c0_226 = arith.constant 0 : index
    %144 = vector.load %arg10[%c0_223, %c2_224, %c0_225, %c0_226] : memref<1x18x18x128xf32, #tpu.memory_space<vmem>>, vector<1x16x16x128xf32>
    %145 = vector.shape_cast %144 : vector<1x16x16x128xf32> to vector<256x128xf32>
    %c6_227 = arith.constant 6 : index
    %c0_228 = arith.constant 0 : index
    %c0_229 = arith.constant 0 : index
    %146 = vector.load %arg4[%c6_227, %c0_228, %c0_229] : memref<9x128x128xf32, #tpu.memory_space<vmem>>, vector<1x128x128xf32>
    %147 = vector.shape_cast %146 : vector<1x128x128xf32> to vector<128x128xf32>
    %cst_230 = arith.constant dense<0.000000e+00> : vector<256x128xf32>
    %148 = tpu.matmul %145, %147, %cst_230 {dimension_numbers = #tpu.dot_dimension_numbers<[1], [0], [0], [1], [0, 0, 1, 1], [], []>} : vector<256x128xf32>, vector<128x128xf32>, vector<256x128xf32> -> vector<256x128xf32>
    %c0_231 = arith.constant 0 : index
    %c0_232 = arith.constant 0 : index
    %149 = vector.load %arg11[%c0_231, %c0_232] : memref<256x128xf32, #tpu.memory_space<vmem>>, vector<256x128xf32>
    %150 = arith.addf %149, %148 : vector<256x128xf32>
    %c0_233 = arith.constant 0 : index
    %c0_234 = arith.constant 0 : index
    %151 = vector.load %arg11[%c0_233, %c0_234] : memref<256x128xf32, #tpu.memory_space<vmem>>, vector<256x128xf32>
    tpu.vector_store %arg11[%c0_233, %c0_234], %150 {strides = array<i32>} : memref<256x128xf32, #tpu.memory_space<vmem>>, vector<256x128xf32>,
    %c0_235 = arith.constant 0 : index
    %c2_236 = arith.constant 2 : index
    %c1_237 = arith.constant 1 : index
    %c0_238 = arith.constant 0 : index
    %152 = vector.load %arg10[%c0_235, %c2_236, %c1_237, %c0_238] : memref<1x18x18x128xf32, #tpu.memory_space<vmem>>, vector<1x16x16x128xf32>
    %153 = vector.shape_cast %152 : vector<1x16x16x128xf32> to vector<256x128xf32>
    %c7_239 = arith.constant 7 : index
    %c0_240 = arith.constant 0 : index
    %c0_241 = arith.constant 0 : index
    %154 = vector.load %arg4[%c7_239, %c0_240, %c0_241] : memref<9x128x128xf32, #tpu.memory_space<vmem>>, vector<1x128x128xf32>
    %155 = vector.shape_cast %154 : vector<1x128x128xf32> to vector<128x128xf32>
    %cst_242 = arith.constant dense<0.000000e+00> : vector<256x128xf32>
    %156 = tpu.matmul %153, %155, %cst_242 {dimension_numbers = #tpu.dot_dimension_numbers<[1], [0], [0], [1], [0, 0, 1, 1], [], []>} : vector<256x128xf32>, vector<128x128xf32>, vector<256x128xf32> -> vector<256x128xf32>
    %c0_243 = arith.constant 0 : index
    %c0_244 = arith.constant 0 : index
    %157 = vector.load %arg11[%c0_243, %c0_244] : memref<256x128xf32, #tpu.memory_space<vmem>>, vector<256x128xf32>
    %158 = arith.addf %157, %156 : vector<256x128xf32>
    %c0_245 = arith.constant 0 : index
    %c0_246 = arith.constant 0 : index
    %159 = vector.load %arg11[%c0_245, %c0_246] : memref<256x128xf32, #tpu.memory_space<vmem>>, vector<256x128xf32>
    tpu.vector_store %arg11[%c0_245, %c0_246], %158 {strides = array<i32>} : memref<256x128xf32, #tpu.memory_space<vmem>>, vector<256x128xf32>,
    %c0_247 = arith.constant 0 : index
    %c2_248 = arith.constant 2 : index
    %c2_249 = arith.constant 2 : index
    %c0_250 = arith.constant 0 : index
    %160 = vector.load %arg10[%c0_247, %c2_248, %c2_249, %c0_250] : memref<1x18x18x128xf32, #tpu.memory_space<vmem>>, vector<1x16x16x128xf32>
    %161 = vector.shape_cast %160 : vector<1x16x16x128xf32> to vector<256x128xf32>
    %c8_251 = arith.constant 8 : index
    %c0_252 = arith.constant 0 : index
    %c0_253 = arith.constant 0 : index
    %162 = vector.load %arg4[%c8_251, %c0_252, %c0_253] : memref<9x128x128xf32, #tpu.memory_space<vmem>>, vector<1x128x128xf32>
    %163 = vector.shape_cast %162 : vector<1x128x128xf32> to vector<128x128xf32>
    %cst_254 = arith.constant dense<0.000000e+00> : vector<256x128xf32>
    %164 = tpu.matmul %161, %163, %cst_254 {dimension_numbers = #tpu.dot_dimension_numbers<[1], [0], [0], [1], [0, 0, 1, 1], [], []>} : vector<256x128xf32>, vector<128x128xf32>, vector<256x128xf32> -> vector<256x128xf32>
    %c0_255 = arith.constant 0 : index
    %c0_256 = arith.constant 0 : index
    %165 = vector.load %arg11[%c0_255, %c0_256] : memref<256x128xf32, #tpu.memory_space<vmem>>, vector<256x128xf32>
    %166 = arith.addf %165, %164 : vector<256x128xf32>
    %c0_257 = arith.constant 0 : index
    %c0_258 = arith.constant 0 : index
    %167 = vector.load %arg11[%c0_257, %c0_258] : memref<256x128xf32, #tpu.memory_space<vmem>>, vector<256x128xf32>
    tpu.vector_store %arg11[%c0_257, %c0_258], %166 {strides = array<i32>} : memref<256x128xf32, #tpu.memory_space<vmem>>, vector<256x128xf32>,
    %c0_259 = arith.constant 0 : index
    %c0_260 = arith.constant 0 : index
    %168 = vector.load %arg11[%c0_259, %c0_260] : memref<256x128xf32, #tpu.memory_space<vmem>>, vector<256x128xf32>
    %c0_261 = arith.constant 0 : index
    %c0_262 = arith.constant 0 : index
    %169 = vector.load %arg5[%c0_261, %c0_262] : memref<1x128xf32, #tpu.memory_space<vmem>>, vector<1x128xf32>
    %170 = vector.broadcast %169 : vector<1x128xf32> to vector<256x128xf32>
    %171 = arith.addf %168, %170 : vector<256x128xf32>
    %172 = vector.shape_cast %2 : vector<1x16x16x128xf32> to vector<256x128xf32>
    %c0_263 = arith.constant 0 : index
    %c0_264 = arith.constant 0 : index
    %173 = vector.load %arg6[%c0_263, %c0_264] : memref<128x128xf32, #tpu.memory_space<vmem>>, vector<128x128xf32>
    %cst_265 = arith.constant dense<0.000000e+00> : vector<256x128xf32>
    %174 = tpu.matmul %172, %173, %cst_265 {dimension_numbers = #tpu.dot_dimension_numbers<[1], [0], [0], [1], [0, 0, 1, 1], [], []>} : vector<256x128xf32>, vector<128x128xf32>, vector<256x128xf32> -> vector<256x128xf32>
    %c0_266 = arith.constant 0 : index
    %c0_267 = arith.constant 0 : index
    %175 = vector.load %arg7[%c0_266, %c0_267] : memref<1x128xf32, #tpu.memory_space<vmem>>, vector<1x128xf32>
    %176 = vector.broadcast %175 : vector<1x128xf32> to vector<256x128xf32>
    %177 = arith.addf %174, %176 : vector<256x128xf32>
    %178 = arith.addf %171, %177 : vector<256x128xf32>
    %179 = vector.shape_cast %178 : vector<256x128xf32> to vector<1x16x16x128xf32>
    %c0_268 = arith.constant 0 : index
    %c0_269 = arith.constant 0 : index
    %c0_270 = arith.constant 0 : index
    %c0_271 = arith.constant 0 : index
    %180 = vector.load %arg8[%c0_268, %c0_269, %c0_270, %c0_271] : memref<1x16x16x128xf32, #tpu.memory_space<vmem>>, vector<1x16x16x128xf32>
    tpu.vector_store %arg8[%c0_268, %c0_269, %c0_270, %c0_271], %179 {strides = array<i32>} : memref<1x16x16x128xf32, #tpu.memory_space<vmem>>, vector<1x16x16x128xf32>,
    return
  }
  func.func @transform_0(%arg0: i32) -> (i32, i32, i32, i32) {
    %c0_i32 = arith.constant 0 : i32
    %c0_i32_0 = arith.constant 0 : i32
    %c0_i32_1 = arith.constant 0 : i32
    %c0_i32_2 = arith.constant 0 : i32
    return %arg0, %c0_i32, %c0_i32_0, %c0_i32_1 : i32, i32, i32, i32
  }
  func.func @transform_1(%arg0: i32) -> (i32, i32, i32) {
    %c0_i32 = arith.constant 0 : i32
    %c0_i32_0 = arith.constant 0 : i32
    %c0_i32_1 = arith.constant 0 : i32
    %c0_i32_2 = arith.constant 0 : i32
    return %c0_i32, %c0_i32_0, %c0_i32_1 : i32, i32, i32
  }
  func.func @transform_2(%arg0: i32) -> (i32, i32) {
    %c0_i32 = arith.constant 0 : i32
    %c0_i32_0 = arith.constant 0 : i32
    %c0_i32_1 = arith.constant 0 : i32
    return %c0_i32, %c0_i32_0 : i32, i32
  }
  func.func @transform_3(%arg0: i32) -> (i32, i32, i32) {
    %c0_i32 = arith.constant 0 : i32
    %c0_i32_0 = arith.constant 0 : i32
    %c0_i32_1 = arith.constant 0 : i32
    %c0_i32_2 = arith.constant 0 : i32
    return %c0_i32, %c0_i32_0, %c0_i32_1 : i32, i32, i32
  }
  func.func @transform_4(%arg0: i32) -> (i32, i32) {
    %c0_i32 = arith.constant 0 : i32
    %c0_i32_0 = arith.constant 0 : i32
    %c0_i32_1 = arith.constant 0 : i32
    return %c0_i32, %c0_i32_0 : i32, i32
  }
  func.func @transform_5(%arg0: i32) -> (i32, i32) {
    %c0_i32 = arith.constant 0 : i32
    %c0_i32_0 = arith.constant 0 : i32
    %c0_i32_1 = arith.constant 0 : i32
    return %c0_i32, %c0_i32_0 : i32, i32
  }
  func.func @transform_6(%arg0: i32) -> (i32, i32) {
    %c0_i32 = arith.constant 0 : i32
    %c0_i32_0 = arith.constant 0 : i32
    %c0_i32_1 = arith.constant 0 : i32
    return %c0_i32, %c0_i32_0 : i32, i32
  }
  func.func @transform_7(%arg0: i32) -> (i32, i32, i32, i32) {
    %c0_i32 = arith.constant 0 : i32
    %c0_i32_0 = arith.constant 0 : i32
    %c0_i32_1 = arith.constant 0 : i32
    %c0_i32_2 = arith.constant 0 : i32
    return %arg0, %c0_i32, %c0_i32_0, %c0_i32_1 : i32, i32, i32, i32
  }
}

</mosaic_0001>

<llo_original>
// kernel: preact_block_no_bn.1
$region0: #{preact_block_no_bn.1}
  #allocation0 [shape = 'u32[]', space=smem, size = 0x4, offset = 0x4, fixed_abs, tag = 'smem constant byte address 0x4 - core index']
  #allocation1 [shape = 'u32[72,128]{1,0:T(1,128)}', space=vmem, size = 0x9000, scoped, tag = 'internal scratch']
  #allocation2 [shape = 'f32[1,18,18,128]{3,2,1,0:T(8,128)}', space=vmem, size = 0x36000, scoped, tag = 'scratch operand']
  #allocation3 [shape = 'f32[1,18,18,128]{3,2,1,0:T(8,128)}', space=vmem, size = 0x36000, scoped, tag = 'scratch operand']
  #allocation4 [shape = 'f32[256,128]{1,0:T(8,128)}', space=vmem, size = 0x20000, scoped, tag = 'scratch operand']
  %s0 = inlined_call_operand.vmem [shape: f32[2,16,16,128], index: 0, kind: input, shape index: {}]
  %s1 = inlined_call_operand.vmem [shape: f32[9,128,128], index: 1, kind: input, shape index: {}]
  %s2 = inlined_call_operand.vmem [shape: f32[1,128], index: 2, kind: input, shape index: {}]
  %s3 = inlined_call_operand.vmem [shape: f32[9,128,128], index: 3, kind: input, shape index: {}]
  %s4 = inlined_call_operand.vmem [shape: f32[1,128], index: 4, kind: input, shape index: {}]
  %s5 = inlined_call_operand.vmem [shape: f32[128,128], index: 5, kind: input, shape index: {}]
  %s6 = inlined_call_operand.vmem [shape: f32[1,128], index: 6, kind: input, shape index: {}]
  %s7 = inlined_call_operand.vmem [shape: f32[2,16,16,128], index: 7, kind: output, shape index: {}]
  %s8 = sld [smem:[#allocation0]]
  $region61: #{preact_block_no_bn.1} parent=0
    _
  %s10 = ssub.s32 1, %s8
  %s11 = scalar_select 0, %s10, %s8
  loop: start=0, step=1, limit=4
  $region2: #{preact_block_no_bn.1} parent=0 // loop_pre_header
    _
  $region3: #{preact_block_no_bn.1} parent=0 // loop_header
    %s13 = sphi 0, %s17
    %p14 = scmp.ge.s32.totalorder %s13, 4
    %s23 = sphi 0, %s25
    %s26 = sphi 0, %s23
    %s27 = sphi 0, %s26
    %s43 = sphi 0, %s27
    %s47 = sphi 0, %s47
    %s49 = sphi 0, %s47
    %s50 = sphi 0, %s49
    %s64 = sphi 0, %s50
    %s68 = sphi 0, %s68
    %s70 = sphi 0, %s68
    %s71 = sphi 0, %s70
    %s85 = sphi 0, %s71
    %s89 = sphi 0, %s89
    %s91 = sphi 0, %s89
    %s92 = sphi 0, %s91
    %s106 = sphi 0, %s92
    %s110 = sphi 0, %s110
    %s112 = sphi 0, %s110
    %s113 = sphi 0, %s112
    %s127 = sphi 0, %s113
    %s131 = sphi 0, %s131
    %s133 = sphi 0, %s131
    %s134 = sphi 0, %s133
    %s148 = sphi 0, %s134
    %s152 = sphi 0, %s152
    %s154 = sphi 0, %s152
    %s155 = sphi 0, %s154
    %s169 = sphi 0, %s155
    %s175 = sphi 0, %s177
    %s178 = sphi 0, %s175
    %s179 = sphi 0, %s178
    %s195 = sphi 0, %s179
  $region4: #{preact_block_no_bn.1} parent=0 // loop_header_branch
    %16 = sbr.rel (%p14) target = $region8
  $region5: #{preact_block_no_bn.1} parent=0 // loop_body
    %s18 = ssub.s32 %s13, 1
    %s19 = ssub.s32 %s13, 2
    %s20 = sadd.s32 %s13, 1
    %s21 = ssub.s32 %s13, %s20
    %p22 = scmp.eq.s32.totalorder %s21, 0
    %s24 = sadd.s32 %s23, 1
    %s25 = scalar_select %p22, %s23, %s24
    %p28 = pneg %p22
    %p29 = scmp.eq.s32.totalorder %s13, 1
    %p30 = por %p28, %p29
    %p31 = scmp.ne.s32.totalorder %s23, %s26
    %p32 = scmp.eq.s32.totalorder %s13, 0
    %p33 = por %p31, %p32
    %p34 = scmp.ne.s32.totalorder %s23, %s26
    %p35 = scmp.eq.s32.totalorder %s18, 1
    %p36 = por %p34, %p35
    %p37 = scmp.ne.s32.totalorder %s26, %s27
    %p38 = scmp.eq.s32.totalorder %s18, 0
    %p39 = por %p37, %p38
    %p40 = scmp.ne.s32.totalorder %s26, %s27
    %p41 = scmp.eq.s32.totalorder %s19, 1
    %p42 = por %p40, %p41
    %p44 = scmp.ne.s32.totalorder %s27, %s43
    %p45 = scmp.eq.s32.totalorder %s19, 0
    %p46 = por %p44, %p45
    %s48 = sadd.s32 %s47, 1
    %p51 = scmp.eq.s32.totalorder %s13, 1
    %p52 = scmp.ne.s32.totalorder %s47, %s49
    %p53 = scmp.eq.s32.totalorder %s13, 0
    %p54 = por %p52, %p53
    %p55 = scmp.ne.s32.totalorder %s47, %s49
    %p56 = scmp.eq.s32.totalorder %s18, 1
    %p57 = por %p55, %p56
    %p58 = scmp.ne.s32.totalorder %s49, %s50
    %p59 = scmp.eq.s32.totalorder %s18, 0
    %p60 = por %p58, %p59
    %p61 = scmp.ne.s32.totalorder %s49, %s50
    %p62 = scmp.eq.s32.totalorder %s19, 1
    %p63 = por %p61, %p62
    %p65 = scmp.ne.s32.totalorder %s50, %s64
    %p66 = scmp.eq.s32.totalorder %s19, 0
    %p67 = por %p65, %p66
    %s69 = sadd.s32 %s68, 1
    %p72 = scmp.eq.s32.totalorder %s13, 1
    %p73 = scmp.ne.s32.totalorder %s68, %s70
    %p74 = scmp.eq.s32.totalorder %s13, 0
    %p75 = por %p73, %p74
    %p76 = scmp.ne.s32.totalorder %s68, %s70
    %p77 = scmp.eq.s32.totalorder %s18, 1
    %p78 = por %p76, %p77
    %p79 = scmp.ne.s32.totalorder %s70, %s71
    %p80 = scmp.eq.s32.totalorder %s18, 0
    %p81 = por %p79, %p80
    %p82 = scmp.ne.s32.totalorder %s70, %s71
    %p83 = scmp.eq.s32.totalorder %s19, 1
    %p84 = por %p82, %p83
    %p86 = scmp.ne.s32.totalorder %s71, %s85
    %p87 = scmp.eq.s32.totalorder %s19, 0
    %p88 = por %p86, %p87
    %s90 = sadd.s32 %s89, 1
    %p93 = scmp.eq.s32.totalorder %s13, 1
    %p94 = scmp.ne.s32.totalorder %s89, %s91
    %p95 = scmp.eq.s32.totalorder %s13, 0
    %p96 = por %p94, %p95
    %p97 = scmp.ne.s32.totalorder %s89, %s91
    %p98 = scmp.eq.s32.totalorder %s18, 1
    %p99 = por %p97, %p98
    %p100 = scmp.ne.s32.totalorder %s91, %s92
    %p101 = scmp.eq.s32.totalorder %s18, 0
    %p102 = por %p100, %p101
    %p103 = scmp.ne.s32.totalorder %s91, %s92
    %p104 = scmp.eq.s32.totalorder %s19, 1
    %p105 = por %p103, %p104
    %p107 = scmp.ne.s32.totalorder %s92, %s106
    %p108 = scmp.eq.s32.totalorder %s19, 0
    %p109 = por %p107, %p108
    %s111 = sadd.s32 %s110, 1
    %p114 = scmp.eq.s32.totalorder %s13, 1
    %p115 = scmp.ne.s32.totalorder %s110, %s112
    %p116 = scmp.eq.s32.totalorder %s13, 0
    %p117 = por %p115, %p116
    %p118 = scmp.ne.s32.totalorder %s110, %s112
    %p119 = scmp.eq.s32.totalorder %s18, 1
    %p120 = por %p118, %p119
    %p121 = scmp.ne.s32.totalorder %s112, %s113
    %p122 = scmp.eq.s32.totalorder %s18, 0
    %p123 = por %p121, %p122
    %p124 = scmp.ne.s32.totalorder %s112, %s113
    %p125 = scmp.eq.s32.totalorder %s19, 1
    %p126 = por %p124, %p125
    %p128 = scmp.ne.s32.totalorder %s113, %s127
    %p129 = scmp.eq.s32.totalorder %s19, 0
    %p130 = por %p128, %p129
    %s132 = sadd.s32 %s131, 1
    %p135 = scmp.eq.s32.totalorder %s13, 1
    %p136 = scmp.ne.s32.totalorder %s131, %s133
    %p137 = scmp.eq.s32.totalorder %s13, 0
    %p138 = por %p136, %p137
    %p139 = scmp.ne.s32.totalorder %s131, %s133
    %p140 = scmp.eq.s32.totalorder %s18, 1
    %p141 = por %p139, %p140
    %p142 = scmp.ne.s32.totalorder %s133, %s134
    %p143 = scmp.eq.s32.totalorder %s18, 0
    %p144 = por %p142, %p143
    %p145 = scmp.ne.s32.totalorder %s133, %s134
    %p146 = scmp.eq.s32.totalorder %s19, 1
    %p147 = por %p145, %p146
    %p149 = scmp.ne.s32.totalorder %s134, %s148
    %p150 = scmp.eq.s32.totalorder %s19, 0
    %p151 = por %p149, %p150
    %s153 = sadd.s32 %s152, 1
    %p156 = scmp.eq.s32.totalorder %s13, 1
    %p157 = scmp.ne.s32.totalorder %s152, %s154
    %p158 = scmp.eq.s32.totalorder %s13, 0
    %p159 = por %p157, %p158
    %p160 = scmp.ne.s32.totalorder %s152, %s154
    %p161 = scmp.eq.s32.totalorder %s18, 1
    %p162 = por %p160, %p161
    %p163 = scmp.ne.s32.totalorder %s154, %s155
    %p164 = scmp.eq.s32.totalorder %s18, 0
    %p165 = por %p163, %p164
    %p166 = scmp.ne.s32.totalorder %s154, %s155
    %p167 = scmp.eq.s32.totalorder %s19, 1
    %p168 = por %p166, %p167
    %p170 = scmp.ne.s32.totalorder %s155, %s169
    %p171 = scmp.eq.s32.totalorder %s19, 0
    %p172 = por %p170, %p171
    %s173 = ssub.s32 %s13, %s20
    %p174 = scmp.eq.s32.totalorder %s173, 0
    %s176 = sadd.s32 %s175, 1
    %s177 = scalar_select %p174, %s175, %s176
    %p180 = pneg %p174
    %p181 = scmp.eq.s32.totalorder %s13, 1
    %p182 = por %p180, %p181
    %p183 = scmp.ne.s32.totalorder %s175, %s178
    %p184 = scmp.eq.s32.totalorder %s13, 0
    %p185 = por %p183, %p184
    %p186 = scmp.ne.s32.totalorder %s175, %s178
    %p187 = scmp.eq.s32.totalorder %s18, 1
    %p188 = por %p186, %p187
    %p189 = scmp.ne.s32.totalorder %s178, %s179
    %p190 = scmp.eq.s32.totalorder %s18, 0
    %p191 = por %p189, %p190
    %p192 = scmp.ne.s32.totalorder %s178, %s179
    %p193 = scmp.eq.s32.totalorder %s19, 1
    %p194 = por %p192, %p193
    %p196 = scmp.ne.s32.totalorder %s179, %s195
    %p197 = scmp.eq.s32.totalorder %s19, 0
    %p198 = por %p196, %p197
    %p199 = scmp.le.s32.totalorder 1, %s13
    %p200 = scmp.lt.s32.totalorder %s13, 3
    %p201 = pnand %p199, %p200
    %p202 = pneg %p201
    // Predicated region
    $region9: #{preact_block_no_bn.1} parent=5 // pred_check
      _
    $region10: #{preact_block_no_bn.1} parent=5 // pred_check_branch
      %204 = sbr.rel (%p201) target = $region12
    $region11: #{preact_block_no_bn.1} parent=5 // pred_region
      %s205 = ssub.s32 %s13, 1
      // Predicated region
      $region13: #{preact_block_no_bn.1} parent=11 // pred_check
        %p206 = pneg %p60
      $region14: #{preact_block_no_bn.1} parent=11 // pred_check_branch
        %208 = sbr.rel (%p206) target = $region16
      $region15: #{preact_block_no_bn.1} parent=11 // pred_region
        _
      $region16: #{preact_block_no_bn.1} parent=11 // pred_fallthru
        _
      // Predicated region
      $region17: #{preact_block_no_bn.1} parent=11 // pred_check
        %p209 = pneg %p81
      $region18: #{preact_block_no_bn.1} parent=11 // pred_check_branch
        %211 = sbr.rel (%p209) target = $region20
      $region19: #{preact_block_no_bn.1} parent=11 // pred_region
        _
      $region20: #{preact_block_no_bn.1} parent=11 // pred_fallthru
        _
      // Predicated region
      $region21: #{preact_block_no_bn.1} parent=11 // pred_check
        %p212 = pneg %p102
      $region22: #{preact_block_no_bn.1} parent=11 // pred_check_branch
        %214 = sbr.rel (%p212) target = $region24
      $region23: #{preact_block_no_bn.1} parent=11 // pred_region
        _
      $region24: #{preact_block_no_bn.1} parent=11 // pred_fallthru
        _
      // Predicated region
      $region25: #{preact_block_no_bn.1} parent=11 // pred_check
        %p215 = pneg %p123
      $region26: #{preact_block_no_bn.1} parent=11 // pred_check_branch
        %217 = sbr.rel (%p215) target = $region28
      $region27: #{preact_block_no_bn.1} parent=11 // pred_region
        _
      $region28: #{preact_block_no_bn.1} parent=11 // pred_fallthru
        _
      // Predicated region
      $region29: #{preact_block_no_bn.1} parent=11 // pred_check
        %p218 = pneg %p144
      $region30: #{preact_block_no_bn.1} parent=11 // pred_check_branch
        %220 = sbr.rel (%p218) target = $region32
      $region31: #{preact_block_no_bn.1} parent=11 // pred_region
        _
      $region32: #{preact_block_no_bn.1} parent=11 // pred_fallthru
        _
      // Predicated region
      $region33: #{preact_block_no_bn.1} parent=11 // pred_check
        %p221 = pneg %p165
      $region34: #{preact_block_no_bn.1} parent=11 // pred_check_branch
        %223 = sbr.rel (%p221) target = $region36
      $region35: #{preact_block_no_bn.1} parent=11 // pred_region
        _
      $region36: #{preact_block_no_bn.1} parent=11 // pred_fallthru
        _
    $region12: #{preact_block_no_bn.1} parent=5 // pred_fallthru
      _
    %p224 = scmp.lt.s32.totalorder %s13, 2
    // Predicated region
    $region37: #{preact_block_no_bn.1} parent=5 // pred_check
      %p225 = pneg %p224
    $region38: #{preact_block_no_bn.1} parent=5 // pred_check_branch
      %227 = sbr.rel (%p225) target = $region40
    $region39: #{preact_block_no_bn.1} parent=5 // pred_region
      // Predicated region
      $region41: #{preact_block_no_bn.1} parent=39 // pred_check
        %p228 = pneg %p33
      $region42: #{preact_block_no_bn.1} parent=39 // pred_check_branch
        %230 = sbr.rel (%p228) target = $region44
      $region43: #{preact_block_no_bn.1} parent=39 // pred_region
        %p231 = scmp.lt.s32.totalorder %s13, 1
        %s232 = scalar_select %p231, %s13, 1
        %s233 = smul.addr %s232, 32
        %s234 = smul.addr %s233, 8
        %s235 = scalar_lea.vmem %s0, %s234
      $region44: #{preact_block_no_bn.1} parent=39 // pred_fallthru
        _
    $region40: #{preact_block_no_bn.1} parent=5 // pred_fallthru
      _
    %p236 = scmp.le.s32.totalorder 1, %s13
    %p237 = scmp.lt.s32.totalorder %s13, 3
    %p238 = pnand %p236, %p237
    %p239 = pneg %p238
    // Predicated region
    $region45: #{preact_block_no_bn.1} parent=5 // pred_check
      _
    $region46: #{preact_block_no_bn.1} parent=5 // pred_check_branch
      %241 = sbr.rel (%p238) target = $region48
    $region47: #{preact_block_no_bn.1} parent=5 // pred_region
      %s242 = ssub.s32 %s13, 1
      %p243 = scmp.lt.s32.totalorder %s18, 1
      %s244 = scalar_select %p243, %s18, 1
      %s245 = smul.addr %s244, 32
      %s246 = smul.addr %s245, 8
      %s247 = scalar_lea.vmem %s0, %s246
      %p248 = pneg %p39
      %p249 = pneg %p36
      %p250 = pneg %p60
      %p251 = pneg %p57
      %p252 = pneg %p81
      %p253 = pneg %p78
      %p254 = pneg %p102
      %p255 = pneg %p99
      %p256 = pneg %p123
      %p257 = pneg %p120
      %p258 = pneg %p144
      %p259 = pneg %p141
      %p260 = pneg %p165
      %p261 = pneg %p162
      %p262 = pneg %p191
      %p263 = pneg %p188
      %p264 = scmp.lt.s32.totalorder %s18, 1
      %s265 = scalar_select %p264, %s18, 1
      %s266 = smul.addr %s265, 32
      %s267 = smul.addr %s266, 8
      %s268 = scalar_lea.vmem %s7, %s267
      %p269 = scmp.lt.s32.totalorder %s18, 1
      %s270 = scalar_select %p269, %s18, 1
      %s271 = smul.addr %s270, 32
      %s272 = smul.addr %s271, 8
      %s273 = scalar_lea.vmem %s0, %s272
      %p274 = scmp.lt.s32.totalorder %s18, 1
      %s275 = scalar_select %p274, %s18, 1
      %s276 = smul.addr %s275, 32
      %s277 = smul.addr %s276, 8
      %s278 = scalar_lea.vmem %s7, %s277
      %v279 = vld [vmem:[%s273] sm:$0xff]
      %v280 = vld [vmem:[%s273 + $0x8] sm:$0xff]
      %v281 = vld [vmem:[%s273 + $0x10] sm:$0xff]
      %v282 = vld [vmem:[%s273 + $0x18] sm:$0xff]
      %v283 = vld [vmem:[%s273 + $0x20] sm:$0xff]
      %v284 = vld [vmem:[%s273 + $0x28] sm:$0xff]
      %v285 = vld [vmem:[%s273 + $0x30] sm:$0xff]
      %v286 = vld [vmem:[%s273 + $0x38] sm:$0xff]
      %v287 = vld [vmem:[%s273 + $0x40] sm:$0xff]
      %v288 = vld [vmem:[%s273 + $0x48] sm:$0xff]
      %v289 = vld [vmem:[%s273 + $0x50] sm:$0xff]
      %v290 = vld [vmem:[%s273 + $0x58] sm:$0xff]
      %v291 = vld [vmem:[%s273 + $0x60] sm:$0xff]
      %v292 = vld [vmem:[%s273 + $0x68] sm:$0xff]
      %v293 = vld [vmem:[%s273 + $0x70] sm:$0xff]
      %v294 = vld [vmem:[%s273 + $0x78] sm:$0xff]
      %v295 = vld [vmem:[%s273 + $0x80] sm:$0xff]
      %v296 = vld [vmem:[%s273 + $0x88] sm:$0xff]
      %v297 = vld [vmem:[%s273 + $0x90] sm:$0xff]
      %v298 = vld [vmem:[%s273 + $0x98] sm:$0xff]
      %v299 = vld [vmem:[%s273 + $0xa0] sm:$0xff]
      %v300 = vld [vmem:[%s273 + $0xa8] sm:$0xff]
      %v301 = vld [vmem:[%s273 + $0xb0] sm:$0xff]
      %v302 = vld [vmem:[%s273 + $0xb8] sm:$0xff]
      %v303 = vld [vmem:[%s273 + $0xc0] sm:$0xff]
      %v304 = vld [vmem:[%s273 + $0xc8] sm:$0xff]
      %v305 = vld [vmem:[%s273 + $0xd0] sm:$0xff]
      %v306 = vld [vmem:[%s273 + $0xd8] sm:$0xff]
      %v307 = vld [vmem:[%s273 + $0xe0] sm:$0xff]
      %v308 = vld [vmem:[%s273 + $0xe8] sm:$0xff]
      %v309 = vld [vmem:[%s273 + $0xf0] sm:$0xff]
      %v310 = vld [vmem:[%s273 + $0xf8] sm:$0xff]
      %v311 = vmax.f32 %v279, 0.0
      %v312 = vmax.f32 %v280, 0.0
      %v313 = vmax.f32 %v281, 0.0
      %v314 = vmax.f32 %v282, 0.0
      %v315 = vmax.f32 %v283, 0.0
      %v316 = vmax.f32 %v284, 0.0
      %v317 = vmax.f32 %v285, 0.0
      %v318 = vmax.f32 %v286, 0.0
      %v319 = vmax.f32 %v287, 0.0
      %v320 = vmax.f32 %v288, 0.0
      %v321 = vmax.f32 %v289, 0.0
      %v322 = vmax.f32 %v290, 0.0
      %v323 = vmax.f32 %v291, 0.0
      %v324 = vmax.f32 %v292, 0.0
      %v325 = vmax.f32 %v293, 0.0
      %v326 = vmax.f32 %v294, 0.0
      %v327 = vmax.f32 %v295, 0.0
      %v328 = vmax.f32 %v296, 0.0
      %v329 = vmax.f32 %v297, 0.0
      %v330 = vmax.f32 %v298, 0.0
      %v331 = vmax.f32 %v299, 0.0
      %v332 = vmax.f32 %v300, 0.0
      %v333 = vmax.f32 %v301, 0.0
      %v334 = vmax.f32 %v302, 0.0
      %v335 = vmax.f32 %v303, 0.0
      %v336 = vmax.f32 %v304, 0.0
      %v337 = vmax.f32 %v305, 0.0
      %v338 = vmax.f32 %v306, 0.0
      %v339 = vmax.f32 %v307, 0.0
      %v340 = vmax.f32 %v308, 0.0
      %v341 = vmax.f32 %v309, 0.0
      %v342 = vmax.f32 %v310, 0.0
      %343 = vst [vmem:[#allocation2] sm:$0xff] 0.0
      %344 = vst [vmem:[#allocation2 + $0x8] sm:$0xff] 0.0
      %345 = vst [vmem:[#allocation2 + $0x10] sm:$0x3] 0.0
      %s346 = scalar_lea.vmem [#allocation2], 408
      %347 = vst [vmem:[%s346] sm:$0xff] 0.0
      %348 = vst [vmem:[%s346 + $0x8] sm:$0xff] 0.0
      %349 = vst [vmem:[%s346 + $0x10] sm:$0x3] 0.0
      %350 = vst [vmem:[#allocation2] sm:$0x1] 0.0
      %351 = vst [vmem:[#allocation2 + $0x18] sm:$0x1] 0.0
      %352 = vst [vmem:[#allocation2 + $0x30] sm:$0x1] 0.0
      %353 = vst [vmem:[#allocation2 + $0x48] sm:$0x1] 0.0
      %354 = vst [vmem:[#allocation2 + $0x60] sm:$0x1] 0.0
      %355 = vst [vmem:[#allocation2 + $0x78] sm:$0x1] 0.0
      %356 = vst [vmem:[#allocation2 + $0x90] sm:$0x1] 0.0
      %357 = vst [vmem:[#allocation2 + $0xa8] sm:$0x1] 0.0
      %358 = vst [vmem:[#allocation2 + $0xc0] sm:$0x1] 0.0
      %359 = vst [vmem:[#allocation2 + $0xd8] sm:$0x1] 0.0
      %360 = vst [vmem:[#allocation2 + $0xf0] sm:$0x1] 0.0
      %361 = vst [vmem:[#allocation2 + $0x108] sm:$0x1] 0.0
      %362 = vst [vmem:[#allocation2 + $0x120] sm:$0x1] 0.0
      %363 = vst [vmem:[#allocation2 + $0x138] sm:$0x1] 0.0
      %364 = vst [vmem:[#allocation2 + $0x150] sm:$0x1] 0.0
      %365 = vst [vmem:[#allocation2 + $0x168] sm:$0x1] 0.0
      %366 = vst [vmem:[#allocation2 + $0x180] sm:$0x1] 0.0
      %367 = vst [vmem:[#allocation2 + $0x198] sm:$0x1] 0.0
      %368 = vst [vmem:[#allocation2 + $0x11] sm:$0x1] 0.0
      %369 = vst [vmem:[#allocation2 + $0x29] sm:$0x1] 0.0
      %370 = vst [vmem:[#allocation2 + $0x41] sm:$0x1] 0.0
      %371 = vst [vmem:[#allocation2 + $0x59] sm:$0x1] 0.0
      %372 = vst [vmem:[#allocation2 + $0x71] sm:$0x1] 0.0
      %373 = vst [vmem:[#allocation2 + $0x89] sm:$0x1] 0.0
      %374 = vst [vmem:[#allocation2 + $0xa1] sm:$0x1] 0.0
      %375 = vst [vmem:[#allocation2 + $0xb9] sm:$0x1] 0.0
      %376 = vst [vmem:[#allocation2 + $0xd1] sm:$0x1] 0.0
      %377 = vst [vmem:[#allocation2 + $0xe9] sm:$0x1] 0.0
      %378 = vst [vmem:[#allocation2 + $0x101] sm:$0x1] 0.0
      %379 = vst [vmem:[#allocation2 + $0x119] sm:$0x1] 0.0
      %380 = vst [vmem:[#allocation2 + $0x131] sm:$0x1] 0.0
      %381 = vst [vmem:[#allocation2 + $0x149] sm:$0x1] 0.0
      %382 = vst [vmem:[#allocation2 + $0x161] sm:$0x1] 0.0
      %383 = vst [vmem:[#allocation2 + $0x179] sm:$0x1] 0.0
      %384 = vst [vmem:[#allocation2 + $0x191] sm:$0x1] 0.0
      %385 = vst [vmem:[#allocation2 + $0x1a9] sm:$0x1] 0.0
      %s386 = scalar_lea.vmem [#allocation2], 24
      %387 = vst [vmem:[%s386 + $0x1] sm:$0xff] %v311
      %388 = vst [vmem:[%s386 + $0x9] sm:$0xff] %v312
      %389 = vst [vmem:[%s386 + $0x19] sm:$0xff] %v313
      %390 = vst [vmem:[%s386 + $0x21] sm:$0xff] %v314
      %391 = vst [vmem:[%s386 + $0x31] sm:$0xff] %v315
      %392 = vst [vmem:[%s386 + $0x39] sm:$0xff] %v316
      %393 = vst [vmem:[%s386 + $0x49] sm:$0xff] %v317
      %394 = vst [vmem:[%s386 + $0x51] sm:$0xff] %v318
      %395 = vst [vmem:[%s386 + $0x61] sm:$0xff] %v319
      %396 = vst [vmem:[%s386 + $0x69] sm:$0xff] %v320
      %397 = vst [vmem:[%s386 + $0x79] sm:$0xff] %v321
      %398 = vst [vmem:[%s386 + $0x81] sm:$0xff] %v322
      %399 = vst [vmem:[%s386 + $0x91] sm:$0xff] %v323
      %400 = vst [vmem:[%s386 + $0x99] sm:$0xff] %v324
      %401 = vst [vmem:[%s386 + $0xa9] sm:$0xff] %v325
      %402 = vst [vmem:[%s386 + $0xb1] sm:$0xff] %v326
      %403 = vst [vmem:[%s386 + $0xc1] sm:$0xff] %v327
      %404 = vst [vmem:[%s386 + $0xc9] sm:$0xff] %v328
      %405 = vst [vmem:[%s386 + $0xd9] sm:$0xff] %v329
      %406 = vst [vmem:[%s386 + $0xe1] sm:$0xff] %v330
      %407 = vst [vmem:[%s386 + $0xf1] sm:$0xff] %v331
      %408 = vst [vmem:[%s386 + $0xf9] sm:$0xff] %v332
      %409 = vst [vmem:[%s386 + $0x109] sm:$0xff] %v333
      %410 = vst [vmem:[%s386 + $0x111] sm:$0xff] %v334
      %411 = vst [vmem:[%s386 + $0x121] sm:$0xff] %v335
      %412 = vst [vmem:[%s386 + $0x129] sm:$0xff] %v336
      %413 = vst [vmem:[%s386 + $0x139] sm:$0xff] %v337
      %414 = vst [vmem:[%s386 + $0x141] sm:$0xff] %v338
      %415 = vst [vmem:[%s386 + $0x151] sm:$0xff] %v339
      %416 = vst [vmem:[%s386 + $0x159] sm:$0xff] %v340
      %417 = vst [vmem:[%s386 + $0x169] sm:$0xff] %v341
      %418 = vst [vmem:[%s386 + $0x171] sm:$0xff] %v342
      %v419 = vld [vmem:[#allocation2] sm:$0xff]
      %v420 = vld [vmem:[#allocation2 + $0x8] sm:$0xff]
      %v421 = vld [vmem:[#allocation2 + $0x18] sm:$0xff]
      %v422 = vld [vmem:[#allocation2 + $0x20] sm:$0xff]
      %v423 = vld [vmem:[#allocation2 + $0x30] sm:$0xff]
      %v424 = vld [vmem:[#allocation2 + $0x38] sm:$0xff]
      %v425 = vld [vmem:[#allocation2 + $0x48] sm:$0xff]
      %v426 = vld [vmem:[#allocation2 + $0x50] sm:$0xff]
      %v427 = vld [vmem:[#allocation2 + $0x60] sm:$0xff]
      %v428 = vld [vmem:[#allocation2 + $0x68] sm:$0xff]
      %v429 = vld [vmem:[#allocation2 + $0x78] sm:$0xff]
      %v430 = vld [vmem:[#allocation2 + $0x80] sm:$0xff]
      %v431 = vld [vmem:[#allocation2 + $0x90] sm:$0xff]
      %v432 = vld [vmem:[#allocation2 + $0x98] sm:$0xff]
      %v433 = vld [vmem:[#allocation2 + $0xa8] sm:$0xff]
      %v434 = vld [vmem:[#allocation2 + $0xb0] sm:$0xff]
      %v435 = vld [vmem:[#allocation2 + $0xc0] sm:$0xff]
      %v436 = vld [vmem:[#allocation2 + $0xc8] sm:$0xff]
      %v437 = vld [vmem:[#allocation2 + $0xd8] sm:$0xff]
      %v438 = vld [vmem:[#allocation2 + $0xe0] sm:$0xff]
      %v439 = vld [vmem:[#allocation2 + $0xf0] sm:$0xff]
      %v440 = vld [vmem:[#allocation2 + $0xf8] sm:$0xff]
      %v441 = vld [vmem:[#allocation2 + $0x108] sm:$0xff]
      %v442 = vld [vmem:[#allocation2 + $0x110] sm:$0xff]
      %v443 = vld [vmem:[#allocation2 + $0x120] sm:$0xff]
      %v444 = vld [vmem:[#allocation2 + $0x128] sm:$0xff]
      %v445 = vld [vmem:[#allocation2 + $0x138] sm:$0xff]
      %v446 = vld [vmem:[#allocation2 + $0x140] sm:$0xff]
      %v447 = vld [vmem:[#allocation2 + $0x150] sm:$0xff]
      %v448 = vld [vmem:[#allocation2 + $0x158] sm:$0xff]
      %v449 = vld [vmem:[#allocation2 + $0x168] sm:$0xff]
      %v450 = vld [vmem:[#allocation2 + $0x170] sm:$0xff]
      %v451 = vld [vmem:[%s1] sm:$0xff]
      %v452 = vld [vmem:[%s1 + $0x8] sm:$0xff]
      %v453 = vld [vmem:[%s1 + $0x10] sm:$0xff]
      %v454 = vld [vmem:[%s1 + $0x18] sm:$0xff]
      %v455 = vld [vmem:[%s1 + $0x20] sm:$0xff]
      %v456 = vld [vmem:[%s1 + $0x28] sm:$0xff]
      %v457 = vld [vmem:[%s1 + $0x30] sm:$0xff]
      %v458 = vld [vmem:[%s1 + $0x38] sm:$0xff]
      %v459 = vld [vmem:[%s1 + $0x40] sm:$0xff]
      %v460 = vld [vmem:[%s1 + $0x48] sm:$0xff]
      %v461 = vld [vmem:[%s1 + $0x50] sm:$0xff]
      %v462 = vld [vmem:[%s1 + $0x58] sm:$0xff]
      %v463 = vld [vmem:[%s1 + $0x60] sm:$0xff]
      %v464 = vld [vmem:[%s1 + $0x68] sm:$0xff]
      %v465 = vld [vmem:[%s1 + $0x70] sm:$0xff]
      %v466 = vld [vmem:[%s1 + $0x78] sm:$0xff]
      %467 = vmatpush.msra.mxu0 %v466
      %468 = vmatpush.msra.mxu0 %v465
      %469 = vmatpush.msra.mxu0 %v464
      %470 = vmatpush.msra.mxu0 %v463
      %471 = vmatpush.msra.mxu0 %v462
      %472 = vmatpush.msra.mxu0 %v461
      %473 = vmatpush.msra.mxu0 %v460
      %474 = vmatpush.msra.mxu0 %v459
      %475 = vmatpush.msra.mxu0 %v458
      %476 = vmatpush.msra.mxu0 %v457
      %477 = vmatpush.msra.mxu0 %v456
      %478 = vmatpush.msra.mxu0 %v455
      %479 = vmatpush.msra.mxu0 %v454
      %480 = vmatpush.msra.mxu0 %v453
      %481 = vmatpush.msra.mxu0 %v452
      %482 = vmatpush.msra.mxu0 %v451
      %483 = vmatmul.f32.gmra.mxu0 %v419
      %v484 = vpop.f32.mrf.mxu0
      %v485 = vadd.f32 0.0, %v484
      %486 = vmatmul.f32.gmra.mxu0 %v420
      %v487 = vpop.f32.mrf.mxu0
      %v488 = vadd.f32 0.0, %v487
      %489 = vmatmul.f32.gmra.mxu0 %v421
      %v490 = vpop.f32.mrf.mxu0
      %v491 = vadd.f32 0.0, %v490
      %492 = vmatmul.f32.gmra.mxu0 %v422
      %v493 = vpop.f32.mrf.mxu0
      %v494 = vadd.f32 0.0, %v493
      %495 = vmatmul.f32.gmra.mxu0 %v423
      %v496 = vpop.f32.mrf.mxu0
      %v497 = vadd.f32 0.0, %v496
      %498 = vmatmul.f32.gmra.mxu0 %v424
      %v499 = vpop.f32.mrf.mxu0
      %v500 = vadd.f32 0.0, %v499
      %501 = vmatmul.f32.gmra.mxu0 %v425
      %v502 = vpop.f32.mrf.mxu0
      %v503 = vadd.f32 0.0, %v502
      %504 = vmatmul.f32.gmra.mxu0 %v426
      %v505 = vpop.f32.mrf.mxu0
      %v506 = vadd.f32 0.0, %v505
      %507 = vmatmul.f32.gmra.mxu0 %v427
      %v508 = vpop.f32.mrf.mxu0
      %v509 = vadd.f32 0.0, %v508
      %510 = vmatmul.f32.gmra.mxu0 %v428
      %v511 = vpop.f32.mrf.mxu0
      %v512 = vadd.f32 0.0, %v511
      %513 = vmatmul.f32.gmra.mxu0 %v429
      %v514 = vpop.f32.mrf.mxu0
      %v515 = vadd.f32 0.0, %v514
      %516 = vmatmul.f32.gmra.mxu0 %v430
      %v517 = vpop.f32.mrf.mxu0
      %v518 = vadd.f32 0.0, %v517
      %519 = vmatmul.f32.gmra.mxu0 %v431
      %v520 = vpop.f32.mrf.mxu0
      %v521 = vadd.f32 0.0, %v520
      %522 = vmatmul.f32.gmra.mxu0 %v432
      %v523 = vpop.f32.mrf.mxu0
      %v524 = vadd.f32 0.0, %v523
      %525 = vmatmul.f32.gmra.mxu0 %v433
      %v526 = vpop.f32.mrf.mxu0
      %v527 = vadd.f32 0.0, %v526
      %528 = vmatmul.f32.gmra.mxu0 %v434
      %v529 = vpop.f32.mrf.mxu0
      %v530 = vadd.f32 0.0, %v529
      %531 = vmatmul.f32.gmra.mxu0 %v435
      %v532 = vpop.f32.mrf.mxu0
      %v533 = vadd.f32 0.0, %v532
      %534 = vmatmul.f32.gmra.mxu0 %v436
      %v535 = vpop.f32.mrf.mxu0
      %v536 = vadd.f32 0.0, %v535
      %537 = vmatmul.f32.gmra.mxu0 %v437
      %v538 = vpop.f32.mrf.mxu0
      %v539 = vadd.f32 0.0, %v538
      %540 = vmatmul.f32.gmra.mxu0 %v438
      %v541 = vpop.f32.mrf.mxu0
      %v542 = vadd.f32 0.0, %v541
      %543 = vmatmul.f32.gmra.mxu0 %v439
      %v544 = vpop.f32.mrf.mxu0
      %v545 = vadd.f32 0.0, %v544
      %546 = vmatmul.f32.gmra.mxu0 %v440
      %v547 = vpop.f32.mrf.mxu0
      %v548 = vadd.f32 0.0, %v547
      %549 = vmatmul.f32.gmra.mxu0 %v441
      %v550 = vpop.f32.mrf.mxu0
      %v551 = vadd.f32 0.0, %v550
      %552 = vmatmul.f32.gmra.mxu0 %v442
      %v553 = vpop.f32.mrf.mxu0
      %v554 = vadd.f32 0.0, %v553
      %555 = vmatmul.f32.gmra.mxu0 %v443
      %v556 = vpop.f32.mrf.mxu0
      %v557 = vadd.f32 0.0, %v556
      %558 = vmatmul.f32.gmra.mxu0 %v444
      %v559 = vpop.f32.mrf.mxu0
      %v560 = vadd.f32 0.0, %v559
      %561 = vmatmul.f32.gmra.mxu0 %v445
      %v562 = vpop.f32.mrf.mxu0
      %v563 = vadd.f32 0.0, %v562
      %564 = vmatmul.f32.gmra.mxu0 %v446
      %v565 = vpop.f32.mrf.mxu0
      %v566 = vadd.f32 0.0, %v565
      %567 = vmatmul.f32.gmra.mxu0 %v447
      %v568 = vpop.f32.mrf.mxu0
      %v569 = vadd.f32 0.0, %v568
      %570 = vmatmul.f32.gmra.mxu0 %v448
      %v571 = vpop.f32.mrf.mxu0
      %v572 = vadd.f32 0.0, %v571
      %573 = vmatmul.f32.gmra.mxu0 %v449
      %v574 = vpop.f32.mrf.mxu0
      %v575 = vadd.f32 0.0, %v574
      %576 = vmatmul.f32.gmra.mxu0 %v450
      %v577 = vpop.f32.mrf.mxu0
      %v578 = vadd.f32 0.0, %v577
      %579 = vdwg.mxu0
      %580 = vst [vmem:[#allocation4] sm:$0xff] %v485
      %581 = vst [vmem:[#allocation4 + $0x8] sm:$0xff] %v488
      %582 = vst [vmem:[#allocation4 + $0x10] sm:$0xff] %v491
      %583 = vst [vmem:[#allocation4 + $0x18] sm:$0xff] %v494
      %584 = vst [vmem:[#allocation4 + $0x20] sm:$0xff] %v497
      %585 = vst [vmem:[#allocation4 + $0x28] sm:$0xff] %v500
      %586 = vst [vmem:[#allocation4 + $0x30] sm:$0xff] %v503
      %587 = vst [vmem:[#allocation4 + $0x38] sm:$0xff] %v506
      %588 = vst [vmem:[#allocation4 + $0x40] sm:$0xff] %v509
      %589 = vst [vmem:[#allocation4 + $0x48] sm:$0xff] %v512
      %590 = vst [vmem:[#allocation4 + $0x50] sm:$0xff] %v515
      %591 = vst [vmem:[#allocation4 + $0x58] sm:$0xff] %v518
      %592 = vst [vmem:[#allocation4 + $0x60] sm:$0xff] %v521
      %593 = vst [vmem:[#allocation4 + $0x68] sm:$0xff] %v524
      %594 = vst [vmem:[#allocation4 + $0x70] sm:$0xff] %v527
      %595 = vst [vmem:[#allocation4 + $0x78] sm:$0xff] %v530
      %596 = vst [vmem:[#allocation4 + $0x80] sm:$0xff] %v533
      %597 = vst [vmem:[#allocation4 + $0x88] sm:$0xff] %v536
      %598 = vst [vmem:[#allocation4 + $0x90] sm:$0xff] %v539
      %599 = vst [vmem:[#allocation4 + $0x98] sm:$0xff] %v542
      %600 = vst [vmem:[#allocation4 + $0xa0] sm:$0xff] %v545
      %601 = vst [vmem:[#allocation4 + $0xa8] sm:$0xff] %v548
      %602 = vst [vmem:[#allocation4 + $0xb0] sm:$0xff] %v551
      %603 = vst [vmem:[#allocation4 + $0xb8] sm:$0xff] %v554
      %604 = vst [vmem:[#allocation4 + $0xc0] sm:$0xff] %v557
      %605 = vst [vmem:[#allocation4 + $0xc8] sm:$0xff] %v560
      %606 = vst [vmem:[#allocation4 + $0xd0] sm:$0xff] %v563
      %607 = vst [vmem:[#allocation4 + $0xd8] sm:$0xff] %v566
      %608 = vst [vmem:[#allocation4 + $0xe0] sm:$0xff] %v569
      %609 = vst [vmem:[#allocation4 + $0xe8] sm:$0xff] %v572
      %610 = vst [vmem:[#allocation4 + $0xf0] sm:$0xff] %v575
      %611 = vst [vmem:[#allocation4 + $0xf8] sm:$0xff] %v578
      %v612 = vld [vmem:[#allocation2 + $0x1] sm:$0xff]
      %v613 = vld [vmem:[#allocation2 + $0x9] sm:$0xff]
      %v614 = vld [vmem:[#allocation2 + $0x19] sm:$0xff]
      %v615 = vld [vmem:[#allocation2 + $0x21] sm:$0xff]
      %v616 = vld [vmem:[#allocation2 + $0x31] sm:$0xff]
      %v617 = vld [vmem:[#allocation2 + $0x39] sm:$0xff]
      %v618 = vld [vmem:[#allocation2 + $0x49] sm:$0xff]
      %v619 = vld [vmem:[#allocation2 + $0x51] sm:$0xff]
      %v620 = vld [vmem:[#allocation2 + $0x61] sm:$0xff]
      %v621 = vld [vmem:[#allocation2 + $0x69] sm:$0xff]
      %v622 = vld [vmem:[#allocation2 + $0x79] sm:$0xff]
      %v623 = vld [vmem:[#allocation2 + $0x81] sm:$0xff]
      %v624 = vld [vmem:[#allocation2 + $0x91] sm:$0xff]
      %v625 = vld [vmem:[#allocation2 + $0x99] sm:$0xff]
      %v626 = vld [vmem:[#allocation2 + $0xa9] sm:$0xff]
      %v627 = vld [vmem:[#allocation2 + $0xb1] sm:$0xff]
      %v628 = vld [vmem:[#allocation2 + $0xc1] sm:$0xff]
      %v629 = vld [vmem:[#allocation2 + $0xc9] sm:$0xff]
      %v630 = vld [vmem:[#allocation2 + $0xd9] sm:$0xff]
      %v631 = vld [vmem:[#allocation2 + $0xe1] sm:$0xff]
      %v632 = vld [vmem:[#allocation2 + $0xf1] sm:$0xff]
      %v633 = vld [vmem:[#allocation2 + $0xf9] sm:$0xff]
      %v634 = vld [vmem:[#allocation2 + $0x109] sm:$0xff]
      %v635 = vld [vmem:[#allocation2 + $0x111] sm:$0xff]
      %v636 = vld [vmem:[#allocation2 + $0x121] sm:$0xff]
      %v637 = vld [vmem:[#allocation2 + $0x129] sm:$0xff]
      %v638 = vld [vmem:[#allocation2 + $0x139] sm:$0xff]
      %v639 = vld [vmem:[#allocation2 + $0x141] sm:$0xff]
      %v640 = vld [vmem:[#allocation2 + $0x151] sm:$0xff]
      %v641 = vld [vmem:[#allocation2 + $0x159] sm:$0xff]
      %v642 = vld [vmem:[#allocation2 + $0x169] sm:$0xff]
      %v643 = vld [vmem:[#allocation2 + $0x171] sm:$0xff]
      %s644 = scalar_lea.vmem %s1, 128
      %v645 = vld [vmem:[%s644] sm:$0xff]
      %v646 = vld [vmem:[%s644 + $0x8] sm:$0xff]
      %v647 = vld [vmem:[%s644 + $0x10] sm:$0xff]
      %v648 = vld [vmem:[%s644 + $0x18] sm:$0xff]
      %v649 = vld [vmem:[%s644 + $0x20] sm:$0xff]
      %v650 = vld [vmem:[%s644 + $0x28] sm:$0xff]
      %v651 = vld [vmem:[%s644 + $0x30] sm:$0xff]
      %v652 = vld [vmem:[%s644 + $0x38] sm:$0xff]
      %v653 = vld [vmem:[%s644 + $0x40] sm:$0xff]
      %v654 = vld [vmem:[%s644 + $0x48] sm:$0xff]
      %v655 = vld [vmem:[%s644 + $0x50] sm:$0xff]
      %v656 = vld [vmem:[%s644 + $0x58] sm:$0xff]
      %v657 = vld [vmem:[%s644 + $0x60] sm:$0xff]
      %v658 = vld [vmem:[%s644 + $0x68] sm:$0xff]
      %v659 = vld [vmem:[%s644 + $0x70] sm:$0xff]
      %v660 = vld [vmem:[%s644 + $0x78] sm:$0xff]
      %661 = vmatpush.msra.mxu0 %v660
      %662 = vmatpush.msra.mxu0 %v659
      %663 = vmatpush.msra.mxu0 %v658
      %664 = vmatpush.msra.mxu0 %v657
      %665 = vmatpush.msra.mxu0 %v656
      %666 = vmatpush.msra.mxu0 %v655
      %667 = vmatpush.msra.mxu0 %v654
      %668 = vmatpush.msra.mxu0 %v653
      %669 = vmatpush.msra.mxu0 %v652
      %670 = vmatpush.msra.mxu0 %v651
      %671 = vmatpush.msra.mxu0 %v650
      %672 = vmatpush.msra.mxu0 %v649
      %673 = vmatpush.msra.mxu0 %v648
      %674 = vmatpush.msra.mxu0 %v647
      %675 = vmatpush.msra.mxu0 %v646
      %676 = vmatpush.msra.mxu0 %v645
      %677 = vmatmul.f32.gmra.mxu0 %v612
      %v678 = vpop.f32.mrf.mxu0
      %v679 = vadd.f32 0.0, %v678
      %680 = vmatmul.f32.gmra.mxu0 %v613
      %v681 = vpop.f32.mrf.mxu0
      %v682 = vadd.f32 0.0, %v681
      %683 = vmatmul.f32.gmra.mxu0 %v614
      %v684 = vpop.f32.mrf.mxu0
      %v685 = vadd.f32 0.0, %v684
      %686 = vmatmul.f32.gmra.mxu0 %v615
      %v687 = vpop.f32.mrf.mxu0
      %v688 = vadd.f32 0.0, %v687
      %689 = vmatmul.f32.gmra.mxu0 %v616
      %v690 = vpop.f32.mrf.mxu0
      %v691 = vadd.f32 0.0, %v690
      %692 = vmatmul.f32.gmra.mxu0 %v617
      %v693 = vpop.f32.mrf.mxu0
      %v694 = vadd.f32 0.0, %v693
      %695 = vmatmul.f32.gmra.mxu0 %v618
      %v696 = vpop.f32.mrf.mxu0
      %v697 = vadd.f32 0.0, %v696
      %698 = vmatmul.f32.gmra.mxu0 %v619
      %v699 = vpop.f32.mrf.mxu0
      %v700 = vadd.f32 0.0, %v699
      %701 = vmatmul.f32.gmra.mxu0 %v620
      %v702 = vpop.f32.mrf.mxu0
      %v703 = vadd.f32 0.0, %v702
      %704 = vmatmul.f32.gmra.mxu0 %v621
      %v705 = vpop.f32.mrf.mxu0
      %v706 = vadd.f32 0.0, %v705
      %707 = vmatmul.f32.gmra.mxu0 %v622
      %v708 = vpop.f32.mrf.mxu0
      %v709 = vadd.f32 0.0, %v708
      %710 = vmatmul.f32.gmra.mxu0 %v623
      %v711 = vpop.f32.mrf.mxu0
      %v712 = vadd.f32 0.0, %v711
      %713 = vmatmul.f32.gmra.mxu0 %v624
      %v714 = vpop.f32.mrf.mxu0
      %v715 = vadd.f32 0.0, %v714
      %716 = vmatmul.f32.gmra.mxu0 %v625
      %v717 = vpop.f32.mrf.mxu0
      %v718 = vadd.f32 0.0, %v717
      %719 = vmatmul.f32.gmra.mxu0 %v626
      %v720 = vpop.f32.mrf.mxu0
      %v721 = vadd.f32 0.0, %v720
      %722 = vmatmul.f32.gmra.mxu0 %v627
      %v723 = vpop.f32.mrf.mxu0
      %v724 = vadd.f32 0.0, %v723
      %725 = vmatmul.f32.gmra.mxu0 %v628
      %v726 = vpop.f32.mrf.mxu0
      %v727 = vadd.f32 0.0, %v726
      %728 = vmatmul.f32.gmra.mxu0 %v629
      %v729 = vpop.f32.mrf.mxu0
      %v730 = vadd.f32 0.0, %v729
      %731 = vmatmul.f32.gmra.mxu0 %v630
      %v732 = vpop.f32.mrf.mxu0
      %v733 = vadd.f32 0.0, %v732
      %734 = vmatmul.f32.gmra.mxu0 %v631
      %v735 = vpop.f32.mrf.mxu0
      %v736 = vadd.f32 0.0, %v735
      %737 = vmatmul.f32.gmra.mxu0 %v632
      %v738 = vpop.f32.mrf.mxu0
      %v739 = vadd.f32 0.0, %v738
      %740 = vmatmul.f32.gmra.mxu0 %v633
      %v741 = vpop.f32.mrf.mxu0
      %v742 = vadd.f32 0.0, %v741
      %743 = vmatmul.f32.gmra.mxu0 %v634
      %v744 = vpop.f32.mrf.mxu0
      %v745 = vadd.f32 0.0, %v744
      %746 = vmatmul.f32.gmra.mxu0 %v635
      %v747 = vpop.f32.mrf.mxu0
      %v748 = vadd.f32 0.0, %v747
      %749 = vmatmul.f32.gmra.mxu0 %v636
      %v750 = vpop.f32.mrf.mxu0
      %v751 = vadd.f32 0.0, %v750
      %752 = vmatmul.f32.gmra.mxu0 %v637
      %v753 = vpop.f32.mrf.mxu0
      %v754 = vadd.f32 0.0, %v753
      %755 = vmatmul.f32.gmra.mxu0 %v638
      %v756 = vpop.f32.mrf.mxu0
      %v757 = vadd.f32 0.0, %v756
      %758 = vmatmul.f32.gmra.mxu0 %v639
      %v759 = vpop.f32.mrf.mxu0
      %v760 = vadd.f32 0.0, %v759
      %761 = vmatmul.f32.gmra.mxu0 %v640
      %v762 = vpop.f32.mrf.mxu0
      %v763 = vadd.f32 0.0, %v762
      %764 = vmatmul.f32.gmra.mxu0 %v641
      %v765 = vpop.f32.mrf.mxu0
      %v766 = vadd.f32 0.0, %v765
      %767 = vmatmul.f32.gmra.mxu0 %v642
      %v768 = vpop.f32.mrf.mxu0
      %v769 = vadd.f32 0.0, %v768
      %770 = vmatmul.f32.gmra.mxu0 %v643
      %v771 = vpop.f32.mrf.mxu0
      %v772 = vadd.f32 0.0, %v771
      %773 = vdwg.mxu0
      %v774 = vld [vmem:[#allocation4] sm:$0xff]
      %v775 = vld [vmem:[#allocation4 + $0x8] sm:$0xff]
      %v776 = vld [vmem:[#allocation4 + $0x10] sm:$0xff]
      %v777 = vld [vmem:[#allocation4 + $0x18] sm:$0xff]
      %v778 = vld [vmem:[#allocation4 + $0x20] sm:$0xff]
      %v779 = vld [vmem:[#allocation4 + $0x28] sm:$0xff]
      %v780 = vld [vmem:[#allocation4 + $0x30] sm:$0xff]
      %v781 = vld [vmem:[#allocation4 + $0x38] sm:$0xff]
      %v782 = vld [vmem:[#allocation4 + $0x40] sm:$0xff]
      %v783 = vld [vmem:[#allocation4 + $0x48] sm:$0xff]
      %v784 = vld [vmem:[#allocation4 + $0x50] sm:$0xff]
      %v785 = vld [vmem:[#allocation4 + $0x58] sm:$0xff]
      %v786 = vld [vmem:[#allocation4 + $0x60] sm:$0xff]
      %v787 = vld [vmem:[#allocation4 + $0x68] sm:$0xff]
      %v788 = vld [vmem:[#allocation4 + $0x70] sm:$0xff]
      %v789 = vld [vmem:[#allocation4 + $0x78] sm:$0xff]
      %v790 = vld [vmem:[#allocation4 + $0x80] sm:$0xff]
      %v791 = vld [vmem:[#allocation4 + $0x88] sm:$0xff]
      %v792 = vld [vmem:[#allocation4 + $0x90] sm:$0xff]
      %v793 = vld [vmem:[#allocation4 + $0x98] sm:$0xff]
      %v794 = vld [vmem:[#allocation4 + $0xa0] sm:$0xff]
      %v795 = vld [vmem:[#allocation4 + $0xa8] sm:$0xff]
      %v796 = vld [vmem:[#allocation4 + $0xb0] sm:$0xff]
      %v797 = vld [vmem:[#allocation4 + $0xb8] sm:$0xff]
      %v798 = vld [vmem:[#allocation4 + $0xc0] sm:$0xff]
      %v799 = vld [vmem:[#allocation4 + $0xc8] sm:$0xff]
      %v800 = vld [vmem:[#allocation4 + $0xd0] sm:$0xff]
      %v801 = vld [vmem:[#allocation4 + $0xd8] sm:$0xff]
      %v802 = vld [vmem:[#allocation4 + $0xe0] sm:$0xff]
      %v803 = vld [vmem:[#allocation4 + $0xe8] sm:$0xff]
      %v804 = vld [vmem:[#allocation4 + $0xf0] sm:$0xff]
      %v805 = vld [vmem:[#allocation4 + $0xf8] sm:$0xff]
      %v806 = vadd.f32 %v774, %v679
      %v807 = vadd.f32 %v775, %v682
      %v808 = vadd.f32 %v776, %v685
      %v809 = vadd.f32 %v777, %v688
      %v810 = vadd.f32 %v778, %v691
      %v811 = vadd.f32 %v779, %v694
      %v812 = vadd.f32 %v780, %v697
      %v813 = vadd.f32 %v781, %v700
      %v814 = vadd.f32 %v782, %v703
      %v815 = vadd.f32 %v783, %v706
      %v816 = vadd.f32 %v784, %v709
      %v817 = vadd.f32 %v785, %v712
      %v818 = vadd.f32 %v786, %v715
      %v819 = vadd.f32 %v787, %v718
      %v820 = vadd.f32 %v788, %v721
      %v821 = vadd.f32 %v789, %v724
      %v822 = vadd.f32 %v790, %v727
      %v823 = vadd.f32 %v791, %v730
      %v824 = vadd.f32 %v792, %v733
      %v825 = vadd.f32 %v793, %v736
      %v826 = vadd.f32 %v794, %v739
      %v827 = vadd.f32 %v795, %v742
      %v828 = vadd.f32 %v796, %v745
      %v829 = vadd.f32 %v797, %v748
      %v830 = vadd.f32 %v798, %v751
      %v831 = vadd.f32 %v799, %v754
      %v832 = vadd.f32 %v800, %v757
      %v833 = vadd.f32 %v801, %v760
      %v834 = vadd.f32 %v802, %v763
      %v835 = vadd.f32 %v803, %v766
      %v836 = vadd.f32 %v804, %v769
      %v837 = vadd.f32 %v805, %v772
      %838 = vst [vmem:[#allocation4] sm:$0xff] %v806
      %839 = vst [vmem:[#allocation4 + $0x8] sm:$0xff] %v807
      %840 = vst [vmem:[#allocation4 + $0x10] sm:$0xff] %v808
      %841 = vst [vmem:[#allocation4 + $0x18] sm:$0xff] %v809
      %842 = vst [vmem:[#allocation4 + $0x20] sm:$0xff] %v810
      %843 = vst [vmem:[#allocation4 + $0x28] sm:$0xff] %v811
      %844 = vst [vmem:[#allocation4 + $0x30] sm:$0xff] %v812
      %845 = vst [vmem:[#allocation4 + $0x38] sm:$0xff] %v813
      %846 = vst [vmem:[#allocation4 + $0x40] sm:$0xff] %v814
      %847 = vst [vmem:[#allocation4 + $0x48] sm:$0xff] %v815
      %848 = vst [vmem:[#allocation4 + $0x50] sm:$0xff] %v816
      %849 = vst [vmem:[#allocation4 + $0x58] sm:$0xff] %v817
      %850 = vst [vmem:[#allocation4 + $0x60] sm:$0xff] %v818
      %851 = vst [vmem:[#allocation4 + $0x68] sm:$0xff] %v819
      %852 = vst [vmem:[#allocation4 + $0x70] sm:$0xff] %v820
      %853 = vst [vmem:[#allocation4 + $0x78] sm:$0xff] %v821
      %854 = vst [vmem:[#allocation4 + $0x80] sm:$0xff] %v822
      %855 = vst [vmem:[#allocation4 + $0x88] sm:$0xff] %v823
      %856 = vst [vmem:[#allocation4 + $0x90] sm:$0xff] %v824
      %857 = vst [vmem:[#allocation4 + $0x98] sm:$0xff] %v825
      %858 = vst [vmem:[#allocation4 + $0xa0] sm:$0xff] %v826
      %859 = vst [vmem:[#allocation4 + $0xa8] sm:$0xff] %v827
      %860 = vst [vmem:[#allocation4 + $0xb0] sm:$0xff] %v828
      %861 = vst [vmem:[#allocation4 + $0xb8] sm:$0xff] %v829
      %862 = vst [vmem:[#allocation4 + $0xc0] sm:$0xff] %v830
      %863 = vst [vmem:[#allocation4 + $0xc8] sm:$0xff] %v831
      %864 = vst [vmem:[#allocation4 + $0xd0] sm:$0xff] %v832
      %865 = vst [vmem:[#allocation4 + $0xd8] sm:$0xff] %v833
      %866 = vst [vmem:[#allocation4 + $0xe0] sm:$0xff] %v834
      %867 = vst [vmem:[#allocation4 + $0xe8] sm:$0xff] %v835
      %868 = vst [vmem:[#allocation4 + $0xf0] sm:$0xff] %v836
      %869 = vst [vmem:[#allocation4 + $0xf8] sm:$0xff] %v837
      %v870 = vld [vmem:[#allocation2 + $0x2] sm:$0xff]
      %v871 = vld [vmem:[#allocation2 + $0xa] sm:$0xff]
      %v872 = vld [vmem:[#allocation2 + $0x1a] sm:$0xff]
      %v873 = vld [vmem:[#allocation2 + $0x22] sm:$0xff]
      %v874 = vld [vmem:[#allocation2 + $0x32] sm:$0xff]
      %v875 = vld [vmem:[#allocation2 + $0x3a] sm:$0xff]
      %v876 = vld [vmem:[#allocation2 + $0x4a] sm:$0xff]
      %v877 = vld [vmem:[#allocation2 + $0x52] sm:$0xff]
      %v878 = vld [vmem:[#allocation2 + $0x62] sm:$0xff]
      %v879 = vld [vmem:[#allocation2 + $0x6a] sm:$0xff]
      %v880 = vld [vmem:[#allocation2 + $0x7a] sm:$0xff]
      %v881 = vld [vmem:[#allocation2 + $0x82] sm:$0xff]
      %v882 = vld [vmem:[#allocation2 + $0x92] sm:$0xff]
      %v883 = vld [vmem:[#allocation2 + $0x9a] sm:$0xff]
      %v884 = vld [vmem:[#allocation2 + $0xaa] sm:$0xff]
      %v885 = vld [vmem:[#allocation2 + $0xb2] sm:$0xff]
      %v886 = vld [vmem:[#allocation2 + $0xc2] sm:$0xff]
      %v887 = vld [vmem:[#allocation2 + $0xca] sm:$0xff]
      %v888 = vld [vmem:[#allocation2 + $0xda] sm:$0xff]
      %v889 = vld [vmem:[#allocation2 + $0xe2] sm:$0xff]
      %v890 = vld [vmem:[#allocation2 + $0xf2] sm:$0xff]
      %v891 = vld [vmem:[#allocation2 + $0xfa] sm:$0xff]
      %v892 = vld [vmem:[#allocation2 + $0x10a] sm:$0xff]
      %v893 = vld [vmem:[#allocation2 + $0x112] sm:$0xff]
      %v894 = vld [vmem:[#allocation2 + $0x122] sm:$0xff]
      %v895 = vld [vmem:[#allocation2 + $0x12a] sm:$0xff]
      %v896 = vld [vmem:[#allocation2 + $0x13a] sm:$0xff]
      %v897 = vld [vmem:[#allocation2 + $0x142] sm:$0xff]
      %v898 = vld [vmem:[#allocation2 + $0x152] sm:$0xff]
      %v899 = vld [vmem:[#allocation2 + $0x15a] sm:$0xff]
      %v900 = vld [vmem:[#allocation2 + $0x16a] sm:$0xff]
      %v901 = vld [vmem:[#allocation2 + $0x172] sm:$0xff]
      %s902 = scalar_lea.vmem %s1, 256
      %v903 = vld [vmem:[%s902] sm:$0xff]
      %v904 = vld [vmem:[%s902 + $0x8] sm:$0xff]
      %v905 = vld [vmem:[%s902 + $0x10] sm:$0xff]
      %v906 = vld [vmem:[%s902 + $0x18] sm:$0xff]
      %v907 = vld [vmem:[%s902 + $0x20] sm:$0xff]
      %v908 = vld [vmem:[%s902 + $0x28] sm:$0xff]
      %v909 = vld [vmem:[%s902 + $0x30] sm:$0xff]
      %v910 = vld [vmem:[%s902 + $0x38] sm:$0xff]
      %v911 = vld [vmem:[%s902 + $0x40] sm:$0xff]
      %v912 = vld [vmem:[%s902 + $0x48] sm:$0xff]
      %v913 = vld [vmem:[%s902 + $0x50] sm:$0xff]
      %v914 = vld [vmem:[%s902 + $0x58] sm:$0xff]
      %v915 = vld [vmem:[%s902 + $0x60] sm:$0xff]
      %v916 = vld [vmem:[%s902 + $0x68] sm:$0xff]
      %v917 = vld [vmem:[%s902 + $0x70] sm:$0xff]
      %v918 = vld [vmem:[%s902 + $0x78] sm:$0xff]
      %919 = vmatpush.msra.mxu0 %v918
      %920 = vmatpush.msra.mxu0 %v917
      %921 = vmatpush.msra.mxu0 %v916
      %922 = vmatpush.msra.mxu0 %v915
      %923 = vmatpush.msra.mxu0 %v914
      %924 = vmatpush.msra.mxu0 %v913
      %925 = vmatpush.msra.mxu0 %v912
      %926 = vmatpush.msra.mxu0 %v911
      %927 = vmatpush.msra.mxu0 %v910
      %928 = vmatpush.msra.mxu0 %v909
      %929 = vmatpush.msra.mxu0 %v908
      %930 = vmatpush.msra.mxu0 %v907
      %931 = vmatpush.msra.mxu0 %v906
      %932 = vmatpush.msra.mxu0 %v905
      %933 = vmatpush.msra.mxu0 %v904
      %934 = vmatpush.msra.mxu0 %v903
      %935 = vmatmul.f32.gmra.mxu0 %v870
      %v936 = vpop.f32.mrf.mxu0
      %v937 = vadd.f32 0.0, %v936
      %938 = vmatmul.f32.gmra.mxu0 %v871
      %v939 = vpop.f32.mrf.mxu0
      %v940 = vadd.f32 0.0, %v939
      %941 = vmatmul.f32.gmra.mxu0 %v872
      %v942 = vpop.f32.mrf.mxu0
      %v943 = vadd.f32 0.0, %v942
      %944 = vmatmul.f32.gmra.mxu0 %v873
      %v945 = vpop.f32.mrf.mxu0
      %v946 = vadd.f32 0.0, %v945
      %947 = vmatmul.f32.gmra.mxu0 %v874
      %v948 = vpop.f32.mrf.mxu0
      %v949 = vadd.f32 0.0, %v948
      %950 = vmatmul.f32.gmra.mxu0 %v875
      %v951 = vpop.f32.mrf.mxu0
      %v952 = vadd.f32 0.0, %v951
      %953 = vmatmul.f32.gmra.mxu0 %v876
      %v954 = vpop.f32.mrf.mxu0
      %v955 = vadd.f32 0.0, %v954
      %956 = vmatmul.f32.gmra.mxu0 %v877
      %v957 = vpop.f32.mrf.mxu0
      %v958 = vadd.f32 0.0, %v957
      %959 = vmatmul.f32.gmra.mxu0 %v878
      %v960 = vpop.f32.mrf.mxu0
      %v961 = vadd.f32 0.0, %v960
      %962 = vmatmul.f32.gmra.mxu0 %v879
      %v963 = vpop.f32.mrf.mxu0
      %v964 = vadd.f32 0.0, %v963
      %965 = vmatmul.f32.gmra.mxu0 %v880
      %v966 = vpop.f32.mrf.mxu0
      %v967 = vadd.f32 0.0, %v966
      %968 = vmatmul.f32.gmra.mxu0 %v881
      %v969 = vpop.f32.mrf.mxu0
      %v970 = vadd.f32 0.0, %v969
      %971 = vmatmul.f32.gmra.mxu0 %v882
      %v972 = vpop.f32.mrf.mxu0
      %v973 = vadd.f32 0.0, %v972
      %974 = vmatmul.f32.gmra.mxu0 %v883
      %v975 = vpop.f32.mrf.mxu0
      %v976 = vadd.f32 0.0, %v975
      %977 = vmatmul.f32.gmra.mxu0 %v884
      %v978 = vpop.f32.mrf.mxu0
      %v979 = vadd.f32 0.0, %v978
      %980 = vmatmul.f32.gmra.mxu0 %v885
      %v981 = vpop.f32.mrf.mxu0
      %v982 = vadd.f32 0.0, %v981
      %983 = vmatmul.f32.gmra.mxu0 %v886
      %v984 = vpop.f32.mrf.mxu0
      %v985 = vadd.f32 0.0, %v984
      %986 = vmatmul.f32.gmra.mxu0 %v887
      %v987 = vpop.f32.mrf.mxu0
      %v988 = vadd.f32 0.0, %v987
      %989 = vmatmul.f32.gmra.mxu0 %v888
      %v990 = vpop.f32.mrf.mxu0
      %v991 = vadd.f32 0.0, %v990
      %992 = vmatmul.f32.gmra.mxu0 %v889
      %v993 = vpop.f32.mrf.mxu0
      %v994 = vadd.f32 0.0, %v993
      %995 = vmatmul.f32.gmra.mxu0 %v890
      %v996 = vpop.f32.mrf.mxu0
      %v997 = vadd.f32 0.0, %v996
      %998 = vmatmul.f32.gmra.mxu0 %v891
      %v999 = vpop.f32.mrf.mxu0
      %v1000 = vadd.f32 0.0, %v999
      %1001 = vmatmul.f32.gmra.mxu0 %v892
      %v1002 = vpop.f32.mrf.mxu0
      %v1003 = vadd.f32 0.0, %v1002
      %1004 = vmatmul.f32.gmra.mxu0 %v893
      %v1005 = vpop.f32.mrf.mxu0
      %v1006 = vadd.f32 0.0, %v1005
      %1007 = vmatmul.f32.gmra.mxu0 %v894
      %v1008 = vpop.f32.mrf.mxu0
      %v1009 = vadd.f32 0.0, %v1008
      %1010 = vmatmul.f32.gmra.mxu0 %v895
      %v1011 = vpop.f32.mrf.mxu0
      %v1012 = vadd.f32 0.0, %v1011
      %1013 = vmatmul.f32.gmra.mxu0 %v896
      %v1014 = vpop.f32.mrf.mxu0
      %v1015 = vadd.f32 0.0, %v1014
      %1016 = vmatmul.f32.gmra.mxu0 %v897
      %v1017 = vpop.f32.mrf.mxu0
      %v1018 = vadd.f32 0.0, %v1017
      %1019 = vmatmul.f32.gmra.mxu0 %v898
      %v1020 = vpop.f32.mrf.mxu0
      %v1021 = vadd.f32 0.0, %v1020
      %1022 = vmatmul.f32.gmra.mxu0 %v899
      %v1023 = vpop.f32.mrf.mxu0
      %v1024 = vadd.f32 0.0, %v1023
      %1025 = vmatmul.f32.gmra.mxu0 %v900
      %v1026 = vpop.f32.mrf.mxu0
      %v1027 = vadd.f32 0.0, %v1026
      %1028 = vmatmul.f32.gmra.mxu0 %v901
      %v1029 = vpop.f32.mrf.mxu0
      %v1030 = vadd.f32 0.0, %v1029
      %1031 = vdwg.mxu0
      %v1032 = vld [vmem:[#allocation4] sm:$0xff]
      %v1033 = vld [vmem:[#allocation4 + $0x8] sm:$0xff]
      %v1034 = vld [vmem:[#allocation4 + $0x10] sm:$0xff]
      %v1035 = vld [vmem:[#allocation4 + $0x18] sm:$0xff]
      %v1036 = vld [vmem:[#allocation4 + $0x20] sm:$0xff]
      %v1037 = vld [vmem:[#allocation4 + $0x28] sm:$0xff]
      %v1038 = vld [vmem:[#allocation4 + $0x30] sm:$0xff]
      %v1039 = vld [vmem:[#allocation4 + $0x38] sm:$0xff]
      %v1040 = vld [vmem:[#allocation4 + $0x40] sm:$0xff]
      %v1041 = vld [vmem:[#allocation4 + $0x48] sm:$0xff]
      %v1042 = vld [vmem:[#allocation4 + $0x50] sm:$0xff]
      %v1043 = vld [vmem:[#allocation4 + $0x58] sm:$0xff]
      %v1044 = vld [vmem:[#allocation4 + $0x60] sm:$0xff]
      %v1045 = vld [vmem:[#allocation4 + $0x68] sm:$0xff]
      %v1046 = vld [vmem:[#allocation4 + $0x70] sm:$0xff]
      %v1047 = vld [vmem:[#allocation4 + $0x78] sm:$0xff]
      %v1048 = vld [vmem:[#allocation4 + $0x80] sm:$0xff]
      %v1049 = vld [vmem:[#allocation4 + $0x88] sm:$0xff]
      %v1050 = vld [vmem:[#allocation4 + $0x90] sm:$0xff]
      %v1051 = vld [vmem:[#allocation4 + $0x98] sm:$0xff]
      %v1052 = vld [vmem:[#allocation4 + $0xa0] sm:$0xff]
      %v1053 = vld [vmem:[#allocation4 + $0xa8] sm:$0xff]
      %v1054 = vld [vmem:[#allocation4 + $0xb0] sm:$0xff]
      %v1055 = vld [vmem:[#allocation4 + $0xb8] sm:$0xff]
      %v1056 = vld [vmem:[#allocation4 + $0xc0] sm:$0xff]
      %v1057 = vld [vmem:[#allocation4 + $0xc8] sm:$0xff]
      %v1058 = vld [vmem:[#allocation4 + $0xd0] sm:$0xff]
      %v1059 = vld [vmem:[#allocation4 + $0xd8] sm:$0xff]
      %v1060 = vld [vmem:[#allocation4 + $0xe0] sm:$0xff]
      %v1061 = vld [vmem:[#allocation4 + $0xe8] sm:$0xff]
      %v1062 = vld [vmem:[#allocation4 + $0xf0] sm:$0xff]
      %v1063 = vld [vmem:[#allocation4 + $0xf8] sm:$0xff]
      %v1064 = vadd.f32 %v1032, %v937
      %v1065 = vadd.f32 %v1033, %v940
      %v1066 = vadd.f32 %v1034, %v943
      %v1067 = vadd.f32 %v1035, %v946
      %v1068 = vadd.f32 %v1036, %v949
      %v1069 = vadd.f32 %v1037, %v952
      %v1070 = vadd.f32 %v1038, %v955
      %v1071 = vadd.f32 %v1039, %v958
      %v1072 = vadd.f32 %v1040, %v961
      %v1073 = vadd.f32 %v1041, %v964
      %v1074 = vadd.f32 %v1042, %v967
      %v1075 = vadd.f32 %v1043, %v970
      %v1076 = vadd.f32 %v1044, %v973
      %v1077 = vadd.f32 %v1045, %v976
      %v1078 = vadd.f32 %v1046, %v979
      %v1079 = vadd.f32 %v1047, %v982
      %v1080 = vadd.f32 %v1048, %v985
      %v1081 = vadd.f32 %v1049, %v988
      %v1082 = vadd.f32 %v1050, %v991
      %v1083 = vadd.f32 %v1051, %v994
      %v1084 = vadd.f32 %v1052, %v997
      %v1085 = vadd.f32 %v1053, %v1000
      %v1086 = vadd.f32 %v1054, %v1003
      %v1087 = vadd.f32 %v1055, %v1006
      %v1088 = vadd.f32 %v1056, %v1009
      %v1089 = vadd.f32 %v1057, %v1012
      %v1090 = vadd.f32 %v1058, %v1015
      %v1091 = vadd.f32 %v1059, %v1018
      %v1092 = vadd.f32 %v1060, %v1021
      %v1093 = vadd.f32 %v1061, %v1024
      %v1094 = vadd.f32 %v1062, %v1027
      %v1095 = vadd.f32 %v1063, %v1030
      %1096 = vst [vmem:[#allocation4] sm:$0xff] %v1064
      %1097 = vst [vmem:[#allocation4 + $0x8] sm:$0xff] %v1065
      %1098 = vst [vmem:[#allocation4 + $0x10] sm:$0xff] %v1066
      %1099 = vst [vmem:[#allocation4 + $0x18] sm:$0xff] %v1067
      %1100 = vst [vmem:[#allocation4 + $0x20] sm:$0xff] %v1068
      %1101 = vst [vmem:[#allocation4 + $0x28] sm:$0xff] %v1069
      %1102 = vst [vmem:[#allocation4 + $0x30] sm:$0xff] %v1070
      %1103 = vst [vmem:[#allocation4 + $0x38] sm:$0xff] %v1071
      %1104 = vst [vmem:[#allocation4 + $0x40] sm:$0xff] %v1072
      %1105 = vst [vmem:[#allocation4 + $0x48] sm:$0xff] %v1073
      %1106 = vst [vmem:[#allocation4 + $0x50] sm:$0xff] %v1074
      %1107 = vst [vmem:[#allocation4 + $0x58] sm:$0xff] %v1075
      %1108 = vst [vmem:[#allocation4 + $0x60] sm:$0xff] %v1076
      %1109 = vst [vmem:[#allocation4 + $0x68] sm:$0xff] %v1077
      %1110 = vst [vmem:[#allocation4 + $0x70] sm:$0xff] %v1078
      %1111 = vst [vmem:[#allocation4 + $0x78] sm:$0xff] %v1079
      %1112 = vst [vmem:[#allocation4 + $0x80] sm:$0xff] %v1080
      %1113 = vst [vmem:[#allocation4 + $0x88] sm:$0xff] %v1081
      %1114 = vst [vmem:[#allocation4 + $0x90] sm:$0xff] %v1082
      %1115 = vst [vmem:[#allocation4 + $0x98] sm:$0xff] %v1083
      %1116 = vst [vmem:[#allocation4 + $0xa0] sm:$0xff] %v1084
      %1117 = vst [vmem:[#allocation4 + $0xa8] sm:$0xff] %v1085
      %1118 = vst [vmem:[#allocation4 + $0xb0] sm:$0xff] %v1086
      %1119 = vst [vmem:[#allocation4 + $0xb8] sm:$0xff] %v1087
      %1120 = vst [vmem:[#allocation4 + $0xc0] sm:$0xff] %v1088
      %1121 = vst [vmem:[#allocation4 + $0xc8] sm:$0xff] %v1089
      %1122 = vst [vmem:[#allocation4 + $0xd0] sm:$0xff] %v1090
      %1123 = vst [vmem:[#allocation4 + $0xd8] sm:$0xff] %v1091
      %1124 = vst [vmem:[#allocation4 + $0xe0] sm:$0xff] %v1092
      %1125 = vst [vmem:[#allocation4 + $0xe8] sm:$0xff] %v1093
      %1126 = vst [vmem:[#allocation4 + $0xf0] sm:$0xff] %v1094
      %1127 = vst [vmem:[#allocation4 + $0xf8] sm:$0xff] %v1095
      %v1128 = vld [vmem:[%s386] sm:$0xff]
      %v1129 = vld [vmem:[%s386 + $0x8] sm:$0xff]
      %v1130 = vld [vmem:[%s386 + $0x18] sm:$0xff]
      %v1131 = vld [vmem:[%s386 + $0x20] sm:$0xff]
      %v1132 = vld [vmem:[%s386 + $0x30] sm:$0xff]
      %v1133 = vld [vmem:[%s386 + $0x38] sm:$0xff]
      %v1134 = vld [vmem:[%s386 + $0x48] sm:$0xff]
      %v1135 = vld [vmem:[%s386 + $0x50] sm:$0xff]
      %v1136 = vld [vmem:[%s386 + $0x60] sm:$0xff]
      %v1137 = vld [vmem:[%s386 + $0x68] sm:$0xff]
      %v1138 = vld [vmem:[%s386 + $0x78] sm:$0xff]
      %v1139 = vld [vmem:[%s386 + $0x80] sm:$0xff]
      %v1140 = vld [vmem:[%s386 + $0x90] sm:$0xff]
      %v1141 = vld [vmem:[%s386 + $0x98] sm:$0xff]
      %v1142 = vld [vmem:[%s386 + $0xa8] sm:$0xff]
      %v1143 = vld [vmem:[%s386 + $0xb0] sm:$0xff]
      %v1144 = vld [vmem:[%s386 + $0xc0] sm:$0xff]
      %v1145 = vld [vmem:[%s386 + $0xc8] sm:$0xff]
      %v1146 = vld [vmem:[%s386 + $0xd8] sm:$0xff]
      %v1147 = vld [vmem:[%s386 + $0xe0] sm:$0xff]
      %v1148 = vld [vmem:[%s386 + $0xf0] sm:$0xff]
      %v1149 = vld [vmem:[%s386 + $0xf8] sm:$0xff]
      %v1150 = vld [vmem:[%s386 + $0x108] sm:$0xff]
      %v1151 = vld [vmem:[%s386 + $0x110] sm:$0xff]
      %v1152 = vld [vmem:[%s386 + $0x120] sm:$0xff]
      %v1153 = vld [vmem:[%s386 + $0x128] sm:$0xff]
      %v1154 = vld [vmem:[%s386 + $0x138] sm:$0xff]
      %v1155 = vld [vmem:[%s386 + $0x140] sm:$0xff]
      %v1156 = vld [vmem:[%s386 + $0x150] sm:$0xff]
      %v1157 = vld [vmem:[%s386 + $0x158] sm:$0xff]
      %v1158 = vld [vmem:[%s386 + $0x168] sm:$0xff]
      %v1159 = vld [vmem:[%s386 + $0x170] sm:$0xff]
      %s1160 = scalar_lea.vmem %s1, 384
      %v1161 = vld [vmem:[%s1160] sm:$0xff]
      %v1162 = vld [vmem:[%s1160 + $0x8] sm:$0xff]
      %v1163 = vld [vmem:[%s1160 + $0x10] sm:$0xff]
      %v1164 = vld [vmem:[%s1160 + $0x18] sm:$0xff]
      %v1165 = vld [vmem:[%s1160 + $0x20] sm:$0xff]
      %v1166 = vld [vmem:[%s1160 + $0x28] sm:$0xff]
      %v1167 = vld [vmem:[%s1160 + $0x30] sm:$0xff]
      %v1168 = vld [vmem:[%s1160 + $0x38] sm:$0xff]
      %v1169 = vld [vmem:[%s1160 + $0x40] sm:$0xff]
      %v1170 = vld [vmem:[%s1160 + $0x48] sm:$0xff]
      %v1171 = vld [vmem:[%s1160 + $0x50] sm:$0xff]
      %v1172 = vld [vmem:[%s1160 + $0x58] sm:$0xff]
      %v1173 = vld [vmem:[%s1160 + $0x60] sm:$0xff]
      %v1174 = vld [vmem:[%s1160 + $0x68] sm:$0xff]
      %v1175 = vld [vmem:[%s1160 + $0x70] sm:$0xff]
      %v1176 = vld [vmem:[%s1160 + $0x78] sm:$0xff]
      %1177 = vmatpush.msra.mxu0 %v1176
      %1178 = vmatpush.msra.mxu0 %v1175
      %1179 = vmatpush.msra.mxu0 %v1174
      %1180 = vmatpush.msra.mxu0 %v1173
      %1181 = vmatpush.msra.mxu0 %v1172
      %1182 = vmatpush.msra.mxu0 %v1171
      %1183 = vmatpush.msra.mxu0 %v1170
      %1184 = vmatpush.msra.mxu0 %v1169
      %1185 = vmatpush.msra.mxu0 %v1168
      %1186 = vmatpush.msra.mxu0 %v1167
      %1187 = vmatpush.msra.mxu0 %v1166
      %1188 = vmatpush.msra.mxu0 %v1165
      %1189 = vmatpush.msra.mxu0 %v1164
      %1190 = vmatpush.msra.mxu0 %v1163
      %1191 = vmatpush.msra.mxu0 %v1162
      %1192 = vmatpush.msra.mxu0 %v1161
      %1193 = vmatmul.f32.gmra.mxu0 %v1128
      %v1194 = vpop.f32.mrf.mxu0
      %v1195 = vadd.f32 0.0, %v1194
      %1196 = vmatmul.f32.gmra.mxu0 %v1129
      %v1197 = vpop.f32.mrf.mxu0
      %v1198 = vadd.f32 0.0, %v1197
      %1199 = vmatmul.f32.gmra.mxu0 %v1130
      %v1200 = vpop.f32.mrf.mxu0
      %v1201 = vadd.f32 0.0, %v1200
      %1202 = vmatmul.f32.gmra.mxu0 %v1131
      %v1203 = vpop.f32.mrf.mxu0
      %v1204 = vadd.f32 0.0, %v1203
      %1205 = vmatmul.f32.gmra.mxu0 %v1132
      %v1206 = vpop.f32.mrf.mxu0
      %v1207 = vadd.f32 0.0, %v1206
      %1208 = vmatmul.f32.gmra.mxu0 %v1133
      %v1209 = vpop.f32.mrf.mxu0
      %v1210 = vadd.f32 0.0, %v1209
      %1211 = vmatmul.f32.gmra.mxu0 %v1134
      %v1212 = vpop.f32.mrf.mxu0
      %v1213 = vadd.f32 0.0, %v1212
      %1214 = vmatmul.f32.gmra.mxu0 %v1135
      %v1215 = vpop.f32.mrf.mxu0
      %v1216 = vadd.f32 0.0, %v1215
      %1217 = vmatmul.f32.gmra.mxu0 %v1136
      %v1218 = vpop.f32.mrf.mxu0
      %v1219 = vadd.f32 0.0, %v1218
      %1220 = vmatmul.f32.gmra.mxu0 %v1137
      %v1221 = vpop.f32.mrf.mxu0
      %v1222 = vadd.f32 0.0, %v1221
      %1223 = vmatmul.f32.gmra.mxu0 %v1138
      %v1224 = vpop.f32.mrf.mxu0
      %v1225 = vadd.f32 0.0, %v1224
      %1226 = vmatmul.f32.gmra.mxu0 %v1139
      %v1227 = vpop.f32.mrf.mxu0
      %v1228 = vadd.f32 0.0, %v1227
      %1229 = vmatmul.f32.gmra.mxu0 %v1140
      %v1230 = vpop.f32.mrf.mxu0
      %v1231 = vadd.f32 0.0, %v1230
      %1232 = vmatmul.f32.gmra.mxu0 %v1141
      %v1233 = vpop.f32.mrf.mxu0
      %v1234 = vadd.f32 0.0, %v1233
      %1235 = vmatmul.f32.gmra.mxu0 %v1142
      %v1236 = vpop.f32.mrf.mxu0
      %v1237 = vadd.f32 0.0, %v1236
      %1238 = vmatmul.f32.gmra.mxu0 %v1143
      %v1239 = vpop.f32.mrf.mxu0
      %v1240 = vadd.f32 0.0, %v1239
      %1241 = vmatmul.f32.gmra.mxu0 %v1144
      %v1242 = vpop.f32.mrf.mxu0
      %v1243 = vadd.f32 0.0, %v1242
      %1244 = vmatmul.f32.gmra.mxu0 %v1145
      %v1245 = vpop.f32.mrf.mxu0
      %v1246 = vadd.f32 0.0, %v1245
      %1247 = vmatmul.f32.gmra.mxu0 %v1146
      %v1248 = vpop.f32.mrf.mxu0
      %v1249 = vadd.f32 0.0, %v1248
      %1250 = vmatmul.f32.gmra.mxu0 %v1147
      %v1251 = vpop.f32.mrf.mxu0
      %v1252 = vadd.f32 0.0, %v1251
      %1253 = vmatmul.f32.gmra.mxu0 %v1148
      %v1254 = vpop.f32.mrf.mxu0
      %v1255 = vadd.f32 0.0, %v1254
      %1256 = vmatmul.f32.gmra.mxu0 %v1149
      %v1257 = vpop.f32.mrf.mxu0
      %v1258 = vadd.f32 0.0, %v1257
      %1259 = vmatmul.f32.gmra.mxu0 %v1150
      %v1260 = vpop.f32.mrf.mxu0
      %v1261 = vadd.f32 0.0, %v1260
      %1262 = vmatmul.f32.gmra.mxu0 %v1151
      %v1263 = vpop.f32.mrf.mxu0
      %v1264 = vadd.f32 0.0, %v1263
      %1265 = vmatmul.f32.gmra.mxu0 %v1152
      %v1266 = vpop.f32.mrf.mxu0
      %v1267 = vadd.f32 0.0, %v1266
      %1268 = vmatmul.f32.gmra.mxu0 %v1153
      %v1269 = vpop.f32.mrf.mxu0
      %v1270 = vadd.f32 0.0, %v1269
      %1271 = vmatmul.f32.gmra.mxu0 %v1154
      %v1272 = vpop.f32.mrf.mxu0
      %v1273 = vadd.f32 0.0, %v1272
      %1274 = vmatmul.f32.gmra.mxu0 %v1155
      %v1275 = vpop.f32.mrf.mxu0
      %v1276 = vadd.f32 0.0, %v1275
      %1277 = vmatmul.f32.gmra.mxu0 %v1156
      %v1278 = vpop.f32.mrf.mxu0
      %v1279 = vadd.f32 0.0, %v1278
      %1280 = vmatmul.f32.gmra.mxu0 %v1157
      %v1281 = vpop.f32.mrf.mxu0
      %v1282 = vadd.f32 0.0, %v1281
      %1283 = vmatmul.f32.gmra.mxu0 %v1158
      %v1284 = vpop.f32.mrf.mxu0
      %v1285 = vadd.f32 0.0, %v1284
      %1286 = vmatmul.f32.gmra.mxu0 %v1159
      %v1287 = vpop.f32.mrf.mxu0
      %v1288 = vadd.f32 0.0, %v1287
      %1289 = vdwg.mxu0
      %v1290 = vld [vmem:[#allocation4] sm:$0xff]
      %v1291 = vld [vmem:[#allocation4 + $0x8] sm:$0xff]
      %v1292 = vld [vmem:[#allocation4 + $0x10] sm:$0xff]
      %v1293 = vld [vmem:[#allocation4 + $0x18] sm:$0xff]
      %v1294 = vld [vmem:[#allocation4 + $0x20] sm:$0xff]
      %v1295 = vld [vmem:[#allocation4 + $0x28] sm:$0xff]
      %v1296 = vld [vmem:[#allocation4 + $0x30] sm:$0xff]
      %v1297 = vld [vmem:[#allocation4 + $0x38] sm:$0xff]
      %v1298 = vld [vmem:[#allocation4 + $0x40] sm:$0xff]
      %v1299 = vld [vmem:[#allocation4 + $0x48] sm:$0xff]
      %v1300 = vld [vmem:[#allocation4 + $0x50] sm:$0xff]
      %v1301 = vld [vmem:[#allocation4 + $0x58] sm:$0xff]
      %v1302 = vld [vmem:[#allocation4 + $0x60] sm:$0xff]
      %v1303 = vld [vmem:[#allocation4 + $0x68] sm:$0xff]
      %v1304 = vld [vmem:[#allocation4 + $0x70] sm:$0xff]
      %v1305 = vld [vmem:[#allocation4 + $0x78] sm:$0xff]
      %v1306 = vld [vmem:[#allocation4 + $0x80] sm:$0xff]
      %v1307 = vld [vmem:[#allocation4 + $0x88] sm:$0xff]
      %v1308 = vld [vmem:[#allocation4 + $0x90] sm:$0xff]
      %v1309 = vld [vmem:[#allocation4 + $0x98] sm:$0xff]
      %v1310 = vld [vmem:[#allocation4 + $0xa0] sm:$0xff]
      %v1311 = vld [vmem:[#allocation4 + $0xa8] sm:$0xff]
      %v1312 = vld [vmem:[#allocation4 + $0xb0] sm:$0xff]
      %v1313 = vld [vmem:[#allocation4 + $0xb8] sm:$0xff]
      %v1314 = vld [vmem:[#allocation4 + $0xc0] sm:$0xff]
      %v1315 = vld [vmem:[#allocation4 + $0xc8] sm:$0xff]
      %v1316 = vld [vmem:[#allocation4 + $0xd0] sm:$0xff]
      %v1317 = vld [vmem:[#allocation4 + $0xd8] sm:$0xff]
      %v1318 = vld [vmem:[#allocation4 + $0xe0] sm:$0xff]
      %v1319 = vld [vmem:[#allocation4 + $0xe8] sm:$0xff]
      %v1320 = vld [vmem:[#allocation4 + $0xf0] sm:$0xff]
      %v1321 = vld [vmem:[#allocation4 + $0xf8] sm:$0xff]
      %v1322 = vadd.f32 %v1290, %v1195
      %v1323 = vadd.f32 %v1291, %v1198
      %v1324 = vadd.f32 %v1292, %v1201
      %v1325 = vadd.f32 %v1293, %v1204
      %v1326 = vadd.f32 %v1294, %v1207
      %v1327 = vadd.f32 %v1295, %v1210
      %v1328 = vadd.f32 %v1296, %v1213
      %v1329 = vadd.f32 %v1297, %v1216
      %v1330 = vadd.f32 %v1298, %v1219
      %v1331 = vadd.f32 %v1299, %v1222
      %v1332 = vadd.f32 %v1300, %v1225
      %v1333 = vadd.f32 %v1301, %v1228
      %v1334 = vadd.f32 %v1302, %v1231
      %v1335 = vadd.f32 %v1303, %v1234
      %v1336 = vadd.f32 %v1304, %v1237
      %v1337 = vadd.f32 %v1305, %v1240
      %v1338 = vadd.f32 %v1306, %v1243
      %v1339 = vadd.f32 %v1307, %v1246
      %v1340 = vadd.f32 %v1308, %v1249
      %v1341 = vadd.f32 %v1309, %v1252
      %v1342 = vadd.f32 %v1310, %v1255
      %v1343 = vadd.f32 %v1311, %v1258
      %v1344 = vadd.f32 %v1312, %v1261
      %v1345 = vadd.f32 %v1313, %v1264
      %v1346 = vadd.f32 %v1314, %v1267
      %v1347 = vadd.f32 %v1315, %v1270
      %v1348 = vadd.f32 %v1316, %v1273
      %v1349 = vadd.f32 %v1317, %v1276
      %v1350 = vadd.f32 %v1318, %v1279
      %v1351 = vadd.f32 %v1319, %v1282
      %v1352 = vadd.f32 %v1320, %v1285
      %v1353 = vadd.f32 %v1321, %v1288
      %1354 = vst [vmem:[#allocation4] sm:$0xff] %v1322
      %1355 = vst [vmem:[#allocation4 + $0x8] sm:$0xff] %v1323
      %1356 = vst [vmem:[#allocation4 + $0x10] sm:$0xff] %v1324
      %1357 = vst [vmem:[#allocation4 + $0x18] sm:$0xff] %v1325
      %1358 = vst [vmem:[#allocation4 + $0x20] sm:$0xff] %v1326
      %1359 = vst [vmem:[#allocation4 + $0x28] sm:$0xff] %v1327
      %1360 = vst [vmem:[#allocation4 + $0x30] sm:$0xff] %v1328
      %1361 = vst [vmem:[#allocation4 + $0x38] sm:$0xff] %v1329
      %1362 = vst [vmem:[#allocation4 + $0x40] sm:$0xff] %v1330
      %1363 = vst [vmem:[#allocation4 + $0x48] sm:$0xff] %v1331
      %1364 = vst [vmem:[#allocation4 + $0x50] sm:$0xff] %v1332
      %1365 = vst [vmem:[#allocation4 + $0x58] sm:$0xff] %v1333
      %1366 = vst [vmem:[#allocation4 + $0x60] sm:$0xff] %v1334
      %1367 = vst [vmem:[#allocation4 + $0x68] sm:$0xff] %v1335
      %1368 = vst [vmem:[#allocation4 + $0x70] sm:$0xff] %v1336
      %1369 = vst [vmem:[#allocation4 + $0x78] sm:$0xff] %v1337
      %1370 = vst [vmem:[#allocation4 + $0x80] sm:$0xff] %v1338
      %1371 = vst [vmem:[#allocation4 + $0x88] sm:$0xff] %v1339
      %1372 = vst [vmem:[#allocation4 + $0x90] sm:$0xff] %v1340
      %1373 = vst [vmem:[#allocation4 + $0x98] sm:$0xff] %v1341
      %1374 = vst [vmem:[#allocation4 + $0xa0] sm:$0xff] %v1342
      %1375 = vst [vmem:[#allocation4 + $0xa8] sm:$0xff] %v1343
      %1376 = vst [vmem:[#allocation4 + $0xb0] sm:$0xff] %v1344
      %1377 = vst [vmem:[#allocation4 + $0xb8] sm:$0xff] %v1345
      %1378 = vst [vmem:[#allocation4 + $0xc0] sm:$0xff] %v1346
      %1379 = vst [vmem:[#allocation4 + $0xc8] sm:$0xff] %v1347
      %1380 = vst [vmem:[#allocation4 + $0xd0] sm:$0xff] %v1348
      %1381 = vst [vmem:[#allocation4 + $0xd8] sm:$0xff] %v1349
      %1382 = vst [vmem:[#allocation4 + $0xe0] sm:$0xff] %v1350
      %1383 = vst [vmem:[#allocation4 + $0xe8] sm:$0xff] %v1351
      %1384 = vst [vmem:[#allocation4 + $0xf0] sm:$0xff] %v1352
      %1385 = vst [vmem:[#allocation4 + $0xf8] sm:$0xff] %v1353
      %v1386 = vld [vmem:[%s386 + $0x1] sm:$0xff]
      %v1387 = vld [vmem:[%s386 + $0x9] sm:$0xff]
      %v1388 = vld [vmem:[%s386 + $0x19] sm:$0xff]
      %v1389 = vld [vmem:[%s386 + $0x21] sm:$0xff]
      %v1390 = vld [vmem:[%s386 + $0x31] sm:$0xff]
      %v1391 = vld [vmem:[%s386 + $0x39] sm:$0xff]
      %v1392 = vld [vmem:[%s386 + $0x49] sm:$0xff]
      %v1393 = vld [vmem:[%s386 + $0x51] sm:$0xff]
      %v1394 = vld [vmem:[%s386 + $0x61] sm:$0xff]
      %v1395 = vld [vmem:[%s386 + $0x69] sm:$0xff]
      %v1396 = vld [vmem:[%s386 + $0x79] sm:$0xff]
      %v1397 = vld [vmem:[%s386 + $0x81] sm:$0xff]
      %v1398 = vld [vmem:[%s386 + $0x91] sm:$0xff]
      %v1399 = vld [vmem:[%s386 + $0x99] sm:$0xff]
      %v1400 = vld [vmem:[%s386 + $0xa9] sm:$0xff]
      %v1401 = vld [vmem:[%s386 + $0xb1] sm:$0xff]
      %v1402 = vld [vmem:[%s386 + $0xc1] sm:$0xff]
      %v1403 = vld [vmem:[%s386 + $0xc9] sm:$0xff]
      %v1404 = vld [vmem:[%s386 + $0xd9] sm:$0xff]
      %v1405 = vld [vmem:[%s386 + $0xe1] sm:$0xff]
      %v1406 = vld [vmem:[%s386 + $0xf1] sm:$0xff]
      %v1407 = vld [vmem:[%s386 + $0xf9] sm:$0xff]
      %v1408 = vld [vmem:[%s386 + $0x109] sm:$0xff]
      %v1409 = vld [vmem:[%s386 + $0x111] sm:$0xff]
      %v1410 = vld [vmem:[%s386 + $0x121] sm:$0xff]
      %v1411 = vld [vmem:[%s386 + $0x129] sm:$0xff]
      %v1412 = vld [vmem:[%s386 + $0x139] sm:$0xff]
      %v1413 = vld [vmem:[%s386 + $0x141] sm:$0xff]
      %v1414 = vld [vmem:[%s386 + $0x151] sm:$0xff]
      %v1415 = vld [vmem:[%s386 + $0x159] sm:$0xff]
      %v1416 = vld [vmem:[%s386 + $0x169] sm:$0xff]
      %v1417 = vld [vmem:[%s386 + $0x171] sm:$0xff]
      %s1418 = scalar_lea.vmem %s1, 512
      %v1419 = vld [vmem:[%s1418] sm:$0xff]
      %v1420 = vld [vmem:[%s1418 + $0x8] sm:$0xff]
      %v1421 = vld [vmem:[%s1418 + $0x10] sm:$0xff]
      %v1422 = vld [vmem:[%s1418 + $0x18] sm:$0xff]
      %v1423 = vld [vmem:[%s1418 + $0x20] sm:$0xff]
      %v1424 = vld [vmem:[%s1418 + $0x28] sm:$0xff]
      %v1425 = vld [vmem:[%s1418 + $0x30] sm:$0xff]
      %v1426 = vld [vmem:[%s1418 + $0x38] sm:$0xff]
      %v1427 = vld [vmem:[%s1418 + $0x40] sm:$0xff]
      %v1428 = vld [vmem:[%s1418 + $0x48] sm:$0xff]
      %v1429 = vld [vmem:[%s1418 + $0x50] sm:$0xff]
      %v1430 = vld [vmem:[%s1418 + $0x58] sm:$0xff]
      %v1431 = vld [vmem:[%s1418 + $0x60] sm:$0xff]
      %v1432 = vld [vmem:[%s1418 + $0x68] sm:$0xff]
      %v1433 = vld [vmem:[%s1418 + $0x70] sm:$0xff]
      %v1434 = vld [vmem:[%s1418 + $0x78] sm:$0xff]
      %1435 = vmatpush.msra.mxu0 %v1434
      %1436 = vmatpush.msra.mxu0 %v1433
      %1437 = vmatpush.msra.mxu0 %v1432
      %1438 = vmatpush.msra.mxu0 %v1431
      %1439 = vmatpush.msra.mxu0 %v1430
      %1440 = vmatpush.msra.mxu0 %v1429
      %1441 = vmatpush.msra.mxu0 %v1428
      %1442 = vmatpush.msra.mxu0 %v1427
      %1443 = vmatpush.msra.mxu0 %v1426
      %1444 = vmatpush.msra.mxu0 %v1425
      %1445 = vmatpush.msra.mxu0 %v1424
      %1446 = vmatpush.msra.mxu0 %v1423
      %1447 = vmatpush.msra.mxu0 %v1422
      %1448 = vmatpush.msra.mxu0 %v1421
      %1449 = vmatpush.msra.mxu0 %v1420
      %1450 = vmatpush.msra.mxu0 %v1419
      %1451 = vmatmul.f32.gmra.mxu0 %v1386
      %v1452 = vpop.f32.mrf.mxu0
      %v1453 = vadd.f32 0.0, %v1452
      %1454 = vmatmul.f32.gmra.mxu0 %v1387
      %v1455 = vpop.f32.mrf.mxu0
      %v1456 = vadd.f32 0.0, %v1455
      %1457 = vmatmul.f32.gmra.mxu0 %v1388
      %v1458 = vpop.f32.mrf.mxu0
      %v1459 = vadd.f32 0.0, %v1458
      %1460 = vmatmul.f32.gmra.mxu0 %v1389
      %v1461 = vpop.f32.mrf.mxu0
      %v1462 = vadd.f32 0.0, %v1461
      %1463 = vmatmul.f32.gmra.mxu0 %v1390
      %v1464 = vpop.f32.mrf.mxu0
      %v1465 = vadd.f32 0.0, %v1464
      %1466 = vmatmul.f32.gmra.mxu0 %v1391
      %v1467 = vpop.f32.mrf.mxu0
      %v1468 = vadd.f32 0.0, %v1467
      %1469 = vmatmul.f32.gmra.mxu0 %v1392
      %v1470 = vpop.f32.mrf.mxu0
      %v1471 = vadd.f32 0.0, %v1470
      %1472 = vmatmul.f32.gmra.mxu0 %v1393
      %v1473 = vpop.f32.mrf.mxu0
      %v1474 = vadd.f32 0.0, %v1473
      %1475 = vmatmul.f32.gmra.mxu0 %v1394
      %v1476 = vpop.f32.mrf.mxu0
      %v1477 = vadd.f32 0.0, %v1476
      %1478 = vmatmul.f32.gmra.mxu0 %v1395
      %v1479 = vpop.f32.mrf.mxu0
      %v1480 = vadd.f32 0.0, %v1479
      %1481 = vmatmul.f32.gmra.mxu0 %v1396
      %v1482 = vpop.f32.mrf.mxu0
      %v1483 = vadd.f32 0.0, %v1482
      %1484 = vmatmul.f32.gmra.mxu0 %v1397
      %v1485 = vpop.f32.mrf.mxu0
      %v1486 = vadd.f32 0.0, %v1485
      %1487 = vmatmul.f32.gmra.mxu0 %v1398
      %v1488 = vpop.f32.mrf.mxu0
      %v1489 = vadd.f32 0.0, %v1488
      %1490 = vmatmul.f32.gmra.mxu0 %v1399
      %v1491 = vpop.f32.mrf.mxu0
      %v1492 = vadd.f32 0.0, %v1491
      %1493 = vmatmul.f32.gmra.mxu0 %v1400
      %v1494 = vpop.f32.mrf.mxu0
      %v1495 = vadd.f32 0.0, %v1494
      %1496 = vmatmul.f32.gmra.mxu0 %v1401
      %v1497 = vpop.f32.mrf.mxu0
      %v1498 = vadd.f32 0.0, %v1497
      %1499 = vmatmul.f32.gmra.mxu0 %v1402
      %v1500 = vpop.f32.mrf.mxu0
      %v1501 = vadd.f32 0.0, %v1500
      %1502 = vmatmul.f32.gmra.mxu0 %v1403
      %v1503 = vpop.f32.mrf.mxu0
      %v1504 = vadd.f32 0.0, %v1503
      %1505 = vmatmul.f32.gmra.mxu0 %v1404
      %v1506 = vpop.f32.mrf.mxu0
      %v1507 = vadd.f32 0.0, %v1506
      %1508 = vmatmul.f32.gmra.mxu0 %v1405
      %v1509 = vpop.f32.mrf.mxu0
      %v1510 = vadd.f32 0.0, %v1509
      %1511 = vmatmul.f32.gmra.mxu0 %v1406
      %v1512 = vpop.f32.mrf.mxu0
      %v1513 = vadd.f32 0.0, %v1512
      %1514 = vmatmul.f32.gmra.mxu0 %v1407
      %v1515 = vpop.f32.mrf.mxu0
      %v1516 = vadd.f32 0.0, %v1515
      %1517 = vmatmul.f32.gmra.mxu0 %v1408
      %v1518 = vpop.f32.mrf.mxu0
      %v1519 = vadd.f32 0.0, %v1518
      %1520 = vmatmul.f32.gmra.mxu0 %v1409
      %v1521 = vpop.f32.mrf.mxu0
      %v1522 = vadd.f32 0.0, %v1521
      %1523 = vmatmul.f32.gmra.mxu0 %v1410
      %v1524 = vpop.f32.mrf.mxu0
      %v1525 = vadd.f32 0.0, %v1524
      %1526 = vmatmul.f32.gmra.mxu0 %v1411
      %v1527 = vpop.f32.mrf.mxu0
      %v1528 = vadd.f32 0.0, %v1527
      %1529 = vmatmul.f32.gmra.mxu0 %v1412
      %v1530 = vpop.f32.mrf.mxu0
      %v1531 = vadd.f32 0.0, %v1530
      %1532 = vmatmul.f32.gmra.mxu0 %v1413
      %v1533 = vpop.f32.mrf.mxu0
      %v1534 = vadd.f32 0.0, %v1533
      %1535 = vmatmul.f32.gmra.mxu0 %v1414
      %v1536 = vpop.f32.mrf.mxu0
      %v1537 = vadd.f32 0.0, %v1536
      %1538 = vmatmul.f32.gmra.mxu0 %v1415
      %v1539 = vpop.f32.mrf.mxu0
      %v1540 = vadd.f32 0.0, %v1539
      %1541 = vmatmul.f32.gmra.mxu0 %v1416
      %v1542 = vpop.f32.mrf.mxu0
      %v1543 = vadd.f32 0.0, %v1542
      %1544 = vmatmul.f32.gmra.mxu0 %v1417
      %v1545 = vpop.f32.mrf.mxu0
      %v1546 = vadd.f32 0.0, %v1545
      %1547 = vdwg.mxu0
      %v1548 = vld [vmem:[#allocation4] sm:$0xff]
      %v1549 = vld [vmem:[#allocation4 + $0x8] sm:$0xff]
      %v1550 = vld [vmem:[#allocation4 + $0x10] sm:$0xff]
      %v1551 = vld [vmem:[#allocation4 + $0x18] sm:$0xff]
      %v1552 = vld [vmem:[#allocation4 + $0x20] sm:$0xff]
      %v1553 = vld [vmem:[#allocation4 + $0x28] sm:$0xff]
      %v1554 = vld [vmem:[#allocation4 + $0x30] sm:$0xff]
      %v1555 = vld [vmem:[#allocation4 + $0x38] sm:$0xff]
      %v1556 = vld [vmem:[#allocation4 + $0x40] sm:$0xff]
      %v1557 = vld [vmem:[#allocation4 + $0x48] sm:$0xff]
      %v1558 = vld [vmem:[#allocation4 + $0x50] sm:$0xff]
      %v1559 = vld [vmem:[#allocation4 + $0x58] sm:$0xff]
      %v1560 = vld [vmem:[#allocation4 + $0x60] sm:$0xff]
      %v1561 = vld [vmem:[#allocation4 + $0x68] sm:$0xff]
      %v1562 = vld [vmem:[#allocation4 + $0x70] sm:$0xff]
      %v1563 = vld [vmem:[#allocation4 + $0x78] sm:$0xff]
      %v1564 = vld [vmem:[#allocation4 + $0x80] sm:$0xff]
      %v1565 = vld [vmem:[#allocation4 + $0x88] sm:$0xff]
      %v1566 = vld [vmem:[#allocation4 + $0x90] sm:$0xff]
      %v1567 = vld [vmem:[#allocation4 + $0x98] sm:$0xff]
      %v1568 = vld [vmem:[#allocation4 + $0xa0] sm:$0xff]
      %v1569 = vld [vmem:[#allocation4 + $0xa8] sm:$0xff]
      %v1570 = vld [vmem:[#allocation4 + $0xb0] sm:$0xff]
      %v1571 = vld [vmem:[#allocation4 + $0xb8] sm:$0xff]
      %v1572 = vld [vmem:[#allocation4 + $0xc0] sm:$0xff]
      %v1573 = vld [vmem:[#allocation4 + $0xc8] sm:$0xff]
      %v1574 = vld [vmem:[#allocation4 + $0xd0] sm:$0xff]
      %v1575 = vld [vmem:[#allocation4 + $0xd8] sm:$0xff]
      %v1576 = vld [vmem:[#allocation4 + $0xe0] sm:$0xff]
      %v1577 = vld [vmem:[#allocation4 + $0xe8] sm:$0xff]
      %v1578 = vld [vmem:[#allocation4 + $0xf0] sm:$0xff]
      %v1579 = vld [vmem:[#allocation4 + $0xf8] sm:$0xff]
      %v1580 = vadd.f32 %v1548, %v1453
      %v1581 = vadd.f32 %v1549, %v1456
      %v1582 = vadd.f32 %v1550, %v1459
      %v1583 = vadd.f32 %v1551, %v1462
      %v1584 = vadd.f32 %v1552, %v1465
      %v1585 = vadd.f32 %v1553, %v1468
      %v1586 = vadd.f32 %v1554, %v1471
      %v1587 = vadd.f32 %v1555, %v1474
      %v1588 = vadd.f32 %v1556, %v1477
      %v1589 = vadd.f32 %v1557, %v1480
      %v1590 = vadd.f32 %v1558, %v1483
      %v1591 = vadd.f32 %v1559, %v1486
      %v1592 = vadd.f32 %v1560, %v1489
      %v1593 = vadd.f32 %v1561, %v1492
      %v1594 = vadd.f32 %v1562, %v1495
      %v1595 = vadd.f32 %v1563, %v1498
      %v1596 = vadd.f32 %v1564, %v1501
      %v1597 = vadd.f32 %v1565, %v1504
      %v1598 = vadd.f32 %v1566, %v1507
      %v1599 = vadd.f32 %v1567, %v1510
      %v1600 = vadd.f32 %v1568, %v1513
      %v1601 = vadd.f32 %v1569, %v1516
      %v1602 = vadd.f32 %v1570, %v1519
      %v1603 = vadd.f32 %v1571, %v1522
      %v1604 = vadd.f32 %v1572, %v1525
      %v1605 = vadd.f32 %v1573, %v1528
      %v1606 = vadd.f32 %v1574, %v1531
      %v1607 = vadd.f32 %v1575, %v1534
      %v1608 = vadd.f32 %v1576, %v1537
      %v1609 = vadd.f32 %v1577, %v1540
      %v1610 = vadd.f32 %v1578, %v1543
      %v1611 = vadd.f32 %v1579, %v1546
      %1612 = vst [vmem:[#allocation4] sm:$0xff] %v1580
      %1613 = vst [vmem:[#allocation4 + $0x8] sm:$0xff] %v1581
      %1614 = vst [vmem:[#allocation4 + $0x10] sm:$0xff] %v1582
      %1615 = vst [vmem:[#allocation4 + $0x18] sm:$0xff] %v1583
      %1616 = vst [vmem:[#allocation4 + $0x20] sm:$0xff] %v1584
      %1617 = vst [vmem:[#allocation4 + $0x28] sm:$0xff] %v1585
      %1618 = vst [vmem:[#allocation4 + $0x30] sm:$0xff] %v1586
      %1619 = vst [vmem:[#allocation4 + $0x38] sm:$0xff] %v1587
      %1620 = vst [vmem:[#allocation4 + $0x40] sm:$0xff] %v1588
      %1621 = vst [vmem:[#allocation4 + $0x48] sm:$0xff] %v1589
      %1622 = vst [vmem:[#allocation4 + $0x50] sm:$0xff] %v1590
      %1623 = vst [vmem:[#allocation4 + $0x58] sm:$0xff] %v1591
      %1624 = vst [vmem:[#allocation4 + $0x60] sm:$0xff] %v1592
      %1625 = vst [vmem:[#allocation4 + $0x68] sm:$0xff] %v1593
      %1626 = vst [vmem:[#allocation4 + $0x70] sm:$0xff] %v1594
      %1627 = vst [vmem:[#allocation4 + $0x78] sm:$0xff] %v1595
      %1628 = vst [vmem:[#allocation4 + $0x80] sm:$0xff] %v1596
      %1629 = vst [vmem:[#allocation4 + $0x88] sm:$0xff] %v1597
      %1630 = vst [vmem:[#allocation4 + $0x90] sm:$0xff] %v1598
      %1631 = vst [vmem:[#allocation4 + $0x98] sm:$0xff] %v1599
      %1632 = vst [vmem:[#allocation4 + $0xa0] sm:$0xff] %v1600
      %1633 = vst [vmem:[#allocation4 + $0xa8] sm:$0xff] %v1601
      %1634 = vst [vmem:[#allocation4 + $0xb0] sm:$0xff] %v1602
      %1635 = vst [vmem:[#allocation4 + $0xb8] sm:$0xff] %v1603
      %1636 = vst [vmem:[#allocation4 + $0xc0] sm:$0xff] %v1604
      %1637 = vst [vmem:[#allocation4 + $0xc8] sm:$0xff] %v1605
      %1638 = vst [vmem:[#allocation4 + $0xd0] sm:$0xff] %v1606
      %1639 = vst [vmem:[#allocation4 + $0xd8] sm:$0xff] %v1607
      %1640 = vst [vmem:[#allocation4 + $0xe0] sm:$0xff] %v1608
      %1641 = vst [vmem:[#allocation4 + $0xe8] sm:$0xff] %v1609
      %1642 = vst [vmem:[#allocation4 + $0xf0] sm:$0xff] %v1610
      %1643 = vst [vmem:[#allocation4 + $0xf8] sm:$0xff] %v1611
      %v1644 = vld [vmem:[%s386 + $0x2] sm:$0xff]
      %v1645 = vld [vmem:[%s386 + $0xa] sm:$0xff]
      %v1646 = vld [vmem:[%s386 + $0x1a] sm:$0xff]
      %v1647 = vld [vmem:[%s386 + $0x22] sm:$0xff]
      %v1648 = vld [vmem:[%s386 + $0x32] sm:$0xff]
      %v1649 = vld [vmem:[%s386 + $0x3a] sm:$0xff]
      %v1650 = vld [vmem:[%s386 + $0x4a] sm:$0xff]
      %v1651 = vld [vmem:[%s386 + $0x52] sm:$0xff]
      %v1652 = vld [vmem:[%s386 + $0x62] sm:$0xff]
      %v1653 = vld [vmem:[%s386 + $0x6a] sm:$0xff]
      %v1654 = vld [vmem:[%s386 + $0x7a] sm:$0xff]
      %v1655 = vld [vmem:[%s386 + $0x82] sm:$0xff]
      %v1656 = vld [vmem:[%s386 + $0x92] sm:$0xff]
      %v1657 = vld [vmem:[%s386 + $0x9a] sm:$0xff]
      %v1658 = vld [vmem:[%s386 + $0xaa] sm:$0xff]
      %v1659 = vld [vmem:[%s386 + $0xb2] sm:$0xff]
      %v1660 = vld [vmem:[%s386 + $0xc2] sm:$0xff]
      %v1661 = vld [vmem:[%s386 + $0xca] sm:$0xff]
      %v1662 = vld [vmem:[%s386 + $0xda] sm:$0xff]
      %v1663 = vld [vmem:[%s386 + $0xe2] sm:$0xff]
      %v1664 = vld [vmem:[%s386 + $0xf2] sm:$0xff]
      %v1665 = vld [vmem:[%s386 + $0xfa] sm:$0xff]
      %v1666 = vld [vmem:[%s386 + $0x10a] sm:$0xff]
      %v1667 = vld [vmem:[%s386 + $0x112] sm:$0xff]
      %v1668 = vld [vmem:[%s386 + $0x122] sm:$0xff]
      %v1669 = vld [vmem:[%s386 + $0x12a] sm:$0xff]
      %v1670 = vld [vmem:[%s386 + $0x13a] sm:$0xff]
      %v1671 = vld [vmem:[%s386 + $0x142] sm:$0xff]
      %v1672 = vld [vmem:[%s386 + $0x152] sm:$0xff]
      %v1673 = vld [vmem:[%s386 + $0x15a] sm:$0xff]
      %v1674 = vld [vmem:[%s386 + $0x16a] sm:$0xff]
      %v1675 = vld [vmem:[%s386 + $0x172] sm:$0xff]
      %s1676 = scalar_lea.vmem %s1, 640
      %v1677 = vld [vmem:[%s1676] sm:$0xff]
      %v1678 = vld [vmem:[%s1676 + $0x8] sm:$0xff]
      %v1679 = vld [vmem:[%s1676 + $0x10] sm:$0xff]
      %v1680 = vld [vmem:[%s1676 + $0x18] sm:$0xff]
      %v1681 = vld [vmem:[%s1676 + $0x20] sm:$0xff]
      %v1682 = vld [vmem:[%s1676 + $0x28] sm:$0xff]
      %v1683 = vld [vmem:[%s1676 + $0x30] sm:$0xff]
      %v1684 = vld [vmem:[%s1676 + $0x38] sm:$0xff]
      %v1685 = vld [vmem:[%s1676 + $0x40] sm:$0xff]
      %v1686 = vld [vmem:[%s1676 + $0x48] sm:$0xff]
      %v1687 = vld [vmem:[%s1676 + $0x50] sm:$0xff]
      %v1688 = vld [vmem:[%s1676 + $0x58] sm:$0xff]
      %v1689 = vld [vmem:[%s1676 + $0x60] sm:$0xff]
      %v1690 = vld [vmem:[%s1676 + $0x68] sm:$0xff]
      %v1691 = vld [vmem:[%s1676 + $0x70] sm:$0xff]
      %v1692 = vld [vmem:[%s1676 + $0x78] sm:$0xff]
      %1693 = vmatpush.msra.mxu0 %v1692
      %1694 = vmatpush.msra.mxu0 %v1691
      %1695 = vmatpush.msra.mxu0 %v1690
      %1696 = vmatpush.msra.mxu0 %v1689
      %1697 = vmatpush.msra.mxu0 %v1688
      %1698 = vmatpush.msra.mxu0 %v1687
      %1699 = vmatpush.msra.mxu0 %v1686
      %1700 = vmatpush.msra.mxu0 %v1685
      %1701 = vmatpush.msra.mxu0 %v1684
      %1702 = vmatpush.msra.mxu0 %v1683
      %1703 = vmatpush.msra.mxu0 %v1682
      %1704 = vmatpush.msra.mxu0 %v1681
      %1705 = vmatpush.msra.mxu0 %v1680
      %1706 = vmatpush.msra.mxu0 %v1679
      %1707 = vmatpush.msra.mxu0 %v1678
      %1708 = vmatpush.msra.mxu0 %v1677
      %1709 = vmatmul.f32.gmra.mxu0 %v1644
      %v1710 = vpop.f32.mrf.mxu0
      %v1711 = vadd.f32 0.0, %v1710
      %1712 = vmatmul.f32.gmra.mxu0 %v1645
      %v1713 = vpop.f32.mrf.mxu0
      %v1714 = vadd.f32 0.0, %v1713
      %1715 = vmatmul.f32.gmra.mxu0 %v1646
      %v1716 = vpop.f32.mrf.mxu0
      %v1717 = vadd.f32 0.0, %v1716
      %1718 = vmatmul.f32.gmra.mxu0 %v1647
      %v1719 = vpop.f32.mrf.mxu0
      %v1720 = vadd.f32 0.0, %v1719
      %1721 = vmatmul.f32.gmra.mxu0 %v1648
      %v1722 = vpop.f32.mrf.mxu0
      %v1723 = vadd.f32 0.0, %v1722
      %1724 = vmatmul.f32.gmra.mxu0 %v1649
      %v1725 = vpop.f32.mrf.mxu0
      %v1726 = vadd.f32 0.0, %v1725
      %1727 = vmatmul.f32.gmra.mxu0 %v1650
      %v1728 = vpop.f32.mrf.mxu0
      %v1729 = vadd.f32 0.0, %v1728
      %1730 = vmatmul.f32.gmra.mxu0 %v1651
      %v1731 = vpop.f32.mrf.mxu0
      %v1732 = vadd.f32 0.0, %v1731
      %1733 = vmatmul.f32.gmra.mxu0 %v1652
      %v1734 = vpop.f32.mrf.mxu0
      %v1735 = vadd.f32 0.0, %v1734
      %1736 = vmatmul.f32.gmra.mxu0 %v1653
      %v1737 = vpop.f32.mrf.mxu0
      %v1738 = vadd.f32 0.0, %v1737
      %1739 = vmatmul.f32.gmra.mxu0 %v1654
      %v1740 = vpop.f32.mrf.mxu0
      %v1741 = vadd.f32 0.0, %v1740
      %1742 = vmatmul.f32.gmra.mxu0 %v1655
      %v1743 = vpop.f32.mrf.mxu0
      %v1744 = vadd.f32 0.0, %v1743
      %1745 = vmatmul.f32.gmra.mxu0 %v1656
      %v1746 = vpop.f32.mrf.mxu0
      %v1747 = vadd.f32 0.0, %v1746
      %1748 = vmatmul.f32.gmra.mxu0 %v1657
      %v1749 = vpop.f32.mrf.mxu0
      %v1750 = vadd.f32 0.0, %v1749
      %1751 = vmatmul.f32.gmra.mxu0 %v1658
      %v1752 = vpop.f32.mrf.mxu0
      %v1753 = vadd.f32 0.0, %v1752
      %1754 = vmatmul.f32.gmra.mxu0 %v1659
      %v1755 = vpop.f32.mrf.mxu0
      %v1756 = vadd.f32 0.0, %v1755
      %1757 = vmatmul.f32.gmra.mxu0 %v1660
      %v1758 = vpop.f32.mrf.mxu0
      %v1759 = vadd.f32 0.0, %v1758
      %1760 = vmatmul.f32.gmra.mxu0 %v1661
      %v1761 = vpop.f32.mrf.mxu0
      %v1762 = vadd.f32 0.0, %v1761
      %1763 = vmatmul.f32.gmra.mxu0 %v1662
      %v1764 = vpop.f32.mrf.mxu0
      %v1765 = vadd.f32 0.0, %v1764
      %1766 = vmatmul.f32.gmra.mxu0 %v1663
      %v1767 = vpop.f32.mrf.mxu0
      %v1768 = vadd.f32 0.0, %v1767
      %1769 = vmatmul.f32.gmra.mxu0 %v1664
      %v1770 = vpop.f32.mrf.mxu0
      %v1771 = vadd.f32 0.0, %v1770
      %1772 = vmatmul.f32.gmra.mxu0 %v1665
      %v1773 = vpop.f32.mrf.mxu0
      %v1774 = vadd.f32 0.0, %v1773
      %1775 = vmatmul.f32.gmra.mxu0 %v1666
      %v1776 = vpop.f32.mrf.mxu0
      %v1777 = vadd.f32 0.0, %v1776
      %1778 = vmatmul.f32.gmra.mxu0 %v1667
      %v1779 = vpop.f32.mrf.mxu0
      %v1780 = vadd.f32 0.0, %v1779
      %1781 = vmatmul.f32.gmra.mxu0 %v1668
      %v1782 = vpop.f32.mrf.mxu0
      %v1783 = vadd.f32 0.0, %v1782
      %1784 = vmatmul.f32.gmra.mxu0 %v1669
      %v1785 = vpop.f32.mrf.mxu0
      %v1786 = vadd.f32 0.0, %v1785
      %1787 = vmatmul.f32.gmra.mxu0 %v1670
      %v1788 = vpop.f32.mrf.mxu0
      %v1789 = vadd.f32 0.0, %v1788
      %1790 = vmatmul.f32.gmra.mxu0 %v1671
      %v1791 = vpop.f32.mrf.mxu0
      %v1792 = vadd.f32 0.0, %v1791
      %1793 = vmatmul.f32.gmra.mxu0 %v1672
      %v1794 = vpop.f32.mrf.mxu0
      %v1795 = vadd.f32 0.0, %v1794
      %1796 = vmatmul.f32.gmra.mxu0 %v1673
      %v1797 = vpop.f32.mrf.mxu0
      %v1798 = vadd.f32 0.0, %v1797
      %1799 = vmatmul.f32.gmra.mxu0 %v1674
      %v1800 = vpop.f32.mrf.mxu0
      %v1801 = vadd.f32 0.0, %v1800
      %1802 = vmatmul.f32.gmra.mxu0 %v1675
      %v1803 = vpop.f32.mrf.mxu0
      %v1804 = vadd.f32 0.0, %v1803
      %1805 = vdwg.mxu0
      %v1806 = vld [vmem:[#allocation4] sm:$0xff]
      %v1807 = vld [vmem:[#allocation4 + $0x8] sm:$0xff]
      %v1808 = vld [vmem:[#allocation4 + $0x10] sm:$0xff]
      %v1809 = vld [vmem:[#allocation4 + $0x18] sm:$0xff]
      %v1810 = vld [vmem:[#allocation4 + $0x20] sm:$0xff]
      %v1811 = vld [vmem:[#allocation4 + $0x28] sm:$0xff]
      %v1812 = vld [vmem:[#allocation4 + $0x30] sm:$0xff]
      %v1813 = vld [vmem:[#allocation4 + $0x38] sm:$0xff]
      %v1814 = vld [vmem:[#allocation4 + $0x40] sm:$0xff]
      %v1815 = vld [vmem:[#allocation4 + $0x48] sm:$0xff]
      %v1816 = vld [vmem:[#allocation4 + $0x50] sm:$0xff]
      %v1817 = vld [vmem:[#allocation4 + $0x58] sm:$0xff]
      %v1818 = vld [vmem:[#allocation4 + $0x60] sm:$0xff]
      %v1819 = vld [vmem:[#allocation4 + $0x68] sm:$0xff]
      %v1820 = vld [vmem:[#allocation4 + $0x70] sm:$0xff]
      %v1821 = vld [vmem:[#allocation4 + $0x78] sm:$0xff]
      %v1822 = vld [vmem:[#allocation4 + $0x80] sm:$0xff]
      %v1823 = vld [vmem:[#allocation4 + $0x88] sm:$0xff]
      %v1824 = vld [vmem:[#allocation4 + $0x90] sm:$0xff]
      %v1825 = vld [vmem:[#allocation4 + $0x98] sm:$0xff]
      %v1826 = vld [vmem:[#allocation4 + $0xa0] sm:$0xff]
      %v1827 = vld [vmem:[#allocation4 + $0xa8] sm:$0xff]
      %v1828 = vld [vmem:[#allocation4 + $0xb0] sm:$0xff]
      %v1829 = vld [vmem:[#allocation4 + $0xb8] sm:$0xff]
      %v1830 = vld [vmem:[#allocation4 + $0xc0] sm:$0xff]
      %v1831 = vld [vmem:[#allocation4 + $0xc8] sm:$0xff]
      %v1832 = vld [vmem:[#allocation4 + $0xd0] sm:$0xff]
      %v1833 = vld [vmem:[#allocation4 + $0xd8] sm:$0xff]
      %v1834 = vld [vmem:[#allocation4 + $0xe0] sm:$0xff]
      %v1835 = vld [vmem:[#allocation4 + $0xe8] sm:$0xff]
      %v1836 = vld [vmem:[#allocation4 + $0xf0] sm:$0xff]
      %v1837 = vld [vmem:[#allocation4 + $0xf8] sm:$0xff]
      %v1838 = vadd.f32 %v1806, %v1711
      %v1839 = vadd.f32 %v1807, %v1714
      %v1840 = vadd.f32 %v1808, %v1717
      %v1841 = vadd.f32 %v1809, %v1720
      %v1842 = vadd.f32 %v1810, %v1723
      %v1843 = vadd.f32 %v1811, %v1726
      %v1844 = vadd.f32 %v1812, %v1729
      %v1845 = vadd.f32 %v1813, %v1732
      %v1846 = vadd.f32 %v1814, %v1735
      %v1847 = vadd.f32 %v1815, %v1738
      %v1848 = vadd.f32 %v1816, %v1741
      %v1849 = vadd.f32 %v1817, %v1744
      %v1850 = vadd.f32 %v1818, %v1747
      %v1851 = vadd.f32 %v1819, %v1750
      %v1852 = vadd.f32 %v1820, %v1753
      %v1853 = vadd.f32 %v1821, %v1756
      %v1854 = vadd.f32 %v1822, %v1759
      %v1855 = vadd.f32 %v1823, %v1762
      %v1856 = vadd.f32 %v1824, %v1765
      %v1857 = vadd.f32 %v1825, %v1768
      %v1858 = vadd.f32 %v1826, %v1771
      %v1859 = vadd.f32 %v1827, %v1774
      %v1860 = vadd.f32 %v1828, %v1777
      %v1861 = vadd.f32 %v1829, %v1780
      %v1862 = vadd.f32 %v1830, %v1783
      %v1863 = vadd.f32 %v1831, %v1786
      %v1864 = vadd.f32 %v1832, %v1789
      %v1865 = vadd.f32 %v1833, %v1792
      %v1866 = vadd.f32 %v1834, %v1795
      %v1867 = vadd.f32 %v1835, %v1798
      %v1868 = vadd.f32 %v1836, %v1801
      %v1869 = vadd.f32 %v1837, %v1804
      %1870 = vst [vmem:[#allocation4] sm:$0xff] %v1838
      %1871 = vst [vmem:[#allocation4 + $0x8] sm:$0xff] %v1839
      %1872 = vst [vmem:[#allocation4 + $0x10] sm:$0xff] %v1840
      %1873 = vst [vmem:[#allocation4 + $0x18] sm:$0xff] %v1841
      %1874 = vst [vmem:[#allocation4 + $0x20] sm:$0xff] %v1842
      %1875 = vst [vmem:[#allocation4 + $0x28] sm:$0xff] %v1843
      %1876 = vst [vmem:[#allocation4 + $0x30] sm:$0xff] %v1844
      %1877 = vst [vmem:[#allocation4 + $0x38] sm:$0xff] %v1845
      %1878 = vst [vmem:[#allocation4 + $0x40] sm:$0xff] %v1846
      %1879 = vst [vmem:[#allocation4 + $0x48] sm:$0xff] %v1847
      %1880 = vst [vmem:[#allocation4 + $0x50] sm:$0xff] %v1848
      %1881 = vst [vmem:[#allocation4 + $0x58] sm:$0xff] %v1849
      %1882 = vst [vmem:[#allocation4 + $0x60] sm:$0xff] %v1850
      %1883 = vst [vmem:[#allocation4 + $0x68] sm:$0xff] %v1851
      %1884 = vst [vmem:[#allocation4 + $0x70] sm:$0xff] %v1852
      %1885 = vst [vmem:[#allocation4 + $0x78] sm:$0xff] %v1853
      %1886 = vst [vmem:[#allocation4 + $0x80] sm:$0xff] %v1854
      %1887 = vst [vmem:[#allocation4 + $0x88] sm:$0xff] %v1855
      %1888 = vst [vmem:[#allocation4 + $0x90] sm:$0xff] %v1856
      %1889 = vst [vmem:[#allocation4 + $0x98] sm:$0xff] %v1857
      %1890 = vst [vmem:[#allocation4 + $0xa0] sm:$0xff] %v1858
      %1891 = vst [vmem:[#allocation4 + $0xa8] sm:$0xff] %v1859
      %1892 = vst [vmem:[#allocation4 + $0xb0] sm:$0xff] %v1860
      %1893 = vst [vmem:[#allocation4 + $0xb8] sm:$0xff] %v1861
      %1894 = vst [vmem:[#allocation4 + $0xc0] sm:$0xff] %v1862
      %1895 = vst [vmem:[#allocation4 + $0xc8] sm:$0xff] %v1863
      %1896 = vst [vmem:[#allocation4 + $0xd0] sm:$0xff] %v1864
      %1897 = vst [vmem:[#allocation4 + $0xd8] sm:$0xff] %v1865
      %1898 = vst [vmem:[#allocation4 + $0xe0] sm:$0xff] %v1866
      %1899 = vst [vmem:[#allocation4 + $0xe8] sm:$0xff] %v1867
      %1900 = vst [vmem:[#allocation4 + $0xf0] sm:$0xff] %v1868
      %1901 = vst [vmem:[#allocation4 + $0xf8] sm:$0xff] %v1869
      %s1902 = scalar_lea.vmem [#allocation2], 48
      %v1903 = vld [vmem:[%s1902] sm:$0xff]
      %v1904 = vld [vmem:[%s1902 + $0x8] sm:$0xff]
      %v1905 = vld [vmem:[%s1902 + $0x18] sm:$0xff]
      %v1906 = vld [vmem:[%s1902 + $0x20] sm:$0xff]
      %v1907 = vld [vmem:[%s1902 + $0x30] sm:$0xff]
      %v1908 = vld [vmem:[%s1902 + $0x38] sm:$0xff]
      %v1909 = vld [vmem:[%s1902 + $0x48] sm:$0xff]
      %v1910 = vld [vmem:[%s1902 + $0x50] sm:$0xff]
      %v1911 = vld [vmem:[%s1902 + $0x60] sm:$0xff]
      %v1912 = vld [vmem:[%s1902 + $0x68] sm:$0xff]
      %v1913 = vld [vmem:[%s1902 + $0x78] sm:$0xff]
      %v1914 = vld [vmem:[%s1902 + $0x80] sm:$0xff]
      %v1915 = vld [vmem:[%s1902 + $0x90] sm:$0xff]
      %v1916 = vld [vmem:[%s1902 + $0x98] sm:$0xff]
      %v1917 = vld [vmem:[%s1902 + $0xa8] sm:$0xff]
      %v1918 = vld [vmem:[%s1902 + $0xb0] sm:$0xff]
      %v1919 = vld [vmem:[%s1902 + $0xc0] sm:$0xff]
      %v1920 = vld [vmem:[%s1902 + $0xc8] sm:$0xff]
      %v1921 = vld [vmem:[%s1902 + $0xd8] sm:$0xff]
      %v1922 = vld [vmem:[%s1902 + $0xe0] sm:$0xff]
      %v1923 = vld [vmem:[%s1902 + $0xf0] sm:$0xff]
      %v1924 = vld [vmem:[%s1902 + $0xf8] sm:$0xff]
      %v1925 = vld [vmem:[%s1902 + $0x108] sm:$0xff]
      %v1926 = vld [vmem:[%s1902 + $0x110] sm:$0xff]
      %v1927 = vld [vmem:[%s1902 + $0x120] sm:$0xff]
      %v1928 = vld [vmem:[%s1902 + $0x128] sm:$0xff]
      %v1929 = vld [vmem:[%s1902 + $0x138] sm:$0xff]
      %v1930 = vld [vmem:[%s1902 + $0x140] sm:$0xff]
      %v1931 = vld [vmem:[%s1902 + $0x150] sm:$0xff]
      %v1932 = vld [vmem:[%s1902 + $0x158] sm:$0xff]
      %v1933 = vld [vmem:[%s1902 + $0x168] sm:$0xff]
      %v1934 = vld [vmem:[%s1902 + $0x170] sm:$0xff]
      %s1935 = scalar_lea.vmem %s1, 768
      %v1936 = vld [vmem:[%s1935] sm:$0xff]
      %v1937 = vld [vmem:[%s1935 + $0x8] sm:$0xff]
      %v1938 = vld [vmem:[%s1935 + $0x10] sm:$0xff]
      %v1939 = vld [vmem:[%s1935 + $0x18] sm:$0xff]
      %v1940 = vld [vmem:[%s1935 + $0x20] sm:$0xff]
      %v1941 = vld [vmem:[%s1935 + $0x28] sm:$0xff]
      %v1942 = vld [vmem:[%s1935 + $0x30] sm:$0xff]
      %v1943 = vld [vmem:[%s1935 + $0x38] sm:$0xff]
      %v1944 = vld [vmem:[%s1935 + $0x40] sm:$0xff]
      %v1945 = vld [vmem:[%s1935 + $0x48] sm:$0xff]
      %v1946 = vld [vmem:[%s1935 + $0x50] sm:$0xff]
      %v1947 = vld [vmem:[%s1935 + $0x58] sm:$0xff]
      %v1948 = vld [vmem:[%s1935 + $0x60] sm:$0xff]
      %v1949 = vld [vmem:[%s1935 + $0x68] sm:$0xff]
      %v1950 = vld [vmem:[%s1935 + $0x70] sm:$0xff]
      %v1951 = vld [vmem:[%s1935 + $0x78] sm:$0xff]
      %1952 = vmatpush.msra.mxu0 %v1951
      %1953 = vmatpush.msra.mxu0 %v1950
      %1954 = vmatpush.msra.mxu0 %v1949
      %1955 = vmatpush.msra.mxu0 %v1948
      %1956 = vmatpush.msra.mxu0 %v1947
      %1957 = vmatpush.msra.mxu0 %v1946
      %1958 = vmatpush.msra.mxu0 %v1945
      %1959 = vmatpush.msra.mxu0 %v1944
      %1960 = vmatpush.msra.mxu0 %v1943
      %1961 = vmatpush.msra.mxu0 %v1942
      %1962 = vmatpush.msra.mxu0 %v1941
      %1963 = vmatpush.msra.mxu0 %v1940
      %1964 = vmatpush.msra.mxu0 %v1939
      %1965 = vmatpush.msra.mxu0 %v1938
      %1966 = vmatpush.msra.mxu0 %v1937
      %1967 = vmatpush.msra.mxu0 %v1936
      %1968 = vmatmul.f32.gmra.mxu0 %v1903
      %v1969 = vpop.f32.mrf.mxu0
      %v1970 = vadd.f32 0.0, %v1969
      %1971 = vmatmul.f32.gmra.mxu0 %v1904
      %v1972 = vpop.f32.mrf.mxu0
      %v1973 = vadd.f32 0.0, %v1972
      %1974 = vmatmul.f32.gmra.mxu0 %v1905
      %v1975 = vpop.f32.mrf.mxu0
      %v1976 = vadd.f32 0.0, %v1975
      %1977 = vmatmul.f32.gmra.mxu0 %v1906
      %v1978 = vpop.f32.mrf.mxu0
      %v1979 = vadd.f32 0.0, %v1978
      %1980 = vmatmul.f32.gmra.mxu0 %v1907
      %v1981 = vpop.f32.mrf.mxu0
      %v1982 = vadd.f32 0.0, %v1981
      %1983 = vmatmul.f32.gmra.mxu0 %v1908
      %v1984 = vpop.f32.mrf.mxu0
      %v1985 = vadd.f32 0.0, %v1984
      %1986 = vmatmul.f32.gmra.mxu0 %v1909
      %v1987 = vpop.f32.mrf.mxu0
      %v1988 = vadd.f32 0.0, %v1987
      %1989 = vmatmul.f32.gmra.mxu0 %v1910
      %v1990 = vpop.f32.mrf.mxu0
      %v1991 = vadd.f32 0.0, %v1990
      %1992 = vmatmul.f32.gmra.mxu0 %v1911
      %v1993 = vpop.f32.mrf.mxu0
      %v1994 = vadd.f32 0.0, %v1993
      %1995 = vmatmul.f32.gmra.mxu0 %v1912
      %v1996 = vpop.f32.mrf.mxu0
      %v1997 = vadd.f32 0.0, %v1996
      %1998 = vmatmul.f32.gmra.mxu0 %v1913
      %v1999 = vpop.f32.mrf.mxu0
      %v2000 = vadd.f32 0.0, %v1999
      %2001 = vmatmul.f32.gmra.mxu0 %v1914
      %v2002 = vpop.f32.mrf.mxu0
      %v2003 = vadd.f32 0.0, %v2002
      %2004 = vmatmul.f32.gmra.mxu0 %v1915
      %v2005 = vpop.f32.mrf.mxu0
      %v2006 = vadd.f32 0.0, %v2005
      %2007 = vmatmul.f32.gmra.mxu0 %v1916
      %v2008 = vpop.f32.mrf.mxu0
      %v2009 = vadd.f32 0.0, %v2008
      %2010 = vmatmul.f32.gmra.mxu0 %v1917
      %v2011 = vpop.f32.mrf.mxu0
      %v2012 = vadd.f32 0.0, %v2011
      %2013 = vmatmul.f32.gmra.mxu0 %v1918
      %v2014 = vpop.f32.mrf.mxu0
      %v2015 = vadd.f32 0.0, %v2014
      %2016 = vmatmul.f32.gmra.mxu0 %v1919
      %v2017 = vpop.f32.mrf.mxu0
      %v2018 = vadd.f32 0.0, %v2017
      %2019 = vmatmul.f32.gmra.mxu0 %v1920
      %v2020 = vpop.f32.mrf.mxu0
      %v2021 = vadd.f32 0.0, %v2020
      %2022 = vmatmul.f32.gmra.mxu0 %v1921
      %v2023 = vpop.f32.mrf.mxu0
      %v2024 = vadd.f32 0.0, %v2023
      %2025 = vmatmul.f32.gmra.mxu0 %v1922
      %v2026 = vpop.f32.mrf.mxu0
      %v2027 = vadd.f32 0.0, %v2026
      %2028 = vmatmul.f32.gmra.mxu0 %v1923
      %v2029 = vpop.f32.mrf.mxu0
      %v2030 = vadd.f32 0.0, %v2029
      %2031 = vmatmul.f32.gmra.mxu0 %v1924
      %v2032 = vpop.f32.mrf.mxu0
      %v2033 = vadd.f32 0.0, %v2032
      %2034 = vmatmul.f32.gmra.mxu0 %v1925
      %v2035 = vpop.f32.mrf.mxu0
      %v2036 = vadd.f32 0.0, %v2035
      %2037 = vmatmul.f32.gmra.mxu0 %v1926
      %v2038 = vpop.f32.mrf.mxu0
      %v2039 = vadd.f32 0.0, %v2038
      %2040 = vmatmul.f32.gmra.mxu0 %v1927
      %v2041 = vpop.f32.mrf.mxu0
      %v2042 = vadd.f32 0.0, %v2041
      %2043 = vmatmul.f32.gmra.mxu0 %v1928
      %v2044 = vpop.f32.mrf.mxu0
      %v2045 = vadd.f32 0.0, %v2044
      %2046 = vmatmul.f32.gmra.mxu0 %v1929
      %v2047 = vpop.f32.mrf.mxu0
      %v2048 = vadd.f32 0.0, %v2047
      %2049 = vmatmul.f32.gmra.mxu0 %v1930
      %v2050 = vpop.f32.mrf.mxu0
      %v2051 = vadd.f32 0.0, %v2050
      %2052 = vmatmul.f32.gmra.mxu0 %v1931
      %v2053 = vpop.f32.mrf.mxu0
      %v2054 = vadd.f32 0.0, %v2053
      %2055 = vmatmul.f32.gmra.mxu0 %v1932
      %v2056 = vpop.f32.mrf.mxu0
      %v2057 = vadd.f32 0.0, %v2056
      %2058 = vmatmul.f32.gmra.mxu0 %v1933
      %v2059 = vpop.f32.mrf.mxu0
      %v2060 = vadd.f32 0.0, %v2059
      %2061 = vmatmul.f32.gmra.mxu0 %v1934
      %v2062 = vpop.f32.mrf.mxu0
      %v2063 = vadd.f32 0.0, %v2062
      %2064 = vdwg.mxu0
      %v2065 = vld [vmem:[#allocation4] sm:$0xff]
      %v2066 = vld [vmem:[#allocation4 + $0x8] sm:$0xff]
      %v2067 = vld [vmem:[#allocation4 + $0x10] sm:$0xff]
      %v2068 = vld [vmem:[#allocation4 + $0x18] sm:$0xff]
      %v2069 = vld [vmem:[#allocation4 + $0x20] sm:$0xff]
      %v2070 = vld [vmem:[#allocation4 + $0x28] sm:$0xff]
      %v2071 = vld [vmem:[#allocation4 + $0x30] sm:$0xff]
      %v2072 = vld [vmem:[#allocation4 + $0x38] sm:$0xff]
      %v2073 = vld [vmem:[#allocation4 + $0x40] sm:$0xff]
      %v2074 = vld [vmem:[#allocation4 + $0x48] sm:$0xff]
      %v2075 = vld [vmem:[#allocation4 + $0x50] sm:$0xff]
      %v2076 = vld [vmem:[#allocation4 + $0x58] sm:$0xff]
      %v2077 = vld [vmem:[#allocation4 + $0x60] sm:$0xff]
      %v2078 = vld [vmem:[#allocation4 + $0x68] sm:$0xff]
      %v2079 = vld [vmem:[#allocation4 + $0x70] sm:$0xff]
      %v2080 = vld [vmem:[#allocation4 + $0x78] sm:$0xff]
      %v2081 = vld [vmem:[#allocation4 + $0x80] sm:$0xff]
      %v2082 = vld [vmem:[#allocation4 + $0x88] sm:$0xff]
      %v2083 = vld [vmem:[#allocation4 + $0x90] sm:$0xff]
      %v2084 = vld [vmem:[#allocation4 + $0x98] sm:$0xff]
      %v2085 = vld [vmem:[#allocation4 + $0xa0] sm:$0xff]
      %v2086 = vld [vmem:[#allocation4 + $0xa8] sm:$0xff]
      %v2087 = vld [vmem:[#allocation4 + $0xb0] sm:$0xff]
      %v2088 = vld [vmem:[#allocation4 + $0xb8] sm:$0xff]
      %v2089 = vld [vmem:[#allocation4 + $0xc0] sm:$0xff]
      %v2090 = vld [vmem:[#allocation4 + $0xc8] sm:$0xff]
      %v2091 = vld [vmem:[#allocation4 + $0xd0] sm:$0xff]
      %v2092 = vld [vmem:[#allocation4 + $0xd8] sm:$0xff]
      %v2093 = vld [vmem:[#allocation4 + $0xe0] sm:$0xff]
      %v2094 = vld [vmem:[#allocation4 + $0xe8] sm:$0xff]
      %v2095 = vld [vmem:[#allocation4 + $0xf0] sm:$0xff]
      %v2096 = vld [vmem:[#allocation4 + $0xf8] sm:$0xff]
      %v2097 = vadd.f32 %v2065, %v1970
      %v2098 = vadd.f32 %v2066, %v1973
      %v2099 = vadd.f32 %v2067, %v1976
      %v2100 = vadd.f32 %v2068, %v1979
      %v2101 = vadd.f32 %v2069, %v1982
      %v2102 = vadd.f32 %v2070, %v1985
      %v2103 = vadd.f32 %v2071, %v1988
      %v2104 = vadd.f32 %v2072, %v1991
      %v2105 = vadd.f32 %v2073, %v1994
      %v2106 = vadd.f32 %v2074, %v1997
      %v2107 = vadd.f32 %v2075, %v2000
      %v2108 = vadd.f32 %v2076, %v2003
      %v2109 = vadd.f32 %v2077, %v2006
      %v2110 = vadd.f32 %v2078, %v2009
      %v2111 = vadd.f32 %v2079, %v2012
      %v2112 = vadd.f32 %v2080, %v2015
      %v2113 = vadd.f32 %v2081, %v2018
      %v2114 = vadd.f32 %v2082, %v2021
      %v2115 = vadd.f32 %v2083, %v2024
      %v2116 = vadd.f32 %v2084, %v2027
      %v2117 = vadd.f32 %v2085, %v2030
      %v2118 = vadd.f32 %v2086, %v2033
      %v2119 = vadd.f32 %v2087, %v2036
      %v2120 = vadd.f32 %v2088, %v2039
      %v2121 = vadd.f32 %v2089, %v2042
      %v2122 = vadd.f32 %v2090, %v2045
      %v2123 = vadd.f32 %v2091, %v2048
      %v2124 = vadd.f32 %v2092, %v2051
      %v2125 = vadd.f32 %v2093, %v2054
      %v2126 = vadd.f32 %v2094, %v2057
      %v2127 = vadd.f32 %v2095, %v2060
      %v2128 = vadd.f32 %v2096, %v2063
      %2129 = vst [vmem:[#allocation4] sm:$0xff] %v2097
      %2130 = vst [vmem:[#allocation4 + $0x8] sm:$0xff] %v2098
      %2131 = vst [vmem:[#allocation4 + $0x10] sm:$0xff] %v2099
      %2132 = vst [vmem:[#allocation4 + $0x18] sm:$0xff] %v2100
      %2133 = vst [vmem:[#allocation4 + $0x20] sm:$0xff] %v2101
      %2134 = vst [vmem:[#allocation4 + $0x28] sm:$0xff] %v2102
      %2135 = vst [vmem:[#allocation4 + $0x30] sm:$0xff] %v2103
      %2136 = vst [vmem:[#allocation4 + $0x38] sm:$0xff] %v2104
      %2137 = vst [vmem:[#allocation4 + $0x40] sm:$0xff] %v2105
      %2138 = vst [vmem:[#allocation4 + $0x48] sm:$0xff] %v2106
      %2139 = vst [vmem:[#allocation4 + $0x50] sm:$0xff] %v2107
      %2140 = vst [vmem:[#allocation4 + $0x58] sm:$0xff] %v2108
      %2141 = vst [vmem:[#allocation4 + $0x60] sm:$0xff] %v2109
      %2142 = vst [vmem:[#allocation4 + $0x68] sm:$0xff] %v2110
      %2143 = vst [vmem:[#allocation4 + $0x70] sm:$0xff] %v2111
      %2144 = vst [vmem:[#allocation4 + $0x78] sm:$0xff] %v2112
      %2145 = vst [vmem:[#allocation4 + $0x80] sm:$0xff] %v2113
      %2146 = vst [vmem:[#allocation4 + $0x88] sm:$0xff] %v2114
      %2147 = vst [vmem:[#allocation4 + $0x90] sm:$0xff] %v2115
      %2148 = vst [vmem:[#allocation4 + $0x98] sm:$0xff] %v2116
      %2149 = vst [vmem:[#allocation4 + $0xa0] sm:$0xff] %v2117
      %2150 = vst [vmem:[#allocation4 + $0xa8] sm:$0xff] %v2118
      %2151 = vst [vmem:[#allocation4 + $0xb0] sm:$0xff] %v2119
      %2152 = vst [vmem:[#allocation4 + $0xb8] sm:$0xff] %v2120
      %2153 = vst [vmem:[#allocation4 + $0xc0] sm:$0xff] %v2121
      %2154 = vst [vmem:[#allocation4 + $0xc8] sm:$0xff] %v2122
      %2155 = vst [vmem:[#allocation4 + $0xd0] sm:$0xff] %v2123
      %2156 = vst [vmem:[#allocation4 + $0xd8] sm:$0xff] %v2124
      %2157 = vst [vmem:[#allocation4 + $0xe0] sm:$0xff] %v2125
      %2158 = vst [vmem:[#allocation4 + $0xe8] sm:$0xff] %v2126
      %2159 = vst [vmem:[#allocation4 + $0xf0] sm:$0xff] %v2127
      %2160 = vst [vmem:[#allocation4 + $0xf8] sm:$0xff] %v2128
      %v2161 = vld [vmem:[%s1902 + $0x1] sm:$0xff]
      %v2162 = vld [vmem:[%s1902 + $0x9] sm:$0xff]
      %v2163 = vld [vmem:[%s1902 + $0x19] sm:$0xff]
      %v2164 = vld [vmem:[%s1902 + $0x21] sm:$0xff]
      %v2165 = vld [vmem:[%s1902 + $0x31] sm:$0xff]
      %v2166 = vld [vmem:[%s1902 + $0x39] sm:$0xff]
      %v2167 = vld [vmem:[%s1902 + $0x49] sm:$0xff]
      %v2168 = vld [vmem:[%s1902 + $0x51] sm:$0xff]
      %v2169 = vld [vmem:[%s1902 + $0x61] sm:$0xff]
      %v2170 = vld [vmem:[%s1902 + $0x69] sm:$0xff]
      %v2171 = vld [vmem:[%s1902 + $0x79] sm:$0xff]
      %v2172 = vld [vmem:[%s1902 + $0x81] sm:$0xff]
      %v2173 = vld [vmem:[%s1902 + $0x91] sm:$0xff]
      %v2174 = vld [vmem:[%s1902 + $0x99] sm:$0xff]
      %v2175 = vld [vmem:[%s1902 + $0xa9] sm:$0xff]
      %v2176 = vld [vmem:[%s1902 + $0xb1] sm:$0xff]
      %v2177 = vld [vmem:[%s1902 + $0xc1] sm:$0xff]
      %v2178 = vld [vmem:[%s1902 + $0xc9] sm:$0xff]
      %v2179 = vld [vmem:[%s1902 + $0xd9] sm:$0xff]
      %v2180 = vld [vmem:[%s1902 + $0xe1] sm:$0xff]
      %v2181 = vld [vmem:[%s1902 + $0xf1] sm:$0xff]
      %v2182 = vld [vmem:[%s1902 + $0xf9] sm:$0xff]
      %v2183 = vld [vmem:[%s1902 + $0x109] sm:$0xff]
      %v2184 = vld [vmem:[%s1902 + $0x111] sm:$0xff]
      %v2185 = vld [vmem:[%s1902 + $0x121] sm:$0xff]
      %v2186 = vld [vmem:[%s1902 + $0x129] sm:$0xff]
      %v2187 = vld [vmem:[%s1902 + $0x139] sm:$0xff]
      %v2188 = vld [vmem:[%s1902 + $0x141] sm:$0xff]
      %v2189 = vld [vmem:[%s1902 + $0x151] sm:$0xff]
      %v2190 = vld [vmem:[%s1902 + $0x159] sm:$0xff]
      %v2191 = vld [vmem:[%s1902 + $0x169] sm:$0xff]
      %v2192 = vld [vmem:[%s1902 + $0x171] sm:$0xff]
      %s2193 = scalar_lea.vmem %s1, 896
      %v2194 = vld [vmem:[%s2193] sm:$0xff]
      %v2195 = vld [vmem:[%s2193 + $0x8] sm:$0xff]
      %v2196 = vld [vmem:[%s2193 + $0x10] sm:$0xff]
      %v2197 = vld [vmem:[%s2193 + $0x18] sm:$0xff]
      %v2198 = vld [vmem:[%s2193 + $0x20] sm:$0xff]
      %v2199 = vld [vmem:[%s2193 + $0x28] sm:$0xff]
      %v2200 = vld [vmem:[%s2193 + $0x30] sm:$0xff]
      %v2201 = vld [vmem:[%s2193 + $0x38] sm:$0xff]
      %v2202 = vld [vmem:[%s2193 + $0x40] sm:$0xff]
      %v2203 = vld [vmem:[%s2193 + $0x48] sm:$0xff]
      %v2204 = vld [vmem:[%s2193 + $0x50] sm:$0xff]
      %v2205 = vld [vmem:[%s2193 + $0x58] sm:$0xff]
      %v2206 = vld [vmem:[%s2193 + $0x60] sm:$0xff]
      %v2207 = vld [vmem:[%s2193 + $0x68] sm:$0xff]
      %v2208 = vld [vmem:[%s2193 + $0x70] sm:$0xff]
      %v2209 = vld [vmem:[%s2193 + $0x78] sm:$0xff]
      %2210 = vmatpush.msra.mxu0 %v2209
      %2211 = vmatpush.msra.mxu0 %v2208
      %2212 = vmatpush.msra.mxu0 %v2207
      %2213 = vmatpush.msra.mxu0 %v2206
      %2214 = vmatpush.msra.mxu0 %v2205
      %2215 = vmatpush.msra.mxu0 %v2204
      %2216 = vmatpush.msra.mxu0 %v2203
      %2217 = vmatpush.msra.mxu0 %v2202
      %2218 = vmatpush.msra.mxu0 %v2201
      %2219 = vmatpush.msra.mxu0 %v2200
      %2220 = vmatpush.msra.mxu0 %v2199
      %2221 = vmatpush.msra.mxu0 %v2198
      %2222 = vmatpush.msra.mxu0 %v2197
      %2223 = vmatpush.msra.mxu0 %v2196
      %2224 = vmatpush.msra.mxu0 %v2195
      %2225 = vmatpush.msra.mxu0 %v2194
      %2226 = vmatmul.f32.gmra.mxu0 %v2161
      %v2227 = vpop.f32.mrf.mxu0
      %v2228 = vadd.f32 0.0, %v2227
      %2229 = vmatmul.f32.gmra.mxu0 %v2162
      %v2230 = vpop.f32.mrf.mxu0
      %v2231 = vadd.f32 0.0, %v2230
      %2232 = vmatmul.f32.gmra.mxu0 %v2163
      %v2233 = vpop.f32.mrf.mxu0
      %v2234 = vadd.f32 0.0, %v2233
      %2235 = vmatmul.f32.gmra.mxu0 %v2164
      %v2236 = vpop.f32.mrf.mxu0
      %v2237 = vadd.f32 0.0, %v2236
      %2238 = vmatmul.f32.gmra.mxu0 %v2165
      %v2239 = vpop.f32.mrf.mxu0
      %v2240 = vadd.f32 0.0, %v2239
      %2241 = vmatmul.f32.gmra.mxu0 %v2166
      %v2242 = vpop.f32.mrf.mxu0
      %v2243 = vadd.f32 0.0, %v2242
      %2244 = vmatmul.f32.gmra.mxu0 %v2167
      %v2245 = vpop.f32.mrf.mxu0
      %v2246 = vadd.f32 0.0, %v2245
      %2247 = vmatmul.f32.gmra.mxu0 %v2168
      %v2248 = vpop.f32.mrf.mxu0
      %v2249 = vadd.f32 0.0, %v2248
      %2250 = vmatmul.f32.gmra.mxu0 %v2169
      %v2251 = vpop.f32.mrf.mxu0
      %v2252 = vadd.f32 0.0, %v2251
      %2253 = vmatmul.f32.gmra.mxu0 %v2170
      %v2254 = vpop.f32.mrf.mxu0
      %v2255 = vadd.f32 0.0, %v2254
      %2256 = vmatmul.f32.gmra.mxu0 %v2171
      %v2257 = vpop.f32.mrf.mxu0
      %v2258 = vadd.f32 0.0, %v2257
      %2259 = vmatmul.f32.gmra.mxu0 %v2172
      %v2260 = vpop.f32.mrf.mxu0
      %v2261 = vadd.f32 0.0, %v2260
      %2262 = vmatmul.f32.gmra.mxu0 %v2173
      %v2263 = vpop.f32.mrf.mxu0
      %v2264 = vadd.f32 0.0, %v2263
      %2265 = vmatmul.f32.gmra.mxu0 %v2174
      %v2266 = vpop.f32.mrf.mxu0
      %v2267 = vadd.f32 0.0, %v2266
      %2268 = vmatmul.f32.gmra.mxu0 %v2175
      %v2269 = vpop.f32.mrf.mxu0
      %v2270 = vadd.f32 0.0, %v2269
      %2271 = vmatmul.f32.gmra.mxu0 %v2176
      %v2272 = vpop.f32.mrf.mxu0
      %v2273 = vadd.f32 0.0, %v2272
      %2274 = vmatmul.f32.gmra.mxu0 %v2177
      %v2275 = vpop.f32.mrf.mxu0
      %v2276 = vadd.f32 0.0, %v2275
      %2277 = vmatmul.f32.gmra.mxu0 %v2178
      %v2278 = vpop.f32.mrf.mxu0
      %v2279 = vadd.f32 0.0, %v2278
      %2280 = vmatmul.f32.gmra.mxu0 %v2179
      %v2281 = vpop.f32.mrf.mxu0
      %v2282 = vadd.f32 0.0, %v2281
      %2283 = vmatmul.f32.gmra.mxu0 %v2180
      %v2284 = vpop.f32.mrf.mxu0
      %v2285 = vadd.f32 0.0, %v2284
      %2286 = vmatmul.f32.gmra.mxu0 %v2181
      %v2287 = vpop.f32.mrf.mxu0
      %v2288 = vadd.f32 0.0, %v2287
      %2289 = vmatmul.f32.gmra.mxu0 %v2182
      %v2290 = vpop.f32.mrf.mxu0
      %v2291 = vadd.f32 0.0, %v2290
      %2292 = vmatmul.f32.gmra.mxu0 %v2183
      %v2293 = vpop.f32.mrf.mxu0
      %v2294 = vadd.f32 0.0, %v2293
      %2295 = vmatmul.f32.gmra.mxu0 %v2184
      %v2296 = vpop.f32.mrf.mxu0
      %v2297 = vadd.f32 0.0, %v2296
      %2298 = vmatmul.f32.gmra.mxu0 %v2185
      %v2299 = vpop.f32.mrf.mxu0
      %v2300 = vadd.f32 0.0, %v2299
      %2301 = vmatmul.f32.gmra.mxu0 %v2186
      %v2302 = vpop.f32.mrf.mxu0
      %v2303 = vadd.f32 0.0, %v2302
      %2304 = vmatmul.f32.gmra.mxu0 %v2187
      %v2305 = vpop.f32.mrf.mxu0
      %v2306 = vadd.f32 0.0, %v2305
      %2307 = vmatmul.f32.gmra.mxu0 %v2188
      %v2308 = vpop.f32.mrf.mxu0
      %v2309 = vadd.f32 0.0, %v2308
      %2310 = vmatmul.f32.gmra.mxu0 %v2189
      %v2311 = vpop.f32.mrf.mxu0
      %v2312 = vadd.f32 0.0, %v2311
      %2313 = vmatmul.f32.gmra.mxu0 %v2190
      %v2314 = vpop.f32.mrf.mxu0
      %v2315 = vadd.f32 0.0, %v2314
      %2316 = vmatmul.f32.gmra.mxu0 %v2191
      %v2317 = vpop.f32.mrf.mxu0
      %v2318 = vadd.f32 0.0, %v2317
      %2319 = vmatmul.f32.gmra.mxu0 %v2192
      %v2320 = vpop.f32.mrf.mxu0
      %v2321 = vadd.f32 0.0, %v2320
      %2322 = vdwg.mxu0
      %v2323 = vld [vmem:[#allocation4] sm:$0xff]
      %v2324 = vld [vmem:[#allocation4 + $0x8] sm:$0xff]
      %v2325 = vld [vmem:[#allocation4 + $0x10] sm:$0xff]
      %v2326 = vld [vmem:[#allocation4 + $0x18] sm:$0xff]
      %v2327 = vld [vmem:[#allocation4 + $0x20] sm:$0xff]
      %v2328 = vld [vmem:[#allocation4 + $0x28] sm:$0xff]
      %v2329 = vld [vmem:[#allocation4 + $0x30] sm:$0xff]
      %v2330 = vld [vmem:[#allocation4 + $0x38] sm:$0xff]
      %v2331 = vld [vmem:[#allocation4 + $0x40] sm:$0xff]
      %v2332 = vld [vmem:[#allocation4 + $0x48] sm:$0xff]
      %v2333 = vld [vmem:[#allocation4 + $0x50] sm:$0xff]
      %v2334 = vld [vmem:[#allocation4 + $0x58] sm:$0xff]
      %v2335 = vld [vmem:[#allocation4 + $0x60] sm:$0xff]
      %v2336 = vld [vmem:[#allocation4 + $0x68] sm:$0xff]
      %v2337 = vld [vmem:[#allocation4 + $0x70] sm:$0xff]
      %v2338 = vld [vmem:[#allocation4 + $0x78] sm:$0xff]
      %v2339 = vld [vmem:[#allocation4 + $0x80] sm:$0xff]
      %v2340 = vld [vmem:[#allocation4 + $0x88] sm:$0xff]
      %v2341 = vld [vmem:[#allocation4 + $0x90] sm:$0xff]
      %v2342 = vld [vmem:[#allocation4 + $0x98] sm:$0xff]
      %v2343 = vld [vmem:[#allocation4 + $0xa0] sm:$0xff]
      %v2344 = vld [vmem:[#allocation4 + $0xa8] sm:$0xff]
      %v2345 = vld [vmem:[#allocation4 + $0xb0] sm:$0xff]
      %v2346 = vld [vmem:[#allocation4 + $0xb8] sm:$0xff]
      %v2347 = vld [vmem:[#allocation4 + $0xc0] sm:$0xff]
      %v2348 = vld [vmem:[#allocation4 + $0xc8] sm:$0xff]
      %v2349 = vld [vmem:[#allocation4 + $0xd0] sm:$0xff]
      %v2350 = vld [vmem:[#allocation4 + $0xd8] sm:$0xff]
      %v2351 = vld [vmem:[#allocation4 + $0xe0] sm:$0xff]
      %v2352 = vld [vmem:[#allocation4 + $0xe8] sm:$0xff]
      %v2353 = vld [vmem:[#allocation4 + $0xf0] sm:$0xff]
      %v2354 = vld [vmem:[#allocation4 + $0xf8] sm:$0xff]
      %v2355 = vadd.f32 %v2323, %v2228
      %v2356 = vadd.f32 %v2324, %v2231
      %v2357 = vadd.f32 %v2325, %v2234
      %v2358 = vadd.f32 %v2326, %v2237
      %v2359 = vadd.f32 %v2327, %v2240
      %v2360 = vadd.f32 %v2328, %v2243
      %v2361 = vadd.f32 %v2329, %v2246
      %v2362 = vadd.f32 %v2330, %v2249
      %v2363 = vadd.f32 %v2331, %v2252
      %v2364 = vadd.f32 %v2332, %v2255
      %v2365 = vadd.f32 %v2333, %v2258
      %v2366 = vadd.f32 %v2334, %v2261
      %v2367 = vadd.f32 %v2335, %v2264
      %v2368 = vadd.f32 %v2336, %v2267
      %v2369 = vadd.f32 %v2337, %v2270
      %v2370 = vadd.f32 %v2338, %v2273
      %v2371 = vadd.f32 %v2339, %v2276
      %v2372 = vadd.f32 %v2340, %v2279
      %v2373 = vadd.f32 %v2341, %v2282
      %v2374 = vadd.f32 %v2342, %v2285
      %v2375 = vadd.f32 %v2343, %v2288
      %v2376 = vadd.f32 %v2344, %v2291
      %v2377 = vadd.f32 %v2345, %v2294
      %v2378 = vadd.f32 %v2346, %v2297
      %v2379 = vadd.f32 %v2347, %v2300
      %v2380 = vadd.f32 %v2348, %v2303
      %v2381 = vadd.f32 %v2349, %v2306
      %v2382 = vadd.f32 %v2350, %v2309
      %v2383 = vadd.f32 %v2351, %v2312
      %v2384 = vadd.f32 %v2352, %v2315
      %v2385 = vadd.f32 %v2353, %v2318
      %v2386 = vadd.f32 %v2354, %v2321
      %2387 = vst [vmem:[#allocation4] sm:$0xff] %v2355
      %2388 = vst [vmem:[#allocation4 + $0x8] sm:$0xff] %v2356
      %2389 = vst [vmem:[#allocation4 + $0x10] sm:$0xff] %v2357
      %2390 = vst [vmem:[#allocation4 + $0x18] sm:$0xff] %v2358
      %2391 = vst [vmem:[#allocation4 + $0x20] sm:$0xff] %v2359
      %2392 = vst [vmem:[#allocation4 + $0x28] sm:$0xff] %v2360
      %2393 = vst [vmem:[#allocation4 + $0x30] sm:$0xff] %v2361
      %2394 = vst [vmem:[#allocation4 + $0x38] sm:$0xff] %v2362
      %2395 = vst [vmem:[#allocation4 + $0x40] sm:$0xff] %v2363
      %2396 = vst [vmem:[#allocation4 + $0x48] sm:$0xff] %v2364
      %2397 = vst [vmem:[#allocation4 + $0x50] sm:$0xff] %v2365
      %2398 = vst [vmem:[#allocation4 + $0x58] sm:$0xff] %v2366
      %2399 = vst [vmem:[#allocation4 + $0x60] sm:$0xff] %v2367
      %2400 = vst [vmem:[#allocation4 + $0x68] sm:$0xff] %v2368
      %2401 = vst [vmem:[#allocation4 + $0x70] sm:$0xff] %v2369
      %2402 = vst [vmem:[#allocation4 + $0x78] sm:$0xff] %v2370
      %2403 = vst [vmem:[#allocation4 + $0x80] sm:$0xff] %v2371
      %2404 = vst [vmem:[#allocation4 + $0x88] sm:$0xff] %v2372
      %2405 = vst [vmem:[#allocation4 + $0x90] sm:$0xff] %v2373
      %2406 = vst [vmem:[#allocation4 + $0x98] sm:$0xff] %v2374
      %2407 = vst [vmem:[#allocation4 + $0xa0] sm:$0xff] %v2375
      %2408 = vst [vmem:[#allocation4 + $0xa8] sm:$0xff] %v2376
      %2409 = vst [vmem:[#allocation4 + $0xb0] sm:$0xff] %v2377
      %2410 = vst [vmem:[#allocation4 + $0xb8] sm:$0xff] %v2378
      %2411 = vst [vmem:[#allocation4 + $0xc0] sm:$0xff] %v2379
      %2412 = vst [vmem:[#allocation4 + $0xc8] sm:$0xff] %v2380
      %2413 = vst [vmem:[#allocation4 + $0xd0] sm:$0xff] %v2381
      %2414 = vst [vmem:[#allocation4 + $0xd8] sm:$0xff] %v2382
      %2415 = vst [vmem:[#allocation4 + $0xe0] sm:$0xff] %v2383
      %2416 = vst [vmem:[#allocation4 + $0xe8] sm:$0xff] %v2384
      %2417 = vst [vmem:[#allocation4 + $0xf0] sm:$0xff] %v2385
      %2418 = vst [vmem:[#allocation4 + $0xf8] sm:$0xff] %v2386
      %v2419 = vld [vmem:[%s1902 + $0x2] sm:$0xff]
      %v2420 = vld [vmem:[%s1902 + $0xa] sm:$0xff]
      %v2421 = vld [vmem:[%s1902 + $0x1a] sm:$0xff]
      %v2422 = vld [vmem:[%s1902 + $0x22] sm:$0xff]
      %v2423 = vld [vmem:[%s1902 + $0x32] sm:$0xff]
      %v2424 = vld [vmem:[%s1902 + $0x3a] sm:$0xff]
      %v2425 = vld [vmem:[%s1902 + $0x4a] sm:$0xff]
      %v2426 = vld [vmem:[%s1902 + $0x52] sm:$0xff]
      %v2427 = vld [vmem:[%s1902 + $0x62] sm:$0xff]
      %v2428 = vld [vmem:[%s1902 + $0x6a] sm:$0xff]
      %v2429 = vld [vmem:[%s1902 + $0x7a] sm:$0xff]
      %v2430 = vld [vmem:[%s1902 + $0x82] sm:$0xff]
      %v2431 = vld [vmem:[%s1902 + $0x92] sm:$0xff]
      %v2432 = vld [vmem:[%s1902 + $0x9a] sm:$0xff]
      %v2433 = vld [vmem:[%s1902 + $0xaa] sm:$0xff]
      %v2434 = vld [vmem:[%s1902 + $0xb2] sm:$0xff]
      %v2435 = vld [vmem:[%s1902 + $0xc2] sm:$0xff]
      %v2436 = vld [vmem:[%s1902 + $0xca] sm:$0xff]
      %v2437 = vld [vmem:[%s1902 + $0xda] sm:$0xff]
      %v2438 = vld [vmem:[%s1902 + $0xe2] sm:$0xff]
      %v2439 = vld [vmem:[%s1902 + $0xf2] sm:$0xff]
      %v2440 = vld [vmem:[%s1902 + $0xfa] sm:$0xff]
      %v2441 = vld [vmem:[%s1902 + $0x10a] sm:$0xff]
      %v2442 = vld [vmem:[%s1902 + $0x112] sm:$0xff]
      %v2443 = vld [vmem:[%s1902 + $0x122] sm:$0xff]
      %v2444 = vld [vmem:[%s1902 + $0x12a] sm:$0xff]
      %v2445 = vld [vmem:[%s1902 + $0x13a] sm:$0xff]
      %v2446 = vld [vmem:[%s1902 + $0x142] sm:$0xff]
      %v2447 = vld [vmem:[%s1902 + $0x152] sm:$0xff]
      %v2448 = vld [vmem:[%s1902 + $0x15a] sm:$0xff]
      %v2449 = vld [vmem:[%s1902 + $0x16a] sm:$0xff]
      %v2450 = vld [vmem:[%s1902 + $0x172] sm:$0xff]
      %s2451 = scalar_lea.vmem %s1, 1024
      %v2452 = vld [vmem:[%s2451] sm:$0xff]
      %v2453 = vld [vmem:[%s2451 + $0x8] sm:$0xff]
      %v2454 = vld [vmem:[%s2451 + $0x10] sm:$0xff]
      %v2455 = vld [vmem:[%s2451 + $0x18] sm:$0xff]
      %v2456 = vld [vmem:[%s2451 + $0x20] sm:$0xff]
      %v2457 = vld [vmem:[%s2451 + $0x28] sm:$0xff]
      %v2458 = vld [vmem:[%s2451 + $0x30] sm:$0xff]
      %v2459 = vld [vmem:[%s2451 + $0x38] sm:$0xff]
      %v2460 = vld [vmem:[%s2451 + $0x40] sm:$0xff]
      %v2461 = vld [vmem:[%s2451 + $0x48] sm:$0xff]
      %v2462 = vld [vmem:[%s2451 + $0x50] sm:$0xff]
      %v2463 = vld [vmem:[%s2451 + $0x58] sm:$0xff]
      %v2464 = vld [vmem:[%s2451 + $0x60] sm:$0xff]
      %v2465 = vld [vmem:[%s2451 + $0x68] sm:$0xff]
      %v2466 = vld [vmem:[%s2451 + $0x70] sm:$0xff]
      %v2467 = vld [vmem:[%s2451 + $0x78] sm:$0xff]
      %2468 = vmatpush.msra.mxu0 %v2467
      %2469 = vmatpush.msra.mxu0 %v2466
      %2470 = vmatpush.msra.mxu0 %v2465
      %2471 = vmatpush.msra.mxu0 %v2464
      %2472 = vmatpush.msra.mxu0 %v2463
      %2473 = vmatpush.msra.mxu0 %v2462
      %2474 = vmatpush.msra.mxu0 %v2461
      %2475 = vmatpush.msra.mxu0 %v2460
      %2476 = vmatpush.msra.mxu0 %v2459
      %2477 = vmatpush.msra.mxu0 %v2458
      %2478 = vmatpush.msra.mxu0 %v2457
      %2479 = vmatpush.msra.mxu0 %v2456
      %2480 = vmatpush.msra.mxu0 %v2455
      %2481 = vmatpush.msra.mxu0 %v2454
      %2482 = vmatpush.msra.mxu0 %v2453
      %2483 = vmatpush.msra.mxu0 %v2452
      %2484 = vmatmul.f32.gmra.mxu0 %v2419
      %v2485 = vpop.f32.mrf.mxu0
      %v2486 = vadd.f32 0.0, %v2485
      %2487 = vmatmul.f32.gmra.mxu0 %v2420
      %v2488 = vpop.f32.mrf.mxu0
      %v2489 = vadd.f32 0.0, %v2488
      %2490 = vmatmul.f32.gmra.mxu0 %v2421
      %v2491 = vpop.f32.mrf.mxu0
      %v2492 = vadd.f32 0.0, %v2491
      %2493 = vmatmul.f32.gmra.mxu0 %v2422
      %v2494 = vpop.f32.mrf.mxu0
      %v2495 = vadd.f32 0.0, %v2494
      %2496 = vmatmul.f32.gmra.mxu0 %v2423
      %v2497 = vpop.f32.mrf.mxu0
      %v2498 = vadd.f32 0.0, %v2497
      %2499 = vmatmul.f32.gmra.mxu0 %v2424
      %v2500 = vpop.f32.mrf.mxu0
      %v2501 = vadd.f32 0.0, %v2500
      %2502 = vmatmul.f32.gmra.mxu0 %v2425
      %v2503 = vpop.f32.mrf.mxu0
      %v2504 = vadd.f32 0.0, %v2503
      %2505 = vmatmul.f32.gmra.mxu0 %v2426
      %v2506 = vpop.f32.mrf.mxu0
      %v2507 = vadd.f32 0.0, %v2506
      %2508 = vmatmul.f32.gmra.mxu0 %v2427
      %v2509 = vpop.f32.mrf.mxu0
      %v2510 = vadd.f32 0.0, %v2509
      %2511 = vmatmul.f32.gmra.mxu0 %v2428
      %v2512 = vpop.f32.mrf.mxu0
      %v2513 = vadd.f32 0.0, %v2512
      %2514 = vmatmul.f32.gmra.mxu0 %v2429
      %v2515 = vpop.f32.mrf.mxu0
      %v2516 = vadd.f32 0.0, %v2515
      %2517 = vmatmul.f32.gmra.mxu0 %v2430
      %v2518 = vpop.f32.mrf.mxu0
      %v2519 = vadd.f32 0.0, %v2518
      %2520 = vmatmul.f32.gmra.mxu0 %v2431
      %v2521 = vpop.f32.mrf.mxu0
      %v2522 = vadd.f32 0.0, %v2521
      %2523 = vmatmul.f32.gmra.mxu0 %v2432
      %v2524 = vpop.f32.mrf.mxu0
      %v2525 = vadd.f32 0.0, %v2524
      %2526 = vmatmul.f32.gmra.mxu0 %v2433
      %v2527 = vpop.f32.mrf.mxu0
      %v2528 = vadd.f32 0.0, %v2527
      %2529 = vmatmul.f32.gmra.mxu0 %v2434
      %v2530 = vpop.f32.mrf.mxu0
      %v2531 = vadd.f32 0.0, %v2530
      %2532 = vmatmul.f32.gmra.mxu0 %v2435
      %v2533 = vpop.f32.mrf.mxu0
      %v2534 = vadd.f32 0.0, %v2533
      %2535 = vmatmul.f32.gmra.mxu0 %v2436
      %v2536 = vpop.f32.mrf.mxu0
      %v2537 = vadd.f32 0.0, %v2536
      %2538 = vmatmul.f32.gmra.mxu0 %v2437
      %v2539 = vpop.f32.mrf.mxu0
      %v2540 = vadd.f32 0.0, %v2539
      %2541 = vmatmul.f32.gmra.mxu0 %v2438
      %v2542 = vpop.f32.mrf.mxu0
      %v2543 = vadd.f32 0.0, %v2542
      %2544 = vmatmul.f32.gmra.mxu0 %v2439
      %v2545 = vpop.f32.mrf.mxu0
      %v2546 = vadd.f32 0.0, %v2545
      %2547 = vmatmul.f32.gmra.mxu0 %v2440
      %v2548 = vpop.f32.mrf.mxu0
      %v2549 = vadd.f32 0.0, %v2548
      %2550 = vmatmul.f32.gmra.mxu0 %v2441
      %v2551 = vpop.f32.mrf.mxu0
      %v2552 = vadd.f32 0.0, %v2551
      %2553 = vmatmul.f32.gmra.mxu0 %v2442
      %v2554 = vpop.f32.mrf.mxu0
      %v2555 = vadd.f32 0.0, %v2554
      %2556 = vmatmul.f32.gmra.mxu0 %v2443
      %v2557 = vpop.f32.mrf.mxu0
      %v2558 = vadd.f32 0.0, %v2557
      %2559 = vmatmul.f32.gmra.mxu0 %v2444
      %v2560 = vpop.f32.mrf.mxu0
      %v2561 = vadd.f32 0.0, %v2560
      %2562 = vmatmul.f32.gmra.mxu0 %v2445
      %v2563 = vpop.f32.mrf.mxu0
      %v2564 = vadd.f32 0.0, %v2563
      %2565 = vmatmul.f32.gmra.mxu0 %v2446
      %v2566 = vpop.f32.mrf.mxu0
      %v2567 = vadd.f32 0.0, %v2566
      %2568 = vmatmul.f32.gmra.mxu0 %v2447
      %v2569 = vpop.f32.mrf.mxu0
      %v2570 = vadd.f32 0.0, %v2569
      %2571 = vmatmul.f32.gmra.mxu0 %v2448
      %v2572 = vpop.f32.mrf.mxu0
      %v2573 = vadd.f32 0.0, %v2572
      %2574 = vmatmul.f32.gmra.mxu0 %v2449
      %v2575 = vpop.f32.mrf.mxu0
      %v2576 = vadd.f32 0.0, %v2575
      %2577 = vmatmul.f32.gmra.mxu0 %v2450
      %v2578 = vpop.f32.mrf.mxu0
      %v2579 = vadd.f32 0.0, %v2578
      %2580 = vdwg.mxu0
      %v2581 = vld [vmem:[#allocation4] sm:$0xff]
      %v2582 = vld [vmem:[#allocation4 + $0x8] sm:$0xff]
      %v2583 = vld [vmem:[#allocation4 + $0x10] sm:$0xff]
      %v2584 = vld [vmem:[#allocation4 + $0x18] sm:$0xff]
      %v2585 = vld [vmem:[#allocation4 + $0x20] sm:$0xff]
      %v2586 = vld [vmem:[#allocation4 + $0x28] sm:$0xff]
      %v2587 = vld [vmem:[#allocation4 + $0x30] sm:$0xff]
      %v2588 = vld [vmem:[#allocation4 + $0x38] sm:$0xff]
      %v2589 = vld [vmem:[#allocation4 + $0x40] sm:$0xff]
      %v2590 = vld [vmem:[#allocation4 + $0x48] sm:$0xff]
      %v2591 = vld [vmem:[#allocation4 + $0x50] sm:$0xff]
      %v2592 = vld [vmem:[#allocation4 + $0x58] sm:$0xff]
      %v2593 = vld [vmem:[#allocation4 + $0x60] sm:$0xff]
      %v2594 = vld [vmem:[#allocation4 + $0x68] sm:$0xff]
      %v2595 = vld [vmem:[#allocation4 + $0x70] sm:$0xff]
      %v2596 = vld [vmem:[#allocation4 + $0x78] sm:$0xff]
      %v2597 = vld [vmem:[#allocation4 + $0x80] sm:$0xff]
      %v2598 = vld [vmem:[#allocation4 + $0x88] sm:$0xff]
      %v2599 = vld [vmem:[#allocation4 + $0x90] sm:$0xff]
      %v2600 = vld [vmem:[#allocation4 + $0x98] sm:$0xff]
      %v2601 = vld [vmem:[#allocation4 + $0xa0] sm:$0xff]
      %v2602 = vld [vmem:[#allocation4 + $0xa8] sm:$0xff]
      %v2603 = vld [vmem:[#allocation4 + $0xb0] sm:$0xff]
      %v2604 = vld [vmem:[#allocation4 + $0xb8] sm:$0xff]
      %v2605 = vld [vmem:[#allocation4 + $0xc0] sm:$0xff]
      %v2606 = vld [vmem:[#allocation4 + $0xc8] sm:$0xff]
      %v2607 = vld [vmem:[#allocation4 + $0xd0] sm:$0xff]
      %v2608 = vld [vmem:[#allocation4 + $0xd8] sm:$0xff]
      %v2609 = vld [vmem:[#allocation4 + $0xe0] sm:$0xff]
      %v2610 = vld [vmem:[#allocation4 + $0xe8] sm:$0xff]
      %v2611 = vld [vmem:[#allocation4 + $0xf0] sm:$0xff]
      %v2612 = vld [vmem:[#allocation4 + $0xf8] sm:$0xff]
      %v2613 = vadd.f32 %v2581, %v2486
      %v2614 = vadd.f32 %v2582, %v2489
      %v2615 = vadd.f32 %v2583, %v2492
      %v2616 = vadd.f32 %v2584, %v2495
      %v2617 = vadd.f32 %v2585, %v2498
      %v2618 = vadd.f32 %v2586, %v2501
      %v2619 = vadd.f32 %v2587, %v2504
      %v2620 = vadd.f32 %v2588, %v2507
      %v2621 = vadd.f32 %v2589, %v2510
      %v2622 = vadd.f32 %v2590, %v2513
      %v2623 = vadd.f32 %v2591, %v2516
      %v2624 = vadd.f32 %v2592, %v2519
      %v2625 = vadd.f32 %v2593, %v2522
      %v2626 = vadd.f32 %v2594, %v2525
      %v2627 = vadd.f32 %v2595, %v2528
      %v2628 = vadd.f32 %v2596, %v2531
      %v2629 = vadd.f32 %v2597, %v2534
      %v2630 = vadd.f32 %v2598, %v2537
      %v2631 = vadd.f32 %v2599, %v2540
      %v2632 = vadd.f32 %v2600, %v2543
      %v2633 = vadd.f32 %v2601, %v2546
      %v2634 = vadd.f32 %v2602, %v2549
      %v2635 = vadd.f32 %v2603, %v2552
      %v2636 = vadd.f32 %v2604, %v2555
      %v2637 = vadd.f32 %v2605, %v2558
      %v2638 = vadd.f32 %v2606, %v2561
      %v2639 = vadd.f32 %v2607, %v2564
      %v2640 = vadd.f32 %v2608, %v2567
      %v2641 = vadd.f32 %v2609, %v2570
      %v2642 = vadd.f32 %v2610, %v2573
      %v2643 = vadd.f32 %v2611, %v2576
      %v2644 = vadd.f32 %v2612, %v2579
      %2645 = vst [vmem:[#allocation4] sm:$0xff] %v2613
      %2646 = vst [vmem:[#allocation4 + $0x8] sm:$0xff] %v2614
      %2647 = vst [vmem:[#allocation4 + $0x10] sm:$0xff] %v2615
      %2648 = vst [vmem:[#allocation4 + $0x18] sm:$0xff] %v2616
      %2649 = vst [vmem:[#allocation4 + $0x20] sm:$0xff] %v2617
      %2650 = vst [vmem:[#allocation4 + $0x28] sm:$0xff] %v2618
      %2651 = vst [vmem:[#allocation4 + $0x30] sm:$0xff] %v2619
      %2652 = vst [vmem:[#allocation4 + $0x38] sm:$0xff] %v2620
      %2653 = vst [vmem:[#allocation4 + $0x40] sm:$0xff] %v2621
      %2654 = vst [vmem:[#allocation4 + $0x48] sm:$0xff] %v2622
      %2655 = vst [vmem:[#allocation4 + $0x50] sm:$0xff] %v2623
      %2656 = vst [vmem:[#allocation4 + $0x58] sm:$0xff] %v2624
      %2657 = vst [vmem:[#allocation4 + $0x60] sm:$0xff] %v2625
      %2658 = vst [vmem:[#allocation4 + $0x68] sm:$0xff] %v2626
      %2659 = vst [vmem:[#allocation4 + $0x70] sm:$0xff] %v2627
      %2660 = vst [vmem:[#allocation4 + $0x78] sm:$0xff] %v2628
      %2661 = vst [vmem:[#allocation4 + $0x80] sm:$0xff] %v2629
      %2662 = vst [vmem:[#allocation4 + $0x88] sm:$0xff] %v2630
      %2663 = vst [vmem:[#allocation4 + $0x90] sm:$0xff] %v2631
      %2664 = vst [vmem:[#allocation4 + $0x98] sm:$0xff] %v2632
      %2665 = vst [vmem:[#allocation4 + $0xa0] sm:$0xff] %v2633
      %2666 = vst [vmem:[#allocation4 + $0xa8] sm:$0xff] %v2634
      %2667 = vst [vmem:[#allocation4 + $0xb0] sm:$0xff] %v2635
      %2668 = vst [vmem:[#allocation4 + $0xb8] sm:$0xff] %v2636
      %2669 = vst [vmem:[#allocation4 + $0xc0] sm:$0xff] %v2637
      %2670 = vst [vmem:[#allocation4 + $0xc8] sm:$0xff] %v2638
      %2671 = vst [vmem:[#allocation4 + $0xd0] sm:$0xff] %v2639
      %2672 = vst [vmem:[#allocation4 + $0xd8] sm:$0xff] %v2640
      %2673 = vst [vmem:[#allocation4 + $0xe0] sm:$0xff] %v2641
      %2674 = vst [vmem:[#allocation4 + $0xe8] sm:$0xff] %v2642
      %2675 = vst [vmem:[#allocation4 + $0xf0] sm:$0xff] %v2643
      %2676 = vst [vmem:[#allocation4 + $0xf8] sm:$0xff] %v2644
      %v2677 = vld [vmem:[#allocation4] sm:$0xff]
      %v2678 = vld [vmem:[#allocation4 + $0x8] sm:$0xff]
      %v2679 = vld [vmem:[#allocation4 + $0x10] sm:$0xff]
      %v2680 = vld [vmem:[#allocation4 + $0x18] sm:$0xff]
      %v2681 = vld [vmem:[#allocation4 + $0x20] sm:$0xff]
      %v2682 = vld [vmem:[#allocation4 + $0x28] sm:$0xff]
      %v2683 = vld [vmem:[#allocation4 + $0x30] sm:$0xff]
      %v2684 = vld [vmem:[#allocation4 + $0x38] sm:$0xff]
      %v2685 = vld [vmem:[#allocation4 + $0x40] sm:$0xff]
      %v2686 = vld [vmem:[#allocation4 + $0x48] sm:$0xff]
      %v2687 = vld [vmem:[#allocation4 + $0x50] sm:$0xff]
      %v2688 = vld [vmem:[#allocation4 + $0x58] sm:$0xff]
      %v2689 = vld [vmem:[#allocation4 + $0x60] sm:$0xff]
      %v2690 = vld [vmem:[#allocation4 + $0x68] sm:$0xff]
      %v2691 = vld [vmem:[#allocation4 + $0x70] sm:$0xff]
      %v2692 = vld [vmem:[#allocation4 + $0x78] sm:$0xff]
      %v2693 = vld [vmem:[#allocation4 + $0x80] sm:$0xff]
      %v2694 = vld [vmem:[#allocation4 + $0x88] sm:$0xff]
      %v2695 = vld [vmem:[#allocation4 + $0x90] sm:$0xff]
      %v2696 = vld [vmem:[#allocation4 + $0x98] sm:$0xff]
      %v2697 = vld [vmem:[#allocation4 + $0xa0] sm:$0xff]
      %v2698 = vld [vmem:[#allocation4 + $0xa8] sm:$0xff]
      %v2699 = vld [vmem:[#allocation4 + $0xb0] sm:$0xff]
      %v2700 = vld [vmem:[#allocation4 + $0xb8] sm:$0xff]
      %v2701 = vld [vmem:[#allocation4 + $0xc0] sm:$0xff]
      %v2702 = vld [vmem:[#allocation4 + $0xc8] sm:$0xff]
      %v2703 = vld [vmem:[#allocation4 + $0xd0] sm:$0xff]
      %v2704 = vld [vmem:[#allocation4 + $0xd8] sm:$0xff]
      %v2705 = vld [vmem:[#allocation4 + $0xe0] sm:$0xff]
      %v2706 = vld [vmem:[#allocation4 + $0xe8] sm:$0xff]
      %v2707 = vld [vmem:[#allocation4 + $0xf0] sm:$0xff]
      %v2708 = vld [vmem:[#allocation4 + $0xf8] sm:$0xff]
      %v2709 = vld [vmem:[%s2] sm:$0x1]
      %v2711 = vperm.slane %v2709, 0
      %v2713 = vadd.f32 %v2677, %v2711
      %v2714 = vadd.f32 %v2678, %v2711
      %v2715 = vadd.f32 %v2679, %v2711
      %v2716 = vadd.f32 %v2680, %v2711
      %v2717 = vadd.f32 %v2681, %v2711
      %v2718 = vadd.f32 %v2682, %v2711
      %v2719 = vadd.f32 %v2683, %v2711
      %v2720 = vadd.f32 %v2684, %v2711
      %v2721 = vadd.f32 %v2685, %v2711
      %v2722 = vadd.f32 %v2686, %v2711
      %v2723 = vadd.f32 %v2687, %v2711
      %v2724 = vadd.f32 %v2688, %v2711
      %v2725 = vadd.f32 %v2689, %v2711
      %v2726 = vadd.f32 %v2690, %v2711
      %v2727 = vadd.f32 %v2691, %v2711
      %v2728 = vadd.f32 %v2692, %v2711
      %v2729 = vadd.f32 %v2693, %v2711
      %v2730 = vadd.f32 %v2694, %v2711
      %v2731 = vadd.f32 %v2695, %v2711
      %v2732 = vadd.f32 %v2696, %v2711
      %v2733 = vadd.f32 %v2697, %v2711
      %v2734 = vadd.f32 %v2698, %v2711
      %v2735 = vadd.f32 %v2699, %v2711
      %v2736 = vadd.f32 %v2700, %v2711
      %v2737 = vadd.f32 %v2701, %v2711
      %v2738 = vadd.f32 %v2702, %v2711
      %v2739 = vadd.f32 %v2703, %v2711
      %v2740 = vadd.f32 %v2704, %v2711
      %v2741 = vadd.f32 %v2705, %v2711
      %v2742 = vadd.f32 %v2706, %v2711
      %v2743 = vadd.f32 %v2707, %v2711
      %v2744 = vadd.f32 %v2708, %v2711
      %v2745 = vmax.f32 %v2713, 0.0
      %v2746 = vmax.f32 %v2714, 0.0
      %v2747 = vmax.f32 %v2715, 0.0
      %v2748 = vmax.f32 %v2716, 0.0
      %v2749 = vmax.f32 %v2717, 0.0
      %v2750 = vmax.f32 %v2718, 0.0
      %v2751 = vmax.f32 %v2719, 0.0
      %v2752 = vmax.f32 %v2720, 0.0
      %v2753 = vmax.f32 %v2721, 0.0
      %v2754 = vmax.f32 %v2722, 0.0
      %v2755 = vmax.f32 %v2723, 0.0
      %v2756 = vmax.f32 %v2724, 0.0
      %v2757 = vmax.f32 %v2725, 0.0
      %v2758 = vmax.f32 %v2726, 0.0
      %v2759 = vmax.f32 %v2727, 0.0
      %v2760 = vmax.f32 %v2728, 0.0
      %v2761 = vmax.f32 %v2729, 0.0
      %v2762 = vmax.f32 %v2730, 0.0
      %v2763 = vmax.f32 %v2731, 0.0
      %v2764 = vmax.f32 %v2732, 0.0
      %v2765 = vmax.f32 %v2733, 0.0
      %v2766 = vmax.f32 %v2734, 0.0
      %v2767 = vmax.f32 %v2735, 0.0
      %v2768 = vmax.f32 %v2736, 0.0
      %v2769 = vmax.f32 %v2737, 0.0
      %v2770 = vmax.f32 %v2738, 0.0
      %v2771 = vmax.f32 %v2739, 0.0
      %v2772 = vmax.f32 %v2740, 0.0
      %v2773 = vmax.f32 %v2741, 0.0
      %v2774 = vmax.f32 %v2742, 0.0
      %v2775 = vmax.f32 %v2743, 0.0
      %v2776 = vmax.f32 %v2744, 0.0
      %2777 = vst [vmem:[#allocation3] sm:$0xff] 0.0
      %2778 = vst [vmem:[#allocation3 + $0x8] sm:$0xff] 0.0
      %2779 = vst [vmem:[#allocation3 + $0x10] sm:$0x3] 0.0
      %s2780 = scalar_lea.vmem [#allocation3], 408
      %2781 = vst [vmem:[%s2780] sm:$0xff] 0.0
      %2782 = vst [vmem:[%s2780 + $0x8] sm:$0xff] 0.0
      %2783 = vst [vmem:[%s2780 + $0x10] sm:$0x3] 0.0
      %2784 = vst [vmem:[#allocation3] sm:$0x1] 0.0
      %2785 = vst [vmem:[#allocation3 + $0x18] sm:$0x1] 0.0
      %2786 = vst [vmem:[#allocation3 + $0x30] sm:$0x1] 0.0
      %2787 = vst [vmem:[#allocation3 + $0x48] sm:$0x1] 0.0
      %2788 = vst [vmem:[#allocation3 + $0x60] sm:$0x1] 0.0
      %2789 = vst [vmem:[#allocation3 + $0x78] sm:$0x1] 0.0
      %2790 = vst [vmem:[#allocation3 + $0x90] sm:$0x1] 0.0
      %2791 = vst [vmem:[#allocation3 + $0xa8] sm:$0x1] 0.0
      %2792 = vst [vmem:[#allocation3 + $0xc0] sm:$0x1] 0.0
      %2793 = vst [vmem:[#allocation3 + $0xd8] sm:$0x1] 0.0
      %2794 = vst [vmem:[#allocation3 + $0xf0] sm:$0x1] 0.0
      %2795 = vst [vmem:[#allocation3 + $0x108] sm:$0x1] 0.0
      %2796 = vst [vmem:[#allocation3 + $0x120] sm:$0x1] 0.0
      %2797 = vst [vmem:[#allocation3 + $0x138] sm:$0x1] 0.0
      %2798 = vst [vmem:[#allocation3 + $0x150] sm:$0x1] 0.0
      %2799 = vst [vmem:[#allocation3 + $0x168] sm:$0x1] 0.0
      %2800 = vst [vmem:[#allocation3 + $0x180] sm:$0x1] 0.0
      %2801 = vst [vmem:[#allocation3 + $0x198] sm:$0x1] 0.0
      %2802 = vst [vmem:[#allocation3 + $0x11] sm:$0x1] 0.0
      %2803 = vst [vmem:[#allocation3 + $0x29] sm:$0x1] 0.0
      %2804 = vst [vmem:[#allocation3 + $0x41] sm:$0x1] 0.0
      %2805 = vst [vmem:[#allocation3 + $0x59] sm:$0x1] 0.0
      %2806 = vst [vmem:[#allocation3 + $0x71] sm:$0x1] 0.0
      %2807 = vst [vmem:[#allocation3 + $0x89] sm:$0x1] 0.0
      %2808 = vst [vmem:[#allocation3 + $0xa1] sm:$0x1] 0.0
      %2809 = vst [vmem:[#allocation3 + $0xb9] sm:$0x1] 0.0
      %2810 = vst [vmem:[#allocation3 + $0xd1] sm:$0x1] 0.0
      %2811 = vst [vmem:[#allocation3 + $0xe9] sm:$0x1] 0.0
      %2812 = vst [vmem:[#allocation3 + $0x101] sm:$0x1] 0.0
      %2813 = vst [vmem:[#allocation3 + $0x119] sm:$0x1] 0.0
      %2814 = vst [vmem:[#allocation3 + $0x131] sm:$0x1] 0.0
      %2815 = vst [vmem:[#allocation3 + $0x149] sm:$0x1] 0.0
      %2816 = vst [vmem:[#allocation3 + $0x161] sm:$0x1] 0.0
      %2817 = vst [vmem:[#allocation3 + $0x179] sm:$0x1] 0.0
      %2818 = vst [vmem:[#allocation3 + $0x191] sm:$0x1] 0.0
      %2819 = vst [vmem:[#allocation3 + $0x1a9] sm:$0x1] 0.0
      %s2820 = scalar_lea.vmem [#allocation3], 24
      %2821 = vst [vmem:[%s2820 + $0x1] sm:$0xff] %v2745
      %2822 = vst [vmem:[%s2820 + $0x9] sm:$0xff] %v2746
      %2823 = vst [vmem:[%s2820 + $0x19] sm:$0xff] %v2747
      %2824 = vst [vmem:[%s2820 + $0x21] sm:$0xff] %v2748
      %2825 = vst [vmem:[%s2820 + $0x31] sm:$0xff] %v2749
      %2826 = vst [vmem:[%s2820 + $0x39] sm:$0xff] %v2750
      %2827 = vst [vmem:[%s2820 + $0x49] sm:$0xff] %v2751
      %2828 = vst [vmem:[%s2820 + $0x51] sm:$0xff] %v2752
      %2829 = vst [vmem:[%s2820 + $0x61] sm:$0xff] %v2753
      %2830 = vst [vmem:[%s2820 + $0x69] sm:$0xff] %v2754
      %2831 = vst [vmem:[%s2820 + $0x79] sm:$0xff] %v2755
      %2832 = vst [vmem:[%s2820 + $0x81] sm:$0xff] %v2756
      %2833 = vst [vmem:[%s2820 + $0x91] sm:$0xff] %v2757
      %2834 = vst [vmem:[%s2820 + $0x99] sm:$0xff] %v2758
      %2835 = vst [vmem:[%s2820 + $0xa9] sm:$0xff] %v2759
      %2836 = vst [vmem:[%s2820 + $0xb1] sm:$0xff] %v2760
      %2837 = vst [vmem:[%s2820 + $0xc1] sm:$0xff] %v2761
      %2838 = vst [vmem:[%s2820 + $0xc9] sm:$0xff] %v2762
      %2839 = vst [vmem:[%s2820 + $0xd9] sm:$0xff] %v2763
      %2840 = vst [vmem:[%s2820 + $0xe1] sm:$0xff] %v2764
      %2841 = vst [vmem:[%s2820 + $0xf1] sm:$0xff] %v2765
      %2842 = vst [vmem:[%s2820 + $0xf9] sm:$0xff] %v2766
      %2843 = vst [vmem:[%s2820 + $0x109] sm:$0xff] %v2767
      %2844 = vst [vmem:[%s2820 + $0x111] sm:$0xff] %v2768
      %2845 = vst [vmem:[%s2820 + $0x121] sm:$0xff] %v2769
      %2846 = vst [vmem:[%s2820 + $0x129] sm:$0xff] %v2770
      %2847 = vst [vmem:[%s2820 + $0x139] sm:$0xff] %v2771
      %2848 = vst [vmem:[%s2820 + $0x141] sm:$0xff] %v2772
      %2849 = vst [vmem:[%s2820 + $0x151] sm:$0xff] %v2773
      %2850 = vst [vmem:[%s2820 + $0x159] sm:$0xff] %v2774
      %2851 = vst [vmem:[%s2820 + $0x169] sm:$0xff] %v2775
      %2852 = vst [vmem:[%s2820 + $0x171] sm:$0xff] %v2776
      %v2853 = vld [vmem:[#allocation3] sm:$0xff]
      %v2854 = vld [vmem:[#allocation3 + $0x8] sm:$0xff]
      %v2855 = vld [vmem:[#allocation3 + $0x18] sm:$0xff]
      %v2856 = vld [vmem:[#allocation3 + $0x20] sm:$0xff]
      %v2857 = vld [vmem:[#allocation3 + $0x30] sm:$0xff]
      %v2858 = vld [vmem:[#allocation3 + $0x38] sm:$0xff]
      %v2859 = vld [vmem:[#allocation3 + $0x48] sm:$0xff]
      %v2860 = vld [vmem:[#allocation3 + $0x50] sm:$0xff]
      %v2861 = vld [vmem:[#allocation3 + $0x60] sm:$0xff]
      %v2862 = vld [vmem:[#allocation3 + $0x68] sm:$0xff]
      %v2863 = vld [vmem:[#allocation3 + $0x78] sm:$0xff]
      %v2864 = vld [vmem:[#allocation3 + $0x80] sm:$0xff]
      %v2865 = vld [vmem:[#allocation3 + $0x90] sm:$0xff]
      %v2866 = vld [vmem:[#allocation3 + $0x98] sm:$0xff]
      %v2867 = vld [vmem:[#allocation3 + $0xa8] sm:$0xff]
      %v2868 = vld [vmem:[#allocation3 + $0xb0] sm:$0xff]
      %v2869 = vld [vmem:[#allocation3 + $0xc0] sm:$0xff]
      %v2870 = vld [vmem:[#allocation3 + $0xc8] sm:$0xff]
      %v2871 = vld [vmem:[#allocation3 + $0xd8] sm:$0xff]
      %v2872 = vld [vmem:[#allocation3 + $0xe0] sm:$0xff]
      %v2873 = vld [vmem:[#allocation3 + $0xf0] sm:$0xff]
      %v2874 = vld [vmem:[#allocation3 + $0xf8] sm:$0xff]
      %v2875 = vld [vmem:[#allocation3 + $0x108] sm:$0xff]
      %v2876 = vld [vmem:[#allocation3 + $0x110] sm:$0xff]
      %v2877 = vld [vmem:[#allocation3 + $0x120] sm:$0xff]
      %v2878 = vld [vmem:[#allocation3 + $0x128] sm:$0xff]
      %v2879 = vld [vmem:[#allocation3 + $0x138] sm:$0xff]
      %v2880 = vld [vmem:[#allocation3 + $0x140] sm:$0xff]
      %v2881 = vld [vmem:[#allocation3 + $0x150] sm:$0xff]
      %v2882 = vld [vmem:[#allocation3 + $0x158] sm:$0xff]
      %v2883 = vld [vmem:[#allocation3 + $0x168] sm:$0xff]
      %v2884 = vld [vmem:[#allocation3 + $0x170] sm:$0xff]
      %v2885 = vld [vmem:[%s3] sm:$0xff]
      %v2886 = vld [vmem:[%s3 + $0x8] sm:$0xff]
      %v2887 = vld [vmem:[%s3 + $0x10] sm:$0xff]
      %v2888 = vld [vmem:[%s3 + $0x18] sm:$0xff]
      %v2889 = vld [vmem:[%s3 + $0x20] sm:$0xff]
      %v2890 = vld [vmem:[%s3 + $0x28] sm:$0xff]
      %v2891 = vld [vmem:[%s3 + $0x30] sm:$0xff]
      %v2892 = vld [vmem:[%s3 + $0x38] sm:$0xff]
      %v2893 = vld [vmem:[%s3 + $0x40] sm:$0xff]
      %v2894 = vld [vmem:[%s3 + $0x48] sm:$0xff]
      %v2895 = vld [vmem:[%s3 + $0x50] sm:$0xff]
      %v2896 = vld [vmem:[%s3 + $0x58] sm:$0xff]
      %v2897 = vld [vmem:[%s3 + $0x60] sm:$0xff]
      %v2898 = vld [vmem:[%s3 + $0x68] sm:$0xff]
      %v2899 = vld [vmem:[%s3 + $0x70] sm:$0xff]
      %v2900 = vld [vmem:[%s3 + $0x78] sm:$0xff]
      %2901 = vmatpush.msra.mxu0 %v2900
      %2902 = vmatpush.msra.mxu0 %v2899
      %2903 = vmatpush.msra.mxu0 %v2898
      %2904 = vmatpush.msra.mxu0 %v2897
      %2905 = vmatpush.msra.mxu0 %v2896
      %2906 = vmatpush.msra.mxu0 %v2895
      %2907 = vmatpush.msra.mxu0 %v2894
      %2908 = vmatpush.msra.mxu0 %v2893
      %2909 = vmatpush.msra.mxu0 %v2892
      %2910 = vmatpush.msra.mxu0 %v2891
      %2911 = vmatpush.msra.mxu0 %v2890
      %2912 = vmatpush.msra.mxu0 %v2889
      %2913 = vmatpush.msra.mxu0 %v2888
      %2914 = vmatpush.msra.mxu0 %v2887
      %2915 = vmatpush.msra.mxu0 %v2886
      %2916 = vmatpush.msra.mxu0 %v2885
      %2917 = vmatmul.f32.gmra.mxu0 %v2853
      %v2918 = vpop.f32.mrf.mxu0
      %v2919 = vadd.f32 0.0, %v2918
      %2920 = vmatmul.f32.gmra.mxu0 %v2854
      %v2921 = vpop.f32.mrf.mxu0
      %v2922 = vadd.f32 0.0, %v2921
      %2923 = vmatmul.f32.gmra.mxu0 %v2855
      %v2924 = vpop.f32.mrf.mxu0
      %v2925 = vadd.f32 0.0, %v2924
      %2926 = vmatmul.f32.gmra.mxu0 %v2856
      %v2927 = vpop.f32.mrf.mxu0
      %v2928 = vadd.f32 0.0, %v2927
      %2929 = vmatmul.f32.gmra.mxu0 %v2857
      %v2930 = vpop.f32.mrf.mxu0
      %v2931 = vadd.f32 0.0, %v2930
      %2932 = vmatmul.f32.gmra.mxu0 %v2858
      %v2933 = vpop.f32.mrf.mxu0
      %v2934 = vadd.f32 0.0, %v2933
      %2935 = vmatmul.f32.gmra.mxu0 %v2859
      %v2936 = vpop.f32.mrf.mxu0
      %v2937 = vadd.f32 0.0, %v2936
      %2938 = vmatmul.f32.gmra.mxu0 %v2860
      %v2939 = vpop.f32.mrf.mxu0
      %v2940 = vadd.f32 0.0, %v2939
      %2941 = vmatmul.f32.gmra.mxu0 %v2861
      %v2942 = vpop.f32.mrf.mxu0
      %v2943 = vadd.f32 0.0, %v2942
      %2944 = vmatmul.f32.gmra.mxu0 %v2862
      %v2945 = vpop.f32.mrf.mxu0
      %v2946 = vadd.f32 0.0, %v2945
      %2947 = vmatmul.f32.gmra.mxu0 %v2863
      %v2948 = vpop.f32.mrf.mxu0
      %v2949 = vadd.f32 0.0, %v2948
      %2950 = vmatmul.f32.gmra.mxu0 %v2864
      %v2951 = vpop.f32.mrf.mxu0
      %v2952 = vadd.f32 0.0, %v2951
      %2953 = vmatmul.f32.gmra.mxu0 %v2865
      %v2954 = vpop.f32.mrf.mxu0
      %v2955 = vadd.f32 0.0, %v2954
      %2956 = vmatmul.f32.gmra.mxu0 %v2866
      %v2957 = vpop.f32.mrf.mxu0
      %v2958 = vadd.f32 0.0, %v2957
      %2959 = vmatmul.f32.gmra.mxu0 %v2867
      %v2960 = vpop.f32.mrf.mxu0
      %v2961 = vadd.f32 0.0, %v2960
      %2962 = vmatmul.f32.gmra.mxu0 %v2868
      %v2963 = vpop.f32.mrf.mxu0
      %v2964 = vadd.f32 0.0, %v2963
      %2965 = vmatmul.f32.gmra.mxu0 %v2869
      %v2966 = vpop.f32.mrf.mxu0
      %v2967 = vadd.f32 0.0, %v2966
      %2968 = vmatmul.f32.gmra.mxu0 %v2870
      %v2969 = vpop.f32.mrf.mxu0
      %v2970 = vadd.f32 0.0, %v2969
      %2971 = vmatmul.f32.gmra.mxu0 %v2871
      %v2972 = vpop.f32.mrf.mxu0
      %v2973 = vadd.f32 0.0, %v2972
      %2974 = vmatmul.f32.gmra.mxu0 %v2872
      %v2975 = vpop.f32.mrf.mxu0
      %v2976 = vadd.f32 0.0, %v2975
      %2977 = vmatmul.f32.gmra.mxu0 %v2873
      %v2978 = vpop.f32.mrf.mxu0
      %v2979 = vadd.f32 0.0, %v2978
      %2980 = vmatmul.f32.gmra.mxu0 %v2874
      %v2981 = vpop.f32.mrf.mxu0
      %v2982 = vadd.f32 0.0, %v2981
      %2983 = vmatmul.f32.gmra.mxu0 %v2875
      %v2984 = vpop.f32.mrf.mxu0
      %v2985 = vadd.f32 0.0, %v2984
      %2986 = vmatmul.f32.gmra.mxu0 %v2876
      %v2987 = vpop.f32.mrf.mxu0
      %v2988 = vadd.f32 0.0, %v2987
      %2989 = vmatmul.f32.gmra.mxu0 %v2877
      %v2990 = vpop.f32.mrf.mxu0
      %v2991 = vadd.f32 0.0, %v2990
      %2992 = vmatmul.f32.gmra.mxu0 %v2878
      %v2993 = vpop.f32.mrf.mxu0
      %v2994 = vadd.f32 0.0, %v2993
      %2995 = vmatmul.f32.gmra.mxu0 %v2879
      %v2996 = vpop.f32.mrf.mxu0
      %v2997 = vadd.f32 0.0, %v2996
      %2998 = vmatmul.f32.gmra.mxu0 %v2880
      %v2999 = vpop.f32.mrf.mxu0
      %v3000 = vadd.f32 0.0, %v2999
      %3001 = vmatmul.f32.gmra.mxu0 %v2881
      %v3002 = vpop.f32.mrf.mxu0
      %v3003 = vadd.f32 0.0, %v3002
      %3004 = vmatmul.f32.gmra.mxu0 %v2882
      %v3005 = vpop.f32.mrf.mxu0
      %v3006 = vadd.f32 0.0, %v3005
      %3007 = vmatmul.f32.gmra.mxu0 %v2883
      %v3008 = vpop.f32.mrf.mxu0
      %v3009 = vadd.f32 0.0, %v3008
      %3010 = vmatmul.f32.gmra.mxu0 %v2884
      %v3011 = vpop.f32.mrf.mxu0
      %v3012 = vadd.f32 0.0, %v3011
      %3013 = vdwg.mxu0
      %3014 = vst [vmem:[#allocation4] sm:$0xff] %v2919
      %3015 = vst [vmem:[#allocation4 + $0x8] sm:$0xff] %v2922
      %3016 = vst [vmem:[#allocation4 + $0x10] sm:$0xff] %v2925
      %3017 = vst [vmem:[#allocation4 + $0x18] sm:$0xff] %v2928
      %3018 = vst [vmem:[#allocation4 + $0x20] sm:$0xff] %v2931
      %3019 = vst [vmem:[#allocation4 + $0x28] sm:$0xff] %v2934
      %3020 = vst [vmem:[#allocation4 + $0x30] sm:$0xff] %v2937
      %3021 = vst [vmem:[#allocation4 + $0x38] sm:$0xff] %v2940
      %3022 = vst [vmem:[#allocation4 + $0x40] sm:$0xff] %v2943
      %3023 = vst [vmem:[#allocation4 + $0x48] sm:$0xff] %v2946
      %3024 = vst [vmem:[#allocation4 + $0x50] sm:$0xff] %v2949
      %3025 = vst [vmem:[#allocation4 + $0x58] sm:$0xff] %v2952
      %3026 = vst [vmem:[#allocation4 + $0x60] sm:$0xff] %v2955
      %3027 = vst [vmem:[#allocation4 + $0x68] sm:$0xff] %v2958
      %3028 = vst [vmem:[#allocation4 + $0x70] sm:$0xff] %v2961
      %3029 = vst [vmem:[#allocation4 + $0x78] sm:$0xff] %v2964
      %3030 = vst [vmem:[#allocation4 + $0x80] sm:$0xff] %v2967
      %3031 = vst [vmem:[#allocation4 + $0x88] sm:$0xff] %v2970
      %3032 = vst [vmem:[#allocation4 + $0x90] sm:$0xff] %v2973
      %3033 = vst [vmem:[#allocation4 + $0x98] sm:$0xff] %v2976
      %3034 = vst [vmem:[#allocation4 + $0xa0] sm:$0xff] %v2979
      %3035 = vst [vmem:[#allocation4 + $0xa8] sm:$0xff] %v2982
      %3036 = vst [vmem:[#allocation4 + $0xb0] sm:$0xff] %v2985
      %3037 = vst [vmem:[#allocation4 + $0xb8] sm:$0xff] %v2988
      %3038 = vst [vmem:[#allocation4 + $0xc0] sm:$0xff] %v2991
      %3039 = vst [vmem:[#allocation4 + $0xc8] sm:$0xff] %v2994
      %3040 = vst [vmem:[#allocation4 + $0xd0] sm:$0xff] %v2997
      %3041 = vst [vmem:[#allocation4 + $0xd8] sm:$0xff] %v3000
      %3042 = vst [vmem:[#allocation4 + $0xe0] sm:$0xff] %v3003
      %3043 = vst [vmem:[#allocation4 + $0xe8] sm:$0xff] %v3006
      %3044 = vst [vmem:[#allocation4 + $0xf0] sm:$0xff] %v3009
      %3045 = vst [vmem:[#allocation4 + $0xf8] sm:$0xff] %v3012
      %v3046 = vld [vmem:[#allocation3 + $0x1] sm:$0xff]
      %v3047 = vld [vmem:[#allocation3 + $0x9] sm:$0xff]
      %v3048 = vld [vmem:[#allocation3 + $0x19] sm:$0xff]
      %v3049 = vld [vmem:[#allocation3 + $0x21] sm:$0xff]
      %v3050 = vld [vmem:[#allocation3 + $0x31] sm:$0xff]
      %v3051 = vld [vmem:[#allocation3 + $0x39] sm:$0xff]
      %v3052 = vld [vmem:[#allocation3 + $0x49] sm:$0xff]
      %v3053 = vld [vmem:[#allocation3 + $0x51] sm:$0xff]
      %v3054 = vld [vmem:[#allocation3 + $0x61] sm:$0xff]
      %v3055 = vld [vmem:[#allocation3 + $0x69] sm:$0xff]
      %v3056 = vld [vmem:[#allocation3 + $0x79] sm:$0xff]
      %v3057 = vld [vmem:[#allocation3 + $0x81] sm:$0xff]
      %v3058 = vld [vmem:[#allocation3 + $0x91] sm:$0xff]
      %v3059 = vld [vmem:[#allocation3 + $0x99] sm:$0xff]
      %v3060 = vld [vmem:[#allocation3 + $0xa9] sm:$0xff]
      %v3061 = vld [vmem:[#allocation3 + $0xb1] sm:$0xff]
      %v3062 = vld [vmem:[#allocation3 + $0xc1] sm:$0xff]
      %v3063 = vld [vmem:[#allocation3 + $0xc9] sm:$0xff]
      %v3064 = vld [vmem:[#allocation3 + $0xd9] sm:$0xff]
      %v3065 = vld [vmem:[#allocation3 + $0xe1] sm:$0xff]
      %v3066 = vld [vmem:[#allocation3 + $0xf1] sm:$0xff]
      %v3067 = vld [vmem:[#allocation3 + $0xf9] sm:$0xff]
      %v3068 = vld [vmem:[#allocation3 + $0x109] sm:$0xff]
      %v3069 = vld [vmem:[#allocation3 + $0x111] sm:$0xff]
      %v3070 = vld [vmem:[#allocation3 + $0x121] sm:$0xff]
      %v3071 = vld [vmem:[#allocation3 + $0x129] sm:$0xff]
      %v3072 = vld [vmem:[#allocation3 + $0x139] sm:$0xff]
      %v3073 = vld [vmem:[#allocation3 + $0x141] sm:$0xff]
      %v3074 = vld [vmem:[#allocation3 + $0x151] sm:$0xff]
      %v3075 = vld [vmem:[#allocation3 + $0x159] sm:$0xff]
      %v3076 = vld [vmem:[#allocation3 + $0x169] sm:$0xff]
      %v3077 = vld [vmem:[#allocation3 + $0x171] sm:$0xff]
      %s3078 = scalar_lea.vmem %s3, 128
      %v3079 = vld [vmem:[%s3078] sm:$0xff]
      %v3080 = vld [vmem:[%s3078 + $0x8] sm:$0xff]
      %v3081 = vld [vmem:[%s3078 + $0x10] sm:$0xff]
      %v3082 = vld [vmem:[%s3078 + $0x18] sm:$0xff]
      %v3083 = vld [vmem:[%s3078 + $0x20] sm:$0xff]
      %v3084 = vld [vmem:[%s3078 + $0x28] sm:$0xff]
      %v3085 = vld [vmem:[%s3078 + $0x30] sm:$0xff]
      %v3086 = vld [vmem:[%s3078 + $0x38] sm:$0xff]
      %v3087 = vld [vmem:[%s3078 + $0x40] sm:$0xff]
      %v3088 = vld [vmem:[%s3078 + $0x48] sm:$0xff]
      %v3089 = vld [vmem:[%s3078 + $0x50] sm:$0xff]
      %v3090 = vld [vmem:[%s3078 + $0x58] sm:$0xff]
      %v3091 = vld [vmem:[%s3078 + $0x60] sm:$0xff]
      %v3092 = vld [vmem:[%s3078 + $0x68] sm:$0xff]
      %v3093 = vld [vmem:[%s3078 + $0x70] sm:$0xff]
      %v3094 = vld [vmem:[%s3078 + $0x78] sm:$0xff]
      %3095 = vmatpush.msra.mxu0 %v3094
      %3096 = vmatpush.msra.mxu0 %v3093
      %3097 = vmatpush.msra.mxu0 %v3092
      %3098 = vmatpush.msra.mxu0 %v3091
      %3099 = vmatpush.msra.mxu0 %v3090
      %3100 = vmatpush.msra.mxu0 %v3089
      %3101 = vmatpush.msra.mxu0 %v3088
      %3102 = vmatpush.msra.mxu0 %v3087
      %3103 = vmatpush.msra.mxu0 %v3086
      %3104 = vmatpush.msra.mxu0 %v3085
      %3105 = vmatpush.msra.mxu0 %v3084
      %3106 = vmatpush.msra.mxu0 %v3083
      %3107 = vmatpush.msra.mxu0 %v3082
      %3108 = vmatpush.msra.mxu0 %v3081
      %3109 = vmatpush.msra.mxu0 %v3080
      %3110 = vmatpush.msra.mxu0 %v3079
      %3111 = vmatmul.f32.gmra.mxu0 %v3046
      %v3112 = vpop.f32.mrf.mxu0
      %v3113 = vadd.f32 0.0, %v3112
      %3114 = vmatmul.f32.gmra.mxu0 %v3047
      %v3115 = vpop.f32.mrf.mxu0
      %v3116 = vadd.f32 0.0, %v3115
      %3117 = vmatmul.f32.gmra.mxu0 %v3048
      %v3118 = vpop.f32.mrf.mxu0
      %v3119 = vadd.f32 0.0, %v3118
      %3120 = vmatmul.f32.gmra.mxu0 %v3049
      %v3121 = vpop.f32.mrf.mxu0
      %v3122 = vadd.f32 0.0, %v3121
      %3123 = vmatmul.f32.gmra.mxu0 %v3050
      %v3124 = vpop.f32.mrf.mxu0
      %v3125 = vadd.f32 0.0, %v3124
      %3126 = vmatmul.f32.gmra.mxu0 %v3051
      %v3127 = vpop.f32.mrf.mxu0
      %v3128 = vadd.f32 0.0, %v3127
      %3129 = vmatmul.f32.gmra.mxu0 %v3052
      %v3130 = vpop.f32.mrf.mxu0
      %v3131 = vadd.f32 0.0, %v3130
      %3132 = vmatmul.f32.gmra.mxu0 %v3053
      %v3133 = vpop.f32.mrf.mxu0
      %v3134 = vadd.f32 0.0, %v3133
      %3135 = vmatmul.f32.gmra.mxu0 %v3054
      %v3136 = vpop.f32.mrf.mxu0
      %v3137 = vadd.f32 0.0, %v3136
      %3138 = vmatmul.f32.gmra.mxu0 %v3055
      %v3139 = vpop.f32.mrf.mxu0
      %v3140 = vadd.f32 0.0, %v3139
      %3141 = vmatmul.f32.gmra.mxu0 %v3056
      %v3142 = vpop.f32.mrf.mxu0
      %v3143 = vadd.f32 0.0, %v3142
      %3144 = vmatmul.f32.gmra.mxu0 %v3057
      %v3145 = vpop.f32.mrf.mxu0
      %v3146 = vadd.f32 0.0, %v3145
      %3147 = vmatmul.f32.gmra.mxu0 %v3058
      %v3148 = vpop.f32.mrf.mxu0
      %v3149 = vadd.f32 0.0, %v3148
      %3150 = vmatmul.f32.gmra.mxu0 %v3059
      %v3151 = vpop.f32.mrf.mxu0
      %v3152 = vadd.f32 0.0, %v3151
      %3153 = vmatmul.f32.gmra.mxu0 %v3060
      %v3154 = vpop.f32.mrf.mxu0
      %v3155 = vadd.f32 0.0, %v3154
      %3156 = vmatmul.f32.gmra.mxu0 %v3061
      %v3157 = vpop.f32.mrf.mxu0
      %v3158 = vadd.f32 0.0, %v3157
      %3159 = vmatmul.f32.gmra.mxu0 %v3062
      %v3160 = vpop.f32.mrf.mxu0
      %v3161 = vadd.f32 0.0, %v3160
      %3162 = vmatmul.f32.gmra.mxu0 %v3063
      %v3163 = vpop.f32.mrf.mxu0
      %v3164 = vadd.f32 0.0, %v3163
      %3165 = vmatmul.f32.gmra.mxu0 %v3064
      %v3166 = vpop.f32.mrf.mxu0
      %v3167 = vadd.f32 0.0, %v3166
      %3168 = vmatmul.f32.gmra.mxu0 %v3065
      %v3169 = vpop.f32.mrf.mxu0
      %v3170 = vadd.f32 0.0, %v3169
      %3171 = vmatmul.f32.gmra.mxu0 %v3066
      %v3172 = vpop.f32.mrf.mxu0
      %v3173 = vadd.f32 0.0, %v3172
      %3174 = vmatmul.f32.gmra.mxu0 %v3067
      %v3175 = vpop.f32.mrf.mxu0
      %v3176 = vadd.f32 0.0, %v3175
      %3177 = vmatmul.f32.gmra.mxu0 %v3068
      %v3178 = vpop.f32.mrf.mxu0
      %v3179 = vadd.f32 0.0, %v3178
      %3180 = vmatmul.f32.gmra.mxu0 %v3069
      %v3181 = vpop.f32.mrf.mxu0
      %v3182 = vadd.f32 0.0, %v3181
      %3183 = vmatmul.f32.gmra.mxu0 %v3070
      %v3184 = vpop.f32.mrf.mxu0
      %v3185 = vadd.f32 0.0, %v3184
      %3186 = vmatmul.f32.gmra.mxu0 %v3071
      %v3187 = vpop.f32.mrf.mxu0
      %v3188 = vadd.f32 0.0, %v3187
      %3189 = vmatmul.f32.gmra.mxu0 %v3072
      %v3190 = vpop.f32.mrf.mxu0
      %v3191 = vadd.f32 0.0, %v3190
      %3192 = vmatmul.f32.gmra.mxu0 %v3073
      %v3193 = vpop.f32.mrf.mxu0
      %v3194 = vadd.f32 0.0, %v3193
      %3195 = vmatmul.f32.gmra.mxu0 %v3074
      %v3196 = vpop.f32.mrf.mxu0
      %v3197 = vadd.f32 0.0, %v3196
      %3198 = vmatmul.f32.gmra.mxu0 %v3075
      %v3199 = vpop.f32.mrf.mxu0
      %v3200 = vadd.f32 0.0, %v3199
      %3201 = vmatmul.f32.gmra.mxu0 %v3076
      %v3202 = vpop.f32.mrf.mxu0
      %v3203 = vadd.f32 0.0, %v3202
      %3204 = vmatmul.f32.gmra.mxu0 %v3077
      %v3205 = vpop.f32.mrf.mxu0
      %v3206 = vadd.f32 0.0, %v3205
      %3207 = vdwg.mxu0
      %v3208 = vld [vmem:[#allocation4] sm:$0xff]
      %v3209 = vld [vmem:[#allocation4 + $0x8] sm:$0xff]
      %v3210 = vld [vmem:[#allocation4 + $0x10] sm:$0xff]
      %v3211 = vld [vmem:[#allocation4 + $0x18] sm:$0xff]
      %v3212 = vld [vmem:[#allocation4 + $0x20] sm:$0xff]
      %v3213 = vld [vmem:[#allocation4 + $0x28] sm:$0xff]
      %v3214 = vld [vmem:[#allocation4 + $0x30] sm:$0xff]
      %v3215 = vld [vmem:[#allocation4 + $0x38] sm:$0xff]
      %v3216 = vld [vmem:[#allocation4 + $0x40] sm:$0xff]
      %v3217 = vld [vmem:[#allocation4 + $0x48] sm:$0xff]
      %v3218 = vld [vmem:[#allocation4 + $0x50] sm:$0xff]
      %v3219 = vld [vmem:[#allocation4 + $0x58] sm:$0xff]
      %v3220 = vld [vmem:[#allocation4 + $0x60] sm:$0xff]
      %v3221 = vld [vmem:[#allocation4 + $0x68] sm:$0xff]
      %v3222 = vld [vmem:[#allocation4 + $0x70] sm:$0xff]
      %v3223 = vld [vmem:[#allocation4 + $0x78] sm:$0xff]
      %v3224 = vld [vmem:[#allocation4 + $0x80] sm:$0xff]
      %v3225 = vld [vmem:[#allocation4 + $0x88] sm:$0xff]
      %v3226 = vld [vmem:[#allocation4 + $0x90] sm:$0xff]
      %v3227 = vld [vmem:[#allocation4 + $0x98] sm:$0xff]
      %v3228 = vld [vmem:[#allocation4 + $0xa0] sm:$0xff]
      %v3229 = vld [vmem:[#allocation4 + $0xa8] sm:$0xff]
      %v3230 = vld [vmem:[#allocation4 + $0xb0] sm:$0xff]
      %v3231 = vld [vmem:[#allocation4 + $0xb8] sm:$0xff]
      %v3232 = vld [vmem:[#allocation4 + $0xc0] sm:$0xff]
      %v3233 = vld [vmem:[#allocation4 + $0xc8] sm:$0xff]
      %v3234 = vld [vmem:[#allocation4 + $0xd0] sm:$0xff]
      %v3235 = vld [vmem:[#allocation4 + $0xd8] sm:$0xff]
      %v3236 = vld [vmem:[#allocation4 + $0xe0] sm:$0xff]
      %v3237 = vld [vmem:[#allocation4 + $0xe8] sm:$0xff]
      %v3238 = vld [vmem:[#allocation4 + $0xf0] sm:$0xff]
      %v3239 = vld [vmem:[#allocation4 + $0xf8] sm:$0xff]
      %v3240 = vadd.f32 %v3208, %v3113
      %v3241 = vadd.f32 %v3209, %v3116
      %v3242 = vadd.f32 %v3210, %v3119
      %v3243 = vadd.f32 %v3211, %v3122
      %v3244 = vadd.f32 %v3212, %v3125
      %v3245 = vadd.f32 %v3213, %v3128
      %v3246 = vadd.f32 %v3214, %v3131
      %v3247 = vadd.f32 %v3215, %v3134
      %v3248 = vadd.f32 %v3216, %v3137
      %v3249 = vadd.f32 %v3217, %v3140
      %v3250 = vadd.f32 %v3218, %v3143
      %v3251 = vadd.f32 %v3219, %v3146
      %v3252 = vadd.f32 %v3220, %v3149
      %v3253 = vadd.f32 %v3221, %v3152
      %v3254 = vadd.f32 %v3222, %v3155
      %v3255 = vadd.f32 %v3223, %v3158
      %v3256 = vadd.f32 %v3224, %v3161
      %v3257 = vadd.f32 %v3225, %v3164
      %v3258 = vadd.f32 %v3226, %v3167
      %v3259 = vadd.f32 %v3227, %v3170
      %v3260 = vadd.f32 %v3228, %v3173
      %v3261 = vadd.f32 %v3229, %v3176
      %v3262 = vadd.f32 %v3230, %v3179
      %v3263 = vadd.f32 %v3231, %v3182
      %v3264 = vadd.f32 %v3232, %v3185
      %v3265 = vadd.f32 %v3233, %v3188
      %v3266 = vadd.f32 %v3234, %v3191
      %v3267 = vadd.f32 %v3235, %v3194
      %v3268 = vadd.f32 %v3236, %v3197
      %v3269 = vadd.f32 %v3237, %v3200
      %v3270 = vadd.f32 %v3238, %v3203
      %v3271 = vadd.f32 %v3239, %v3206
      %3272 = vst [vmem:[#allocation4] sm:$0xff] %v3240
      %3273 = vst [vmem:[#allocation4 + $0x8] sm:$0xff] %v3241
      %3274 = vst [vmem:[#allocation4 + $0x10] sm:$0xff] %v3242
      %3275 = vst [vmem:[#allocation4 + $0x18] sm:$0xff] %v3243
      %3276 = vst [vmem:[#allocation4 + $0x20] sm:$0xff] %v3244
      %3277 = vst [vmem:[#allocation4 + $0x28] sm:$0xff] %v3245
      %3278 = vst [vmem:[#allocation4 + $0x30] sm:$0xff] %v3246
      %3279 = vst [vmem:[#allocation4 + $0x38] sm:$0xff] %v3247
      %3280 = vst [vmem:[#allocation4 + $0x40] sm:$0xff] %v3248
      %3281 = vst [vmem:[#allocation4 + $0x48] sm:$0xff] %v3249
      %3282 = vst [vmem:[#allocation4 + $0x50] sm:$0xff] %v3250
      %3283 = vst [vmem:[#allocation4 + $0x58] sm:$0xff] %v3251
      %3284 = vst [vmem:[#allocation4 + $0x60] sm:$0xff] %v3252
      %3285 = vst [vmem:[#allocation4 + $0x68] sm:$0xff] %v3253
      %3286 = vst [vmem:[#allocation4 + $0x70] sm:$0xff] %v3254
      %3287 = vst [vmem:[#allocation4 + $0x78] sm:$0xff] %v3255
      %3288 = vst [vmem:[#allocation4 + $0x80] sm:$0xff] %v3256
      %3289 = vst [vmem:[#allocation4 + $0x88] sm:$0xff] %v3257
      %3290 = vst [vmem:[#allocation4 + $0x90] sm:$0xff] %v3258
      %3291 = vst [vmem:[#allocation4 + $0x98] sm:$0xff] %v3259
      %3292 = vst [vmem:[#allocation4 + $0xa0] sm:$0xff] %v3260
      %3293 = vst [vmem:[#allocation4 + $0xa8] sm:$0xff] %v3261
      %3294 = vst [vmem:[#allocation4 + $0xb0] sm:$0xff] %v3262
      %3295 = vst [vmem:[#allocation4 + $0xb8] sm:$0xff] %v3263
      %3296 = vst [vmem:[#allocation4 + $0xc0] sm:$0xff] %v3264
      %3297 = vst [vmem:[#allocation4 + $0xc8] sm:$0xff] %v3265
      %3298 = vst [vmem:[#allocation4 + $0xd0] sm:$0xff] %v3266
      %3299 = vst [vmem:[#allocation4 + $0xd8] sm:$0xff] %v3267
      %3300 = vst [vmem:[#allocation4 + $0xe0] sm:$0xff] %v3268
      %3301 = vst [vmem:[#allocation4 + $0xe8] sm:$0xff] %v3269
      %3302 = vst [vmem:[#allocation4 + $0xf0] sm:$0xff] %v3270
      %3303 = vst [vmem:[#allocation4 + $0xf8] sm:$0xff] %v3271
      %v3304 = vld [vmem:[#allocation3 + $0x2] sm:$0xff]
      %v3305 = vld [vmem:[#allocation3 + $0xa] sm:$0xff]
      %v3306 = vld [vmem:[#allocation3 + $0x1a] sm:$0xff]
      %v3307 = vld [vmem:[#allocation3 + $0x22] sm:$0xff]
      %v3308 = vld [vmem:[#allocation3 + $0x32] sm:$0xff]
      %v3309 = vld [vmem:[#allocation3 + $0x3a] sm:$0xff]
      %v3310 = vld [vmem:[#allocation3 + $0x4a] sm:$0xff]
      %v3311 = vld [vmem:[#allocation3 + $0x52] sm:$0xff]
      %v3312 = vld [vmem:[#allocation3 + $0x62] sm:$0xff]
      %v3313 = vld [vmem:[#allocation3 + $0x6a] sm:$0xff]
      %v3314 = vld [vmem:[#allocation3 + $0x7a] sm:$0xff]
      %v3315 = vld [vmem:[#allocation3 + $0x82] sm:$0xff]
      %v3316 = vld [vmem:[#allocation3 + $0x92] sm:$0xff]
      %v3317 = vld [vmem:[#allocation3 + $0x9a] sm:$0xff]
      %v3318 = vld [vmem:[#allocation3 + $0xaa] sm:$0xff]
      %v3319 = vld [vmem:[#allocation3 + $0xb2] sm:$0xff]
      %v3320 = vld [vmem:[#allocation3 + $0xc2] sm:$0xff]
      %v3321 = vld [vmem:[#allocation3 + $0xca] sm:$0xff]
      %v3322 = vld [vmem:[#allocation3 + $0xda] sm:$0xff]
      %v3323 = vld [vmem:[#allocation3 + $0xe2] sm:$0xff]
      %v3324 = vld [vmem:[#allocation3 + $0xf2] sm:$0xff]
      %v3325 = vld [vmem:[#allocation3 + $0xfa] sm:$0xff]
      %v3326 = vld [vmem:[#allocation3 + $0x10a] sm:$0xff]
      %v3327 = vld [vmem:[#allocation3 + $0x112] sm:$0xff]
      %v3328 = vld [vmem:[#allocation3 + $0x122] sm:$0xff]
      %v3329 = vld [vmem:[#allocation3 + $0x12a] sm:$0xff]
      %v3330 = vld [vmem:[#allocation3 + $0x13a] sm:$0xff]
      %v3331 = vld [vmem:[#allocation3 + $0x142] sm:$0xff]
      %v3332 = vld [vmem:[#allocation3 + $0x152] sm:$0xff]
      %v3333 = vld [vmem:[#allocation3 + $0x15a] sm:$0xff]
      %v3334 = vld [vmem:[#allocation3 + $0x16a] sm:$0xff]
      %v3335 = vld [vmem:[#allocation3 + $0x172] sm:$0xff]
      %s3336 = scalar_lea.vmem %s3, 256
      %v3337 = vld [vmem:[%s3336] sm:$0xff]
      %v3338 = vld [vmem:[%s3336 + $0x8] sm:$0xff]
      %v3339 = vld [vmem:[%s3336 + $0x10] sm:$0xff]
      %v3340 = vld [vmem:[%s3336 + $0x18] sm:$0xff]
      %v3341 = vld [vmem:[%s3336 + $0x20] sm:$0xff]
      %v3342 = vld [vmem:[%s3336 + $0x28] sm:$0xff]
      %v3343 = vld [vmem:[%s3336 + $0x30] sm:$0xff]
      %v3344 = vld [vmem:[%s3336 + $0x38] sm:$0xff]
      %v3345 = vld [vmem:[%s3336 + $0x40] sm:$0xff]
      %v3346 = vld [vmem:[%s3336 + $0x48] sm:$0xff]
      %v3347 = vld [vmem:[%s3336 + $0x50] sm:$0xff]
      %v3348 = vld [vmem:[%s3336 + $0x58] sm:$0xff]
      %v3349 = vld [vmem:[%s3336 + $0x60] sm:$0xff]
      %v3350 = vld [vmem:[%s3336 + $0x68] sm:$0xff]
      %v3351 = vld [vmem:[%s3336 + $0x70] sm:$0xff]
      %v3352 = vld [vmem:[%s3336 + $0x78] sm:$0xff]
      %3353 = vmatpush.msra.mxu0 %v3352
      %3354 = vmatpush.msra.mxu0 %v3351
      %3355 = vmatpush.msra.mxu0 %v3350
      %3356 = vmatpush.msra.mxu0 %v3349
      %3357 = vmatpush.msra.mxu0 %v3348
      %3358 = vmatpush.msra.mxu0 %v3347
      %3359 = vmatpush.msra.mxu0 %v3346
      %3360 = vmatpush.msra.mxu0 %v3345
      %3361 = vmatpush.msra.mxu0 %v3344
      %3362 = vmatpush.msra.mxu0 %v3343
      %3363 = vmatpush.msra.mxu0 %v3342
      %3364 = vmatpush.msra.mxu0 %v3341
      %3365 = vmatpush.msra.mxu0 %v3340
      %3366 = vmatpush.msra.mxu0 %v3339
      %3367 = vmatpush.msra.mxu0 %v3338
      %3368 = vmatpush.msra.mxu0 %v3337
      %3369 = vmatmul.f32.gmra.mxu0 %v3304
      %v3370 = vpop.f32.mrf.mxu0
      %v3371 = vadd.f32 0.0, %v3370
      %3372 = vmatmul.f32.gmra.mxu0 %v3305
      %v3373 = vpop.f32.mrf.mxu0
      %v3374 = vadd.f32 0.0, %v3373
      %3375 = vmatmul.f32.gmra.mxu0 %v3306
      %v3376 = vpop.f32.mrf.mxu0
      %v3377 = vadd.f32 0.0, %v3376
      %3378 = vmatmul.f32.gmra.mxu0 %v3307
      %v3379 = vpop.f32.mrf.mxu0
      %v3380 = vadd.f32 0.0, %v3379
      %3381 = vmatmul.f32.gmra.mxu0 %v3308
      %v3382 = vpop.f32.mrf.mxu0
      %v3383 = vadd.f32 0.0, %v3382
      %3384 = vmatmul.f32.gmra.mxu0 %v3309
      %v3385 = vpop.f32.mrf.mxu0
      %v3386 = vadd.f32 0.0, %v3385
      %3387 = vmatmul.f32.gmra.mxu0 %v3310
      %v3388 = vpop.f32.mrf.mxu0
      %v3389 = vadd.f32 0.0, %v3388
      %3390 = vmatmul.f32.gmra.mxu0 %v3311
      %v3391 = vpop.f32.mrf.mxu0
      %v3392 = vadd.f32 0.0, %v3391
      %3393 = vmatmul.f32.gmra.mxu0 %v3312
      %v3394 = vpop.f32.mrf.mxu0
      %v3395 = vadd.f32 0.0, %v3394
      %3396 = vmatmul.f32.gmra.mxu0 %v3313
      %v3397 = vpop.f32.mrf.mxu0
      %v3398 = vadd.f32 0.0, %v3397
      %3399 = vmatmul.f32.gmra.mxu0 %v3314
      %v3400 = vpop.f32.mrf.mxu0
      %v3401 = vadd.f32 0.0, %v3400
      %3402 = vmatmul.f32.gmra.mxu0 %v3315
      %v3403 = vpop.f32.mrf.mxu0
      %v3404 = vadd.f32 0.0, %v3403
      %3405 = vmatmul.f32.gmra.mxu0 %v3316
      %v3406 = vpop.f32.mrf.mxu0
      %v3407 = vadd.f32 0.0, %v3406
      %3408 = vmatmul.f32.gmra.mxu0 %v3317
      %v3409 = vpop.f32.mrf.mxu0
      %v3410 = vadd.f32 0.0, %v3409
      %3411 = vmatmul.f32.gmra.mxu0 %v3318
      %v3412 = vpop.f32.mrf.mxu0
      %v3413 = vadd.f32 0.0, %v3412
      %3414 = vmatmul.f32.gmra.mxu0 %v3319
      %v3415 = vpop.f32.mrf.mxu0
      %v3416 = vadd.f32 0.0, %v3415
      %3417 = vmatmul.f32.gmra.mxu0 %v3320
      %v3418 = vpop.f32.mrf.mxu0
      %v3419 = vadd.f32 0.0, %v3418
      %3420 = vmatmul.f32.gmra.mxu0 %v3321
      %v3421 = vpop.f32.mrf.mxu0
      %v3422 = vadd.f32 0.0, %v3421
      %3423 = vmatmul.f32.gmra.mxu0 %v3322
      %v3424 = vpop.f32.mrf.mxu0
      %v3425 = vadd.f32 0.0, %v3424
      %3426 = vmatmul.f32.gmra.mxu0 %v3323
      %v3427 = vpop.f32.mrf.mxu0
      %v3428 = vadd.f32 0.0, %v3427
      %3429 = vmatmul.f32.gmra.mxu0 %v3324
      %v3430 = vpop.f32.mrf.mxu0
      %v3431 = vadd.f32 0.0, %v3430
      %3432 = vmatmul.f32.gmra.mxu0 %v3325
      %v3433 = vpop.f32.mrf.mxu0
      %v3434 = vadd.f32 0.0, %v3433
      %3435 = vmatmul.f32.gmra.mxu0 %v3326
      %v3436 = vpop.f32.mrf.mxu0
      %v3437 = vadd.f32 0.0, %v3436
      %3438 = vmatmul.f32.gmra.mxu0 %v3327
      %v3439 = vpop.f32.mrf.mxu0
      %v3440 = vadd.f32 0.0, %v3439
      %3441 = vmatmul.f32.gmra.mxu0 %v3328
      %v3442 = vpop.f32.mrf.mxu0
      %v3443 = vadd.f32 0.0, %v3442
      %3444 = vmatmul.f32.gmra.mxu0 %v3329
      %v3445 = vpop.f32.mrf.mxu0
      %v3446 = vadd.f32 0.0, %v3445
      %3447 = vmatmul.f32.gmra.mxu0 %v3330
      %v3448 = vpop.f32.mrf.mxu0
      %v3449 = vadd.f32 0.0, %v3448
      %3450 = vmatmul.f32.gmra.mxu0 %v3331
      %v3451 = vpop.f32.mrf.mxu0
      %v3452 = vadd.f32 0.0, %v3451
      %3453 = vmatmul.f32.gmra.mxu0 %v3332
      %v3454 = vpop.f32.mrf.mxu0
      %v3455 = vadd.f32 0.0, %v3454
      %3456 = vmatmul.f32.gmra.mxu0 %v3333
      %v3457 = vpop.f32.mrf.mxu0
      %v3458 = vadd.f32 0.0, %v3457
      %3459 = vmatmul.f32.gmra.mxu0 %v3334
      %v3460 = vpop.f32.mrf.mxu0
      %v3461 = vadd.f32 0.0, %v3460
      %3462 = vmatmul.f32.gmra.mxu0 %v3335
      %v3463 = vpop.f32.mrf.mxu0
      %v3464 = vadd.f32 0.0, %v3463
      %3465 = vdwg.mxu0
      %v3466 = vld [vmem:[#allocation4] sm:$0xff]
      %v3467 = vld [vmem:[#allocation4 + $0x8] sm:$0xff]
      %v3468 = vld [vmem:[#allocation4 + $0x10] sm:$0xff]
      %v3469 = vld [vmem:[#allocation4 + $0x18] sm:$0xff]
      %v3470 = vld [vmem:[#allocation4 + $0x20] sm:$0xff]
      %v3471 = vld [vmem:[#allocation4 + $0x28] sm:$0xff]
      %v3472 = vld [vmem:[#allocation4 + $0x30] sm:$0xff]
      %v3473 = vld [vmem:[#allocation4 + $0x38] sm:$0xff]
      %v3474 = vld [vmem:[#allocation4 + $0x40] sm:$0xff]
      %v3475 = vld [vmem:[#allocation4 + $0x48] sm:$0xff]
      %v3476 = vld [vmem:[#allocation4 + $0x50] sm:$0xff]
      %v3477 = vld [vmem:[#allocation4 + $0x58] sm:$0xff]
      %v3478 = vld [vmem:[#allocation4 + $0x60] sm:$0xff]
      %v3479 = vld [vmem:[#allocation4 + $0x68] sm:$0xff]
      %v3480 = vld [vmem:[#allocation4 + $0x70] sm:$0xff]
      %v3481 = vld [vmem:[#allocation4 + $0x78] sm:$0xff]
      %v3482 = vld [vmem:[#allocation4 + $0x80] sm:$0xff]
      %v3483 = vld [vmem:[#allocation4 + $0x88] sm:$0xff]
      %v3484 = vld [vmem:[#allocation4 + $0x90] sm:$0xff]
      %v3485 = vld [vmem:[#allocation4 + $0x98] sm:$0xff]
      %v3486 = vld [vmem:[#allocation4 + $0xa0] sm:$0xff]
      %v3487 = vld [vmem:[#allocation4 + $0xa8] sm:$0xff]
      %v3488 = vld [vmem:[#allocation4 + $0xb0] sm:$0xff]
      %v3489 = vld [vmem:[#allocation4 + $0xb8] sm:$0xff]
      %v3490 = vld [vmem:[#allocation4 + $0xc0] sm:$0xff]
      %v3491 = vld [vmem:[#allocation4 + $0xc8] sm:$0xff]
      %v3492 = vld [vmem:[#allocation4 + $0xd0] sm:$0xff]
      %v3493 = vld [vmem:[#allocation4 + $0xd8] sm:$0xff]
      %v3494 = vld [vmem:[#allocation4 + $0xe0] sm:$0xff]
      %v3495 = vld [vmem:[#allocation4 + $0xe8] sm:$0xff]
      %v3496 = vld [vmem:[#allocation4 + $0xf0] sm:$0xff]
      %v3497 = vld [vmem:[#allocation4 + $0xf8] sm:$0xff]
      %v3498 = vadd.f32 %v3466, %v3371
      %v3499 = vadd.f32 %v3467, %v3374
      %v3500 = vadd.f32 %v3468, %v3377
      %v3501 = vadd.f32 %v3469, %v3380
      %v3502 = vadd.f32 %v3470, %v3383
      %v3503 = vadd.f32 %v3471, %v3386
      %v3504 = vadd.f32 %v3472, %v3389
      %v3505 = vadd.f32 %v3473, %v3392
      %v3506 = vadd.f32 %v3474, %v3395
      %v3507 = vadd.f32 %v3475, %v3398
      %v3508 = vadd.f32 %v3476, %v3401
      %v3509 = vadd.f32 %v3477, %v3404
      %v3510 = vadd.f32 %v3478, %v3407
      %v3511 = vadd.f32 %v3479, %v3410
      %v3512 = vadd.f32 %v3480, %v3413
      %v3513 = vadd.f32 %v3481, %v3416
      %v3514 = vadd.f32 %v3482, %v3419
      %v3515 = vadd.f32 %v3483, %v3422
      %v3516 = vadd.f32 %v3484, %v3425
      %v3517 = vadd.f32 %v3485, %v3428
      %v3518 = vadd.f32 %v3486, %v3431
      %v3519 = vadd.f32 %v3487, %v3434
      %v3520 = vadd.f32 %v3488, %v3437
      %v3521 = vadd.f32 %v3489, %v3440
      %v3522 = vadd.f32 %v3490, %v3443
      %v3523 = vadd.f32 %v3491, %v3446
      %v3524 = vadd.f32 %v3492, %v3449
      %v3525 = vadd.f32 %v3493, %v3452
      %v3526 = vadd.f32 %v3494, %v3455
      %v3527 = vadd.f32 %v3495, %v3458
      %v3528 = vadd.f32 %v3496, %v3461
      %v3529 = vadd.f32 %v3497, %v3464
      %3530 = vst [vmem:[#allocation4] sm:$0xff] %v3498
      %3531 = vst [vmem:[#allocation4 + $0x8] sm:$0xff] %v3499
      %3532 = vst [vmem:[#allocation4 + $0x10] sm:$0xff] %v3500
      %3533 = vst [vmem:[#allocation4 + $0x18] sm:$0xff] %v3501
      %3534 = vst [vmem:[#allocation4 + $0x20] sm:$0xff] %v3502
      %3535 = vst [vmem:[#allocation4 + $0x28] sm:$0xff] %v3503
      %3536 = vst [vmem:[#allocation4 + $0x30] sm:$0xff] %v3504
      %3537 = vst [vmem:[#allocation4 + $0x38] sm:$0xff] %v3505
      %3538 = vst [vmem:[#allocation4 + $0x40] sm:$0xff] %v3506
      %3539 = vst [vmem:[#allocation4 + $0x48] sm:$0xff] %v3507
      %3540 = vst [vmem:[#allocation4 + $0x50] sm:$0xff] %v3508
      %3541 = vst [vmem:[#allocation4 + $0x58] sm:$0xff] %v3509
      %3542 = vst [vmem:[#allocation4 + $0x60] sm:$0xff] %v3510
      %3543 = vst [vmem:[#allocation4 + $0x68] sm:$0xff] %v3511
      %3544 = vst [vmem:[#allocation4 + $0x70] sm:$0xff] %v3512
      %3545 = vst [vmem:[#allocation4 + $0x78] sm:$0xff] %v3513
      %3546 = vst [vmem:[#allocation4 + $0x80] sm:$0xff] %v3514
      %3547 = vst [vmem:[#allocation4 + $0x88] sm:$0xff] %v3515
      %3548 = vst [vmem:[#allocation4 + $0x90] sm:$0xff] %v3516
      %3549 = vst [vmem:[#allocation4 + $0x98] sm:$0xff] %v3517
      %3550 = vst [vmem:[#allocation4 + $0xa0] sm:$0xff] %v3518
      %3551 = vst [vmem:[#allocation4 + $0xa8] sm:$0xff] %v3519
      %3552 = vst [vmem:[#allocation4 + $0xb0] sm:$0xff] %v3520
      %3553 = vst [vmem:[#allocation4 + $0xb8] sm:$0xff] %v3521
      %3554 = vst [vmem:[#allocation4 + $0xc0] sm:$0xff] %v3522
      %3555 = vst [vmem:[#allocation4 + $0xc8] sm:$0xff] %v3523
      %3556 = vst [vmem:[#allocation4 + $0xd0] sm:$0xff] %v3524
      %3557 = vst [vmem:[#allocation4 + $0xd8] sm:$0xff] %v3525
      %3558 = vst [vmem:[#allocation4 + $0xe0] sm:$0xff] %v3526
      %3559 = vst [vmem:[#allocation4 + $0xe8] sm:$0xff] %v3527
      %3560 = vst [vmem:[#allocation4 + $0xf0] sm:$0xff] %v3528
      %3561 = vst [vmem:[#allocation4 + $0xf8] sm:$0xff] %v3529
      %v3562 = vld [vmem:[%s2820] sm:$0xff]
      %v3563 = vld [vmem:[%s2820 + $0x8] sm:$0xff]
      %v3564 = vld [vmem:[%s2820 + $0x18] sm:$0xff]
      %v3565 = vld [vmem:[%s2820 + $0x20] sm:$0xff]
      %v3566 = vld [vmem:[%s2820 + $0x30] sm:$0xff]
      %v3567 = vld [vmem:[%s2820 + $0x38] sm:$0xff]
      %v3568 = vld [vmem:[%s2820 + $0x48] sm:$0xff]
      %v3569 = vld [vmem:[%s2820 + $0x50] sm:$0xff]
      %v3570 = vld [vmem:[%s2820 + $0x60] sm:$0xff]
      %v3571 = vld [vmem:[%s2820 + $0x68] sm:$0xff]
      %v3572 = vld [vmem:[%s2820 + $0x78] sm:$0xff]
      %v3573 = vld [vmem:[%s2820 + $0x80] sm:$0xff]
      %v3574 = vld [vmem:[%s2820 + $0x90] sm:$0xff]
      %v3575 = vld [vmem:[%s2820 + $0x98] sm:$0xff]
      %v3576 = vld [vmem:[%s2820 + $0xa8] sm:$0xff]
      %v3577 = vld [vmem:[%s2820 + $0xb0] sm:$0xff]
      %v3578 = vld [vmem:[%s2820 + $0xc0] sm:$0xff]
      %v3579 = vld [vmem:[%s2820 + $0xc8] sm:$0xff]
      %v3580 = vld [vmem:[%s2820 + $0xd8] sm:$0xff]
      %v3581 = vld [vmem:[%s2820 + $0xe0] sm:$0xff]
      %v3582 = vld [vmem:[%s2820 + $0xf0] sm:$0xff]
      %v3583 = vld [vmem:[%s2820 + $0xf8] sm:$0xff]
      %v3584 = vld [vmem:[%s2820 + $0x108] sm:$0xff]
      %v3585 = vld [vmem:[%s2820 + $0x110] sm:$0xff]
      %v3586 = vld [vmem:[%s2820 + $0x120] sm:$0xff]
      %v3587 = vld [vmem:[%s2820 + $0x128] sm:$0xff]
      %v3588 = vld [vmem:[%s2820 + $0x138] sm:$0xff]
      %v3589 = vld [vmem:[%s2820 + $0x140] sm:$0xff]
      %v3590 = vld [vmem:[%s2820 + $0x150] sm:$0xff]
      %v3591 = vld [vmem:[%s2820 + $0x158] sm:$0xff]
      %v3592 = vld [vmem:[%s2820 + $0x168] sm:$0xff]
      %v3593 = vld [vmem:[%s2820 + $0x170] sm:$0xff]
      %s3594 = scalar_lea.vmem %s3, 384
      %v3595 = vld [vmem:[%s3594] sm:$0xff]
      %v3596 = vld [vmem:[%s3594 + $0x8] sm:$0xff]
      %v3597 = vld [vmem:[%s3594 + $0x10] sm:$0xff]
      %v3598 = vld [vmem:[%s3594 + $0x18] sm:$0xff]
      %v3599 = vld [vmem:[%s3594 + $0x20] sm:$0xff]
      %v3600 = vld [vmem:[%s3594 + $0x28] sm:$0xff]
      %v3601 = vld [vmem:[%s3594 + $0x30] sm:$0xff]
      %v3602 = vld [vmem:[%s3594 + $0x38] sm:$0xff]
      %v3603 = vld [vmem:[%s3594 + $0x40] sm:$0xff]
      %v3604 = vld [vmem:[%s3594 + $0x48] sm:$0xff]
      %v3605 = vld [vmem:[%s3594 + $0x50] sm:$0xff]
      %v3606 = vld [vmem:[%s3594 + $0x58] sm:$0xff]
      %v3607 = vld [vmem:[%s3594 + $0x60] sm:$0xff]
      %v3608 = vld [vmem:[%s3594 + $0x68] sm:$0xff]
      %v3609 = vld [vmem:[%s3594 + $0x70] sm:$0xff]
      %v3610 = vld [vmem:[%s3594 + $0x78] sm:$0xff]
      %3611 = vmatpush.msra.mxu0 %v3610
      %3612 = vmatpush.msra.mxu0 %v3609
      %3613 = vmatpush.msra.mxu0 %v3608
      %3614 = vmatpush.msra.mxu0 %v3607
      %3615 = vmatpush.msra.mxu0 %v3606
      %3616 = vmatpush.msra.mxu0 %v3605
      %3617 = vmatpush.msra.mxu0 %v3604
      %3618 = vmatpush.msra.mxu0 %v3603
      %3619 = vmatpush.msra.mxu0 %v3602
      %3620 = vmatpush.msra.mxu0 %v3601
      %3621 = vmatpush.msra.mxu0 %v3600
      %3622 = vmatpush.msra.mxu0 %v3599
      %3623 = vmatpush.msra.mxu0 %v3598
      %3624 = vmatpush.msra.mxu0 %v3597
      %3625 = vmatpush.msra.mxu0 %v3596
      %3626 = vmatpush.msra.mxu0 %v3595
      %3627 = vmatmul.f32.gmra.mxu0 %v3562
      %v3628 = vpop.f32.mrf.mxu0
      %v3629 = vadd.f32 0.0, %v3628
      %3630 = vmatmul.f32.gmra.mxu0 %v3563
      %v3631 = vpop.f32.mrf.mxu0
      %v3632 = vadd.f32 0.0, %v3631
      %3633 = vmatmul.f32.gmra.mxu0 %v3564
      %v3634 = vpop.f32.mrf.mxu0
      %v3635 = vadd.f32 0.0, %v3634
      %3636 = vmatmul.f32.gmra.mxu0 %v3565
      %v3637 = vpop.f32.mrf.mxu0
      %v3638 = vadd.f32 0.0, %v3637
      %3639 = vmatmul.f32.gmra.mxu0 %v3566
      %v3640 = vpop.f32.mrf.mxu0
      %v3641 = vadd.f32 0.0, %v3640
      %3642 = vmatmul.f32.gmra.mxu0 %v3567
      %v3643 = vpop.f32.mrf.mxu0
      %v3644 = vadd.f32 0.0, %v3643
      %3645 = vmatmul.f32.gmra.mxu0 %v3568
      %v3646 = vpop.f32.mrf.mxu0
      %v3647 = vadd.f32 0.0, %v3646
      %3648 = vmatmul.f32.gmra.mxu0 %v3569
      %v3649 = vpop.f32.mrf.mxu0
      %v3650 = vadd.f32 0.0, %v3649
      %3651 = vmatmul.f32.gmra.mxu0 %v3570
      %v3652 = vpop.f32.mrf.mxu0
      %v3653 = vadd.f32 0.0, %v3652
      %3654 = vmatmul.f32.gmra.mxu0 %v3571
      %v3655 = vpop.f32.mrf.mxu0
      %v3656 = vadd.f32 0.0, %v3655
      %3657 = vmatmul.f32.gmra.mxu0 %v3572
      %v3658 = vpop.f32.mrf.mxu0
      %v3659 = vadd.f32 0.0, %v3658
      %3660 = vmatmul.f32.gmra.mxu0 %v3573
      %v3661 = vpop.f32.mrf.mxu0
      %v3662 = vadd.f32 0.0, %v3661
      %3663 = vmatmul.f32.gmra.mxu0 %v3574
      %v3664 = vpop.f32.mrf.mxu0
      %v3665 = vadd.f32 0.0, %v3664
      %3666 = vmatmul.f32.gmra.mxu0 %v3575
      %v3667 = vpop.f32.mrf.mxu0
      %v3668 = vadd.f32 0.0, %v3667
      %3669 = vmatmul.f32.gmra.mxu0 %v3576
      %v3670 = vpop.f32.mrf.mxu0
      %v3671 = vadd.f32 0.0, %v3670
      %3672 = vmatmul.f32.gmra.mxu0 %v3577
      %v3673 = vpop.f32.mrf.mxu0
      %v3674 = vadd.f32 0.0, %v3673
      %3675 = vmatmul.f32.gmra.mxu0 %v3578
      %v3676 = vpop.f32.mrf.mxu0
      %v3677 = vadd.f32 0.0, %v3676
      %3678 = vmatmul.f32.gmra.mxu0 %v3579
      %v3679 = vpop.f32.mrf.mxu0
      %v3680 = vadd.f32 0.0, %v3679
      %3681 = vmatmul.f32.gmra.mxu0 %v3580
      %v3682 = vpop.f32.mrf.mxu0
      %v3683 = vadd.f32 0.0, %v3682
      %3684 = vmatmul.f32.gmra.mxu0 %v3581
      %v3685 = vpop.f32.mrf.mxu0
      %v3686 = vadd.f32 0.0, %v3685
      %3687 = vmatmul.f32.gmra.mxu0 %v3582
      %v3688 = vpop.f32.mrf.mxu0
      %v3689 = vadd.f32 0.0, %v3688
      %3690 = vmatmul.f32.gmra.mxu0 %v3583
      %v3691 = vpop.f32.mrf.mxu0
      %v3692 = vadd.f32 0.0, %v3691
      %3693 = vmatmul.f32.gmra.mxu0 %v3584
      %v3694 = vpop.f32.mrf.mxu0
      %v3695 = vadd.f32 0.0, %v3694
      %3696 = vmatmul.f32.gmra.mxu0 %v3585
      %v3697 = vpop.f32.mrf.mxu0
      %v3698 = vadd.f32 0.0, %v3697
      %3699 = vmatmul.f32.gmra.mxu0 %v3586
      %v3700 = vpop.f32.mrf.mxu0
      %v3701 = vadd.f32 0.0, %v3700
      %3702 = vmatmul.f32.gmra.mxu0 %v3587
      %v3703 = vpop.f32.mrf.mxu0
      %v3704 = vadd.f32 0.0, %v3703
      %3705 = vmatmul.f32.gmra.mxu0 %v3588
      %v3706 = vpop.f32.mrf.mxu0
      %v3707 = vadd.f32 0.0, %v3706
      %3708 = vmatmul.f32.gmra.mxu0 %v3589
      %v3709 = vpop.f32.mrf.mxu0
      %v3710 = vadd.f32 0.0, %v3709
      %3711 = vmatmul.f32.gmra.mxu0 %v3590
      %v3712 = vpop.f32.mrf.mxu0
      %v3713 = vadd.f32 0.0, %v3712
      %3714 = vmatmul.f32.gmra.mxu0 %v3591
      %v3715 = vpop.f32.mrf.mxu0
      %v3716 = vadd.f32 0.0, %v3715
      %3717 = vmatmul.f32.gmra.mxu0 %v3592
      %v3718 = vpop.f32.mrf.mxu0
      %v3719 = vadd.f32 0.0, %v3718
      %3720 = vmatmul.f32.gmra.mxu0 %v3593
      %v3721 = vpop.f32.mrf.mxu0
      %v3722 = vadd.f32 0.0, %v3721
      %3723 = vdwg.mxu0
      %v3724 = vld [vmem:[#allocation4] sm:$0xff]
      %v3725 = vld [vmem:[#allocation4 + $0x8] sm:$0xff]
      %v3726 = vld [vmem:[#allocation4 + $0x10] sm:$0xff]
      %v3727 = vld [vmem:[#allocation4 + $0x18] sm:$0xff]
      %v3728 = vld [vmem:[#allocation4 + $0x20] sm:$0xff]
      %v3729 = vld [vmem:[#allocation4 + $0x28] sm:$0xff]
      %v3730 = vld [vmem:[#allocation4 + $0x30] sm:$0xff]
      %v3731 = vld [vmem:[#allocation4 + $0x38] sm:$0xff]
      %v3732 = vld [vmem:[#allocation4 + $0x40] sm:$0xff]
      %v3733 = vld [vmem:[#allocation4 + $0x48] sm:$0xff]
      %v3734 = vld [vmem:[#allocation4 + $0x50] sm:$0xff]
      %v3735 = vld [vmem:[#allocation4 + $0x58] sm:$0xff]
      %v3736 = vld [vmem:[#allocation4 + $0x60] sm:$0xff]
      %v3737 = vld [vmem:[#allocation4 + $0x68] sm:$0xff]
      %v3738 = vld [vmem:[#allocation4 + $0x70] sm:$0xff]
      %v3739 = vld [vmem:[#allocation4 + $0x78] sm:$0xff]
      %v3740 = vld [vmem:[#allocation4 + $0x80] sm:$0xff]
      %v3741 = vld [vmem:[#allocation4 + $0x88] sm:$0xff]
      %v3742 = vld [vmem:[#allocation4 + $0x90] sm:$0xff]
      %v3743 = vld [vmem:[#allocation4 + $0x98] sm:$0xff]
      %v3744 = vld [vmem:[#allocation4 + $0xa0] sm:$0xff]
      %v3745 = vld [vmem:[#allocation4 + $0xa8] sm:$0xff]
      %v3746 = vld [vmem:[#allocation4 + $0xb0] sm:$0xff]
      %v3747 = vld [vmem:[#allocation4 + $0xb8] sm:$0xff]
      %v3748 = vld [vmem:[#allocation4 + $0xc0] sm:$0xff]
      %v3749 = vld [vmem:[#allocation4 + $0xc8] sm:$0xff]
      %v3750 = vld [vmem:[#allocation4 + $0xd0] sm:$0xff]
      %v3751 = vld [vmem:[#allocation4 + $0xd8] sm:$0xff]
      %v3752 = vld [vmem:[#allocation4 + $0xe0] sm:$0xff]
      %v3753 = vld [vmem:[#allocation4 + $0xe8] sm:$0xff]
      %v3754 = vld [vmem:[#allocation4 + $0xf0] sm:$0xff]
      %v3755 = vld [vmem:[#allocation4 + $0xf8] sm:$0xff]
      %v3756 = vadd.f32 %v3724, %v3629
      %v3757 = vadd.f32 %v3725, %v3632
      %v3758 = vadd.f32 %v3726, %v3635
      %v3759 = vadd.f32 %v3727, %v3638
      %v3760 = vadd.f32 %v3728, %v3641
      %v3761 = vadd.f32 %v3729, %v3644
      %v3762 = vadd.f32 %v3730, %v3647
      %v3763 = vadd.f32 %v3731, %v3650
      %v3764 = vadd.f32 %v3732, %v3653
      %v3765 = vadd.f32 %v3733, %v3656
      %v3766 = vadd.f32 %v3734, %v3659
      %v3767 = vadd.f32 %v3735, %v3662
      %v3768 = vadd.f32 %v3736, %v3665
      %v3769 = vadd.f32 %v3737, %v3668
      %v3770 = vadd.f32 %v3738, %v3671
      %v3771 = vadd.f32 %v3739, %v3674
      %v3772 = vadd.f32 %v3740, %v3677
      %v3773 = vadd.f32 %v3741, %v3680
      %v3774 = vadd.f32 %v3742, %v3683
      %v3775 = vadd.f32 %v3743, %v3686
      %v3776 = vadd.f32 %v3744, %v3689
      %v3777 = vadd.f32 %v3745, %v3692
      %v3778 = vadd.f32 %v3746, %v3695
      %v3779 = vadd.f32 %v3747, %v3698
      %v3780 = vadd.f32 %v3748, %v3701
      %v3781 = vadd.f32 %v3749, %v3704
      %v3782 = vadd.f32 %v3750, %v3707
      %v3783 = vadd.f32 %v3751, %v3710
      %v3784 = vadd.f32 %v3752, %v3713
      %v3785 = vadd.f32 %v3753, %v3716
      %v3786 = vadd.f32 %v3754, %v3719
      %v3787 = vadd.f32 %v3755, %v3722
      %3788 = vst [vmem:[#allocation4] sm:$0xff] %v3756
      %3789 = vst [vmem:[#allocation4 + $0x8] sm:$0xff] %v3757
      %3790 = vst [vmem:[#allocation4 + $0x10] sm:$0xff] %v3758
      %3791 = vst [vmem:[#allocation4 + $0x18] sm:$0xff] %v3759
      %3792 = vst [vmem:[#allocation4 + $0x20] sm:$0xff] %v3760
      %3793 = vst [vmem:[#allocation4 + $0x28] sm:$0xff] %v3761
      %3794 = vst [vmem:[#allocation4 + $0x30] sm:$0xff] %v3762
      %3795 = vst [vmem:[#allocation4 + $0x38] sm:$0xff] %v3763
      %3796 = vst [vmem:[#allocation4 + $0x40] sm:$0xff] %v3764
      %3797 = vst [vmem:[#allocation4 + $0x48] sm:$0xff] %v3765
      %3798 = vst [vmem:[#allocation4 + $0x50] sm:$0xff] %v3766
      %3799 = vst [vmem:[#allocation4 + $0x58] sm:$0xff] %v3767
      %3800 = vst [vmem:[#allocation4 + $0x60] sm:$0xff] %v3768
      %3801 = vst [vmem:[#allocation4 + $0x68] sm:$0xff] %v3769
      %3802 = vst [vmem:[#allocation4 + $0x70] sm:$0xff] %v3770
      %3803 = vst [vmem:[#allocation4 + $0x78] sm:$0xff] %v3771
      %3804 = vst [vmem:[#allocation4 + $0x80] sm:$0xff] %v3772
      %3805 = vst [vmem:[#allocation4 + $0x88] sm:$0xff] %v3773
      %3806 = vst [vmem:[#allocation4 + $0x90] sm:$0xff] %v3774
      %3807 = vst [vmem:[#allocation4 + $0x98] sm:$0xff] %v3775
      %3808 = vst [vmem:[#allocation4 + $0xa0] sm:$0xff] %v3776
      %3809 = vst [vmem:[#allocation4 + $0xa8] sm:$0xff] %v3777
      %3810 = vst [vmem:[#allocation4 + $0xb0] sm:$0xff] %v3778
      %3811 = vst [vmem:[#allocation4 + $0xb8] sm:$0xff] %v3779
      %3812 = vst [vmem:[#allocation4 + $0xc0] sm:$0xff] %v3780
      %3813 = vst [vmem:[#allocation4 + $0xc8] sm:$0xff] %v3781
      %3814 = vst [vmem:[#allocation4 + $0xd0] sm:$0xff] %v3782
      %3815 = vst [vmem:[#allocation4 + $0xd8] sm:$0xff] %v3783
      %3816 = vst [vmem:[#allocation4 + $0xe0] sm:$0xff] %v3784
      %3817 = vst [vmem:[#allocation4 + $0xe8] sm:$0xff] %v3785
      %3818 = vst [vmem:[#allocation4 + $0xf0] sm:$0xff] %v3786
      %3819 = vst [vmem:[#allocation4 + $0xf8] sm:$0xff] %v3787
      %v3820 = vld [vmem:[%s2820 + $0x1] sm:$0xff]
      %v3821 = vld [vmem:[%s2820 + $0x9] sm:$0xff]
      %v3822 = vld [vmem:[%s2820 + $0x19] sm:$0xff]
      %v3823 = vld [vmem:[%s2820 + $0x21] sm:$0xff]
      %v3824 = vld [vmem:[%s2820 + $0x31] sm:$0xff]
      %v3825 = vld [vmem:[%s2820 + $0x39] sm:$0xff]
      %v3826 = vld [vmem:[%s2820 + $0x49] sm:$0xff]
      %v3827 = vld [vmem:[%s2820 + $0x51] sm:$0xff]
      %v3828 = vld [vmem:[%s2820 + $0x61] sm:$0xff]
      %v3829 = vld [vmem:[%s2820 + $0x69] sm:$0xff]
      %v3830 = vld [vmem:[%s2820 + $0x79] sm:$0xff]
      %v3831 = vld [vmem:[%s2820 + $0x81] sm:$0xff]
      %v3832 = vld [vmem:[%s2820 + $0x91] sm:$0xff]
      %v3833 = vld [vmem:[%s2820 + $0x99] sm:$0xff]
      %v3834 = vld [vmem:[%s2820 + $0xa9] sm:$0xff]
      %v3835 = vld [vmem:[%s2820 + $0xb1] sm:$0xff]
      %v3836 = vld [vmem:[%s2820 + $0xc1] sm:$0xff]
      %v3837 = vld [vmem:[%s2820 + $0xc9] sm:$0xff]
      %v3838 = vld [vmem:[%s2820 + $0xd9] sm:$0xff]
      %v3839 = vld [vmem:[%s2820 + $0xe1] sm:$0xff]
      %v3840 = vld [vmem:[%s2820 + $0xf1] sm:$0xff]
      %v3841 = vld [vmem:[%s2820 + $0xf9] sm:$0xff]
      %v3842 = vld [vmem:[%s2820 + $0x109] sm:$0xff]
      %v3843 = vld [vmem:[%s2820 + $0x111] sm:$0xff]
      %v3844 = vld [vmem:[%s2820 + $0x121] sm:$0xff]
      %v3845 = vld [vmem:[%s2820 + $0x129] sm:$0xff]
      %v3846 = vld [vmem:[%s2820 + $0x139] sm:$0xff]
      %v3847 = vld [vmem:[%s2820 + $0x141] sm:$0xff]
      %v3848 = vld [vmem:[%s2820 + $0x151] sm:$0xff]
      %v3849 = vld [vmem:[%s2820 + $0x159] sm:$0xff]
      %v3850 = vld [vmem:[%s2820 + $0x169] sm:$0xff]
      %v3851 = vld [vmem:[%s2820 + $0x171] sm:$0xff]
      %s3852 = scalar_lea.vmem %s3, 512
      %v3853 = vld [vmem:[%s3852] sm:$0xff]
      %v3854 = vld [vmem:[%s3852 + $0x8] sm:$0xff]
      %v3855 = vld [vmem:[%s3852 + $0x10] sm:$0xff]
      %v3856 = vld [vmem:[%s3852 + $0x18] sm:$0xff]
      %v3857 = vld [vmem:[%s3852 + $0x20] sm:$0xff]
      %v3858 = vld [vmem:[%s3852 + $0x28] sm:$0xff]
      %v3859 = vld [vmem:[%s3852 + $0x30] sm:$0xff]
      %v3860 = vld [vmem:[%s3852 + $0x38] sm:$0xff]
      %v3861 = vld [vmem:[%s3852 + $0x40] sm:$0xff]
      %v3862 = vld [vmem:[%s3852 + $0x48] sm:$0xff]
      %v3863 = vld [vmem:[%s3852 + $0x50] sm:$0xff]
      %v3864 = vld [vmem:[%s3852 + $0x58] sm:$0xff]
      %v3865 = vld [vmem:[%s3852 + $0x60] sm:$0xff]
      %v3866 = vld [vmem:[%s3852 + $0x68] sm:$0xff]
      %v3867 = vld [vmem:[%s3852 + $0x70] sm:$0xff]
      %v3868 = vld [vmem:[%s3852 + $0x78] sm:$0xff]
      %3869 = vmatpush.msra.mxu0 %v3868
      %3870 = vmatpush.msra.mxu0 %v3867
      %3871 = vmatpush.msra.mxu0 %v3866
      %3872 = vmatpush.msra.mxu0 %v3865
      %3873 = vmatpush.msra.mxu0 %v3864
      %3874 = vmatpush.msra.mxu0 %v3863
      %3875 = vmatpush.msra.mxu0 %v3862
      %3876 = vmatpush.msra.mxu0 %v3861
      %3877 = vmatpush.msra.mxu0 %v3860
      %3878 = vmatpush.msra.mxu0 %v3859
      %3879 = vmatpush.msra.mxu0 %v3858
      %3880 = vmatpush.msra.mxu0 %v3857
      %3881 = vmatpush.msra.mxu0 %v3856
      %3882 = vmatpush.msra.mxu0 %v3855
      %3883 = vmatpush.msra.mxu0 %v3854
      %3884 = vmatpush.msra.mxu0 %v3853
      %3885 = vmatmul.f32.gmra.mxu0 %v3820
      %v3886 = vpop.f32.mrf.mxu0
      %v3887 = vadd.f32 0.0, %v3886
      %3888 = vmatmul.f32.gmra.mxu0 %v3821
      %v3889 = vpop.f32.mrf.mxu0
      %v3890 = vadd.f32 0.0, %v3889
      %3891 = vmatmul.f32.gmra.mxu0 %v3822
      %v3892 = vpop.f32.mrf.mxu0
      %v3893 = vadd.f32 0.0, %v3892
      %3894 = vmatmul.f32.gmra.mxu0 %v3823
      %v3895 = vpop.f32.mrf.mxu0
      %v3896 = vadd.f32 0.0, %v3895
      %3897 = vmatmul.f32.gmra.mxu0 %v3824
      %v3898 = vpop.f32.mrf.mxu0
      %v3899 = vadd.f32 0.0, %v3898
      %3900 = vmatmul.f32.gmra.mxu0 %v3825
      %v3901 = vpop.f32.mrf.mxu0
      %v3902 = vadd.f32 0.0, %v3901
      %3903 = vmatmul.f32.gmra.mxu0 %v3826
      %v3904 = vpop.f32.mrf.mxu0
      %v3905 = vadd.f32 0.0, %v3904
      %3906 = vmatmul.f32.gmra.mxu0 %v3827
      %v3907 = vpop.f32.mrf.mxu0
      %v3908 = vadd.f32 0.0, %v3907
      %3909 = vmatmul.f32.gmra.mxu0 %v3828
      %v3910 = vpop.f32.mrf.mxu0
      %v3911 = vadd.f32 0.0, %v3910
      %3912 = vmatmul.f32.gmra.mxu0 %v3829
      %v3913 = vpop.f32.mrf.mxu0
      %v3914 = vadd.f32 0.0, %v3913
      %3915 = vmatmul.f32.gmra.mxu0 %v3830
      %v3916 = vpop.f32.mrf.mxu0
      %v3917 = vadd.f32 0.0, %v3916
      %3918 = vmatmul.f32.gmra.mxu0 %v3831
      %v3919 = vpop.f32.mrf.mxu0
      %v3920 = vadd.f32 0.0, %v3919
      %3921 = vmatmul.f32.gmra.mxu0 %v3832
      %v3922 = vpop.f32.mrf.mxu0
      %v3923 = vadd.f32 0.0, %v3922
      %3924 = vmatmul.f32.gmra.mxu0 %v3833
      %v3925 = vpop.f32.mrf.mxu0
      %v3926 = vadd.f32 0.0, %v3925
      %3927 = vmatmul.f32.gmra.mxu0 %v3834
      %v3928 = vpop.f32.mrf.mxu0
      %v3929 = vadd.f32 0.0, %v3928
      %3930 = vmatmul.f32.gmra.mxu0 %v3835
      %v3931 = vpop.f32.mrf.mxu0
      %v3932 = vadd.f32 0.0, %v3931
      %3933 = vmatmul.f32.gmra.mxu0 %v3836
      %v3934 = vpop.f32.mrf.mxu0
      %v3935 = vadd.f32 0.0, %v3934
      %3936 = vmatmul.f32.gmra.mxu0 %v3837
      %v3937 = vpop.f32.mrf.mxu0
      %v3938 = vadd.f32 0.0, %v3937
      %3939 = vmatmul.f32.gmra.mxu0 %v3838
      %v3940 = vpop.f32.mrf.mxu0
      %v3941 = vadd.f32 0.0, %v3940
      %3942 = vmatmul.f32.gmra.mxu0 %v3839
      %v3943 = vpop.f32.mrf.mxu0
      %v3944 = vadd.f32 0.0, %v3943
      %3945 = vmatmul.f32.gmra.mxu0 %v3840
      %v3946 = vpop.f32.mrf.mxu0
      %v3947 = vadd.f32 0.0, %v3946
      %3948 = vmatmul.f32.gmra.mxu0 %v3841
      %v3949 = vpop.f32.mrf.mxu0
      %v3950 = vadd.f32 0.0, %v3949
      %3951 = vmatmul.f32.gmra.mxu0 %v3842
      %v3952 = vpop.f32.mrf.mxu0
      %v3953 = vadd.f32 0.0, %v3952
      %3954 = vmatmul.f32.gmra.mxu0 %v3843
      %v3955 = vpop.f32.mrf.mxu0
      %v3956 = vadd.f32 0.0, %v3955
      %3957 = vmatmul.f32.gmra.mxu0 %v3844
      %v3958 = vpop.f32.mrf.mxu0
      %v3959 = vadd.f32 0.0, %v3958
      %3960 = vmatmul.f32.gmra.mxu0 %v3845
      %v3961 = vpop.f32.mrf.mxu0
      %v3962 = vadd.f32 0.0, %v3961
      %3963 = vmatmul.f32.gmra.mxu0 %v3846
      %v3964 = vpop.f32.mrf.mxu0
      %v3965 = vadd.f32 0.0, %v3964
      %3966 = vmatmul.f32.gmra.mxu0 %v3847
      %v3967 = vpop.f32.mrf.mxu0
      %v3968 = vadd.f32 0.0, %v3967
      %3969 = vmatmul.f32.gmra.mxu0 %v3848
      %v3970 = vpop.f32.mrf.mxu0
      %v3971 = vadd.f32 0.0, %v3970
      %3972 = vmatmul.f32.gmra.mxu0 %v3849
      %v3973 = vpop.f32.mrf.mxu0
      %v3974 = vadd.f32 0.0, %v3973
      %3975 = vmatmul.f32.gmra.mxu0 %v3850
      %v3976 = vpop.f32.mrf.mxu0
      %v3977 = vadd.f32 0.0, %v3976
      %3978 = vmatmul.f32.gmra.mxu0 %v3851
      %v3979 = vpop.f32.mrf.mxu0
      %v3980 = vadd.f32 0.0, %v3979
      %3981 = vdwg.mxu0
      %v3982 = vld [vmem:[#allocation4] sm:$0xff]
      %v3983 = vld [vmem:[#allocation4 + $0x8] sm:$0xff]
      %v3984 = vld [vmem:[#allocation4 + $0x10] sm:$0xff]
      %v3985 = vld [vmem:[#allocation4 + $0x18] sm:$0xff]
      %v3986 = vld [vmem:[#allocation4 + $0x20] sm:$0xff]
      %v3987 = vld [vmem:[#allocation4 + $0x28] sm:$0xff]
      %v3988 = vld [vmem:[#allocation4 + $0x30] sm:$0xff]
      %v3989 = vld [vmem:[#allocation4 + $0x38] sm:$0xff]
      %v3990 = vld [vmem:[#allocation4 + $0x40] sm:$0xff]
      %v3991 = vld [vmem:[#allocation4 + $0x48] sm:$0xff]
      %v3992 = vld [vmem:[#allocation4 + $0x50] sm:$0xff]
      %v3993 = vld [vmem:[#allocation4 + $0x58] sm:$0xff]
      %v3994 = vld [vmem:[#allocation4 + $0x60] sm:$0xff]
      %v3995 = vld [vmem:[#allocation4 + $0x68] sm:$0xff]
      %v3996 = vld [vmem:[#allocation4 + $0x70] sm:$0xff]
      %v3997 = vld [vmem:[#allocation4 + $0x78] sm:$0xff]
      %v3998 = vld [vmem:[#allocation4 + $0x80] sm:$0xff]
      %v3999 = vld [vmem:[#allocation4 + $0x88] sm:$0xff]
      %v4000 = vld [vmem:[#allocation4 + $0x90] sm:$0xff]
      %v4001 = vld [vmem:[#allocation4 + $0x98] sm:$0xff]
      %v4002 = vld [vmem:[#allocation4 + $0xa0] sm:$0xff]
      %v4003 = vld [vmem:[#allocation4 + $0xa8] sm:$0xff]
      %v4004 = vld [vmem:[#allocation4 + $0xb0] sm:$0xff]
      %v4005 = vld [vmem:[#allocation4 + $0xb8] sm:$0xff]
      %v4006 = vld [vmem:[#allocation4 + $0xc0] sm:$0xff]
      %v4007 = vld [vmem:[#allocation4 + $0xc8] sm:$0xff]
      %v4008 = vld [vmem:[#allocation4 + $0xd0] sm:$0xff]
      %v4009 = vld [vmem:[#allocation4 + $0xd8] sm:$0xff]
      %v4010 = vld [vmem:[#allocation4 + $0xe0] sm:$0xff]
      %v4011 = vld [vmem:[#allocation4 + $0xe8] sm:$0xff]
      %v4012 = vld [vmem:[#allocation4 + $0xf0] sm:$0xff]
      %v4013 = vld [vmem:[#allocation4 + $0xf8] sm:$0xff]
      %v4014 = vadd.f32 %v3982, %v3887
      %v4015 = vadd.f32 %v3983, %v3890
      %v4016 = vadd.f32 %v3984, %v3893
      %v4017 = vadd.f32 %v3985, %v3896
      %v4018 = vadd.f32 %v3986, %v3899
      %v4019 = vadd.f32 %v3987, %v3902
      %v4020 = vadd.f32 %v3988, %v3905
      %v4021 = vadd.f32 %v3989, %v3908
      %v4022 = vadd.f32 %v3990, %v3911
      %v4023 = vadd.f32 %v3991, %v3914
      %v4024 = vadd.f32 %v3992, %v3917
      %v4025 = vadd.f32 %v3993, %v3920
      %v4026 = vadd.f32 %v3994, %v3923
      %v4027 = vadd.f32 %v3995, %v3926
      %v4028 = vadd.f32 %v3996, %v3929
      %v4029 = vadd.f32 %v3997, %v3932
      %v4030 = vadd.f32 %v3998, %v3935
      %v4031 = vadd.f32 %v3999, %v3938
      %v4032 = vadd.f32 %v4000, %v3941
      %v4033 = vadd.f32 %v4001, %v3944
      %v4034 = vadd.f32 %v4002, %v3947
      %v4035 = vadd.f32 %v4003, %v3950
      %v4036 = vadd.f32 %v4004, %v3953
      %v4037 = vadd.f32 %v4005, %v3956
      %v4038 = vadd.f32 %v4006, %v3959
      %v4039 = vadd.f32 %v4007, %v3962
      %v4040 = vadd.f32 %v4008, %v3965
      %v4041 = vadd.f32 %v4009, %v3968
      %v4042 = vadd.f32 %v4010, %v3971
      %v4043 = vadd.f32 %v4011, %v3974
      %v4044 = vadd.f32 %v4012, %v3977
      %v4045 = vadd.f32 %v4013, %v3980
      %4046 = vst [vmem:[#allocation4] sm:$0xff] %v4014
      %4047 = vst [vmem:[#allocation4 + $0x8] sm:$0xff] %v4015
      %4048 = vst [vmem:[#allocation4 + $0x10] sm:$0xff] %v4016
      %4049 = vst [vmem:[#allocation4 + $0x18] sm:$0xff] %v4017
      %4050 = vst [vmem:[#allocation4 + $0x20] sm:$0xff] %v4018
      %4051 = vst [vmem:[#allocation4 + $0x28] sm:$0xff] %v4019
      %4052 = vst [vmem:[#allocation4 + $0x30] sm:$0xff] %v4020
      %4053 = vst [vmem:[#allocation4 + $0x38] sm:$0xff] %v4021
      %4054 = vst [vmem:[#allocation4 + $0x40] sm:$0xff] %v4022
      %4055 = vst [vmem:[#allocation4 + $0x48] sm:$0xff] %v4023
      %4056 = vst [vmem:[#allocation4 + $0x50] sm:$0xff] %v4024
      %4057 = vst [vmem:[#allocation4 + $0x58] sm:$0xff] %v4025
      %4058 = vst [vmem:[#allocation4 + $0x60] sm:$0xff] %v4026
      %4059 = vst [vmem:[#allocation4 + $0x68] sm:$0xff] %v4027
      %4060 = vst [vmem:[#allocation4 + $0x70] sm:$0xff] %v4028
      %4061 = vst [vmem:[#allocation4 + $0x78] sm:$0xff] %v4029
      %4062 = vst [vmem:[#allocation4 + $0x80] sm:$0xff] %v4030
      %4063 = vst [vmem:[#allocation4 + $0x88] sm:$0xff] %v4031
      %4064 = vst [vmem:[#allocation4 + $0x90] sm:$0xff] %v4032
      %4065 = vst [vmem:[#allocation4 + $0x98] sm:$0xff] %v4033
      %4066 = vst [vmem:[#allocation4 + $0xa0] sm:$0xff] %v4034
      %4067 = vst [vmem:[#allocation4 + $0xa8] sm:$0xff] %v4035
      %4068 = vst [vmem:[#allocation4 + $0xb0] sm:$0xff] %v4036
      %4069 = vst [vmem:[#allocation4 + $0xb8] sm:$0xff] %v4037
      %4070 = vst [vmem:[#allocation4 + $0xc0] sm:$0xff] %v4038
      %4071 = vst [vmem:[#allocation4 + $0xc8] sm:$0xff] %v4039
      %4072 = vst [vmem:[#allocation4 + $0xd0] sm:$0xff] %v4040
      %4073 = vst [vmem:[#allocation4 + $0xd8] sm:$0xff] %v4041
      %4074 = vst [vmem:[#allocation4 + $0xe0] sm:$0xff] %v4042
      %4075 = vst [vmem:[#allocation4 + $0xe8] sm:$0xff] %v4043
      %4076 = vst [vmem:[#allocation4 + $0xf0] sm:$0xff] %v4044
      %4077 = vst [vmem:[#allocation4 + $0xf8] sm:$0xff] %v4045
      %v4078 = vld [vmem:[%s2820 + $0x2] sm:$0xff]
      %v4079 = vld [vmem:[%s2820 + $0xa] sm:$0xff]
      %v4080 = vld [vmem:[%s2820 + $0x1a] sm:$0xff]
      %v4081 = vld [vmem:[%s2820 + $0x22] sm:$0xff]
      %v4082 = vld [vmem:[%s2820 + $0x32] sm:$0xff]
      %v4083 = vld [vmem:[%s2820 + $0x3a] sm:$0xff]
      %v4084 = vld [vmem:[%s2820 + $0x4a] sm:$0xff]
      %v4085 = vld [vmem:[%s2820 + $0x52] sm:$0xff]
      %v4086 = vld [vmem:[%s2820 + $0x62] sm:$0xff]
      %v4087 = vld [vmem:[%s2820 + $0x6a] sm:$0xff]
      %v4088 = vld [vmem:[%s2820 + $0x7a] sm:$0xff]
      %v4089 = vld [vmem:[%s2820 + $0x82] sm:$0xff]
      %v4090 = vld [vmem:[%s2820 + $0x92] sm:$0xff]
      %v4091 = vld [vmem:[%s2820 + $0x9a] sm:$0xff]
      %v4092 = vld [vmem:[%s2820 + $0xaa] sm:$0xff]
      %v4093 = vld [vmem:[%s2820 + $0xb2] sm:$0xff]
      %v4094 = vld [vmem:[%s2820 + $0xc2] sm:$0xff]
      %v4095 = vld [vmem:[%s2820 + $0xca] sm:$0xff]
      %v4096 = vld [vmem:[%s2820 + $0xda] sm:$0xff]
      %v4097 = vld [vmem:[%s2820 + $0xe2] sm:$0xff]
      %v4098 = vld [vmem:[%s2820 + $0xf2] sm:$0xff]
      %v4099 = vld [vmem:[%s2820 + $0xfa] sm:$0xff]
      %v4100 = vld [vmem:[%s2820 + $0x10a] sm:$0xff]
      %v4101 = vld [vmem:[%s2820 + $0x112] sm:$0xff]
      %v4102 = vld [vmem:[%s2820 + $0x122] sm:$0xff]
      %v4103 = vld [vmem:[%s2820 + $0x12a] sm:$0xff]
      %v4104 = vld [vmem:[%s2820 + $0x13a] sm:$0xff]
      %v4105 = vld [vmem:[%s2820 + $0x142] sm:$0xff]
      %v4106 = vld [vmem:[%s2820 + $0x152] sm:$0xff]
      %v4107 = vld [vmem:[%s2820 + $0x15a] sm:$0xff]
      %v4108 = vld [vmem:[%s2820 + $0x16a] sm:$0xff]
      %v4109 = vld [vmem:[%s2820 + $0x172] sm:$0xff]
      %s4110 = scalar_lea.vmem %s3, 640
      %v4111 = vld [vmem:[%s4110] sm:$0xff]
      %v4112 = vld [vmem:[%s4110 + $0x8] sm:$0xff]
      %v4113 = vld [vmem:[%s4110 + $0x10] sm:$0xff]
      %v4114 = vld [vmem:[%s4110 + $0x18] sm:$0xff]
      %v4115 = vld [vmem:[%s4110 + $0x20] sm:$0xff]
      %v4116 = vld [vmem:[%s4110 + $0x28] sm:$0xff]
      %v4117 = vld [vmem:[%s4110 + $0x30] sm:$0xff]
      %v4118 = vld [vmem:[%s4110 + $0x38] sm:$0xff]
      %v4119 = vld [vmem:[%s4110 + $0x40] sm:$0xff]
      %v4120 = vld [vmem:[%s4110 + $0x48] sm:$0xff]
      %v4121 = vld [vmem:[%s4110 + $0x50] sm:$0xff]
      %v4122 = vld [vmem:[%s4110 + $0x58] sm:$0xff]
      %v4123 = vld [vmem:[%s4110 + $0x60] sm:$0xff]
      %v4124 = vld [vmem:[%s4110 + $0x68] sm:$0xff]
      %v4125 = vld [vmem:[%s4110 + $0x70] sm:$0xff]
      %v4126 = vld [vmem:[%s4110 + $0x78] sm:$0xff]
      %4127 = vmatpush.msra.mxu0 %v4126
      %4128 = vmatpush.msra.mxu0 %v4125
      %4129 = vmatpush.msra.mxu0 %v4124
      %4130 = vmatpush.msra.mxu0 %v4123
      %4131 = vmatpush.msra.mxu0 %v4122
      %4132 = vmatpush.msra.mxu0 %v4121
      %4133 = vmatpush.msra.mxu0 %v4120
      %4134 = vmatpush.msra.mxu0 %v4119
      %4135 = vmatpush.msra.mxu0 %v4118
      %4136 = vmatpush.msra.mxu0 %v4117
      %4137 = vmatpush.msra.mxu0 %v4116
      %4138 = vmatpush.msra.mxu0 %v4115
      %4139 = vmatpush.msra.mxu0 %v4114
      %4140 = vmatpush.msra.mxu0 %v4113
      %4141 = vmatpush.msra.mxu0 %v4112
      %4142 = vmatpush.msra.mxu0 %v4111
      %4143 = vmatmul.f32.gmra.mxu0 %v4078
      %v4144 = vpop.f32.mrf.mxu0
      %v4145 = vadd.f32 0.0, %v4144
      %4146 = vmatmul.f32.gmra.mxu0 %v4079
      %v4147 = vpop.f32.mrf.mxu0
      %v4148 = vadd.f32 0.0, %v4147
      %4149 = vmatmul.f32.gmra.mxu0 %v4080
      %v4150 = vpop.f32.mrf.mxu0
      %v4151 = vadd.f32 0.0, %v4150
      %4152 = vmatmul.f32.gmra.mxu0 %v4081
      %v4153 = vpop.f32.mrf.mxu0
      %v4154 = vadd.f32 0.0, %v4153
      %4155 = vmatmul.f32.gmra.mxu0 %v4082
      %v4156 = vpop.f32.mrf.mxu0
      %v4157 = vadd.f32 0.0, %v4156
      %4158 = vmatmul.f32.gmra.mxu0 %v4083
      %v4159 = vpop.f32.mrf.mxu0
      %v4160 = vadd.f32 0.0, %v4159
      %4161 = vmatmul.f32.gmra.mxu0 %v4084
      %v4162 = vpop.f32.mrf.mxu0
      %v4163 = vadd.f32 0.0, %v4162
      %4164 = vmatmul.f32.gmra.mxu0 %v4085
      %v4165 = vpop.f32.mrf.mxu0
      %v4166 = vadd.f32 0.0, %v4165
      %4167 = vmatmul.f32.gmra.mxu0 %v4086
      %v4168 = vpop.f32.mrf.mxu0
      %v4169 = vadd.f32 0.0, %v4168
      %4170 = vmatmul.f32.gmra.mxu0 %v4087
      %v4171 = vpop.f32.mrf.mxu0
      %v4172 = vadd.f32 0.0, %v4171
      %4173 = vmatmul.f32.gmra.mxu0 %v4088
      %v4174 = vpop.f32.mrf.mxu0
      %v4175 = vadd.f32 0.0, %v4174
      %4176 = vmatmul.f32.gmra.mxu0 %v4089
      %v4177 = vpop.f32.mrf.mxu0
      %v4178 = vadd.f32 0.0, %v4177
      %4179 = vmatmul.f32.gmra.mxu0 %v4090
      %v4180 = vpop.f32.mrf.mxu0
      %v4181 = vadd.f32 0.0, %v4180
      %4182 = vmatmul.f32.gmra.mxu0 %v4091
      %v4183 = vpop.f32.mrf.mxu0
      %v4184 = vadd.f32 0.0, %v4183
      %4185 = vmatmul.f32.gmra.mxu0 %v4092
      %v4186 = vpop.f32.mrf.mxu0
      %v4187 = vadd.f32 0.0, %v4186
      %4188 = vmatmul.f32.gmra.mxu0 %v4093
      %v4189 = vpop.f32.mrf.mxu0
      %v4190 = vadd.f32 0.0, %v4189
      %4191 = vmatmul.f32.gmra.mxu0 %v4094
      %v4192 = vpop.f32.mrf.mxu0
      %v4193 = vadd.f32 0.0, %v4192
      %4194 = vmatmul.f32.gmra.mxu0 %v4095
      %v4195 = vpop.f32.mrf.mxu0
      %v4196 = vadd.f32 0.0, %v4195
      %4197 = vmatmul.f32.gmra.mxu0 %v4096
      %v4198 = vpop.f32.mrf.mxu0
      %v4199 = vadd.f32 0.0, %v4198
      %4200 = vmatmul.f32.gmra.mxu0 %v4097
      %v4201 = vpop.f32.mrf.mxu0
      %v4202 = vadd.f32 0.0, %v4201
      %4203 = vmatmul.f32.gmra.mxu0 %v4098
      %v4204 = vpop.f32.mrf.mxu0
      %v4205 = vadd.f32 0.0, %v4204
      %4206 = vmatmul.f32.gmra.mxu0 %v4099
      %v4207 = vpop.f32.mrf.mxu0
      %v4208 = vadd.f32 0.0, %v4207
      %4209 = vmatmul.f32.gmra.mxu0 %v4100
      %v4210 = vpop.f32.mrf.mxu0
      %v4211 = vadd.f32 0.0, %v4210
      %4212 = vmatmul.f32.gmra.mxu0 %v4101
      %v4213 = vpop.f32.mrf.mxu0
      %v4214 = vadd.f32 0.0, %v4213
      %4215 = vmatmul.f32.gmra.mxu0 %v4102
      %v4216 = vpop.f32.mrf.mxu0
      %v4217 = vadd.f32 0.0, %v4216
      %4218 = vmatmul.f32.gmra.mxu0 %v4103
      %v4219 = vpop.f32.mrf.mxu0
      %v4220 = vadd.f32 0.0, %v4219
      %4221 = vmatmul.f32.gmra.mxu0 %v4104
      %v4222 = vpop.f32.mrf.mxu0
      %v4223 = vadd.f32 0.0, %v4222
      %4224 = vmatmul.f32.gmra.mxu0 %v4105
      %v4225 = vpop.f32.mrf.mxu0
      %v4226 = vadd.f32 0.0, %v4225
      %4227 = vmatmul.f32.gmra.mxu0 %v4106
      %v4228 = vpop.f32.mrf.mxu0
      %v4229 = vadd.f32 0.0, %v4228
      %4230 = vmatmul.f32.gmra.mxu0 %v4107
      %v4231 = vpop.f32.mrf.mxu0
      %v4232 = vadd.f32 0.0, %v4231
      %4233 = vmatmul.f32.gmra.mxu0 %v4108
      %v4234 = vpop.f32.mrf.mxu0
      %v4235 = vadd.f32 0.0, %v4234
      %4236 = vmatmul.f32.gmra.mxu0 %v4109
      %v4237 = vpop.f32.mrf.mxu0
      %v4238 = vadd.f32 0.0, %v4237
      %4239 = vdwg.mxu0
      %v4240 = vld [vmem:[#allocation4] sm:$0xff]
      %v4241 = vld [vmem:[#allocation4 + $0x8] sm:$0xff]
      %v4242 = vld [vmem:[#allocation4 + $0x10] sm:$0xff]
      %v4243 = vld [vmem:[#allocation4 + $0x18] sm:$0xff]
      %v4244 = vld [vmem:[#allocation4 + $0x20] sm:$0xff]
      %v4245 = vld [vmem:[#allocation4 + $0x28] sm:$0xff]
      %v4246 = vld [vmem:[#allocation4 + $0x30] sm:$0xff]
      %v4247 = vld [vmem:[#allocation4 + $0x38] sm:$0xff]
      %v4248 = vld [vmem:[#allocation4 + $0x40] sm:$0xff]
      %v4249 = vld [vmem:[#allocation4 + $0x48] sm:$0xff]
      %v4250 = vld [vmem:[#allocation4 + $0x50] sm:$0xff]
      %v4251 = vld [vmem:[#allocation4 + $0x58] sm:$0xff]
      %v4252 = vld [vmem:[#allocation4 + $0x60] sm:$0xff]
      %v4253 = vld [vmem:[#allocation4 + $0x68] sm:$0xff]
      %v4254 = vld [vmem:[#allocation4 + $0x70] sm:$0xff]
      %v4255 = vld [vmem:[#allocation4 + $0x78] sm:$0xff]
      %v4256 = vld [vmem:[#allocation4 + $0x80] sm:$0xff]
      %v4257 = vld [vmem:[#allocation4 + $0x88] sm:$0xff]
      %v4258 = vld [vmem:[#allocation4 + $0x90] sm:$0xff]
      %v4259 = vld [vmem:[#allocation4 + $0x98] sm:$0xff]
      %v4260 = vld [vmem:[#allocation4 + $0xa0] sm:$0xff]
      %v4261 = vld [vmem:[#allocation4 + $0xa8] sm:$0xff]
      %v4262 = vld [vmem:[#allocation4 + $0xb0] sm:$0xff]
      %v4263 = vld [vmem:[#allocation4 + $0xb8] sm:$0xff]
      %v4264 = vld [vmem:[#allocation4 + $0xc0] sm:$0xff]
      %v4265 = vld [vmem:[#allocation4 + $0xc8] sm:$0xff]
      %v4266 = vld [vmem:[#allocation4 + $0xd0] sm:$0xff]
      %v4267 = vld [vmem:[#allocation4 + $0xd8] sm:$0xff]
      %v4268 = vld [vmem:[#allocation4 + $0xe0] sm:$0xff]
      %v4269 = vld [vmem:[#allocation4 + $0xe8] sm:$0xff]
      %v4270 = vld [vmem:[#allocation4 + $0xf0] sm:$0xff]
      %v4271 = vld [vmem:[#allocation4 + $0xf8] sm:$0xff]
      %v4272 = vadd.f32 %v4240, %v4145
      %v4273 = vadd.f32 %v4241, %v4148
      %v4274 = vadd.f32 %v4242, %v4151
      %v4275 = vadd.f32 %v4243, %v4154
      %v4276 = vadd.f32 %v4244, %v4157
      %v4277 = vadd.f32 %v4245, %v4160
      %v4278 = vadd.f32 %v4246, %v4163
      %v4279 = vadd.f32 %v4247, %v4166
      %v4280 = vadd.f32 %v4248, %v4169
      %v4281 = vadd.f32 %v4249, %v4172
      %v4282 = vadd.f32 %v4250, %v4175
      %v4283 = vadd.f32 %v4251, %v4178
      %v4284 = vadd.f32 %v4252, %v4181
      %v4285 = vadd.f32 %v4253, %v4184
      %v4286 = vadd.f32 %v4254, %v4187
      %v4287 = vadd.f32 %v4255, %v4190
      %v4288 = vadd.f32 %v4256, %v4193
      %v4289 = vadd.f32 %v4257, %v4196
      %v4290 = vadd.f32 %v4258, %v4199
      %v4291 = vadd.f32 %v4259, %v4202
      %v4292 = vadd.f32 %v4260, %v4205
      %v4293 = vadd.f32 %v4261, %v4208
      %v4294 = vadd.f32 %v4262, %v4211
      %v4295 = vadd.f32 %v4263, %v4214
      %v4296 = vadd.f32 %v4264, %v4217
      %v4297 = vadd.f32 %v4265, %v4220
      %v4298 = vadd.f32 %v4266, %v4223
      %v4299 = vadd.f32 %v4267, %v4226
      %v4300 = vadd.f32 %v4268, %v4229
      %v4301 = vadd.f32 %v4269, %v4232
      %v4302 = vadd.f32 %v4270, %v4235
      %v4303 = vadd.f32 %v4271, %v4238
      %4304 = vst [vmem:[#allocation4] sm:$0xff] %v4272
      %4305 = vst [vmem:[#allocation4 + $0x8] sm:$0xff] %v4273
      %4306 = vst [vmem:[#allocation4 + $0x10] sm:$0xff] %v4274
      %4307 = vst [vmem:[#allocation4 + $0x18] sm:$0xff] %v4275
      %4308 = vst [vmem:[#allocation4 + $0x20] sm:$0xff] %v4276
      %4309 = vst [vmem:[#allocation4 + $0x28] sm:$0xff] %v4277
      %4310 = vst [vmem:[#allocation4 + $0x30] sm:$0xff] %v4278
      %4311 = vst [vmem:[#allocation4 + $0x38] sm:$0xff] %v4279
      %4312 = vst [vmem:[#allocation4 + $0x40] sm:$0xff] %v4280
      %4313 = vst [vmem:[#allocation4 + $0x48] sm:$0xff] %v4281
      %4314 = vst [vmem:[#allocation4 + $0x50] sm:$0xff] %v4282
      %4315 = vst [vmem:[#allocation4 + $0x58] sm:$0xff] %v4283
      %4316 = vst [vmem:[#allocation4 + $0x60] sm:$0xff] %v4284
      %4317 = vst [vmem:[#allocation4 + $0x68] sm:$0xff] %v4285
      %4318 = vst [vmem:[#allocation4 + $0x70] sm:$0xff] %v4286
      %4319 = vst [vmem:[#allocation4 + $0x78] sm:$0xff] %v4287
      %4320 = vst [vmem:[#allocation4 + $0x80] sm:$0xff] %v4288
      %4321 = vst [vmem:[#allocation4 + $0x88] sm:$0xff] %v4289
      %4322 = vst [vmem:[#allocation4 + $0x90] sm:$0xff] %v4290
      %4323 = vst [vmem:[#allocation4 + $0x98] sm:$0xff] %v4291
      %4324 = vst [vmem:[#allocation4 + $0xa0] sm:$0xff] %v4292
      %4325 = vst [vmem:[#allocation4 + $0xa8] sm:$0xff] %v4293
      %4326 = vst [vmem:[#allocation4 + $0xb0] sm:$0xff] %v4294
      %4327 = vst [vmem:[#allocation4 + $0xb8] sm:$0xff] %v4295
      %4328 = vst [vmem:[#allocation4 + $0xc0] sm:$0xff] %v4296
      %4329 = vst [vmem:[#allocation4 + $0xc8] sm:$0xff] %v4297
      %4330 = vst [vmem:[#allocation4 + $0xd0] sm:$0xff] %v4298
      %4331 = vst [vmem:[#allocation4 + $0xd8] sm:$0xff] %v4299
      %4332 = vst [vmem:[#allocation4 + $0xe0] sm:$0xff] %v4300
      %4333 = vst [vmem:[#allocation4 + $0xe8] sm:$0xff] %v4301
      %4334 = vst [vmem:[#allocation4 + $0xf0] sm:$0xff] %v4302
      %4335 = vst [vmem:[#allocation4 + $0xf8] sm:$0xff] %v4303
      %s4336 = scalar_lea.vmem [#allocation3], 48
      %v4337 = vld [vmem:[%s4336] sm:$0xff]
      %v4338 = vld [vmem:[%s4336 + $0x8] sm:$0xff]
      %v4339 = vld [vmem:[%s4336 + $0x18] sm:$0xff]
      %v4340 = vld [vmem:[%s4336 + $0x20] sm:$0xff]
      %v4341 = vld [vmem:[%s4336 + $0x30] sm:$0xff]
      %v4342 = vld [vmem:[%s4336 + $0x38] sm:$0xff]
      %v4343 = vld [vmem:[%s4336 + $0x48] sm:$0xff]
      %v4344 = vld [vmem:[%s4336 + $0x50] sm:$0xff]
      %v4345 = vld [vmem:[%s4336 + $0x60] sm:$0xff]
      %v4346 = vld [vmem:[%s4336 + $0x68] sm:$0xff]
      %v4347 = vld [vmem:[%s4336 + $0x78] sm:$0xff]
      %v4348 = vld [vmem:[%s4336 + $0x80] sm:$0xff]
      %v4349 = vld [vmem:[%s4336 + $0x90] sm:$0xff]
      %v4350 = vld [vmem:[%s4336 + $0x98] sm:$0xff]
      %v4351 = vld [vmem:[%s4336 + $0xa8] sm:$0xff]
      %v4352 = vld [vmem:[%s4336 + $0xb0] sm:$0xff]
      %v4353 = vld [vmem:[%s4336 + $0xc0] sm:$0xff]
      %v4354 = vld [vmem:[%s4336 + $0xc8] sm:$0xff]
      %v4355 = vld [vmem:[%s4336 + $0xd8] sm:$0xff]
      %v4356 = vld [vmem:[%s4336 + $0xe0] sm:$0xff]
      %v4357 = vld [vmem:[%s4336 + $0xf0] sm:$0xff]
      %v4358 = vld [vmem:[%s4336 + $0xf8] sm:$0xff]
      %v4359 = vld [vmem:[%s4336 + $0x108] sm:$0xff]
      %v4360 = vld [vmem:[%s4336 + $0x110] sm:$0xff]
      %v4361 = vld [vmem:[%s4336 + $0x120] sm:$0xff]
      %v4362 = vld [vmem:[%s4336 + $0x128] sm:$0xff]
      %v4363 = vld [vmem:[%s4336 + $0x138] sm:$0xff]
      %v4364 = vld [vmem:[%s4336 + $0x140] sm:$0xff]
      %v4365 = vld [vmem:[%s4336 + $0x150] sm:$0xff]
      %v4366 = vld [vmem:[%s4336 + $0x158] sm:$0xff]
      %v4367 = vld [vmem:[%s4336 + $0x168] sm:$0xff]
      %v4368 = vld [vmem:[%s4336 + $0x170] sm:$0xff]
      %s4369 = scalar_lea.vmem %s3, 768
      %v4370 = vld [vmem:[%s4369] sm:$0xff]
      %v4371 = vld [vmem:[%s4369 + $0x8] sm:$0xff]
      %v4372 = vld [vmem:[%s4369 + $0x10] sm:$0xff]
      %v4373 = vld [vmem:[%s4369 + $0x18] sm:$0xff]
      %v4374 = vld [vmem:[%s4369 + $0x20] sm:$0xff]
      %v4375 = vld [vmem:[%s4369 + $0x28] sm:$0xff]
      %v4376 = vld [vmem:[%s4369 + $0x30] sm:$0xff]
      %v4377 = vld [vmem:[%s4369 + $0x38] sm:$0xff]
      %v4378 = vld [vmem:[%s4369 + $0x40] sm:$0xff]
      %v4379 = vld [vmem:[%s4369 + $0x48] sm:$0xff]
      %v4380 = vld [vmem:[%s4369 + $0x50] sm:$0xff]
      %v4381 = vld [vmem:[%s4369 + $0x58] sm:$0xff]
      %v4382 = vld [vmem:[%s4369 + $0x60] sm:$0xff]
      %v4383 = vld [vmem:[%s4369 + $0x68] sm:$0xff]
      %v4384 = vld [vmem:[%s4369 + $0x70] sm:$0xff]
      %v4385 = vld [vmem:[%s4369 + $0x78] sm:$0xff]
      %4386 = vmatpush.msra.mxu0 %v4385
      %4387 = vmatpush.msra.mxu0 %v4384
      %4388 = vmatpush.msra.mxu0 %v4383
      %4389 = vmatpush.msra.mxu0 %v4382
      %4390 = vmatpush.msra.mxu0 %v4381
      %4391 = vmatpush.msra.mxu0 %v4380
      %4392 = vmatpush.msra.mxu0 %v4379
      %4393 = vmatpush.msra.mxu0 %v4378
      %4394 = vmatpush.msra.mxu0 %v4377
      %4395 = vmatpush.msra.mxu0 %v4376
      %4396 = vmatpush.msra.mxu0 %v4375
      %4397 = vmatpush.msra.mxu0 %v4374
      %4398 = vmatpush.msra.mxu0 %v4373
      %4399 = vmatpush.msra.mxu0 %v4372
      %4400 = vmatpush.msra.mxu0 %v4371
      %4401 = vmatpush.msra.mxu0 %v4370
      %4402 = vmatmul.f32.gmra.mxu0 %v4337
      %v4403 = vpop.f32.mrf.mxu0
      %v4404 = vadd.f32 0.0, %v4403
      %4405 = vmatmul.f32.gmra.mxu0 %v4338
      %v4406 = vpop.f32.mrf.mxu0
      %v4407 = vadd.f32 0.0, %v4406
      %4408 = vmatmul.f32.gmra.mxu0 %v4339
      %v4409 = vpop.f32.mrf.mxu0
      %v4410 = vadd.f32 0.0, %v4409
      %4411 = vmatmul.f32.gmra.mxu0 %v4340
      %v4412 = vpop.f32.mrf.mxu0
      %v4413 = vadd.f32 0.0, %v4412
      %4414 = vmatmul.f32.gmra.mxu0 %v4341
      %v4415 = vpop.f32.mrf.mxu0
      %v4416 = vadd.f32 0.0, %v4415
      %4417 = vmatmul.f32.gmra.mxu0 %v4342
      %v4418 = vpop.f32.mrf.mxu0
      %v4419 = vadd.f32 0.0, %v4418
      %4420 = vmatmul.f32.gmra.mxu0 %v4343
      %v4421 = vpop.f32.mrf.mxu0
      %v4422 = vadd.f32 0.0, %v4421
      %4423 = vmatmul.f32.gmra.mxu0 %v4344
      %v4424 = vpop.f32.mrf.mxu0
      %v4425 = vadd.f32 0.0, %v4424
      %4426 = vmatmul.f32.gmra.mxu0 %v4345
      %v4427 = vpop.f32.mrf.mxu0
      %v4428 = vadd.f32 0.0, %v4427
      %4429 = vmatmul.f32.gmra.mxu0 %v4346
      %v4430 = vpop.f32.mrf.mxu0
      %v4431 = vadd.f32 0.0, %v4430
      %4432 = vmatmul.f32.gmra.mxu0 %v4347
      %v4433 = vpop.f32.mrf.mxu0
      %v4434 = vadd.f32 0.0, %v4433
      %4435 = vmatmul.f32.gmra.mxu0 %v4348
      %v4436 = vpop.f32.mrf.mxu0
      %v4437 = vadd.f32 0.0, %v4436
      %4438 = vmatmul.f32.gmra.mxu0 %v4349
      %v4439 = vpop.f32.mrf.mxu0
      %v4440 = vadd.f32 0.0, %v4439
      %4441 = vmatmul.f32.gmra.mxu0 %v4350
      %v4442 = vpop.f32.mrf.mxu0
      %v4443 = vadd.f32 0.0, %v4442
      %4444 = vmatmul.f32.gmra.mxu0 %v4351
      %v4445 = vpop.f32.mrf.mxu0
      %v4446 = vadd.f32 0.0, %v4445
      %4447 = vmatmul.f32.gmra.mxu0 %v4352
      %v4448 = vpop.f32.mrf.mxu0
      %v4449 = vadd.f32 0.0, %v4448
      %4450 = vmatmul.f32.gmra.mxu0 %v4353
      %v4451 = vpop.f32.mrf.mxu0
      %v4452 = vadd.f32 0.0, %v4451
      %4453 = vmatmul.f32.gmra.mxu0 %v4354
      %v4454 = vpop.f32.mrf.mxu0
      %v4455 = vadd.f32 0.0, %v4454
      %4456 = vmatmul.f32.gmra.mxu0 %v4355
      %v4457 = vpop.f32.mrf.mxu0
      %v4458 = vadd.f32 0.0, %v4457
      %4459 = vmatmul.f32.gmra.mxu0 %v4356
      %v4460 = vpop.f32.mrf.mxu0
      %v4461 = vadd.f32 0.0, %v4460
      %4462 = vmatmul.f32.gmra.mxu0 %v4357
      %v4463 = vpop.f32.mrf.mxu0
      %v4464 = vadd.f32 0.0, %v4463
      %4465 = vmatmul.f32.gmra.mxu0 %v4358
      %v4466 = vpop.f32.mrf.mxu0
      %v4467 = vadd.f32 0.0, %v4466
      %4468 = vmatmul.f32.gmra.mxu0 %v4359
      %v4469 = vpop.f32.mrf.mxu0
      %v4470 = vadd.f32 0.0, %v4469
      %4471 = vmatmul.f32.gmra.mxu0 %v4360
      %v4472 = vpop.f32.mrf.mxu0
      %v4473 = vadd.f32 0.0, %v4472
      %4474 = vmatmul.f32.gmra.mxu0 %v4361
      %v4475 = vpop.f32.mrf.mxu0
      %v4476 = vadd.f32 0.0, %v4475
      %4477 = vmatmul.f32.gmra.mxu0 %v4362
      %v4478 = vpop.f32.mrf.mxu0
      %v4479 = vadd.f32 0.0, %v4478
      %4480 = vmatmul.f32.gmra.mxu0 %v4363
      %v4481 = vpop.f32.mrf.mxu0
      %v4482 = vadd.f32 0.0, %v4481
      %4483 = vmatmul.f32.gmra.mxu0 %v4364
      %v4484 = vpop.f32.mrf.mxu0
      %v4485 = vadd.f32 0.0, %v4484
      %4486 = vmatmul.f32.gmra.mxu0 %v4365
      %v4487 = vpop.f32.mrf.mxu0
      %v4488 = vadd.f32 0.0, %v4487
      %4489 = vmatmul.f32.gmra.mxu0 %v4366
      %v4490 = vpop.f32.mrf.mxu0
      %v4491 = vadd.f32 0.0, %v4490
      %4492 = vmatmul.f32.gmra.mxu0 %v4367
      %v4493 = vpop.f32.mrf.mxu0
      %v4494 = vadd.f32 0.0, %v4493
      %4495 = vmatmul.f32.gmra.mxu0 %v4368
      %v4496 = vpop.f32.mrf.mxu0
      %v4497 = vadd.f32 0.0, %v4496
      %4498 = vdwg.mxu0
      %v4499 = vld [vmem:[#allocation4] sm:$0xff]
      %v4500 = vld [vmem:[#allocation4 + $0x8] sm:$0xff]
      %v4501 = vld [vmem:[#allocation4 + $0x10] sm:$0xff]
      %v4502 = vld [vmem:[#allocation4 + $0x18] sm:$0xff]
      %v4503 = vld [vmem:[#allocation4 + $0x20] sm:$0xff]
      %v4504 = vld [vmem:[#allocation4 + $0x28] sm:$0xff]
      %v4505 = vld [vmem:[#allocation4 + $0x30] sm:$0xff]
      %v4506 = vld [vmem:[#allocation4 + $0x38] sm:$0xff]
      %v4507 = vld [vmem:[#allocation4 + $0x40] sm:$0xff]
      %v4508 = vld [vmem:[#allocation4 + $0x48] sm:$0xff]
      %v4509 = vld [vmem:[#allocation4 + $0x50] sm:$0xff]
      %v4510 = vld [vmem:[#allocation4 + $0x58] sm:$0xff]
      %v4511 = vld [vmem:[#allocation4 + $0x60] sm:$0xff]
      %v4512 = vld [vmem:[#allocation4 + $0x68] sm:$0xff]
      %v4513 = vld [vmem:[#allocation4 + $0x70] sm:$0xff]
      %v4514 = vld [vmem:[#allocation4 + $0x78] sm:$0xff]
      %v4515 = vld [vmem:[#allocation4 + $0x80] sm:$0xff]
      %v4516 = vld [vmem:[#allocation4 + $0x88] sm:$0xff]
      %v4517 = vld [vmem:[#allocation4 + $0x90] sm:$0xff]
      %v4518 = vld [vmem:[#allocation4 + $0x98] sm:$0xff]
      %v4519 = vld [vmem:[#allocation4 + $0xa0] sm:$0xff]
      %v4520 = vld [vmem:[#allocation4 + $0xa8] sm:$0xff]
      %v4521 = vld [vmem:[#allocation4 + $0xb0] sm:$0xff]
      %v4522 = vld [vmem:[#allocation4 + $0xb8] sm:$0xff]
      %v4523 = vld [vmem:[#allocation4 + $0xc0] sm:$0xff]
      %v4524 = vld [vmem:[#allocation4 + $0xc8] sm:$0xff]
      %v4525 = vld [vmem:[#allocation4 + $0xd0] sm:$0xff]
      %v4526 = vld [vmem:[#allocation4 + $0xd8] sm:$0xff]
      %v4527 = vld [vmem:[#allocation4 + $0xe0] sm:$0xff]
      %v4528 = vld [vmem:[#allocation4 + $0xe8] sm:$0xff]
      %v4529 = vld [vmem:[#allocation4 + $0xf0] sm:$0xff]
      %v4530 = vld [vmem:[#allocation4 + $0xf8] sm:$0xff]
      %v4531 = vadd.f32 %v4499, %v4404
      %v4532 = vadd.f32 %v4500, %v4407
      %v4533 = vadd.f32 %v4501, %v4410
      %v4534 = vadd.f32 %v4502, %v4413
      %v4535 = vadd.f32 %v4503, %v4416
      %v4536 = vadd.f32 %v4504, %v4419
      %v4537 = vadd.f32 %v4505, %v4422
      %v4538 = vadd.f32 %v4506, %v4425
      %v4539 = vadd.f32 %v4507, %v4428
      %v4540 = vadd.f32 %v4508, %v4431
      %v4541 = vadd.f32 %v4509, %v4434
      %v4542 = vadd.f32 %v4510, %v4437
      %v4543 = vadd.f32 %v4511, %v4440
      %v4544 = vadd.f32 %v4512, %v4443
      %v4545 = vadd.f32 %v4513, %v4446
      %v4546 = vadd.f32 %v4514, %v4449
      %v4547 = vadd.f32 %v4515, %v4452
      %v4548 = vadd.f32 %v4516, %v4455
      %v4549 = vadd.f32 %v4517, %v4458
      %v4550 = vadd.f32 %v4518, %v4461
      %v4551 = vadd.f32 %v4519, %v4464
      %v4552 = vadd.f32 %v4520, %v4467
      %v4553 = vadd.f32 %v4521, %v4470
      %v4554 = vadd.f32 %v4522, %v4473
      %v4555 = vadd.f32 %v4523, %v4476
      %v4556 = vadd.f32 %v4524, %v4479
      %v4557 = vadd.f32 %v4525, %v4482
      %v4558 = vadd.f32 %v4526, %v4485
      %v4559 = vadd.f32 %v4527, %v4488
      %v4560 = vadd.f32 %v4528, %v4491
      %v4561 = vadd.f32 %v4529, %v4494
      %v4562 = vadd.f32 %v4530, %v4497
      %4563 = vst [vmem:[#allocation4] sm:$0xff] %v4531
      %4564 = vst [vmem:[#allocation4 + $0x8] sm:$0xff] %v4532
      %4565 = vst [vmem:[#allocation4 + $0x10] sm:$0xff] %v4533
      %4566 = vst [vmem:[#allocation4 + $0x18] sm:$0xff] %v4534
      %4567 = vst [vmem:[#allocation4 + $0x20] sm:$0xff] %v4535
      %4568 = vst [vmem:[#allocation4 + $0x28] sm:$0xff] %v4536
      %4569 = vst [vmem:[#allocation4 + $0x30] sm:$0xff] %v4537
      %4570 = vst [vmem:[#allocation4 + $0x38] sm:$0xff] %v4538
      %4571 = vst [vmem:[#allocation4 + $0x40] sm:$0xff] %v4539
      %4572 = vst [vmem:[#allocation4 + $0x48] sm:$0xff] %v4540
      %4573 = vst [vmem:[#allocation4 + $0x50] sm:$0xff] %v4541
      %4574 = vst [vmem:[#allocation4 + $0x58] sm:$0xff] %v4542
      %4575 = vst [vmem:[#allocation4 + $0x60] sm:$0xff] %v4543
      %4576 = vst [vmem:[#allocation4 + $0x68] sm:$0xff] %v4544
      %4577 = vst [vmem:[#allocation4 + $0x70] sm:$0xff] %v4545
      %4578 = vst [vmem:[#allocation4 + $0x78] sm:$0xff] %v4546
      %4579 = vst [vmem:[#allocation4 + $0x80] sm:$0xff] %v4547
      %4580 = vst [vmem:[#allocation4 + $0x88] sm:$0xff] %v4548
      %4581 = vst [vmem:[#allocation4 + $0x90] sm:$0xff] %v4549
      %4582 = vst [vmem:[#allocation4 + $0x98] sm:$0xff] %v4550
      %4583 = vst [vmem:[#allocation4 + $0xa0] sm:$0xff] %v4551
      %4584 = vst [vmem:[#allocation4 + $0xa8] sm:$0xff] %v4552
      %4585 = vst [vmem:[#allocation4 + $0xb0] sm:$0xff] %v4553
      %4586 = vst [vmem:[#allocation4 + $0xb8] sm:$0xff] %v4554
      %4587 = vst [vmem:[#allocation4 + $0xc0] sm:$0xff] %v4555
      %4588 = vst [vmem:[#allocation4 + $0xc8] sm:$0xff] %v4556
      %4589 = vst [vmem:[#allocation4 + $0xd0] sm:$0xff] %v4557
      %4590 = vst [vmem:[#allocation4 + $0xd8] sm:$0xff] %v4558
      %4591 = vst [vmem:[#allocation4 + $0xe0] sm:$0xff] %v4559
      %4592 = vst [vmem:[#allocation4 + $0xe8] sm:$0xff] %v4560
      %4593 = vst [vmem:[#allocation4 + $0xf0] sm:$0xff] %v4561
      %4594 = vst [vmem:[#allocation4 + $0xf8] sm:$0xff] %v4562
      %v4595 = vld [vmem:[%s4336 + $0x1] sm:$0xff]
      %v4596 = vld [vmem:[%s4336 + $0x9] sm:$0xff]
      %v4597 = vld [vmem:[%s4336 + $0x19] sm:$0xff]
      %v4598 = vld [vmem:[%s4336 + $0x21] sm:$0xff]
      %v4599 = vld [vmem:[%s4336 + $0x31] sm:$0xff]
      %v4600 = vld [vmem:[%s4336 + $0x39] sm:$0xff]
      %v4601 = vld [vmem:[%s4336 + $0x49] sm:$0xff]
      %v4602 = vld [vmem:[%s4336 + $0x51] sm:$0xff]
      %v4603 = vld [vmem:[%s4336 + $0x61] sm:$0xff]
      %v4604 = vld [vmem:[%s4336 + $0x69] sm:$0xff]
      %v4605 = vld [vmem:[%s4336 + $0x79] sm:$0xff]
      %v4606 = vld [vmem:[%s4336 + $0x81] sm:$0xff]
      %v4607 = vld [vmem:[%s4336 + $0x91] sm:$0xff]
      %v4608 = vld [vmem:[%s4336 + $0x99] sm:$0xff]
      %v4609 = vld [vmem:[%s4336 + $0xa9] sm:$0xff]
      %v4610 = vld [vmem:[%s4336 + $0xb1] sm:$0xff]
      %v4611 = vld [vmem:[%s4336 + $0xc1] sm:$0xff]
      %v4612 = vld [vmem:[%s4336 + $0xc9] sm:$0xff]
      %v4613 = vld [vmem:[%s4336 + $0xd9] sm:$0xff]
      %v4614 = vld [vmem:[%s4336 + $0xe1] sm:$0xff]
      %v4615 = vld [vmem:[%s4336 + $0xf1] sm:$0xff]
      %v4616 = vld [vmem:[%s4336 + $0xf9] sm:$0xff]
      %v4617 = vld [vmem:[%s4336 + $0x109] sm:$0xff]
      %v4618 = vld [vmem:[%s4336 + $0x111] sm:$0xff]
      %v4619 = vld [vmem:[%s4336 + $0x121] sm:$0xff]
      %v4620 = vld [vmem:[%s4336 + $0x129] sm:$0xff]
      %v4621 = vld [vmem:[%s4336 + $0x139] sm:$0xff]
      %v4622 = vld [vmem:[%s4336 + $0x141] sm:$0xff]
      %v4623 = vld [vmem:[%s4336 + $0x151] sm:$0xff]
      %v4624 = vld [vmem:[%s4336 + $0x159] sm:$0xff]
      %v4625 = vld [vmem:[%s4336 + $0x169] sm:$0xff]
      %v4626 = vld [vmem:[%s4336 + $0x171] sm:$0xff]
      %s4627 = scalar_lea.vmem %s3, 896
      %v4628 = vld [vmem:[%s4627] sm:$0xff]
      %v4629 = vld [vmem:[%s4627 + $0x8] sm:$0xff]
      %v4630 = vld [vmem:[%s4627 + $0x10] sm:$0xff]
      %v4631 = vld [vmem:[%s4627 + $0x18] sm:$0xff]
      %v4632 = vld [vmem:[%s4627 + $0x20] sm:$0xff]
      %v4633 = vld [vmem:[%s4627 + $0x28] sm:$0xff]
      %v4634 = vld [vmem:[%s4627 + $0x30] sm:$0xff]
      %v4635 = vld [vmem:[%s4627 + $0x38] sm:$0xff]
      %v4636 = vld [vmem:[%s4627 + $0x40] sm:$0xff]
      %v4637 = vld [vmem:[%s4627 + $0x48] sm:$0xff]
      %v4638 = vld [vmem:[%s4627 + $0x50] sm:$0xff]
      %v4639 = vld [vmem:[%s4627 + $0x58] sm:$0xff]
      %v4640 = vld [vmem:[%s4627 + $0x60] sm:$0xff]
      %v4641 = vld [vmem:[%s4627 + $0x68] sm:$0xff]
      %v4642 = vld [vmem:[%s4627 + $0x70] sm:$0xff]
      %v4643 = vld [vmem:[%s4627 + $0x78] sm:$0xff]
      %4644 = vmatpush.msra.mxu0 %v4643
      %4645 = vmatpush.msra.mxu0 %v4642
      %4646 = vmatpush.msra.mxu0 %v4641
      %4647 = vmatpush.msra.mxu0 %v4640
      %4648 = vmatpush.msra.mxu0 %v4639
      %4649 = vmatpush.msra.mxu0 %v4638
      %4650 = vmatpush.msra.mxu0 %v4637
      %4651 = vmatpush.msra.mxu0 %v4636
      %4652 = vmatpush.msra.mxu0 %v4635
      %4653 = vmatpush.msra.mxu0 %v4634
      %4654 = vmatpush.msra.mxu0 %v4633
      %4655 = vmatpush.msra.mxu0 %v4632
      %4656 = vmatpush.msra.mxu0 %v4631
      %4657 = vmatpush.msra.mxu0 %v4630
      %4658 = vmatpush.msra.mxu0 %v4629
      %4659 = vmatpush.msra.mxu0 %v4628
      %4660 = vmatmul.f32.gmra.mxu0 %v4595
      %v4661 = vpop.f32.mrf.mxu0
      %v4662 = vadd.f32 0.0, %v4661
      %4663 = vmatmul.f32.gmra.mxu0 %v4596
      %v4664 = vpop.f32.mrf.mxu0
      %v4665 = vadd.f32 0.0, %v4664
      %4666 = vmatmul.f32.gmra.mxu0 %v4597
      %v4667 = vpop.f32.mrf.mxu0
      %v4668 = vadd.f32 0.0, %v4667
      %4669 = vmatmul.f32.gmra.mxu0 %v4598
      %v4670 = vpop.f32.mrf.mxu0
      %v4671 = vadd.f32 0.0, %v4670
      %4672 = vmatmul.f32.gmra.mxu0 %v4599
      %v4673 = vpop.f32.mrf.mxu0
      %v4674 = vadd.f32 0.0, %v4673
      %4675 = vmatmul.f32.gmra.mxu0 %v4600
      %v4676 = vpop.f32.mrf.mxu0
      %v4677 = vadd.f32 0.0, %v4676
      %4678 = vmatmul.f32.gmra.mxu0 %v4601
      %v4679 = vpop.f32.mrf.mxu0
      %v4680 = vadd.f32 0.0, %v4679
      %4681 = vmatmul.f32.gmra.mxu0 %v4602
      %v4682 = vpop.f32.mrf.mxu0
      %v4683 = vadd.f32 0.0, %v4682
      %4684 = vmatmul.f32.gmra.mxu0 %v4603
      %v4685 = vpop.f32.mrf.mxu0
      %v4686 = vadd.f32 0.0, %v4685
      %4687 = vmatmul.f32.gmra.mxu0 %v4604
      %v4688 = vpop.f32.mrf.mxu0
      %v4689 = vadd.f32 0.0, %v4688
      %4690 = vmatmul.f32.gmra.mxu0 %v4605
      %v4691 = vpop.f32.mrf.mxu0
      %v4692 = vadd.f32 0.0, %v4691
      %4693 = vmatmul.f32.gmra.mxu0 %v4606
      %v4694 = vpop.f32.mrf.mxu0
      %v4695 = vadd.f32 0.0, %v4694
      %4696 = vmatmul.f32.gmra.mxu0 %v4607
      %v4697 = vpop.f32.mrf.mxu0
      %v4698 = vadd.f32 0.0, %v4697
      %4699 = vmatmul.f32.gmra.mxu0 %v4608
      %v4700 = vpop.f32.mrf.mxu0
      %v4701 = vadd.f32 0.0, %v4700
      %4702 = vmatmul.f32.gmra.mxu0 %v4609
      %v4703 = vpop.f32.mrf.mxu0
      %v4704 = vadd.f32 0.0, %v4703
      %4705 = vmatmul.f32.gmra.mxu0 %v4610
      %v4706 = vpop.f32.mrf.mxu0
      %v4707 = vadd.f32 0.0, %v4706
      %4708 = vmatmul.f32.gmra.mxu0 %v4611
      %v4709 = vpop.f32.mrf.mxu0
      %v4710 = vadd.f32 0.0, %v4709
      %4711 = vmatmul.f32.gmra.mxu0 %v4612
      %v4712 = vpop.f32.mrf.mxu0
      %v4713 = vadd.f32 0.0, %v4712
      %4714 = vmatmul.f32.gmra.mxu0 %v4613
      %v4715 = vpop.f32.mrf.mxu0
      %v4716 = vadd.f32 0.0, %v4715
      %4717 = vmatmul.f32.gmra.mxu0 %v4614
      %v4718 = vpop.f32.mrf.mxu0
      %v4719 = vadd.f32 0.0, %v4718
      %4720 = vmatmul.f32.gmra.mxu0 %v4615
      %v4721 = vpop.f32.mrf.mxu0
      %v4722 = vadd.f32 0.0, %v4721
      %4723 = vmatmul.f32.gmra.mxu0 %v4616
      %v4724 = vpop.f32.mrf.mxu0
      %v4725 = vadd.f32 0.0, %v4724
      %4726 = vmatmul.f32.gmra.mxu0 %v4617
      %v4727 = vpop.f32.mrf.mxu0
      %v4728 = vadd.f32 0.0, %v4727
      %4729 = vmatmul.f32.gmra.mxu0 %v4618
      %v4730 = vpop.f32.mrf.mxu0
      %v4731 = vadd.f32 0.0, %v4730
      %4732 = vmatmul.f32.gmra.mxu0 %v4619
      %v4733 = vpop.f32.mrf.mxu0
      %v4734 = vadd.f32 0.0, %v4733
      %4735 = vmatmul.f32.gmra.mxu0 %v4620
      %v4736 = vpop.f32.mrf.mxu0
      %v4737 = vadd.f32 0.0, %v4736
      %4738 = vmatmul.f32.gmra.mxu0 %v4621
      %v4739 = vpop.f32.mrf.mxu0
      %v4740 = vadd.f32 0.0, %v4739
      %4741 = vmatmul.f32.gmra.mxu0 %v4622
      %v4742 = vpop.f32.mrf.mxu0
      %v4743 = vadd.f32 0.0, %v4742
      %4744 = vmatmul.f32.gmra.mxu0 %v4623
      %v4745 = vpop.f32.mrf.mxu0
      %v4746 = vadd.f32 0.0, %v4745
      %4747 = vmatmul.f32.gmra.mxu0 %v4624
      %v4748 = vpop.f32.mrf.mxu0
      %v4749 = vadd.f32 0.0, %v4748
      %4750 = vmatmul.f32.gmra.mxu0 %v4625
      %v4751 = vpop.f32.mrf.mxu0
      %v4752 = vadd.f32 0.0, %v4751
      %4753 = vmatmul.f32.gmra.mxu0 %v4626
      %v4754 = vpop.f32.mrf.mxu0
      %v4755 = vadd.f32 0.0, %v4754
      %4756 = vdwg.mxu0
      %v4757 = vld [vmem:[#allocation4] sm:$0xff]
      %v4758 = vld [vmem:[#allocation4 + $0x8] sm:$0xff]
      %v4759 = vld [vmem:[#allocation4 + $0x10] sm:$0xff]
      %v4760 = vld [vmem:[#allocation4 + $0x18] sm:$0xff]
      %v4761 = vld [vmem:[#allocation4 + $0x20] sm:$0xff]
      %v4762 = vld [vmem:[#allocation4 + $0x28] sm:$0xff]
      %v4763 = vld [vmem:[#allocation4 + $0x30] sm:$0xff]
      %v4764 = vld [vmem:[#allocation4 + $0x38] sm:$0xff]
      %v4765 = vld [vmem:[#allocation4 + $0x40] sm:$0xff]
      %v4766 = vld [vmem:[#allocation4 + $0x48] sm:$0xff]
      %v4767 = vld [vmem:[#allocation4 + $0x50] sm:$0xff]
      %v4768 = vld [vmem:[#allocation4 + $0x58] sm:$0xff]
      %v4769 = vld [vmem:[#allocation4 + $0x60] sm:$0xff]
      %v4770 = vld [vmem:[#allocation4 + $0x68] sm:$0xff]
      %v4771 = vld [vmem:[#allocation4 + $0x70] sm:$0xff]
      %v4772 = vld [vmem:[#allocation4 + $0x78] sm:$0xff]
      %v4773 = vld [vmem:[#allocation4 + $0x80] sm:$0xff]
      %v4774 = vld [vmem:[#allocation4 + $0x88] sm:$0xff]
      %v4775 = vld [vmem:[#allocation4 + $0x90] sm:$0xff]
      %v4776 = vld [vmem:[#allocation4 + $0x98] sm:$0xff]
      %v4777 = vld [vmem:[#allocation4 + $0xa0] sm:$0xff]
      %v4778 = vld [vmem:[#allocation4 + $0xa8] sm:$0xff]
      %v4779 = vld [vmem:[#allocation4 + $0xb0] sm:$0xff]
      %v4780 = vld [vmem:[#allocation4 + $0xb8] sm:$0xff]
      %v4781 = vld [vmem:[#allocation4 + $0xc0] sm:$0xff]
      %v4782 = vld [vmem:[#allocation4 + $0xc8] sm:$0xff]
      %v4783 = vld [vmem:[#allocation4 + $0xd0] sm:$0xff]
      %v4784 = vld [vmem:[#allocation4 + $0xd8] sm:$0xff]
      %v4785 = vld [vmem:[#allocation4 + $0xe0] sm:$0xff]
      %v4786 = vld [vmem:[#allocation4 + $0xe8] sm:$0xff]
      %v4787 = vld [vmem:[#allocation4 + $0xf0] sm:$0xff]
      %v4788 = vld [vmem:[#allocation4 + $0xf8] sm:$0xff]
      %v4789 = vadd.f32 %v4757, %v4662
      %v4790 = vadd.f32 %v4758, %v4665
      %v4791 = vadd.f32 %v4759, %v4668
      %v4792 = vadd.f32 %v4760, %v4671
      %v4793 = vadd.f32 %v4761, %v4674
      %v4794 = vadd.f32 %v4762, %v4677
      %v4795 = vadd.f32 %v4763, %v4680
      %v4796 = vadd.f32 %v4764, %v4683
      %v4797 = vadd.f32 %v4765, %v4686
      %v4798 = vadd.f32 %v4766, %v4689
      %v4799 = vadd.f32 %v4767, %v4692
      %v4800 = vadd.f32 %v4768, %v4695
      %v4801 = vadd.f32 %v4769, %v4698
      %v4802 = vadd.f32 %v4770, %v4701
      %v4803 = vadd.f32 %v4771, %v4704
      %v4804 = vadd.f32 %v4772, %v4707
      %v4805 = vadd.f32 %v4773, %v4710
      %v4806 = vadd.f32 %v4774, %v4713
      %v4807 = vadd.f32 %v4775, %v4716
      %v4808 = vadd.f32 %v4776, %v4719
      %v4809 = vadd.f32 %v4777, %v4722
      %v4810 = vadd.f32 %v4778, %v4725
      %v4811 = vadd.f32 %v4779, %v4728
      %v4812 = vadd.f32 %v4780, %v4731
      %v4813 = vadd.f32 %v4781, %v4734
      %v4814 = vadd.f32 %v4782, %v4737
      %v4815 = vadd.f32 %v4783, %v4740
      %v4816 = vadd.f32 %v4784, %v4743
      %v4817 = vadd.f32 %v4785, %v4746
      %v4818 = vadd.f32 %v4786, %v4749
      %v4819 = vadd.f32 %v4787, %v4752
      %v4820 = vadd.f32 %v4788, %v4755
      %4821 = vst [vmem:[#allocation4] sm:$0xff] %v4789
      %4822 = vst [vmem:[#allocation4 + $0x8] sm:$0xff] %v4790
      %4823 = vst [vmem:[#allocation4 + $0x10] sm:$0xff] %v4791
      %4824 = vst [vmem:[#allocation4 + $0x18] sm:$0xff] %v4792
      %4825 = vst [vmem:[#allocation4 + $0x20] sm:$0xff] %v4793
      %4826 = vst [vmem:[#allocation4 + $0x28] sm:$0xff] %v4794
      %4827 = vst [vmem:[#allocation4 + $0x30] sm:$0xff] %v4795
      %4828 = vst [vmem:[#allocation4 + $0x38] sm:$0xff] %v4796
      %4829 = vst [vmem:[#allocation4 + $0x40] sm:$0xff] %v4797
      %4830 = vst [vmem:[#allocation4 + $0x48] sm:$0xff] %v4798
      %4831 = vst [vmem:[#allocation4 + $0x50] sm:$0xff] %v4799
      %4832 = vst [vmem:[#allocation4 + $0x58] sm:$0xff] %v4800
      %4833 = vst [vmem:[#allocation4 + $0x60] sm:$0xff] %v4801
      %4834 = vst [vmem:[#allocation4 + $0x68] sm:$0xff] %v4802
      %4835 = vst [vmem:[#allocation4 + $0x70] sm:$0xff] %v4803
      %4836 = vst [vmem:[#allocation4 + $0x78] sm:$0xff] %v4804
      %4837 = vst [vmem:[#allocation4 + $0x80] sm:$0xff] %v4805
      %4838 = vst [vmem:[#allocation4 + $0x88] sm:$0xff] %v4806
      %4839 = vst [vmem:[#allocation4 + $0x90] sm:$0xff] %v4807
      %4840 = vst [vmem:[#allocation4 + $0x98] sm:$0xff] %v4808
      %4841 = vst [vmem:[#allocation4 + $0xa0] sm:$0xff] %v4809
      %4842 = vst [vmem:[#allocation4 + $0xa8] sm:$0xff] %v4810
      %4843 = vst [vmem:[#allocation4 + $0xb0] sm:$0xff] %v4811
      %4844 = vst [vmem:[#allocation4 + $0xb8] sm:$0xff] %v4812
      %4845 = vst [vmem:[#allocation4 + $0xc0] sm:$0xff] %v4813
      %4846 = vst [vmem:[#allocation4 + $0xc8] sm:$0xff] %v4814
      %4847 = vst [vmem:[#allocation4 + $0xd0] sm:$0xff] %v4815
      %4848 = vst [vmem:[#allocation4 + $0xd8] sm:$0xff] %v4816
      %4849 = vst [vmem:[#allocation4 + $0xe0] sm:$0xff] %v4817
      %4850 = vst [vmem:[#allocation4 + $0xe8] sm:$0xff] %v4818
      %4851 = vst [vmem:[#allocation4 + $0xf0] sm:$0xff] %v4819
      %4852 = vst [vmem:[#allocation4 + $0xf8] sm:$0xff] %v4820
      %v4853 = vld [vmem:[%s4336 + $0x2] sm:$0xff]
      %v4854 = vld [vmem:[%s4336 + $0xa] sm:$0xff]
      %v4855 = vld [vmem:[%s4336 + $0x1a] sm:$0xff]
      %v4856 = vld [vmem:[%s4336 + $0x22] sm:$0xff]
      %v4857 = vld [vmem:[%s4336 + $0x32] sm:$0xff]
      %v4858 = vld [vmem:[%s4336 + $0x3a] sm:$0xff]
      %v4859 = vld [vmem:[%s4336 + $0x4a] sm:$0xff]
      %v4860 = vld [vmem:[%s4336 + $0x52] sm:$0xff]
      %v4861 = vld [vmem:[%s4336 + $0x62] sm:$0xff]
      %v4862 = vld [vmem:[%s4336 + $0x6a] sm:$0xff]
      %v4863 = vld [vmem:[%s4336 + $0x7a] sm:$0xff]
      %v4864 = vld [vmem:[%s4336 + $0x82] sm:$0xff]
      %v4865 = vld [vmem:[%s4336 + $0x92] sm:$0xff]
      %v4866 = vld [vmem:[%s4336 + $0x9a] sm:$0xff]
      %v4867 = vld [vmem:[%s4336 + $0xaa] sm:$0xff]
      %v4868 = vld [vmem:[%s4336 + $0xb2] sm:$0xff]
      %v4869 = vld [vmem:[%s4336 + $0xc2] sm:$0xff]
      %v4870 = vld [vmem:[%s4336 + $0xca] sm:$0xff]
      %v4871 = vld [vmem:[%s4336 + $0xda] sm:$0xff]
      %v4872 = vld [vmem:[%s4336 + $0xe2] sm:$0xff]
      %v4873 = vld [vmem:[%s4336 + $0xf2] sm:$0xff]
      %v4874 = vld [vmem:[%s4336 + $0xfa] sm:$0xff]
      %v4875 = vld [vmem:[%s4336 + $0x10a] sm:$0xff]
      %v4876 = vld [vmem:[%s4336 + $0x112] sm:$0xff]
      %v4877 = vld [vmem:[%s4336 + $0x122] sm:$0xff]
      %v4878 = vld [vmem:[%s4336 + $0x12a] sm:$0xff]
      %v4879 = vld [vmem:[%s4336 + $0x13a] sm:$0xff]
      %v4880 = vld [vmem:[%s4336 + $0x142] sm:$0xff]
      %v4881 = vld [vmem:[%s4336 + $0x152] sm:$0xff]
      %v4882 = vld [vmem:[%s4336 + $0x15a] sm:$0xff]
      %v4883 = vld [vmem:[%s4336 + $0x16a] sm:$0xff]
      %v4884 = vld [vmem:[%s4336 + $0x172] sm:$0xff]
      %s4885 = scalar_lea.vmem %s3, 1024
      %v4886 = vld [vmem:[%s4885] sm:$0xff]
      %v4887 = vld [vmem:[%s4885 + $0x8] sm:$0xff]
      %v4888 = vld [vmem:[%s4885 + $0x10] sm:$0xff]
      %v4889 = vld [vmem:[%s4885 + $0x18] sm:$0xff]
      %v4890 = vld [vmem:[%s4885 + $0x20] sm:$0xff]
      %v4891 = vld [vmem:[%s4885 + $0x28] sm:$0xff]
      %v4892 = vld [vmem:[%s4885 + $0x30] sm:$0xff]
      %v4893 = vld [vmem:[%s4885 + $0x38] sm:$0xff]
      %v4894 = vld [vmem:[%s4885 + $0x40] sm:$0xff]
      %v4895 = vld [vmem:[%s4885 + $0x48] sm:$0xff]
      %v4896 = vld [vmem:[%s4885 + $0x50] sm:$0xff]
      %v4897 = vld [vmem:[%s4885 + $0x58] sm:$0xff]
      %v4898 = vld [vmem:[%s4885 + $0x60] sm:$0xff]
      %v4899 = vld [vmem:[%s4885 + $0x68] sm:$0xff]
      %v4900 = vld [vmem:[%s4885 + $0x70] sm:$0xff]
      %v4901 = vld [vmem:[%s4885 + $0x78] sm:$0xff]
      %4902 = vmatpush.msra.mxu0 %v4901
      %4903 = vmatpush.msra.mxu0 %v4900
      %4904 = vmatpush.msra.mxu0 %v4899
      %4905 = vmatpush.msra.mxu0 %v4898
      %4906 = vmatpush.msra.mxu0 %v4897
      %4907 = vmatpush.msra.mxu0 %v4896
      %4908 = vmatpush.msra.mxu0 %v4895
      %4909 = vmatpush.msra.mxu0 %v4894
      %4910 = vmatpush.msra.mxu0 %v4893
      %4911 = vmatpush.msra.mxu0 %v4892
      %4912 = vmatpush.msra.mxu0 %v4891
      %4913 = vmatpush.msra.mxu0 %v4890
      %4914 = vmatpush.msra.mxu0 %v4889
      %4915 = vmatpush.msra.mxu0 %v4888
      %4916 = vmatpush.msra.mxu0 %v4887
      %4917 = vmatpush.msra.mxu0 %v4886
      %4918 = vmatmul.f32.gmra.mxu0 %v4853
      %v4919 = vpop.f32.mrf.mxu0
      %v4920 = vadd.f32 0.0, %v4919
      %4921 = vmatmul.f32.gmra.mxu0 %v4854
      %v4922 = vpop.f32.mrf.mxu0
      %v4923 = vadd.f32 0.0, %v4922
      %4924 = vmatmul.f32.gmra.mxu0 %v4855
      %v4925 = vpop.f32.mrf.mxu0
      %v4926 = vadd.f32 0.0, %v4925
      %4927 = vmatmul.f32.gmra.mxu0 %v4856
      %v4928 = vpop.f32.mrf.mxu0
      %v4929 = vadd.f32 0.0, %v4928
      %4930 = vmatmul.f32.gmra.mxu0 %v4857
      %v4931 = vpop.f32.mrf.mxu0
      %v4932 = vadd.f32 0.0, %v4931
      %4933 = vmatmul.f32.gmra.mxu0 %v4858
      %v4934 = vpop.f32.mrf.mxu0
      %v4935 = vadd.f32 0.0, %v4934
      %4936 = vmatmul.f32.gmra.mxu0 %v4859
      %v4937 = vpop.f32.mrf.mxu0
      %v4938 = vadd.f32 0.0, %v4937
      %4939 = vmatmul.f32.gmra.mxu0 %v4860
      %v4940 = vpop.f32.mrf.mxu0
      %v4941 = vadd.f32 0.0, %v4940
      %4942 = vmatmul.f32.gmra.mxu0 %v4861
      %v4943 = vpop.f32.mrf.mxu0
      %v4944 = vadd.f32 0.0, %v4943
      %4945 = vmatmul.f32.gmra.mxu0 %v4862
      %v4946 = vpop.f32.mrf.mxu0
      %v4947 = vadd.f32 0.0, %v4946
      %4948 = vmatmul.f32.gmra.mxu0 %v4863
      %v4949 = vpop.f32.mrf.mxu0
      %v4950 = vadd.f32 0.0, %v4949
      %4951 = vmatmul.f32.gmra.mxu0 %v4864
      %v4952 = vpop.f32.mrf.mxu0
      %v4953 = vadd.f32 0.0, %v4952
      %4954 = vmatmul.f32.gmra.mxu0 %v4865
      %v4955 = vpop.f32.mrf.mxu0
      %v4956 = vadd.f32 0.0, %v4955
      %4957 = vmatmul.f32.gmra.mxu0 %v4866
      %v4958 = vpop.f32.mrf.mxu0
      %v4959 = vadd.f32 0.0, %v4958
      %4960 = vmatmul.f32.gmra.mxu0 %v4867
      %v4961 = vpop.f32.mrf.mxu0
      %v4962 = vadd.f32 0.0, %v4961
      %4963 = vmatmul.f32.gmra.mxu0 %v4868
      %v4964 = vpop.f32.mrf.mxu0
      %v4965 = vadd.f32 0.0, %v4964
      %4966 = vmatmul.f32.gmra.mxu0 %v4869
      %v4967 = vpop.f32.mrf.mxu0
      %v4968 = vadd.f32 0.0, %v4967
      %4969 = vmatmul.f32.gmra.mxu0 %v4870
      %v4970 = vpop.f32.mrf.mxu0
      %v4971 = vadd.f32 0.0, %v4970
      %4972 = vmatmul.f32.gmra.mxu0 %v4871
      %v4973 = vpop.f32.mrf.mxu0
      %v4974 = vadd.f32 0.0, %v4973
      %4975 = vmatmul.f32.gmra.mxu0 %v4872
      %v4976 = vpop.f32.mrf.mxu0
      %v4977 = vadd.f32 0.0, %v4976
      %4978 = vmatmul.f32.gmra.mxu0 %v4873
      %v4979 = vpop.f32.mrf.mxu0
      %v4980 = vadd.f32 0.0, %v4979
      %4981 = vmatmul.f32.gmra.mxu0 %v4874
      %v4982 = vpop.f32.mrf.mxu0
      %v4983 = vadd.f32 0.0, %v4982
      %4984 = vmatmul.f32.gmra.mxu0 %v4875
      %v4985 = vpop.f32.mrf.mxu0
      %v4986 = vadd.f32 0.0, %v4985
      %4987 = vmatmul.f32.gmra.mxu0 %v4876
      %v4988 = vpop.f32.mrf.mxu0
      %v4989 = vadd.f32 0.0, %v4988
      %4990 = vmatmul.f32.gmra.mxu0 %v4877
      %v4991 = vpop.f32.mrf.mxu0
      %v4992 = vadd.f32 0.0, %v4991
      %4993 = vmatmul.f32.gmra.mxu0 %v4878
      %v4994 = vpop.f32.mrf.mxu0
      %v4995 = vadd.f32 0.0, %v4994
      %4996 = vmatmul.f32.gmra.mxu0 %v4879
      %v4997 = vpop.f32.mrf.mxu0
      %v4998 = vadd.f32 0.0, %v4997
      %4999 = vmatmul.f32.gmra.mxu0 %v4880
      %v5000 = vpop.f32.mrf.mxu0
      %v5001 = vadd.f32 0.0, %v5000
      %5002 = vmatmul.f32.gmra.mxu0 %v4881
      %v5003 = vpop.f32.mrf.mxu0
      %v5004 = vadd.f32 0.0, %v5003
      %5005 = vmatmul.f32.gmra.mxu0 %v4882
      %v5006 = vpop.f32.mrf.mxu0
      %v5007 = vadd.f32 0.0, %v5006
      %5008 = vmatmul.f32.gmra.mxu0 %v4883
      %v5009 = vpop.f32.mrf.mxu0
      %v5010 = vadd.f32 0.0, %v5009
      %5011 = vmatmul.f32.gmra.mxu0 %v4884
      %v5012 = vpop.f32.mrf.mxu0
      %v5013 = vadd.f32 0.0, %v5012
      %5014 = vdwg.mxu0
      %v5015 = vld [vmem:[#allocation4] sm:$0xff]
      %v5016 = vld [vmem:[#allocation4 + $0x8] sm:$0xff]
      %v5017 = vld [vmem:[#allocation4 + $0x10] sm:$0xff]
      %v5018 = vld [vmem:[#allocation4 + $0x18] sm:$0xff]
      %v5019 = vld [vmem:[#allocation4 + $0x20] sm:$0xff]
      %v5020 = vld [vmem:[#allocation4 + $0x28] sm:$0xff]
      %v5021 = vld [vmem:[#allocation4 + $0x30] sm:$0xff]
      %v5022 = vld [vmem:[#allocation4 + $0x38] sm:$0xff]
      %v5023 = vld [vmem:[#allocation4 + $0x40] sm:$0xff]
      %v5024 = vld [vmem:[#allocation4 + $0x48] sm:$0xff]
      %v5025 = vld [vmem:[#allocation4 + $0x50] sm:$0xff]
      %v5026 = vld [vmem:[#allocation4 + $0x58] sm:$0xff]
      %v5027 = vld [vmem:[#allocation4 + $0x60] sm:$0xff]
      %v5028 = vld [vmem:[#allocation4 + $0x68] sm:$0xff]
      %v5029 = vld [vmem:[#allocation4 + $0x70] sm:$0xff]
      %v5030 = vld [vmem:[#allocation4 + $0x78] sm:$0xff]
      %v5031 = vld [vmem:[#allocation4 + $0x80] sm:$0xff]
      %v5032 = vld [vmem:[#allocation4 + $0x88] sm:$0xff]
      %v5033 = vld [vmem:[#allocation4 + $0x90] sm:$0xff]
      %v5034 = vld [vmem:[#allocation4 + $0x98] sm:$0xff]
      %v5035 = vld [vmem:[#allocation4 + $0xa0] sm:$0xff]
      %v5036 = vld [vmem:[#allocation4 + $0xa8] sm:$0xff]
      %v5037 = vld [vmem:[#allocation4 + $0xb0] sm:$0xff]
      %v5038 = vld [vmem:[#allocation4 + $0xb8] sm:$0xff]
      %v5039 = vld [vmem:[#allocation4 + $0xc0] sm:$0xff]
      %v5040 = vld [vmem:[#allocation4 + $0xc8] sm:$0xff]
      %v5041 = vld [vmem:[#allocation4 + $0xd0] sm:$0xff]
      %v5042 = vld [vmem:[#allocation4 + $0xd8] sm:$0xff]
      %v5043 = vld [vmem:[#allocation4 + $0xe0] sm:$0xff]
      %v5044 = vld [vmem:[#allocation4 + $0xe8] sm:$0xff]
      %v5045 = vld [vmem:[#allocation4 + $0xf0] sm:$0xff]
      %v5046 = vld [vmem:[#allocation4 + $0xf8] sm:$0xff]
      %v5047 = vadd.f32 %v5015, %v4920
      %v5048 = vadd.f32 %v5016, %v4923
      %v5049 = vadd.f32 %v5017, %v4926
      %v5050 = vadd.f32 %v5018, %v4929
      %v5051 = vadd.f32 %v5019, %v4932
      %v5052 = vadd.f32 %v5020, %v4935
      %v5053 = vadd.f32 %v5021, %v4938
      %v5054 = vadd.f32 %v5022, %v4941
      %v5055 = vadd.f32 %v5023, %v4944
      %v5056 = vadd.f32 %v5024, %v4947
      %v5057 = vadd.f32 %v5025, %v4950
      %v5058 = vadd.f32 %v5026, %v4953
      %v5059 = vadd.f32 %v5027, %v4956
      %v5060 = vadd.f32 %v5028, %v4959
      %v5061 = vadd.f32 %v5029, %v4962
      %v5062 = vadd.f32 %v5030, %v4965
      %v5063 = vadd.f32 %v5031, %v4968
      %v5064 = vadd.f32 %v5032, %v4971
      %v5065 = vadd.f32 %v5033, %v4974
      %v5066 = vadd.f32 %v5034, %v4977
      %v5067 = vadd.f32 %v5035, %v4980
      %v5068 = vadd.f32 %v5036, %v4983
      %v5069 = vadd.f32 %v5037, %v4986
      %v5070 = vadd.f32 %v5038, %v4989
      %v5071 = vadd.f32 %v5039, %v4992
      %v5072 = vadd.f32 %v5040, %v4995
      %v5073 = vadd.f32 %v5041, %v4998
      %v5074 = vadd.f32 %v5042, %v5001
      %v5075 = vadd.f32 %v5043, %v5004
      %v5076 = vadd.f32 %v5044, %v5007
      %v5077 = vadd.f32 %v5045, %v5010
      %v5078 = vadd.f32 %v5046, %v5013
      %5079 = vst [vmem:[#allocation4] sm:$0xff] %v5047
      %5080 = vst [vmem:[#allocation4 + $0x8] sm:$0xff] %v5048
      %5081 = vst [vmem:[#allocation4 + $0x10] sm:$0xff] %v5049
      %5082 = vst [vmem:[#allocation4 + $0x18] sm:$0xff] %v5050
      %5083 = vst [vmem:[#allocation4 + $0x20] sm:$0xff] %v5051
      %5084 = vst [vmem:[#allocation4 + $0x28] sm:$0xff] %v5052
      %5085 = vst [vmem:[#allocation4 + $0x30] sm:$0xff] %v5053
      %5086 = vst [vmem:[#allocation4 + $0x38] sm:$0xff] %v5054
      %5087 = vst [vmem:[#allocation4 + $0x40] sm:$0xff] %v5055
      %5088 = vst [vmem:[#allocation4 + $0x48] sm:$0xff] %v5056
      %5089 = vst [vmem:[#allocation4 + $0x50] sm:$0xff] %v5057
      %5090 = vst [vmem:[#allocation4 + $0x58] sm:$0xff] %v5058
      %5091 = vst [vmem:[#allocation4 + $0x60] sm:$0xff] %v5059
      %5092 = vst [vmem:[#allocation4 + $0x68] sm:$0xff] %v5060
      %5093 = vst [vmem:[#allocation4 + $0x70] sm:$0xff] %v5061
      %5094 = vst [vmem:[#allocation4 + $0x78] sm:$0xff] %v5062
      %5095 = vst [vmem:[#allocation4 + $0x80] sm:$0xff] %v5063
      %5096 = vst [vmem:[#allocation4 + $0x88] sm:$0xff] %v5064
      %5097 = vst [vmem:[#allocation4 + $0x90] sm:$0xff] %v5065
      %5098 = vst [vmem:[#allocation4 + $0x98] sm:$0xff] %v5066
      %5099 = vst [vmem:[#allocation4 + $0xa0] sm:$0xff] %v5067
      %5100 = vst [vmem:[#allocation4 + $0xa8] sm:$0xff] %v5068
      %5101 = vst [vmem:[#allocation4 + $0xb0] sm:$0xff] %v5069
      %5102 = vst [vmem:[#allocation4 + $0xb8] sm:$0xff] %v5070
      %5103 = vst [vmem:[#allocation4 + $0xc0] sm:$0xff] %v5071
      %5104 = vst [vmem:[#allocation4 + $0xc8] sm:$0xff] %v5072
      %5105 = vst [vmem:[#allocation4 + $0xd0] sm:$0xff] %v5073
      %5106 = vst [vmem:[#allocation4 + $0xd8] sm:$0xff] %v5074
      %5107 = vst [vmem:[#allocation4 + $0xe0] sm:$0xff] %v5075
      %5108 = vst [vmem:[#allocation4 + $0xe8] sm:$0xff] %v5076
      %5109 = vst [vmem:[#allocation4 + $0xf0] sm:$0xff] %v5077
      %5110 = vst [vmem:[#allocation4 + $0xf8] sm:$0xff] %v5078
      %v5111 = vld [vmem:[#allocation4] sm:$0xff]
      %v5112 = vld [vmem:[#allocation4 + $0x8] sm:$0xff]
      %v5113 = vld [vmem:[#allocation4 + $0x10] sm:$0xff]
      %v5114 = vld [vmem:[#allocation4 + $0x18] sm:$0xff]
      %v5115 = vld [vmem:[#allocation4 + $0x20] sm:$0xff]
      %v5116 = vld [vmem:[#allocation4 + $0x28] sm:$0xff]
      %v5117 = vld [vmem:[#allocation4 + $0x30] sm:$0xff]
      %v5118 = vld [vmem:[#allocation4 + $0x38] sm:$0xff]
      %v5119 = vld [vmem:[#allocation4 + $0x40] sm:$0xff]
      %v5120 = vld [vmem:[#allocation4 + $0x48] sm:$0xff]
      %v5121 = vld [vmem:[#allocation4 + $0x50] sm:$0xff]
      %v5122 = vld [vmem:[#allocation4 + $0x58] sm:$0xff]
      %v5123 = vld [vmem:[#allocation4 + $0x60] sm:$0xff]
      %v5124 = vld [vmem:[#allocation4 + $0x68] sm:$0xff]
      %v5125 = vld [vmem:[#allocation4 + $0x70] sm:$0xff]
      %v5126 = vld [vmem:[#allocation4 + $0x78] sm:$0xff]
      %v5127 = vld [vmem:[#allocation4 + $0x80] sm:$0xff]
      %v5128 = vld [vmem:[#allocation4 + $0x88] sm:$0xff]
      %v5129 = vld [vmem:[#allocation4 + $0x90] sm:$0xff]
      %v5130 = vld [vmem:[#allocation4 + $0x98] sm:$0xff]
      %v5131 = vld [vmem:[#allocation4 + $0xa0] sm:$0xff]
      %v5132 = vld [vmem:[#allocation4 + $0xa8] sm:$0xff]
      %v5133 = vld [vmem:[#allocation4 + $0xb0] sm:$0xff]
      %v5134 = vld [vmem:[#allocation4 + $0xb8] sm:$0xff]
      %v5135 = vld [vmem:[#allocation4 + $0xc0] sm:$0xff]
      %v5136 = vld [vmem:[#allocation4 + $0xc8] sm:$0xff]
      %v5137 = vld [vmem:[#allocation4 + $0xd0] sm:$0xff]
      %v5138 = vld [vmem:[#allocation4 + $0xd8] sm:$0xff]
      %v5139 = vld [vmem:[#allocation4 + $0xe0] sm:$0xff]
      %v5140 = vld [vmem:[#allocation4 + $0xe8] sm:$0xff]
      %v5141 = vld [vmem:[#allocation4 + $0xf0] sm:$0xff]
      %v5142 = vld [vmem:[#allocation4 + $0xf8] sm:$0xff]
      %v5143 = vld [vmem:[%s4] sm:$0x1]
      %v5145 = vperm.slane %v5143, 0
      %v5147 = vadd.f32 %v5111, %v5145
      %v5148 = vadd.f32 %v5112, %v5145
      %v5149 = vadd.f32 %v5113, %v5145
      %v5150 = vadd.f32 %v5114, %v5145
      %v5151 = vadd.f32 %v5115, %v5145
      %v5152 = vadd.f32 %v5116, %v5145
      %v5153 = vadd.f32 %v5117, %v5145
      %v5154 = vadd.f32 %v5118, %v5145
      %v5155 = vadd.f32 %v5119, %v5145
      %v5156 = vadd.f32 %v5120, %v5145
      %v5157 = vadd.f32 %v5121, %v5145
      %v5158 = vadd.f32 %v5122, %v5145
      %v5159 = vadd.f32 %v5123, %v5145
      %v5160 = vadd.f32 %v5124, %v5145
      %v5161 = vadd.f32 %v5125, %v5145
      %v5162 = vadd.f32 %v5126, %v5145
      %v5163 = vadd.f32 %v5127, %v5145
      %v5164 = vadd.f32 %v5128, %v5145
      %v5165 = vadd.f32 %v5129, %v5145
      %v5166 = vadd.f32 %v5130, %v5145
      %v5167 = vadd.f32 %v5131, %v5145
      %v5168 = vadd.f32 %v5132, %v5145
      %v5169 = vadd.f32 %v5133, %v5145
      %v5170 = vadd.f32 %v5134, %v5145
      %v5171 = vadd.f32 %v5135, %v5145
      %v5172 = vadd.f32 %v5136, %v5145
      %v5173 = vadd.f32 %v5137, %v5145
      %v5174 = vadd.f32 %v5138, %v5145
      %v5175 = vadd.f32 %v5139, %v5145
      %v5176 = vadd.f32 %v5140, %v5145
      %v5177 = vadd.f32 %v5141, %v5145
      %v5178 = vadd.f32 %v5142, %v5145
      %v5179 = vld [vmem:[%s5] sm:$0xff]
      %v5180 = vld [vmem:[%s5 + $0x8] sm:$0xff]
      %v5181 = vld [vmem:[%s5 + $0x10] sm:$0xff]
      %v5182 = vld [vmem:[%s5 + $0x18] sm:$0xff]
      %v5183 = vld [vmem:[%s5 + $0x20] sm:$0xff]
      %v5184 = vld [vmem:[%s5 + $0x28] sm:$0xff]
      %v5185 = vld [vmem:[%s5 + $0x30] sm:$0xff]
      %v5186 = vld [vmem:[%s5 + $0x38] sm:$0xff]
      %v5187 = vld [vmem:[%s5 + $0x40] sm:$0xff]
      %v5188 = vld [vmem:[%s5 + $0x48] sm:$0xff]
      %v5189 = vld [vmem:[%s5 + $0x50] sm:$0xff]
      %v5190 = vld [vmem:[%s5 + $0x58] sm:$0xff]
      %v5191 = vld [vmem:[%s5 + $0x60] sm:$0xff]
      %v5192 = vld [vmem:[%s5 + $0x68] sm:$0xff]
      %v5193 = vld [vmem:[%s5 + $0x70] sm:$0xff]
      %v5194 = vld [vmem:[%s5 + $0x78] sm:$0xff]
      %v5195 = vld [vmem:[%s6] sm:$0x1]
      %v5197 = vperm.slane %v5195, 0
      %5199 = vmatpush.msra.mxu0 %v5194
      %5200 = vmatpush.msra.mxu0 %v5193
      %5201 = vmatpush.msra.mxu0 %v5192
      %5202 = vmatpush.msra.mxu0 %v5191
      %5203 = vmatpush.msra.mxu0 %v5190
      %5204 = vmatpush.msra.mxu0 %v5189
      %5205 = vmatpush.msra.mxu0 %v5188
      %5206 = vmatpush.msra.mxu0 %v5187
      %5207 = vmatpush.msra.mxu0 %v5186
      %5208 = vmatpush.msra.mxu0 %v5185
      %5209 = vmatpush.msra.mxu0 %v5184
      %5210 = vmatpush.msra.mxu0 %v5183
      %5211 = vmatpush.msra.mxu0 %v5182
      %5212 = vmatpush.msra.mxu0 %v5181
      %5213 = vmatpush.msra.mxu0 %v5180
      %5214 = vmatpush.msra.mxu0 %v5179
      %5215 = vmatmul.f32.gmra.mxu0 %v311
      %v5216 = vpop.f32.mrf.mxu0
      %v5217 = vadd.f32 %v5197, %v5216
      %5218 = vmatmul.f32.gmra.mxu0 %v312
      %v5219 = vpop.f32.mrf.mxu0
      %v5220 = vadd.f32 %v5197, %v5219
      %5221 = vmatmul.f32.gmra.mxu0 %v313
      %v5222 = vpop.f32.mrf.mxu0
      %v5223 = vadd.f32 %v5197, %v5222
      %5224 = vmatmul.f32.gmra.mxu0 %v314
      %v5225 = vpop.f32.mrf.mxu0
      %v5226 = vadd.f32 %v5197, %v5225
      %5227 = vmatmul.f32.gmra.mxu0 %v315
      %v5228 = vpop.f32.mrf.mxu0
      %v5229 = vadd.f32 %v5197, %v5228
      %5230 = vmatmul.f32.gmra.mxu0 %v316
      %v5231 = vpop.f32.mrf.mxu0
      %v5232 = vadd.f32 %v5197, %v5231
      %5233 = vmatmul.f32.gmra.mxu0 %v317
      %v5234 = vpop.f32.mrf.mxu0
      %v5235 = vadd.f32 %v5197, %v5234
      %5236 = vmatmul.f32.gmra.mxu0 %v318
      %v5237 = vpop.f32.mrf.mxu0
      %v5238 = vadd.f32 %v5197, %v5237
      %5239 = vmatmul.f32.gmra.mxu0 %v319
      %v5240 = vpop.f32.mrf.mxu0
      %v5241 = vadd.f32 %v5197, %v5240
      %5242 = vmatmul.f32.gmra.mxu0 %v320
      %v5243 = vpop.f32.mrf.mxu0
      %v5244 = vadd.f32 %v5197, %v5243
      %5245 = vmatmul.f32.gmra.mxu0 %v321
      %v5246 = vpop.f32.mrf.mxu0
      %v5247 = vadd.f32 %v5197, %v5246
      %5248 = vmatmul.f32.gmra.mxu0 %v322
      %v5249 = vpop.f32.mrf.mxu0
      %v5250 = vadd.f32 %v5197, %v5249
      %5251 = vmatmul.f32.gmra.mxu0 %v323
      %v5252 = vpop.f32.mrf.mxu0
      %v5253 = vadd.f32 %v5197, %v5252
      %5254 = vmatmul.f32.gmra.mxu0 %v324
      %v5255 = vpop.f32.mrf.mxu0
      %v5256 = vadd.f32 %v5197, %v5255
      %5257 = vmatmul.f32.gmra.mxu0 %v325
      %v5258 = vpop.f32.mrf.mxu0
      %v5259 = vadd.f32 %v5197, %v5258
      %5260 = vmatmul.f32.gmra.mxu0 %v326
      %v5261 = vpop.f32.mrf.mxu0
      %v5262 = vadd.f32 %v5197, %v5261
      %5263 = vmatmul.f32.gmra.mxu0 %v327
      %v5264 = vpop.f32.mrf.mxu0
      %v5265 = vadd.f32 %v5197, %v5264
      %5266 = vmatmul.f32.gmra.mxu0 %v328
      %v5267 = vpop.f32.mrf.mxu0
      %v5268 = vadd.f32 %v5197, %v5267
      %5269 = vmatmul.f32.gmra.mxu0 %v329
      %v5270 = vpop.f32.mrf.mxu0
      %v5271 = vadd.f32 %v5197, %v5270
      %5272 = vmatmul.f32.gmra.mxu0 %v330
      %v5273 = vpop.f32.mrf.mxu0
      %v5274 = vadd.f32 %v5197, %v5273
      %5275 = vmatmul.f32.gmra.mxu0 %v331
      %v5276 = vpop.f32.mrf.mxu0
      %v5277 = vadd.f32 %v5197, %v5276
      %5278 = vmatmul.f32.gmra.mxu0 %v332
      %v5279 = vpop.f32.mrf.mxu0
      %v5280 = vadd.f32 %v5197, %v5279
      %5281 = vmatmul.f32.gmra.mxu0 %v333
      %v5282 = vpop.f32.mrf.mxu0
      %v5283 = vadd.f32 %v5197, %v5282
      %5284 = vmatmul.f32.gmra.mxu0 %v334
      %v5285 = vpop.f32.mrf.mxu0
      %v5286 = vadd.f32 %v5197, %v5285
      %5287 = vmatmul.f32.gmra.mxu0 %v335
      %v5288 = vpop.f32.mrf.mxu0
      %v5289 = vadd.f32 %v5197, %v5288
      %5290 = vmatmul.f32.gmra.mxu0 %v336
      %v5291 = vpop.f32.mrf.mxu0
      %v5292 = vadd.f32 %v5197, %v5291
      %5293 = vmatmul.f32.gmra.mxu0 %v337
      %v5294 = vpop.f32.mrf.mxu0
      %v5295 = vadd.f32 %v5197, %v5294
      %5296 = vmatmul.f32.gmra.mxu0 %v338
      %v5297 = vpop.f32.mrf.mxu0
      %v5298 = vadd.f32 %v5197, %v5297
      %5299 = vmatmul.f32.gmra.mxu0 %v339
      %v5300 = vpop.f32.mrf.mxu0
      %v5301 = vadd.f32 %v5197, %v5300
      %5302 = vmatmul.f32.gmra.mxu0 %v340
      %v5303 = vpop.f32.mrf.mxu0
      %v5304 = vadd.f32 %v5197, %v5303
      %5305 = vmatmul.f32.gmra.mxu0 %v341
      %v5306 = vpop.f32.mrf.mxu0
      %v5307 = vadd.f32 %v5197, %v5306
      %5308 = vmatmul.f32.gmra.mxu0 %v342
      %v5309 = vpop.f32.mrf.mxu0
      %v5310 = vadd.f32 %v5197, %v5309
      %5311 = vdwg.mxu0
      %v5312 = vadd.f32 %v5147, %v5217
      %v5313 = vadd.f32 %v5148, %v5220
      %v5314 = vadd.f32 %v5149, %v5223
      %v5315 = vadd.f32 %v5150, %v5226
      %v5316 = vadd.f32 %v5151, %v5229
      %v5317 = vadd.f32 %v5152, %v5232
      %v5318 = vadd.f32 %v5153, %v5235
      %v5319 = vadd.f32 %v5154, %v5238
      %v5320 = vadd.f32 %v5155, %v5241
      %v5321 = vadd.f32 %v5156, %v5244
      %v5322 = vadd.f32 %v5157, %v5247
      %v5323 = vadd.f32 %v5158, %v5250
      %v5324 = vadd.f32 %v5159, %v5253
      %v5325 = vadd.f32 %v5160, %v5256
      %v5326 = vadd.f32 %v5161, %v5259
      %v5327 = vadd.f32 %v5162, %v5262
      %v5328 = vadd.f32 %v5163, %v5265
      %v5329 = vadd.f32 %v5164, %v5268
      %v5330 = vadd.f32 %v5165, %v5271
      %v5331 = vadd.f32 %v5166, %v5274
      %v5332 = vadd.f32 %v5167, %v5277
      %v5333 = vadd.f32 %v5168, %v5280
      %v5334 = vadd.f32 %v5169, %v5283
      %v5335 = vadd.f32 %v5170, %v5286
      %v5336 = vadd.f32 %v5171, %v5289
      %v5337 = vadd.f32 %v5172, %v5292
      %v5338 = vadd.f32 %v5173, %v5295
      %v5339 = vadd.f32 %v5174, %v5298
      %v5340 = vadd.f32 %v5175, %v5301
      %v5341 = vadd.f32 %v5176, %v5304
      %v5342 = vadd.f32 %v5177, %v5307
      %v5343 = vadd.f32 %v5178, %v5310
      %5344 = vst [vmem:[%s278] sm:$0xff] %v5312
      %5345 = vst [vmem:[%s278 + $0x8] sm:$0xff] %v5313
      %5346 = vst [vmem:[%s278 + $0x10] sm:$0xff] %v5314
      %5347 = vst [vmem:[%s278 + $0x18] sm:$0xff] %v5315
      %5348 = vst [vmem:[%s278 + $0x20] sm:$0xff] %v5316
      %5349 = vst [vmem:[%s278 + $0x28] sm:$0xff] %v5317
      %5350 = vst [vmem:[%s278 + $0x30] sm:$0xff] %v5318
      %5351 = vst [vmem:[%s278 + $0x38] sm:$0xff] %v5319
      %5352 = vst [vmem:[%s278 + $0x40] sm:$0xff] %v5320
      %5353 = vst [vmem:[%s278 + $0x48] sm:$0xff] %v5321
      %5354 = vst [vmem:[%s278 + $0x50] sm:$0xff] %v5322
      %5355 = vst [vmem:[%s278 + $0x58] sm:$0xff] %v5323
      %5356 = vst [vmem:[%s278 + $0x60] sm:$0xff] %v5324
      %5357 = vst [vmem:[%s278 + $0x68] sm:$0xff] %v5325
      %5358 = vst [vmem:[%s278 + $0x70] sm:$0xff] %v5326
      %5359 = vst [vmem:[%s278 + $0x78] sm:$0xff] %v5327
      %5360 = vst [vmem:[%s278 + $0x80] sm:$0xff] %v5328
      %5361 = vst [vmem:[%s278 + $0x88] sm:$0xff] %v5329
      %5362 = vst [vmem:[%s278 + $0x90] sm:$0xff] %v5330
      %5363 = vst [vmem:[%s278 + $0x98] sm:$0xff] %v5331
      %5364 = vst [vmem:[%s278 + $0xa0] sm:$0xff] %v5332
      %5365 = vst [vmem:[%s278 + $0xa8] sm:$0xff] %v5333
      %5366 = vst [vmem:[%s278 + $0xb0] sm:$0xff] %v5334
      %5367 = vst [vmem:[%s278 + $0xb8] sm:$0xff] %v5335
      %5368 = vst [vmem:[%s278 + $0xc0] sm:$0xff] %v5336
      %5369 = vst [vmem:[%s278 + $0xc8] sm:$0xff] %v5337
      %5370 = vst [vmem:[%s278 + $0xd0] sm:$0xff] %v5338
      %5371 = vst [vmem:[%s278 + $0xd8] sm:$0xff] %v5339
      %5372 = vst [vmem:[%s278 + $0xe0] sm:$0xff] %v5340
      %5373 = vst [vmem:[%s278 + $0xe8] sm:$0xff] %v5341
      %5374 = vst [vmem:[%s278 + $0xf0] sm:$0xff] %v5342
      %5375 = vst [vmem:[%s278 + $0xf8] sm:$0xff] %v5343
      %p5376 = scmp.lt.s32.totalorder %s18, 1
      %s5377 = scalar_select %p5376, %s18, 1
      %s5378 = smul.addr %s5377, 32
      %s5379 = smul.addr %s5378, 8
      %s5380 = scalar_lea.vmem %s7, %s5379
      // Predicated region
      $region49: #{preact_block_no_bn.1} parent=47 // pred_check
        %p5381 = pneg %p188
      $region50: #{preact_block_no_bn.1} parent=47 // pred_check_branch
        %5383 = sbr.rel (%p5381) target = $region52
      $region51: #{preact_block_no_bn.1} parent=47 // pred_region
        _
      $region52: #{preact_block_no_bn.1} parent=47 // pred_fallthru
        _
    $region48: #{preact_block_no_bn.1} parent=5 // pred_fallthru
      _
    %p5384 = scmp.le.s32.totalorder 2, %s13
    // Predicated region
    $region53: #{preact_block_no_bn.1} parent=5 // pred_check
      %p5385 = pneg %p5384
    $region54: #{preact_block_no_bn.1} parent=5 // pred_check_branch
      %5387 = sbr.rel (%p5385) target = $region56
    $region55: #{preact_block_no_bn.1} parent=5 // pred_region
      %s5388 = ssub.s32 %s13, 2
      // Predicated region
      $region57: #{preact_block_no_bn.1} parent=55 // pred_check
        %p5389 = pneg %p194
      $region58: #{preact_block_no_bn.1} parent=55 // pred_check_branch
        %5391 = sbr.rel (%p5389) target = $region60
      $region59: #{preact_block_no_bn.1} parent=55 // pred_region
        %p5392 = scmp.lt.s32.totalorder %s19, 1
        %s5393 = scalar_select %p5392, %s19, 1
        %s5394 = smul.addr %s5393, 32
        %s5395 = smul.addr %s5394, 8
        %s5396 = scalar_lea.vmem %s7, %s5395
      $region60: #{preact_block_no_bn.1} parent=55 // pred_fallthru
        _
    $region56: #{preact_block_no_bn.1} parent=5 // pred_fallthru
      _
  $region6: #{preact_block_no_bn.1} parent=0 // loop_footer
    %s17 = sadd.s32 1, %s13
  $region7: #{preact_block_no_bn.1} parent=0 // loop_footer_branch
    %12 = sbr.rel target = $region3
  $region8: #{preact_block_no_bn.1} parent=0 // loop_exit
    _

</llo_original>
